<compile_context>
chip_gen: v7x
topology: tpu7x:2x2x1
jax: 0.10.0
libtpu: 0.0.40
codegen_flags: <defaults>
</compile_context>

<pallas_src>
import functools
import math

import jax
import jax.numpy as jnp
from jax.experimental import pallas as pl
from jax.experimental.pallas import tpu as pltpu

# E5 / BERT token ids used by the module.
CLS_ID, QUERY_ID, PASSAGE_ID, COLON_ID, SEP_ID, PAD_ID = 101, 23032, 6019, 1024, 102, 0


def _token_seq_kernel(mid_ref, out_ref, *, vocab_size, half_batch, block_rows):
    # mid_ref: (BB, S-5, V)  depth-reduced trainable logits for BB batch rows (V on lanes)
    # out_ref: (BB, S, V)
    BB = block_rows
    V = vocab_size
    base_row = pl.program_id(0) * BB

    # ---- middle rows: numerically stable log-softmax over the lane (vocab) axis ----
    mid = mid_ref[...]                                       # (BB, S-5, V)
    m = jnp.max(mid, axis=-1, keepdims=True)
    shifted = mid - m
    p = jnp.exp(shifted)                                     # reused for the LSE (single exp pass)
    lse = jnp.log(jnp.sum(p, axis=-1, keepdims=True))
    mid_ls = shifted - lse                                   # (BB, S-5, V)

    # ---- prefix / postfix rows: closed-form log-softmax of a one-hot row ----
    # log_softmax(one_hot)[hot] = 1 - log(e + V - 1);  elsewhere = -log(e + V - 1)
    c = math.log(math.e + (vocab_size - 1))                  # true (unpadded) vocab size
    hot_val = jnp.float32(1.0 - c)
    cold_val = jnp.float32(-c)

    # Per-row second prefix token (query vs passage), from the global batch-row index.
    row3 = jax.lax.broadcasted_iota(jnp.int32, (BB, 3, 1), 1)
    bidx = jax.lax.broadcasted_iota(jnp.int32, (BB, 3, 1), 0) + base_row
    tok1 = jnp.where(bidx < half_batch, QUERY_ID, PASSAGE_ID).astype(jnp.int32)
    tgt3 = jnp.where(row3 == 0, CLS_ID, jnp.where(row3 == 1, tok1, COLON_ID))  # (BB, 3, 1)
    lane3 = jax.lax.broadcasted_iota(jnp.int32, (BB, 3, V), 2)
    prefix_ls = jnp.where(lane3 == tgt3, hot_val, cold_val)                    # (BB, 3, V)

    row2 = jax.lax.broadcasted_iota(jnp.int32, (BB, 2, 1), 1)
    tgt2 = jnp.where(row2 == 0, SEP_ID, PAD_ID).astype(jnp.int32)              # (BB, 2, 1)
    lane2 = jax.lax.broadcasted_iota(jnp.int32, (BB, 2, V), 2)
    postfix_ls = jnp.where(lane2 == tgt2, hot_val, cold_val)                   # (BB, 2, V)

    # ---- single assembled full-block store ----
    out_ref[...] = jnp.concatenate([prefix_ls, mid_ls, postfix_ls], axis=1)    # (BB, S, V)


def _pick_block_rows(batch_size, sequence_length, vocab_size, budget_bytes=20 << 20):
    """Largest divisor of B that (a) fits the double-buffered in+out blocks in `budget_bytes`
    and (b) keeps at least 2 grid steps (megacore) when B allows it."""
    B, S, V = batch_size, sequence_length, vocab_size
    bytes_per_row = ((S - 5) + S) * V * 4 * 2        # f32 in+out, double-buffered
    cap = max(1, budget_bytes // max(1, bytes_per_row))
    target = max(1, B // 2)                          # prefer >= 2 grid steps
    best = 1
    for d in range(1, B + 1):
        if B % d == 0 and d <= cap and d <= target:
            best = d
    return best


def trainable_token_sequence_forward(token_logits, batch_size, sequence_length,
                                     vocab_size, depth):
    """token_logits: (B, S-5, V, D) float32 (torch layout). Returns (B, S, V) float32."""
    B, S, V, D = batch_size, sequence_length, vocab_size, depth
    assert B % 2 == 0
    assert token_logits.shape == (B, S - 5, V, D)

    # Depth reduction as a cheap contiguous last-dim reduction in XLA (avoids putting D on the
    # lane axis in-kernel and D-times-larger kernel-side HBM reads).
    mid = jnp.sum(token_logits.astype(jnp.float32), axis=-1)        # (B, S-5, V)

    BB = _pick_block_rows(B, S, V)
    kernel = functools.partial(_token_seq_kernel, vocab_size=V, half_batch=B // 2,
                               block_rows=BB)

    return pl.pallas_call(
        kernel,
        out_shape=jax.ShapeDtypeStruct((B, S, V), jnp.float32),
        grid_spec=pltpu.PrefetchScalarGridSpec(
            num_scalar_prefetch=0,
            grid=(B // BB,),
            in_specs=[pl.BlockSpec((BB, S - 5, V), lambda b: (b, 0, 0))],
            out_specs=pl.BlockSpec((BB, S, V), lambda b: (b, 0, 0)),
        ),
        compiler_params=pltpu.CompilerParams(
            dimension_semantics=("parallel",),
            vmem_limit_bytes=32 << 20,
        ),
    )(mid)


if __name__ == "__main__":
    # Small shapes consistent with the module (vocab kept at 30522 so the real E5 token ids
    # 101 / 23032 / 6019 / 1024 / 102 / 0 are in range).
    B, S, V, D = 4, 8, 30522, 4

    key = jax.random.PRNGKey(0)
    token_logits = jax.random.normal(key, (B, S - 5, V, D), dtype=jnp.float32)

    out = trainable_token_sequence_forward(token_logits, B, S, V, D)
    out = jax.block_until_ready(out)
    assert out.shape == (B, S, V), out.shape

    # Pure-JAX reference for correctness (mirrors the torch forward in eval mode).
    def oh(i):
        return jax.nn.one_hot(i, V, dtype=jnp.float32)

    half = B // 2
    q_pre = jnp.stack([oh(CLS_ID), oh(QUERY_ID), oh(COLON_ID)])
    p_pre = jnp.stack([oh(CLS_ID), oh(PASSAGE_ID), oh(COLON_ID)])
    post = jnp.stack([oh(SEP_ID), oh(PAD_ID)])
    prefix = jnp.concatenate([jnp.tile(q_pre[None], (half, 1, 1)),
                              jnp.tile(p_pre[None], (half, 1, 1))], axis=0)
    logits = jnp.concatenate(
        [prefix, jnp.sum(token_logits, axis=-1), jnp.tile(post[None], (B, 1, 1))], axis=1)
    ref = jax.nn.log_softmax(logits, axis=-1)

    assert jnp.allclose(out, ref, atol=1e-4, rtol=1e-4), float(jnp.max(jnp.abs(out - ref)))
    print("KERNEL_OK")
</pallas_src>

<mosaic_0001>
module attributes {stable_mosaic.version = 11 : i64} {
  func.func @_token_seq_kernel(%arg0: i32, %arg1: memref<2x3x30522xf32, #tpu.memory_space<vmem>>, %arg2: memref<2x8x30522xf32, #tpu.memory_space<vmem>>) attributes {dimension_semantics = [#tpu.dimension_semantics<parallel>], iteration_bounds = array<i64: 2>, scalar_prefetch = 0 : i64, scratch_operands = 0 : i64, tpu.core_type = #tpu.core_type<tc>, window_params = [{transform_indices = @transform_0, window_bounds = array<i64: 2, 3, 30522>}, {transform_indices = @transform_1, window_bounds = array<i64: 2, 8, 30522>}]} {
    %c2_i32 = arith.constant 2 : i32
    %0 = arith.muli %arg0, %c2_i32 : i32
    %c0 = arith.constant 0 : index
    %c0_0 = arith.constant 0 : index
    %c0_1 = arith.constant 0 : index
    %1 = vector.load %arg1[%c0, %c0_0, %c0_1] : memref<2x3x30522xf32, #tpu.memory_space<vmem>>, vector<2x3x30522xf32>
    %cst = arith.constant dense<0xFF800000> : vector<2x3xf32>
    %2 = vector.multi_reduction <maximumf>, %1, %cst [2] : vector<2x3x30522xf32> to vector<2x3xf32>
    %3 = vector.shape_cast %2 : vector<2x3xf32> to vector<2x3x1xf32>
    %4 = vector.broadcast %3 : vector<2x3x1xf32> to vector<2x3x30522xf32>
    %5 = arith.subf %1, %4 : vector<2x3x30522xf32>
    %6 = math.exp %5 : vector<2x3x30522xf32>
    %cst_2 = arith.constant dense<0.000000e+00> : vector<2x3xf32>
    %7 = vector.multi_reduction <add>, %6, %cst_2 [2] : vector<2x3x30522xf32> to vector<2x3xf32>
    %8 = vector.shape_cast %7 : vector<2x3xf32> to vector<2x3x1xf32>
    %9 = math.log %8 : vector<2x3x1xf32>
    %10 = vector.broadcast %9 : vector<2x3x1xf32> to vector<2x3x30522xf32>
    %11 = arith.subf %5, %10 : vector<2x3x30522xf32>
    %12 = tpu.iota {dimensions = array<i32: 1>} : vector<2x3x1xi32>
    %13 = tpu.iota {dimensions = array<i32: 0>} : vector<2x3x1xi32>
    %14 = vector.broadcast %0 : i32 to vector<2x3x1xi32>
    %15 = arith.addi %13, %14 : vector<2x3x1xi32>
    %c2_i32_3 = arith.constant 2 : i32
    %16 = vector.broadcast %c2_i32_3 : i32 to vector<2x3x1xi32>
    %17 = arith.cmpi slt, %15, %16 : vector<2x3x1xi32>
    %c23032_i32 = arith.constant 23032 : i32
    %c6019_i32 = arith.constant 6019 : i32
    %18 = vector.broadcast %c23032_i32 : i32 to vector<2x3x1xi32>
    %19 = vector.broadcast %c6019_i32 : i32 to vector<2x3x1xi32>
    %20 = arith.select %17, %18, %19 : vector<2x3x1xi1>, vector<2x3x1xi32>
    %c0_i32 = arith.constant 0 : i32
    %21 = vector.broadcast %c0_i32 : i32 to vector<2x3x1xi32>
    %22 = arith.cmpi eq, %12, %21 : vector<2x3x1xi32>
    %c1_i32 = arith.constant 1 : i32
    %23 = vector.broadcast %c1_i32 : i32 to vector<2x3x1xi32>
    %24 = arith.cmpi eq, %12, %23 : vector<2x3x1xi32>
    %c1024_i32 = arith.constant 1024 : i32
    %25 = vector.broadcast %c1024_i32 : i32 to vector<2x3x1xi32>
    %26 = arith.select %24, %20, %25 : vector<2x3x1xi1>, vector<2x3x1xi32>
    %c101_i32 = arith.constant 101 : i32
    %27 = vector.broadcast %c101_i32 : i32 to vector<2x3x1xi32>
    %28 = arith.select %22, %27, %26 : vector<2x3x1xi1>, vector<2x3x1xi32>
    %29 = tpu.iota {dimensions = array<i32: 2>} : vector<2x3x30522xi32>
    %30 = vector.broadcast %28 : vector<2x3x1xi32> to vector<2x3x30522xi32>
    %31 = arith.cmpi eq, %29, %30 : vector<2x3x30522xi32>
    %cst_4 = arith.constant -9.32625961 : f32
    %cst_5 = arith.constant -10.3262596 : f32
    %32 = vector.broadcast %cst_4 : f32 to vector<2x3x30522xf32>
    %33 = vector.broadcast %cst_5 : f32 to vector<2x3x30522xf32>
    %34 = arith.select %31, %32, %33 : vector<2x3x30522xi1>, vector<2x3x30522xf32>
    %35 = tpu.iota {dimensions = array<i32: 1>} : vector<2x2x1xi32>
    %c0_i32_6 = arith.constant 0 : i32
    %36 = vector.broadcast %c0_i32_6 : i32 to vector<2x2x1xi32>
    %37 = arith.cmpi eq, %35, %36 : vector<2x2x1xi32>
    %c102_i32 = arith.constant 102 : i32
    %c0_i32_7 = arith.constant 0 : i32
    %38 = vector.broadcast %c102_i32 : i32 to vector<2x2x1xi32>
    %39 = vector.broadcast %c0_i32_7 : i32 to vector<2x2x1xi32>
    %40 = arith.select %37, %38, %39 : vector<2x2x1xi1>, vector<2x2x1xi32>
    %41 = tpu.iota {dimensions = array<i32: 2>} : vector<2x2x30522xi32>
    %42 = vector.broadcast %40 : vector<2x2x1xi32> to vector<2x2x30522xi32>
    %43 = arith.cmpi eq, %41, %42 : vector<2x2x30522xi32>
    %cst_8 = arith.constant -9.32625961 : f32
    %cst_9 = arith.constant -10.3262596 : f32
    %44 = vector.broadcast %cst_8 : f32 to vector<2x2x30522xf32>
    %45 = vector.broadcast %cst_9 : f32 to vector<2x2x30522xf32>
    %46 = arith.select %43, %44, %45 : vector<2x2x30522xi1>, vector<2x2x30522xf32>
    %47 = tpu.concatenate %34, %11, %46 in 1 : vector<2x3x30522xf32>, vector<2x3x30522xf32>, vector<2x2x30522xf32> -> vector<2x8x30522xf32>
    %c0_10 = arith.constant 0 : index
    %c0_11 = arith.constant 0 : index
    %c0_12 = arith.constant 0 : index
    %48 = vector.load %arg2[%c0_10, %c0_11, %c0_12] : memref<2x8x30522xf32, #tpu.memory_space<vmem>>, vector<2x8x30522xf32>
    tpu.vector_store %arg2[%c0_10, %c0_11, %c0_12], %47 {strides = array<i32>} : memref<2x8x30522xf32, #tpu.memory_space<vmem>>, vector<2x8x30522xf32>,
    return
  }
  func.func @transform_0(%arg0: i32) -> (i32, i32, i32) {
    %c0_i32 = arith.constant 0 : i32
    %c0_i32_0 = arith.constant 0 : i32
    %c0_i32_1 = arith.constant 0 : i32
    return %arg0, %c0_i32, %c0_i32_0 : i32, i32, i32
  }
  func.func @transform_1(%arg0: i32) -> (i32, i32, i32) {
    %c0_i32 = arith.constant 0 : i32
    %c0_i32_0 = arith.constant 0 : i32
    %c0_i32_1 = arith.constant 0 : i32
    return %arg0, %c0_i32, %c0_i32_0 : i32, i32, i32
  }
}

</mosaic_0001>

<llo_original>
// kernel: tpu_custom_call.1
$region0: #{tpu_custom_call.1}
  #allocation0 [shape = 'u32[]', space=smem, size = 0x4, offset = 0x4, fixed_abs, tag = 'smem constant byte address 0x4 - core index']
  #allocation1 [shape = 'u32[144,128]{1,0:T(1,128)}', space=vmem, size = 0x12000, scoped, tag = 'internal scratch']
  %s0 = inlined_call_operand.vmem [shape: f32[4,3,30522], index: 0, kind: input, shape index: {}]
  %s1 = inlined_call_operand.hbm [shape: f32[4,8,30522], index: 1, kind: output, shape index: {}]
  %s2 = sld [smem:[#allocation0]]
  $region37: #{tpu_custom_call.1} parent=0
    _
  %s4 = ssub.s32 1, %s2
  %s5 = scalar_select 0, %s4, %s2
  $region1: #{tpu_custom_call.1} parent=0
    #allocation2 [shape = 'u8[3915776]{0}', space=vmem, size = 0x3bc000, scoped, tag = 'output window, operand 0']
    #allocation3 [shape = 's32[2]{0}', space=sflag, size = 0x8, scoped, tag = 'scoped memory for tpu_custom_call.1']
    %6 = vsyncpa [#allocation3], 0
    %s7 = scalar_lea.sflag [#allocation3], 1
    %8 = vsyncpa %s7, 0
    loop: start=0, step=1, limit=4
    $region2: #{tpu_custom_call.1} parent=1 // loop_pre_header
      _
    $region3: #{tpu_custom_call.1} parent=1 // loop_header
      %s10 = sphi 0, %s14
      %p11 = scmp.ge.s32.totalorder %s10, 4
      %s20 = sphi 0, %s22
      %s23 = sphi 0, %s20
      %s24 = sphi 0, %s23
      %s40 = sphi 0, %s24
      %s46 = sphi 0, %s48
      %s49 = sphi 0, %s46
      %s50 = sphi 0, %s49
      %s66 = sphi 0, %s50
    $region4: #{tpu_custom_call.1} parent=1 // loop_header_branch
      %13 = sbr.rel (%p11) target = $region8
    $region5: #{tpu_custom_call.1} parent=1 // loop_body
      %s15 = ssub.s32 %s10, 1
      %s16 = ssub.s32 %s10, 2
      %s17 = sadd.s32 %s10, 1
      %s18 = ssub.s32 %s10, %s17
      %p19 = scmp.eq.s32.totalorder %s18, 0
      %s21 = sadd.s32 %s20, 1
      %s22 = scalar_select %p19, %s20, %s21
      %p25 = pneg %p19
      %p26 = scmp.eq.s32.totalorder %s10, 1
      %p27 = por %p25, %p26
      %p28 = scmp.ne.s32.totalorder %s20, %s23
      %p29 = scmp.eq.s32.totalorder %s10, 0
      %p30 = por %p28, %p29
      %p31 = scmp.ne.s32.totalorder %s20, %s23
      %p32 = scmp.eq.s32.totalorder %s15, 1
      %p33 = por %p31, %p32
      %p34 = scmp.ne.s32.totalorder %s23, %s24
      %p35 = scmp.eq.s32.totalorder %s15, 0
      %p36 = por %p34, %p35
      %p37 = scmp.ne.s32.totalorder %s23, %s24
      %p38 = scmp.eq.s32.totalorder %s16, 1
      %p39 = por %p37, %p38
      %p41 = scmp.ne.s32.totalorder %s24, %s40
      %p42 = scmp.eq.s32.totalorder %s16, 0
      %p43 = por %p41, %p42
      %s44 = ssub.s32 %s10, %s17
      %p45 = scmp.eq.s32.totalorder %s44, 0
      %s47 = sadd.s32 %s46, 1
      %s48 = scalar_select %p45, %s46, %s47
      %p51 = pneg %p45
      %p52 = scmp.eq.s32.totalorder %s10, 1
      %p53 = por %p51, %p52
      %p54 = scmp.ne.s32.totalorder %s46, %s49
      %p55 = scmp.eq.s32.totalorder %s10, 0
      %p56 = por %p54, %p55
      %p57 = scmp.ne.s32.totalorder %s46, %s49
      %p58 = scmp.eq.s32.totalorder %s15, 1
      %p59 = por %p57, %p58
      %p60 = scmp.ne.s32.totalorder %s49, %s50
      %p61 = scmp.eq.s32.totalorder %s15, 0
      %p62 = por %p60, %p61
      %p63 = scmp.ne.s32.totalorder %s49, %s50
      %p64 = scmp.eq.s32.totalorder %s16, 1
      %p65 = por %p63, %p64
      %p67 = scmp.ne.s32.totalorder %s50, %s66
      %p68 = scmp.eq.s32.totalorder %s16, 0
      %p69 = por %p67, %p68
      %p70 = scmp.le.s32.totalorder 1, %s10
      %p71 = scmp.lt.s32.totalorder %s10, 3
      %p72 = pnand %p70, %p71
      %p73 = pneg %p72
      // Predicated region
      $region9: #{tpu_custom_call.1} parent=5 // pred_check
        _
      $region10: #{tpu_custom_call.1} parent=5 // pred_check_branch
        %75 = sbr.rel (%p72) target = $region12
      $region11: #{tpu_custom_call.1} parent=5 // pred_region
        %s76 = ssub.s32 %s10, 1
      $region12: #{tpu_custom_call.1} parent=5 // pred_fallthru
        _
      %p77 = scmp.lt.s32.totalorder %s10, 2
      // Predicated region
      $region13: #{tpu_custom_call.1} parent=5 // pred_check
        %p78 = pneg %p77
      $region14: #{tpu_custom_call.1} parent=5 // pred_check_branch
        %80 = sbr.rel (%p78) target = $region16
      $region15: #{tpu_custom_call.1} parent=5 // pred_region
        // Predicated region
        $region17: #{tpu_custom_call.1} parent=15 // pred_check
          %p81 = pneg %p30
        $region18: #{tpu_custom_call.1} parent=15 // pred_check_branch
          %83 = sbr.rel (%p81) target = $region20
        $region19: #{tpu_custom_call.1} parent=15 // pred_region
          %s84 = smul.u32 2, %s10
          %p85 = scmp.lt.s32.totalorder %s84, 3
          %s86 = scalar_select %p85, %s84, 3
          %s87 = smul.addr %s86, 239
          %s88 = smul.addr %s87, 4
          %s89 = scalar_lea.vmem %s0, %s88
          %s90 = smul.u32 2, %s10
        $region20: #{tpu_custom_call.1} parent=15 // pred_fallthru
          _
      $region16: #{tpu_custom_call.1} parent=5 // pred_fallthru
        _
      %p91 = scmp.le.s32.totalorder 1, %s10
      %p92 = scmp.lt.s32.totalorder %s10, 3
      %p93 = pnand %p91, %p92
      %p94 = pneg %p93
      // Predicated region
      $region21: #{tpu_custom_call.1} parent=5 // pred_check
        _
      $region22: #{tpu_custom_call.1} parent=5 // pred_check_branch
        %96 = sbr.rel (%p93) target = $region24
      $region23: #{tpu_custom_call.1} parent=5 // pred_region
        %s97 = ssub.s32 %s10, 1
        %s98 = smul.u32 2, %s15
        %p99 = scmp.lt.s32.totalorder %s98, 3
        %s100 = scalar_select %p99, %s98, 3
        %s101 = smul.addr %s100, 239
        %s102 = smul.addr %s101, 4
        %s103 = scalar_lea.vmem %s0, %s102
        %p104 = pneg %p36
        %p105 = pneg %p33
        %p106 = pneg %p62
        %p107 = pneg %p59
        %s108 = sand.u32 %s49, 1
        %s109 = scalar_lea.sflag [#allocation3], %s108
        %s110 = sand.u32 %s49, 1
        %s111 = smul.addr %s110, 3824
        %s112 = scalar_lea.vmem [#allocation2], %s111
        %s113 = smul.u32 2, %s15
        %p114 = scmp.lt.s32.totalorder %s113, 3
        %s115 = scalar_select %p114, %s113, 3
        %s116 = smul.addr %s115, 239
        %s117 = smul.addr %s116, 4
        %s118 = scalar_lea.vmem %s0, %s117
        %s119 = smul.u32 2, %s15
        %s120 = smul.u32 2, %s15
        %s121 = smul.u32 %s15, 2
        %v122 = vld [vmem:[%s118] sm:$0x77]
        %v123 = vld [vmem:[%s118 + $0x8] sm:$0x77]
        %v124 = vld [vmem:[%s118 + $0x10] sm:$0x77]
        %v125 = vld [vmem:[%s118 + $0x18] sm:$0x77]
        %v126 = vld [vmem:[%s118 + $0x20] sm:$0x77]
        %v127 = vld [vmem:[%s118 + $0x28] sm:$0x77]
        %v128 = vld [vmem:[%s118 + $0x30] sm:$0x77]
        %v129 = vld [vmem:[%s118 + $0x38] sm:$0x77]
        %v130 = vld [vmem:[%s118 + $0x40] sm:$0x77]
        %v131 = vld [vmem:[%s118 + $0x48] sm:$0x77]
        %v132 = vld [vmem:[%s118 + $0x50] sm:$0x77]
        %v133 = vld [vmem:[%s118 + $0x58] sm:$0x77]
        %v134 = vld [vmem:[%s118 + $0x60] sm:$0x77]
        %v135 = vld [vmem:[%s118 + $0x68] sm:$0x77]
        %v136 = vld [vmem:[%s118 + $0x70] sm:$0x77]
        %v137 = vld [vmem:[%s118 + $0x78] sm:$0x77]
        %v138 = vld [vmem:[%s118 + $0x80] sm:$0x77]
        %v139 = vld [vmem:[%s118 + $0x88] sm:$0x77]
        %v140 = vld [vmem:[%s118 + $0x90] sm:$0x77]
        %v141 = vld [vmem:[%s118 + $0x98] sm:$0x77]
        %v142 = vld [vmem:[%s118 + $0xa0] sm:$0x77]
        %v143 = vld [vmem:[%s118 + $0xa8] sm:$0x77]
        %v144 = vld [vmem:[%s118 + $0xb0] sm:$0x77]
        %v145 = vld [vmem:[%s118 + $0xb8] sm:$0x77]
        %v146 = vld [vmem:[%s118 + $0xc0] sm:$0x77]
        %v147 = vld [vmem:[%s118 + $0xc8] sm:$0x77]
        %v148 = vld [vmem:[%s118 + $0xd0] sm:$0x77]
        %v149 = vld [vmem:[%s118 + $0xd8] sm:$0x77]
        %v150 = vld [vmem:[%s118 + $0xe0] sm:$0x77]
        %v151 = vld [vmem:[%s118 + $0xe8] sm:$0x77]
        %v152 = vld [vmem:[%s118 + $0xf0] sm:$0x77]
        %v153 = vld [vmem:[%s118 + $0xf8] sm:$0x77]
        %v154 = vld [vmem:[%s118 + $0x100] sm:$0x77]
        %v155 = vld [vmem:[%s118 + $0x108] sm:$0x77]
        %v156 = vld [vmem:[%s118 + $0x110] sm:$0x77]
        %v157 = vld [vmem:[%s118 + $0x118] sm:$0x77]
        %v158 = vld [vmem:[%s118 + $0x120] sm:$0x77]
        %v159 = vld [vmem:[%s118 + $0x128] sm:$0x77]
        %v160 = vld [vmem:[%s118 + $0x130] sm:$0x77]
        %v161 = vld [vmem:[%s118 + $0x138] sm:$0x77]
        %v162 = vld [vmem:[%s118 + $0x140] sm:$0x77]
        %v163 = vld [vmem:[%s118 + $0x148] sm:$0x77]
        %v164 = vld [vmem:[%s118 + $0x150] sm:$0x77]
        %v165 = vld [vmem:[%s118 + $0x158] sm:$0x77]
        %v166 = vld [vmem:[%s118 + $0x160] sm:$0x77]
        %v167 = vld [vmem:[%s118 + $0x168] sm:$0x77]
        %v168 = vld [vmem:[%s118 + $0x170] sm:$0x77]
        %v169 = vld [vmem:[%s118 + $0x178] sm:$0x77]
        %v170 = vld [vmem:[%s118 + $0x180] sm:$0x77]
        %v171 = vld [vmem:[%s118 + $0x188] sm:$0x77]
        %v172 = vld [vmem:[%s118 + $0x190] sm:$0x77]
        %v173 = vld [vmem:[%s118 + $0x198] sm:$0x77]
        %v174 = vld [vmem:[%s118 + $0x1a0] sm:$0x77]
        %v175 = vld [vmem:[%s118 + $0x1a8] sm:$0x77]
        %v176 = vld [vmem:[%s118 + $0x1b0] sm:$0x77]
        %v177 = vld [vmem:[%s118 + $0x1b8] sm:$0x77]
        %v178 = vld [vmem:[%s118 + $0x1c0] sm:$0x77]
        %v179 = vld [vmem:[%s118 + $0x1c8] sm:$0x77]
        %v180 = vld [vmem:[%s118 + $0x1d0] sm:$0x77]
        %v181 = vld [vmem:[%s118 + $0x1d8] sm:$0x77]
        %v182 = vld [vmem:[%s118 + $0x1e0] sm:$0x77]
        %v183 = vld [vmem:[%s118 + $0x1e8] sm:$0x77]
        %v184 = vld [vmem:[%s118 + $0x1f0] sm:$0x77]
        %v185 = vld [vmem:[%s118 + $0x1f8] sm:$0x77]
        %v186 = vld [vmem:[%s118 + $0x200] sm:$0x77]
        %v187 = vld [vmem:[%s118 + $0x208] sm:$0x77]
        %v188 = vld [vmem:[%s118 + $0x210] sm:$0x77]
        %v189 = vld [vmem:[%s118 + $0x218] sm:$0x77]
        %v190 = vld [vmem:[%s118 + $0x220] sm:$0x77]
        %v191 = vld [vmem:[%s118 + $0x228] sm:$0x77]
        %v192 = vld [vmem:[%s118 + $0x230] sm:$0x77]
        %v193 = vld [vmem:[%s118 + $0x238] sm:$0x77]
        %v194 = vld [vmem:[%s118 + $0x240] sm:$0x77]
        %v195 = vld [vmem:[%s118 + $0x248] sm:$0x77]
        %v196 = vld [vmem:[%s118 + $0x250] sm:$0x77]
        %v197 = vld [vmem:[%s118 + $0x258] sm:$0x77]
        %v198 = vld [vmem:[%s118 + $0x260] sm:$0x77]
        %v199 = vld [vmem:[%s118 + $0x268] sm:$0x77]
        %v200 = vld [vmem:[%s118 + $0x270] sm:$0x77]
        %v201 = vld [vmem:[%s118 + $0x278] sm:$0x77]
        %v202 = vld [vmem:[%s118 + $0x280] sm:$0x77]
        %v203 = vld [vmem:[%s118 + $0x288] sm:$0x77]
        %v204 = vld [vmem:[%s118 + $0x290] sm:$0x77]
        %v205 = vld [vmem:[%s118 + $0x298] sm:$0x77]
        %v206 = vld [vmem:[%s118 + $0x2a0] sm:$0x77]
        %v207 = vld [vmem:[%s118 + $0x2a8] sm:$0x77]
        %v208 = vld [vmem:[%s118 + $0x2b0] sm:$0x77]
        %v209 = vld [vmem:[%s118 + $0x2b8] sm:$0x77]
        %v210 = vld [vmem:[%s118 + $0x2c0] sm:$0x77]
        %v211 = vld [vmem:[%s118 + $0x2c8] sm:$0x77]
        %v212 = vld [vmem:[%s118 + $0x2d0] sm:$0x77]
        %v213 = vld [vmem:[%s118 + $0x2d8] sm:$0x77]
        %v214 = vld [vmem:[%s118 + $0x2e0] sm:$0x77]
        %v215 = vld [vmem:[%s118 + $0x2e8] sm:$0x77]
        %v216 = vld [vmem:[%s118 + $0x2f0] sm:$0x77]
        %v217 = vld [vmem:[%s118 + $0x2f8] sm:$0x77]
        %v218 = vld [vmem:[%s118 + $0x300] sm:$0x77]
        %v219 = vld [vmem:[%s118 + $0x308] sm:$0x77]
        %v220 = vld [vmem:[%s118 + $0x310] sm:$0x77]
        %v221 = vld [vmem:[%s118 + $0x318] sm:$0x77]
        %v222 = vld [vmem:[%s118 + $0x320] sm:$0x77]
        %v223 = vld [vmem:[%s118 + $0x328] sm:$0x77]
        %v224 = vld [vmem:[%s118 + $0x330] sm:$0x77]
        %v225 = vld [vmem:[%s118 + $0x338] sm:$0x77]
        %v226 = vld [vmem:[%s118 + $0x340] sm:$0x77]
        %v227 = vld [vmem:[%s118 + $0x348] sm:$0x77]
        %v228 = vld [vmem:[%s118 + $0x350] sm:$0x77]
        %v229 = vld [vmem:[%s118 + $0x358] sm:$0x77]
        %v230 = vld [vmem:[%s118 + $0x360] sm:$0x77]
        %v231 = vld [vmem:[%s118 + $0x368] sm:$0x77]
        %v232 = vld [vmem:[%s118 + $0x370] sm:$0x77]
        %v233 = vld [vmem:[%s118 + $0x378] sm:$0x77]
        %v234 = vld [vmem:[%s118 + $0x380] sm:$0x77]
        %v235 = vld [vmem:[%s118 + $0x388] sm:$0x77]
        %v236 = vld [vmem:[%s118 + $0x390] sm:$0x77]
        %v237 = vld [vmem:[%s118 + $0x398] sm:$0x77]
        %v238 = vld [vmem:[%s118 + $0x3a0] sm:$0x77]
        %v239 = vld [vmem:[%s118 + $0x3a8] sm:$0x77]
        %v240 = vld [vmem:[%s118 + $0x3b0] sm:$0x77]
        %v241 = vld [vmem:[%s118 + $0x3b8] sm:$0x7]
        %v242 = vld [vmem:[%s118 + $0x3bc] sm:$0x77]
        %v243 = vld [vmem:[%s118 + $0x3c4] sm:$0x77]
        %v244 = vld [vmem:[%s118 + $0x3cc] sm:$0x77]
        %v245 = vld [vmem:[%s118 + $0x3d4] sm:$0x77]
        %v246 = vld [vmem:[%s118 + $0x3dc] sm:$0x77]
        %v247 = vld [vmem:[%s118 + $0x3e4] sm:$0x77]
        %v248 = vld [vmem:[%s118 + $0x3ec] sm:$0x77]
        %v249 = vld [vmem:[%s118 + $0x3f4] sm:$0x77]
        %v250 = vld [vmem:[%s118 + $0x3fc] sm:$0x77]
        %v251 = vld [vmem:[%s118 + $0x404] sm:$0x77]
        %v252 = vld [vmem:[%s118 + $0x40c] sm:$0x77]
        %v253 = vld [vmem:[%s118 + $0x414] sm:$0x77]
        %v254 = vld [vmem:[%s118 + $0x41c] sm:$0x77]
        %v255 = vld [vmem:[%s118 + $0x424] sm:$0x77]
        %v256 = vld [vmem:[%s118 + $0x42c] sm:$0x77]
        %v257 = vld [vmem:[%s118 + $0x434] sm:$0x77]
        %v258 = vld [vmem:[%s118 + $0x43c] sm:$0x77]
        %v259 = vld [vmem:[%s118 + $0x444] sm:$0x77]
        %v260 = vld [vmem:[%s118 + $0x44c] sm:$0x77]
        %v261 = vld [vmem:[%s118 + $0x454] sm:$0x77]
        %v262 = vld [vmem:[%s118 + $0x45c] sm:$0x77]
        %v263 = vld [vmem:[%s118 + $0x464] sm:$0x77]
        %v264 = vld [vmem:[%s118 + $0x46c] sm:$0x77]
        %v265 = vld [vmem:[%s118 + $0x474] sm:$0x77]
        %v266 = vld [vmem:[%s118 + $0x47c] sm:$0x77]
        %v267 = vld [vmem:[%s118 + $0x484] sm:$0x77]
        %v268 = vld [vmem:[%s118 + $0x48c] sm:$0x77]
        %v269 = vld [vmem:[%s118 + $0x494] sm:$0x77]
        %v270 = vld [vmem:[%s118 + $0x49c] sm:$0x77]
        %v271 = vld [vmem:[%s118 + $0x4a4] sm:$0x77]
        %v272 = vld [vmem:[%s118 + $0x4ac] sm:$0x77]
        %v273 = vld [vmem:[%s118 + $0x4b4] sm:$0x77]
        %v274 = vld [vmem:[%s118 + $0x4bc] sm:$0x77]
        %v275 = vld [vmem:[%s118 + $0x4c4] sm:$0x77]
        %v276 = vld [vmem:[%s118 + $0x4cc] sm:$0x77]
        %v277 = vld [vmem:[%s118 + $0x4d4] sm:$0x77]
        %v278 = vld [vmem:[%s118 + $0x4dc] sm:$0x77]
        %v279 = vld [vmem:[%s118 + $0x4e4] sm:$0x77]
        %v280 = vld [vmem:[%s118 + $0x4ec] sm:$0x77]
        %v281 = vld [vmem:[%s118 + $0x4f4] sm:$0x77]
        %v282 = vld [vmem:[%s118 + $0x4fc] sm:$0x77]
        %v283 = vld [vmem:[%s118 + $0x504] sm:$0x77]
        %v284 = vld [vmem:[%s118 + $0x50c] sm:$0x77]
        %v285 = vld [vmem:[%s118 + $0x514] sm:$0x77]
        %v286 = vld [vmem:[%s118 + $0x51c] sm:$0x77]
        %v287 = vld [vmem:[%s118 + $0x524] sm:$0x77]
        %v288 = vld [vmem:[%s118 + $0x52c] sm:$0x77]
        %v289 = vld [vmem:[%s118 + $0x534] sm:$0x77]
        %v290 = vld [vmem:[%s118 + $0x53c] sm:$0x77]
        %v291 = vld [vmem:[%s118 + $0x544] sm:$0x77]
        %v292 = vld [vmem:[%s118 + $0x54c] sm:$0x77]
        %v293 = vld [vmem:[%s118 + $0x554] sm:$0x77]
        %v294 = vld [vmem:[%s118 + $0x55c] sm:$0x77]
        %v295 = vld [vmem:[%s118 + $0x564] sm:$0x77]
        %v296 = vld [vmem:[%s118 + $0x56c] sm:$0x77]
        %v297 = vld [vmem:[%s118 + $0x574] sm:$0x77]
        %v298 = vld [vmem:[%s118 + $0x57c] sm:$0x77]
        %v299 = vld [vmem:[%s118 + $0x584] sm:$0x77]
        %v300 = vld [vmem:[%s118 + $0x58c] sm:$0x77]
        %v301 = vld [vmem:[%s118 + $0x594] sm:$0x77]
        %v302 = vld [vmem:[%s118 + $0x59c] sm:$0x77]
        %v303 = vld [vmem:[%s118 + $0x5a4] sm:$0x77]
        %v304 = vld [vmem:[%s118 + $0x5ac] sm:$0x77]
        %v305 = vld [vmem:[%s118 + $0x5b4] sm:$0x77]
        %v306 = vld [vmem:[%s118 + $0x5bc] sm:$0x77]
        %v307 = vld [vmem:[%s118 + $0x5c4] sm:$0x77]
        %v308 = vld [vmem:[%s118 + $0x5cc] sm:$0x77]
        %v309 = vld [vmem:[%s118 + $0x5d4] sm:$0x77]
        %v310 = vld [vmem:[%s118 + $0x5dc] sm:$0x77]
        %v311 = vld [vmem:[%s118 + $0x5e4] sm:$0x77]
        %v312 = vld [vmem:[%s118 + $0x5ec] sm:$0x77]
        %v313 = vld [vmem:[%s118 + $0x5f4] sm:$0x77]
        %v314 = vld [vmem:[%s118 + $0x5fc] sm:$0x77]
        %v315 = vld [vmem:[%s118 + $0x604] sm:$0x77]
        %v316 = vld [vmem:[%s118 + $0x60c] sm:$0x77]
        %v317 = vld [vmem:[%s118 + $0x614] sm:$0x77]
        %v318 = vld [vmem:[%s118 + $0x61c] sm:$0x77]
        %v319 = vld [vmem:[%s118 + $0x624] sm:$0x77]
        %v320 = vld [vmem:[%s118 + $0x62c] sm:$0x77]
        %v321 = vld [vmem:[%s118 + $0x634] sm:$0x77]
        %v322 = vld [vmem:[%s118 + $0x63c] sm:$0x77]
        %v323 = vld [vmem:[%s118 + $0x644] sm:$0x77]
        %v324 = vld [vmem:[%s118 + $0x64c] sm:$0x77]
        %v325 = vld [vmem:[%s118 + $0x654] sm:$0x77]
        %v326 = vld [vmem:[%s118 + $0x65c] sm:$0x77]
        %v327 = vld [vmem:[%s118 + $0x664] sm:$0x77]
        %v328 = vld [vmem:[%s118 + $0x66c] sm:$0x77]
        %v329 = vld [vmem:[%s118 + $0x674] sm:$0x77]
        %v330 = vld [vmem:[%s118 + $0x67c] sm:$0x77]
        %v331 = vld [vmem:[%s118 + $0x684] sm:$0x77]
        %v332 = vld [vmem:[%s118 + $0x68c] sm:$0x77]
        %v333 = vld [vmem:[%s118 + $0x694] sm:$0x77]
        %v334 = vld [vmem:[%s118 + $0x69c] sm:$0x77]
        %v335 = vld [vmem:[%s118 + $0x6a4] sm:$0x77]
        %v336 = vld [vmem:[%s118 + $0x6ac] sm:$0x77]
        %v337 = vld [vmem:[%s118 + $0x6b4] sm:$0x77]
        %v338 = vld [vmem:[%s118 + $0x6bc] sm:$0x77]
        %v339 = vld [vmem:[%s118 + $0x6c4] sm:$0x77]
        %v340 = vld [vmem:[%s118 + $0x6cc] sm:$0x77]
        %v341 = vld [vmem:[%s118 + $0x6d4] sm:$0x77]
        %v342 = vld [vmem:[%s118 + $0x6dc] sm:$0x77]
        %v343 = vld [vmem:[%s118 + $0x6e4] sm:$0x77]
        %v344 = vld [vmem:[%s118 + $0x6ec] sm:$0x77]
        %v345 = vld [vmem:[%s118 + $0x6f4] sm:$0x77]
        %v346 = vld [vmem:[%s118 + $0x6fc] sm:$0x77]
        %v347 = vld [vmem:[%s118 + $0x704] sm:$0x77]
        %v348 = vld [vmem:[%s118 + $0x70c] sm:$0x77]
        %v349 = vld [vmem:[%s118 + $0x714] sm:$0x77]
        %v350 = vld [vmem:[%s118 + $0x71c] sm:$0x77]
        %v351 = vld [vmem:[%s118 + $0x724] sm:$0x77]
        %v352 = vld [vmem:[%s118 + $0x72c] sm:$0x77]
        %v353 = vld [vmem:[%s118 + $0x734] sm:$0x77]
        %v354 = vld [vmem:[%s118 + $0x73c] sm:$0x77]
        %v355 = vld [vmem:[%s118 + $0x744] sm:$0x77]
        %v356 = vld [vmem:[%s118 + $0x74c] sm:$0x77]
        %v357 = vld [vmem:[%s118 + $0x754] sm:$0x77]
        %v358 = vld [vmem:[%s118 + $0x75c] sm:$0x77]
        %v359 = vld [vmem:[%s118 + $0x764] sm:$0x77]
        %v360 = vld [vmem:[%s118 + $0x76c] sm:$0x77]
        %v361 = vld [vmem:[%s118 + $0x774] sm:$0x7]
        %v600 = vcombine.high %v122, %v122
        %v601 = vcombine.high %v123, %v123
        %v602 = vcombine.high %v124, %v124
        %v603 = vcombine.high %v125, %v125
        %v604 = vcombine.high %v126, %v126
        %v605 = vcombine.high %v127, %v127
        %v606 = vcombine.high %v128, %v128
        %v607 = vcombine.high %v129, %v129
        %v608 = vcombine.high %v130, %v130
        %v609 = vcombine.high %v131, %v131
        %v610 = vcombine.high %v132, %v132
        %v611 = vcombine.high %v133, %v133
        %v612 = vcombine.high %v134, %v134
        %v613 = vcombine.high %v135, %v135
        %v614 = vcombine.high %v136, %v136
        %v615 = vcombine.high %v137, %v137
        %v616 = vcombine.high %v138, %v138
        %v617 = vcombine.high %v139, %v139
        %v618 = vcombine.high %v140, %v140
        %v619 = vcombine.high %v141, %v141
        %v620 = vcombine.high %v142, %v142
        %v621 = vcombine.high %v143, %v143
        %v622 = vcombine.high %v144, %v144
        %v623 = vcombine.high %v145, %v145
        %v624 = vcombine.high %v146, %v146
        %v625 = vcombine.high %v147, %v147
        %v626 = vcombine.high %v148, %v148
        %v627 = vcombine.high %v149, %v149
        %v628 = vcombine.high %v150, %v150
        %v629 = vcombine.high %v151, %v151
        %v630 = vcombine.high %v152, %v152
        %v631 = vcombine.high %v153, %v153
        %v632 = vcombine.high %v154, %v154
        %v633 = vcombine.high %v155, %v155
        %v634 = vcombine.high %v156, %v156
        %v635 = vcombine.high %v157, %v157
        %v636 = vcombine.high %v158, %v158
        %v637 = vcombine.high %v159, %v159
        %v638 = vcombine.high %v160, %v160
        %v639 = vcombine.high %v161, %v161
        %v640 = vcombine.high %v162, %v162
        %v641 = vcombine.high %v163, %v163
        %v642 = vcombine.high %v164, %v164
        %v643 = vcombine.high %v165, %v165
        %v644 = vcombine.high %v166, %v166
        %v645 = vcombine.high %v167, %v167
        %v646 = vcombine.high %v168, %v168
        %v647 = vcombine.high %v169, %v169
        %v648 = vcombine.high %v170, %v170
        %v649 = vcombine.high %v171, %v171
        %v650 = vcombine.high %v172, %v172
        %v651 = vcombine.high %v173, %v173
        %v652 = vcombine.high %v174, %v174
        %v653 = vcombine.high %v175, %v175
        %v654 = vcombine.high %v176, %v176
        %v655 = vcombine.high %v177, %v177
        %v656 = vcombine.high %v178, %v178
        %v657 = vcombine.high %v179, %v179
        %v658 = vcombine.high %v180, %v180
        %v659 = vcombine.high %v181, %v181
        %v660 = vcombine.high %v182, %v182
        %v661 = vcombine.high %v183, %v183
        %v662 = vcombine.high %v184, %v184
        %v663 = vcombine.high %v185, %v185
        %v664 = vcombine.high %v186, %v186
        %v665 = vcombine.high %v187, %v187
        %v666 = vcombine.high %v188, %v188
        %v667 = vcombine.high %v189, %v189
        %v668 = vcombine.high %v190, %v190
        %v669 = vcombine.high %v191, %v191
        %v670 = vcombine.high %v192, %v192
        %v671 = vcombine.high %v193, %v193
        %v672 = vcombine.high %v194, %v194
        %v673 = vcombine.high %v195, %v195
        %v674 = vcombine.high %v196, %v196
        %v675 = vcombine.high %v197, %v197
        %v676 = vcombine.high %v198, %v198
        %v677 = vcombine.high %v199, %v199
        %v678 = vcombine.high %v200, %v200
        %v679 = vcombine.high %v201, %v201
        %v680 = vcombine.high %v202, %v202
        %v681 = vcombine.high %v203, %v203
        %v682 = vcombine.high %v204, %v204
        %v683 = vcombine.high %v205, %v205
        %v684 = vcombine.high %v206, %v206
        %v685 = vcombine.high %v207, %v207
        %v686 = vcombine.high %v208, %v208
        %v687 = vcombine.high %v209, %v209
        %v688 = vcombine.high %v210, %v210
        %v689 = vcombine.high %v211, %v211
        %v690 = vcombine.high %v212, %v212
        %v691 = vcombine.high %v213, %v213
        %v692 = vcombine.high %v214, %v214
        %v693 = vcombine.high %v215, %v215
        %v694 = vcombine.high %v216, %v216
        %v695 = vcombine.high %v217, %v217
        %v696 = vcombine.high %v218, %v218
        %v697 = vcombine.high %v219, %v219
        %v698 = vcombine.high %v220, %v220
        %v699 = vcombine.high %v221, %v221
        %v700 = vcombine.high %v222, %v222
        %v701 = vcombine.high %v223, %v223
        %v702 = vcombine.high %v224, %v224
        %v703 = vcombine.high %v225, %v225
        %v704 = vcombine.high %v226, %v226
        %v705 = vcombine.high %v227, %v227
        %v706 = vcombine.high %v228, %v228
        %v707 = vcombine.high %v229, %v229
        %v708 = vcombine.high %v230, %v230
        %v709 = vcombine.high %v231, %v231
        %v710 = vcombine.high %v232, %v232
        %v711 = vcombine.high %v233, %v233
        %v712 = vcombine.high %v234, %v234
        %v713 = vcombine.high %v235, %v235
        %v714 = vcombine.high %v236, %v236
        %v715 = vcombine.high %v237, %v237
        %v716 = vcombine.high %v238, %v238
        %v717 = vcombine.high %v239, %v239
        %v718 = vcombine.high %v240, %v240
        %v719 = vcombine.high %v242, %v242
        %v720 = vcombine.high %v243, %v243
        %v721 = vcombine.high %v244, %v244
        %v722 = vcombine.high %v245, %v245
        %v723 = vcombine.high %v246, %v246
        %v724 = vcombine.high %v247, %v247
        %v725 = vcombine.high %v248, %v248
        %v726 = vcombine.high %v249, %v249
        %v727 = vcombine.high %v250, %v250
        %v728 = vcombine.high %v251, %v251
        %v729 = vcombine.high %v252, %v252
        %v730 = vcombine.high %v253, %v253
        %v731 = vcombine.high %v254, %v254
        %v732 = vcombine.high %v255, %v255
        %v733 = vcombine.high %v256, %v256
        %v734 = vcombine.high %v257, %v257
        %v735 = vcombine.high %v258, %v258
        %v736 = vcombine.high %v259, %v259
        %v737 = vcombine.high %v260, %v260
        %v738 = vcombine.high %v261, %v261
        %v739 = vcombine.high %v262, %v262
        %v740 = vcombine.high %v263, %v263
        %v741 = vcombine.high %v264, %v264
        %v742 = vcombine.high %v265, %v265
        %v743 = vcombine.high %v266, %v266
        %v744 = vcombine.high %v267, %v267
        %v745 = vcombine.high %v268, %v268
        %v746 = vcombine.high %v269, %v269
        %v747 = vcombine.high %v270, %v270
        %v748 = vcombine.high %v271, %v271
        %v749 = vcombine.high %v272, %v272
        %v750 = vcombine.high %v273, %v273
        %v751 = vcombine.high %v274, %v274
        %v752 = vcombine.high %v275, %v275
        %v753 = vcombine.high %v276, %v276
        %v754 = vcombine.high %v277, %v277
        %v755 = vcombine.high %v278, %v278
        %v756 = vcombine.high %v279, %v279
        %v757 = vcombine.high %v280, %v280
        %v758 = vcombine.high %v281, %v281
        %v759 = vcombine.high %v282, %v282
        %v760 = vcombine.high %v283, %v283
        %v761 = vcombine.high %v284, %v284
        %v762 = vcombine.high %v285, %v285
        %v763 = vcombine.high %v286, %v286
        %v764 = vcombine.high %v287, %v287
        %v765 = vcombine.high %v288, %v288
        %v766 = vcombine.high %v289, %v289
        %v767 = vcombine.high %v290, %v290
        %v768 = vcombine.high %v291, %v291
        %v769 = vcombine.high %v292, %v292
        %v770 = vcombine.high %v293, %v293
        %v771 = vcombine.high %v294, %v294
        %v772 = vcombine.high %v295, %v295
        %v773 = vcombine.high %v296, %v296
        %v774 = vcombine.high %v297, %v297
        %v775 = vcombine.high %v298, %v298
        %v776 = vcombine.high %v299, %v299
        %v777 = vcombine.high %v300, %v300
        %v778 = vcombine.high %v301, %v301
        %v779 = vcombine.high %v302, %v302
        %v780 = vcombine.high %v303, %v303
        %v781 = vcombine.high %v304, %v304
        %v782 = vcombine.high %v305, %v305
        %v783 = vcombine.high %v306, %v306
        %v784 = vcombine.high %v307, %v307
        %v785 = vcombine.high %v308, %v308
        %v786 = vcombine.high %v309, %v309
        %v787 = vcombine.high %v310, %v310
        %v788 = vcombine.high %v311, %v311
        %v789 = vcombine.high %v312, %v312
        %v790 = vcombine.high %v313, %v313
        %v791 = vcombine.high %v314, %v314
        %v792 = vcombine.high %v315, %v315
        %v793 = vcombine.high %v316, %v316
        %v794 = vcombine.high %v317, %v317
        %v795 = vcombine.high %v318, %v318
        %v796 = vcombine.high %v319, %v319
        %v797 = vcombine.high %v320, %v320
        %v798 = vcombine.high %v321, %v321
        %v799 = vcombine.high %v322, %v322
        %v800 = vcombine.high %v323, %v323
        %v801 = vcombine.high %v324, %v324
        %v802 = vcombine.high %v325, %v325
        %v803 = vcombine.high %v326, %v326
        %v804 = vcombine.high %v327, %v327
        %v805 = vcombine.high %v328, %v328
        %v806 = vcombine.high %v329, %v329
        %v807 = vcombine.high %v330, %v330
        %v808 = vcombine.high %v331, %v331
        %v809 = vcombine.high %v332, %v332
        %v810 = vcombine.high %v333, %v333
        %v811 = vcombine.high %v334, %v334
        %v812 = vcombine.high %v335, %v335
        %v813 = vcombine.high %v336, %v336
        %v814 = vcombine.high %v337, %v337
        %v815 = vcombine.high %v338, %v338
        %v816 = vcombine.high %v339, %v339
        %v817 = vcombine.high %v340, %v340
        %v818 = vcombine.high %v341, %v341
        %v819 = vcombine.high %v342, %v342
        %v820 = vcombine.high %v343, %v343
        %v821 = vcombine.high %v344, %v344
        %v822 = vcombine.high %v345, %v345
        %v823 = vcombine.high %v346, %v346
        %v824 = vcombine.high %v347, %v347
        %v825 = vcombine.high %v348, %v348
        %v826 = vcombine.high %v349, %v349
        %v827 = vcombine.high %v350, %v350
        %v828 = vcombine.high %v351, %v351
        %v829 = vcombine.high %v352, %v352
        %v830 = vcombine.high %v353, %v353
        %v831 = vcombine.high %v354, %v354
        %v832 = vcombine.high %v355, %v355
        %v833 = vcombine.high %v356, %v356
        %v834 = vcombine.high %v357, %v357
        %v835 = vcombine.high %v358, %v358
        %v836 = vcombine.high %v359, %v359
        %v837 = vcombine.high %v360, %v360
        %vm1076 = vcmask 1042432
        %v1077 = vsel %vm1076, %v122, -inf
        %v1078 = vsel %vm1076, %v600, -inf
        %v1079 = vsel %vm1076, %v123, -inf
        %v1080 = vmax.f32 %v1077, %v1079
        %v1081 = vsel %vm1076, %v601, -inf
        %v1082 = vmax.f32 %v1078, %v1081
        %v1083 = vsel %vm1076, %v124, -inf
        %v1084 = vmax.f32 %v1080, %v1083
        %v1085 = vsel %vm1076, %v602, -inf
        %v1086 = vmax.f32 %v1082, %v1085
        %v1087 = vsel %vm1076, %v125, -inf
        %v1088 = vmax.f32 %v1084, %v1087
        %v1089 = vsel %vm1076, %v603, -inf
        %v1090 = vmax.f32 %v1086, %v1089
        %v1091 = vsel %vm1076, %v126, -inf
        %v1092 = vmax.f32 %v1088, %v1091
        %v1093 = vsel %vm1076, %v604, -inf
        %v1094 = vmax.f32 %v1090, %v1093
        %v1095 = vsel %vm1076, %v127, -inf
        %v1096 = vmax.f32 %v1092, %v1095
        %v1097 = vsel %vm1076, %v605, -inf
        %v1098 = vmax.f32 %v1094, %v1097
        %v1099 = vsel %vm1076, %v128, -inf
        %v1100 = vmax.f32 %v1096, %v1099
        %v1101 = vsel %vm1076, %v606, -inf
        %v1102 = vmax.f32 %v1098, %v1101
        %v1103 = vsel %vm1076, %v129, -inf
        %v1104 = vmax.f32 %v1100, %v1103
        %v1105 = vsel %vm1076, %v607, -inf
        %v1106 = vmax.f32 %v1102, %v1105
        %v1107 = vsel %vm1076, %v130, -inf
        %v1108 = vmax.f32 %v1104, %v1107
        %v1109 = vsel %vm1076, %v608, -inf
        %v1110 = vmax.f32 %v1106, %v1109
        %v1111 = vsel %vm1076, %v131, -inf
        %v1112 = vmax.f32 %v1108, %v1111
        %v1113 = vsel %vm1076, %v609, -inf
        %v1114 = vmax.f32 %v1110, %v1113
        %v1115 = vsel %vm1076, %v132, -inf
        %v1116 = vmax.f32 %v1112, %v1115
        %v1117 = vsel %vm1076, %v610, -inf
        %v1118 = vmax.f32 %v1114, %v1117
        %v1119 = vsel %vm1076, %v133, -inf
        %v1120 = vmax.f32 %v1116, %v1119
        %v1121 = vsel %vm1076, %v611, -inf
        %v1122 = vmax.f32 %v1118, %v1121
        %v1123 = vsel %vm1076, %v134, -inf
        %v1124 = vmax.f32 %v1120, %v1123
        %v1125 = vsel %vm1076, %v612, -inf
        %v1126 = vmax.f32 %v1122, %v1125
        %v1127 = vsel %vm1076, %v135, -inf
        %v1128 = vmax.f32 %v1124, %v1127
        %v1129 = vsel %vm1076, %v613, -inf
        %v1130 = vmax.f32 %v1126, %v1129
        %v1131 = vsel %vm1076, %v136, -inf
        %v1132 = vmax.f32 %v1128, %v1131
        %v1133 = vsel %vm1076, %v614, -inf
        %v1134 = vmax.f32 %v1130, %v1133
        %v1135 = vsel %vm1076, %v137, -inf
        %v1136 = vmax.f32 %v1132, %v1135
        %v1137 = vsel %vm1076, %v615, -inf
        %v1138 = vmax.f32 %v1134, %v1137
        %v1139 = vsel %vm1076, %v138, -inf
        %v1140 = vmax.f32 %v1136, %v1139
        %v1141 = vsel %vm1076, %v616, -inf
        %v1142 = vmax.f32 %v1138, %v1141
        %v1143 = vsel %vm1076, %v139, -inf
        %v1144 = vmax.f32 %v1140, %v1143
        %v1145 = vsel %vm1076, %v617, -inf
        %v1146 = vmax.f32 %v1142, %v1145
        %v1147 = vsel %vm1076, %v140, -inf
        %v1148 = vmax.f32 %v1144, %v1147
        %v1149 = vsel %vm1076, %v618, -inf
        %v1150 = vmax.f32 %v1146, %v1149
        %v1151 = vsel %vm1076, %v141, -inf
        %v1152 = vmax.f32 %v1148, %v1151
        %v1153 = vsel %vm1076, %v619, -inf
        %v1154 = vmax.f32 %v1150, %v1153
        %v1155 = vsel %vm1076, %v142, -inf
        %v1156 = vmax.f32 %v1152, %v1155
        %v1157 = vsel %vm1076, %v620, -inf
        %v1158 = vmax.f32 %v1154, %v1157
        %v1159 = vsel %vm1076, %v143, -inf
        %v1160 = vmax.f32 %v1156, %v1159
        %v1161 = vsel %vm1076, %v621, -inf
        %v1162 = vmax.f32 %v1158, %v1161
        %v1163 = vsel %vm1076, %v144, -inf
        %v1164 = vmax.f32 %v1160, %v1163
        %v1165 = vsel %vm1076, %v622, -inf
        %v1166 = vmax.f32 %v1162, %v1165
        %v1167 = vsel %vm1076, %v145, -inf
        %v1168 = vmax.f32 %v1164, %v1167
        %v1169 = vsel %vm1076, %v623, -inf
        %v1170 = vmax.f32 %v1166, %v1169
        %v1171 = vsel %vm1076, %v146, -inf
        %v1172 = vmax.f32 %v1168, %v1171
        %v1173 = vsel %vm1076, %v624, -inf
        %v1174 = vmax.f32 %v1170, %v1173
        %v1175 = vsel %vm1076, %v147, -inf
        %v1176 = vmax.f32 %v1172, %v1175
        %v1177 = vsel %vm1076, %v625, -inf
        %v1178 = vmax.f32 %v1174, %v1177
        %v1179 = vsel %vm1076, %v148, -inf
        %v1180 = vmax.f32 %v1176, %v1179
        %v1181 = vsel %vm1076, %v626, -inf
        %v1182 = vmax.f32 %v1178, %v1181
        %v1183 = vsel %vm1076, %v149, -inf
        %v1184 = vmax.f32 %v1180, %v1183
        %v1185 = vsel %vm1076, %v627, -inf
        %v1186 = vmax.f32 %v1182, %v1185
        %v1187 = vsel %vm1076, %v150, -inf
        %v1188 = vmax.f32 %v1184, %v1187
        %v1189 = vsel %vm1076, %v628, -inf
        %v1190 = vmax.f32 %v1186, %v1189
        %v1191 = vsel %vm1076, %v151, -inf
        %v1192 = vmax.f32 %v1188, %v1191
        %v1193 = vsel %vm1076, %v629, -inf
        %v1194 = vmax.f32 %v1190, %v1193
        %v1195 = vsel %vm1076, %v152, -inf
        %v1196 = vmax.f32 %v1192, %v1195
        %v1197 = vsel %vm1076, %v630, -inf
        %v1198 = vmax.f32 %v1194, %v1197
        %v1199 = vsel %vm1076, %v153, -inf
        %v1200 = vmax.f32 %v1196, %v1199
        %v1201 = vsel %vm1076, %v631, -inf
        %v1202 = vmax.f32 %v1198, %v1201
        %v1203 = vsel %vm1076, %v154, -inf
        %v1204 = vmax.f32 %v1200, %v1203
        %v1205 = vsel %vm1076, %v632, -inf
        %v1206 = vmax.f32 %v1202, %v1205
        %v1207 = vsel %vm1076, %v155, -inf
        %v1208 = vmax.f32 %v1204, %v1207
        %v1209 = vsel %vm1076, %v633, -inf
        %v1210 = vmax.f32 %v1206, %v1209
        %v1211 = vsel %vm1076, %v156, -inf
        %v1212 = vmax.f32 %v1208, %v1211
        %v1213 = vsel %vm1076, %v634, -inf
        %v1214 = vmax.f32 %v1210, %v1213
        %v1215 = vsel %vm1076, %v157, -inf
        %v1216 = vmax.f32 %v1212, %v1215
        %v1217 = vsel %vm1076, %v635, -inf
        %v1218 = vmax.f32 %v1214, %v1217
        %v1219 = vsel %vm1076, %v158, -inf
        %v1220 = vmax.f32 %v1216, %v1219
        %v1221 = vsel %vm1076, %v636, -inf
        %v1222 = vmax.f32 %v1218, %v1221
        %v1223 = vsel %vm1076, %v159, -inf
        %v1224 = vmax.f32 %v1220, %v1223
        %v1225 = vsel %vm1076, %v637, -inf
        %v1226 = vmax.f32 %v1222, %v1225
        %v1227 = vsel %vm1076, %v160, -inf
        %v1228 = vmax.f32 %v1224, %v1227
        %v1229 = vsel %vm1076, %v638, -inf
        %v1230 = vmax.f32 %v1226, %v1229
        %v1231 = vsel %vm1076, %v161, -inf
        %v1232 = vmax.f32 %v1228, %v1231
        %v1233 = vsel %vm1076, %v639, -inf
        %v1234 = vmax.f32 %v1230, %v1233
        %v1235 = vsel %vm1076, %v162, -inf
        %v1236 = vmax.f32 %v1232, %v1235
        %v1237 = vsel %vm1076, %v640, -inf
        %v1238 = vmax.f32 %v1234, %v1237
        %v1239 = vsel %vm1076, %v163, -inf
        %v1240 = vmax.f32 %v1236, %v1239
        %v1241 = vsel %vm1076, %v641, -inf
        %v1242 = vmax.f32 %v1238, %v1241
        %v1243 = vsel %vm1076, %v164, -inf
        %v1244 = vmax.f32 %v1240, %v1243
        %v1245 = vsel %vm1076, %v642, -inf
        %v1246 = vmax.f32 %v1242, %v1245
        %v1247 = vsel %vm1076, %v165, -inf
        %v1248 = vmax.f32 %v1244, %v1247
        %v1249 = vsel %vm1076, %v643, -inf
        %v1250 = vmax.f32 %v1246, %v1249
        %v1251 = vsel %vm1076, %v166, -inf
        %v1252 = vmax.f32 %v1248, %v1251
        %v1253 = vsel %vm1076, %v644, -inf
        %v1254 = vmax.f32 %v1250, %v1253
        %v1255 = vsel %vm1076, %v167, -inf
        %v1256 = vmax.f32 %v1252, %v1255
        %v1257 = vsel %vm1076, %v645, -inf
        %v1258 = vmax.f32 %v1254, %v1257
        %v1259 = vsel %vm1076, %v168, -inf
        %v1260 = vmax.f32 %v1256, %v1259
        %v1261 = vsel %vm1076, %v646, -inf
        %v1262 = vmax.f32 %v1258, %v1261
        %v1263 = vsel %vm1076, %v169, -inf
        %v1264 = vmax.f32 %v1260, %v1263
        %v1265 = vsel %vm1076, %v647, -inf
        %v1266 = vmax.f32 %v1262, %v1265
        %v1267 = vsel %vm1076, %v170, -inf
        %v1268 = vmax.f32 %v1264, %v1267
        %v1269 = vsel %vm1076, %v648, -inf
        %v1270 = vmax.f32 %v1266, %v1269
        %v1271 = vsel %vm1076, %v171, -inf
        %v1272 = vmax.f32 %v1268, %v1271
        %v1273 = vsel %vm1076, %v649, -inf
        %v1274 = vmax.f32 %v1270, %v1273
        %v1275 = vsel %vm1076, %v172, -inf
        %v1276 = vmax.f32 %v1272, %v1275
        %v1277 = vsel %vm1076, %v650, -inf
        %v1278 = vmax.f32 %v1274, %v1277
        %v1279 = vsel %vm1076, %v173, -inf
        %v1280 = vmax.f32 %v1276, %v1279
        %v1281 = vsel %vm1076, %v651, -inf
        %v1282 = vmax.f32 %v1278, %v1281
        %v1283 = vsel %vm1076, %v174, -inf
        %v1284 = vmax.f32 %v1280, %v1283
        %v1285 = vsel %vm1076, %v652, -inf
        %v1286 = vmax.f32 %v1282, %v1285
        %v1287 = vsel %vm1076, %v175, -inf
        %v1288 = vmax.f32 %v1284, %v1287
        %v1289 = vsel %vm1076, %v653, -inf
        %v1290 = vmax.f32 %v1286, %v1289
        %v1291 = vsel %vm1076, %v176, -inf
        %v1292 = vmax.f32 %v1288, %v1291
        %v1293 = vsel %vm1076, %v654, -inf
        %v1294 = vmax.f32 %v1290, %v1293
        %v1295 = vsel %vm1076, %v177, -inf
        %v1296 = vmax.f32 %v1292, %v1295
        %v1297 = vsel %vm1076, %v655, -inf
        %v1298 = vmax.f32 %v1294, %v1297
        %v1299 = vsel %vm1076, %v178, -inf
        %v1300 = vmax.f32 %v1296, %v1299
        %v1301 = vsel %vm1076, %v656, -inf
        %v1302 = vmax.f32 %v1298, %v1301
        %v1303 = vsel %vm1076, %v179, -inf
        %v1304 = vmax.f32 %v1300, %v1303
        %v1305 = vsel %vm1076, %v657, -inf
        %v1306 = vmax.f32 %v1302, %v1305
        %v1307 = vsel %vm1076, %v180, -inf
        %v1308 = vmax.f32 %v1304, %v1307
        %v1309 = vsel %vm1076, %v658, -inf
        %v1310 = vmax.f32 %v1306, %v1309
        %v1311 = vsel %vm1076, %v181, -inf
        %v1312 = vmax.f32 %v1308, %v1311
        %v1313 = vsel %vm1076, %v659, -inf
        %v1314 = vmax.f32 %v1310, %v1313
        %v1315 = vsel %vm1076, %v182, -inf
        %v1316 = vmax.f32 %v1312, %v1315
        %v1317 = vsel %vm1076, %v660, -inf
        %v1318 = vmax.f32 %v1314, %v1317
        %v1319 = vsel %vm1076, %v183, -inf
        %v1320 = vmax.f32 %v1316, %v1319
        %v1321 = vsel %vm1076, %v661, -inf
        %v1322 = vmax.f32 %v1318, %v1321
        %v1323 = vsel %vm1076, %v184, -inf
        %v1324 = vmax.f32 %v1320, %v1323
        %v1325 = vsel %vm1076, %v662, -inf
        %v1326 = vmax.f32 %v1322, %v1325
        %v1327 = vsel %vm1076, %v185, -inf
        %v1328 = vmax.f32 %v1324, %v1327
        %v1329 = vsel %vm1076, %v663, -inf
        %v1330 = vmax.f32 %v1326, %v1329
        %v1331 = vsel %vm1076, %v186, -inf
        %v1332 = vmax.f32 %v1328, %v1331
        %v1333 = vsel %vm1076, %v664, -inf
        %v1334 = vmax.f32 %v1330, %v1333
        %v1335 = vsel %vm1076, %v187, -inf
        %v1336 = vmax.f32 %v1332, %v1335
        %v1337 = vsel %vm1076, %v665, -inf
        %v1338 = vmax.f32 %v1334, %v1337
        %v1339 = vsel %vm1076, %v188, -inf
        %v1340 = vmax.f32 %v1336, %v1339
        %v1341 = vsel %vm1076, %v666, -inf
        %v1342 = vmax.f32 %v1338, %v1341
        %v1343 = vsel %vm1076, %v189, -inf
        %v1344 = vmax.f32 %v1340, %v1343
        %v1345 = vsel %vm1076, %v667, -inf
        %v1346 = vmax.f32 %v1342, %v1345
        %v1347 = vsel %vm1076, %v190, -inf
        %v1348 = vmax.f32 %v1344, %v1347
        %v1349 = vsel %vm1076, %v668, -inf
        %v1350 = vmax.f32 %v1346, %v1349
        %v1351 = vsel %vm1076, %v191, -inf
        %v1352 = vmax.f32 %v1348, %v1351
        %v1353 = vsel %vm1076, %v669, -inf
        %v1354 = vmax.f32 %v1350, %v1353
        %v1355 = vsel %vm1076, %v192, -inf
        %v1356 = vmax.f32 %v1352, %v1355
        %v1357 = vsel %vm1076, %v670, -inf
        %v1358 = vmax.f32 %v1354, %v1357
        %v1359 = vsel %vm1076, %v193, -inf
        %v1360 = vmax.f32 %v1356, %v1359
        %v1361 = vsel %vm1076, %v671, -inf
        %v1362 = vmax.f32 %v1358, %v1361
        %v1363 = vsel %vm1076, %v194, -inf
        %v1364 = vmax.f32 %v1360, %v1363
        %v1365 = vsel %vm1076, %v672, -inf
        %v1366 = vmax.f32 %v1362, %v1365
        %v1367 = vsel %vm1076, %v195, -inf
        %v1368 = vmax.f32 %v1364, %v1367
        %v1369 = vsel %vm1076, %v673, -inf
        %v1370 = vmax.f32 %v1366, %v1369
        %v1371 = vsel %vm1076, %v196, -inf
        %v1372 = vmax.f32 %v1368, %v1371
        %v1373 = vsel %vm1076, %v674, -inf
        %v1374 = vmax.f32 %v1370, %v1373
        %v1375 = vsel %vm1076, %v197, -inf
        %v1376 = vmax.f32 %v1372, %v1375
        %v1377 = vsel %vm1076, %v675, -inf
        %v1378 = vmax.f32 %v1374, %v1377
        %v1379 = vsel %vm1076, %v198, -inf
        %v1380 = vmax.f32 %v1376, %v1379
        %v1381 = vsel %vm1076, %v676, -inf
        %v1382 = vmax.f32 %v1378, %v1381
        %v1383 = vsel %vm1076, %v199, -inf
        %v1384 = vmax.f32 %v1380, %v1383
        %v1385 = vsel %vm1076, %v677, -inf
        %v1386 = vmax.f32 %v1382, %v1385
        %v1387 = vsel %vm1076, %v200, -inf
        %v1388 = vmax.f32 %v1384, %v1387
        %v1389 = vsel %vm1076, %v678, -inf
        %v1390 = vmax.f32 %v1386, %v1389
        %v1391 = vsel %vm1076, %v201, -inf
        %v1392 = vmax.f32 %v1388, %v1391
        %v1393 = vsel %vm1076, %v679, -inf
        %v1394 = vmax.f32 %v1390, %v1393
        %v1395 = vsel %vm1076, %v202, -inf
        %v1396 = vmax.f32 %v1392, %v1395
        %v1397 = vsel %vm1076, %v680, -inf
        %v1398 = vmax.f32 %v1394, %v1397
        %v1399 = vsel %vm1076, %v203, -inf
        %v1400 = vmax.f32 %v1396, %v1399
        %v1401 = vsel %vm1076, %v681, -inf
        %v1402 = vmax.f32 %v1398, %v1401
        %v1403 = vsel %vm1076, %v204, -inf
        %v1404 = vmax.f32 %v1400, %v1403
        %v1405 = vsel %vm1076, %v682, -inf
        %v1406 = vmax.f32 %v1402, %v1405
        %v1407 = vsel %vm1076, %v205, -inf
        %v1408 = vmax.f32 %v1404, %v1407
        %v1409 = vsel %vm1076, %v683, -inf
        %v1410 = vmax.f32 %v1406, %v1409
        %v1411 = vsel %vm1076, %v206, -inf
        %v1412 = vmax.f32 %v1408, %v1411
        %v1413 = vsel %vm1076, %v684, -inf
        %v1414 = vmax.f32 %v1410, %v1413
        %v1415 = vsel %vm1076, %v207, -inf
        %v1416 = vmax.f32 %v1412, %v1415
        %v1417 = vsel %vm1076, %v685, -inf
        %v1418 = vmax.f32 %v1414, %v1417
        %v1419 = vsel %vm1076, %v208, -inf
        %v1420 = vmax.f32 %v1416, %v1419
        %v1421 = vsel %vm1076, %v686, -inf
        %v1422 = vmax.f32 %v1418, %v1421
        %v1423 = vsel %vm1076, %v209, -inf
        %v1424 = vmax.f32 %v1420, %v1423
        %v1425 = vsel %vm1076, %v687, -inf
        %v1426 = vmax.f32 %v1422, %v1425
        %v1427 = vsel %vm1076, %v210, -inf
        %v1428 = vmax.f32 %v1424, %v1427
        %v1429 = vsel %vm1076, %v688, -inf
        %v1430 = vmax.f32 %v1426, %v1429
        %v1431 = vsel %vm1076, %v211, -inf
        %v1432 = vmax.f32 %v1428, %v1431
        %v1433 = vsel %vm1076, %v689, -inf
        %v1434 = vmax.f32 %v1430, %v1433
        %v1435 = vsel %vm1076, %v212, -inf
        %v1436 = vmax.f32 %v1432, %v1435
        %v1437 = vsel %vm1076, %v690, -inf
        %v1438 = vmax.f32 %v1434, %v1437
        %v1439 = vsel %vm1076, %v213, -inf
        %v1440 = vmax.f32 %v1436, %v1439
        %v1441 = vsel %vm1076, %v691, -inf
        %v1442 = vmax.f32 %v1438, %v1441
        %v1443 = vsel %vm1076, %v214, -inf
        %v1444 = vmax.f32 %v1440, %v1443
        %v1445 = vsel %vm1076, %v692, -inf
        %v1446 = vmax.f32 %v1442, %v1445
        %v1447 = vsel %vm1076, %v215, -inf
        %v1448 = vmax.f32 %v1444, %v1447
        %v1449 = vsel %vm1076, %v693, -inf
        %v1450 = vmax.f32 %v1446, %v1449
        %v1451 = vsel %vm1076, %v216, -inf
        %v1452 = vmax.f32 %v1448, %v1451
        %v1453 = vsel %vm1076, %v694, -inf
        %v1454 = vmax.f32 %v1450, %v1453
        %v1455 = vsel %vm1076, %v217, -inf
        %v1456 = vmax.f32 %v1452, %v1455
        %v1457 = vsel %vm1076, %v695, -inf
        %v1458 = vmax.f32 %v1454, %v1457
        %v1459 = vsel %vm1076, %v218, -inf
        %v1460 = vmax.f32 %v1456, %v1459
        %v1461 = vsel %vm1076, %v696, -inf
        %v1462 = vmax.f32 %v1458, %v1461
        %v1463 = vsel %vm1076, %v219, -inf
        %v1464 = vmax.f32 %v1460, %v1463
        %v1465 = vsel %vm1076, %v697, -inf
        %v1466 = vmax.f32 %v1462, %v1465
        %v1467 = vsel %vm1076, %v220, -inf
        %v1468 = vmax.f32 %v1464, %v1467
        %v1469 = vsel %vm1076, %v698, -inf
        %v1470 = vmax.f32 %v1466, %v1469
        %v1471 = vsel %vm1076, %v221, -inf
        %v1472 = vmax.f32 %v1468, %v1471
        %v1473 = vsel %vm1076, %v699, -inf
        %v1474 = vmax.f32 %v1470, %v1473
        %v1475 = vsel %vm1076, %v222, -inf
        %v1476 = vmax.f32 %v1472, %v1475
        %v1477 = vsel %vm1076, %v700, -inf
        %v1478 = vmax.f32 %v1474, %v1477
        %v1479 = vsel %vm1076, %v223, -inf
        %v1480 = vmax.f32 %v1476, %v1479
        %v1481 = vsel %vm1076, %v701, -inf
        %v1482 = vmax.f32 %v1478, %v1481
        %v1483 = vsel %vm1076, %v224, -inf
        %v1484 = vmax.f32 %v1480, %v1483
        %v1485 = vsel %vm1076, %v702, -inf
        %v1486 = vmax.f32 %v1482, %v1485
        %v1487 = vsel %vm1076, %v225, -inf
        %v1488 = vmax.f32 %v1484, %v1487
        %v1489 = vsel %vm1076, %v703, -inf
        %v1490 = vmax.f32 %v1486, %v1489
        %v1491 = vsel %vm1076, %v226, -inf
        %v1492 = vmax.f32 %v1488, %v1491
        %v1493 = vsel %vm1076, %v704, -inf
        %v1494 = vmax.f32 %v1490, %v1493
        %v1495 = vsel %vm1076, %v227, -inf
        %v1496 = vmax.f32 %v1492, %v1495
        %v1497 = vsel %vm1076, %v705, -inf
        %v1498 = vmax.f32 %v1494, %v1497
        %v1499 = vsel %vm1076, %v228, -inf
        %v1500 = vmax.f32 %v1496, %v1499
        %v1501 = vsel %vm1076, %v706, -inf
        %v1502 = vmax.f32 %v1498, %v1501
        %v1503 = vsel %vm1076, %v229, -inf
        %v1504 = vmax.f32 %v1500, %v1503
        %v1505 = vsel %vm1076, %v707, -inf
        %v1506 = vmax.f32 %v1502, %v1505
        %v1507 = vsel %vm1076, %v230, -inf
        %v1508 = vmax.f32 %v1504, %v1507
        %v1509 = vsel %vm1076, %v708, -inf
        %v1510 = vmax.f32 %v1506, %v1509
        %v1511 = vsel %vm1076, %v231, -inf
        %v1512 = vmax.f32 %v1508, %v1511
        %v1513 = vsel %vm1076, %v709, -inf
        %v1514 = vmax.f32 %v1510, %v1513
        %v1515 = vsel %vm1076, %v232, -inf
        %v1516 = vmax.f32 %v1512, %v1515
        %v1517 = vsel %vm1076, %v710, -inf
        %v1518 = vmax.f32 %v1514, %v1517
        %v1519 = vsel %vm1076, %v233, -inf
        %v1520 = vmax.f32 %v1516, %v1519
        %v1521 = vsel %vm1076, %v711, -inf
        %v1522 = vmax.f32 %v1518, %v1521
        %v1523 = vsel %vm1076, %v234, -inf
        %v1524 = vmax.f32 %v1520, %v1523
        %v1525 = vsel %vm1076, %v712, -inf
        %v1526 = vmax.f32 %v1522, %v1525
        %v1527 = vsel %vm1076, %v235, -inf
        %v1528 = vmax.f32 %v1524, %v1527
        %v1529 = vsel %vm1076, %v713, -inf
        %v1530 = vmax.f32 %v1526, %v1529
        %v1531 = vsel %vm1076, %v236, -inf
        %v1532 = vmax.f32 %v1528, %v1531
        %v1533 = vsel %vm1076, %v714, -inf
        %v1534 = vmax.f32 %v1530, %v1533
        %v1535 = vsel %vm1076, %v237, -inf
        %v1536 = vmax.f32 %v1532, %v1535
        %v1537 = vsel %vm1076, %v715, -inf
        %v1538 = vmax.f32 %v1534, %v1537
        %v1539 = vsel %vm1076, %v238, -inf
        %v1540 = vmax.f32 %v1536, %v1539
        %v1541 = vsel %vm1076, %v716, -inf
        %v1542 = vmax.f32 %v1538, %v1541
        %v1543 = vsel %vm1076, %v239, -inf
        %v1544 = vmax.f32 %v1540, %v1543
        %v1545 = vsel %vm1076, %v717, -inf
        %v1546 = vmax.f32 %v1542, %v1545
        %v1547 = vsel %vm1076, %v240, -inf
        %v1548 = vmax.f32 %v1544, %v1547
        %v1549 = vsel %vm1076, %v718, -inf
        %v1550 = vmax.f32 %v1546, %v1549
        %vm1551 = vcmask 468992
        %v1552 = vsel %vm1551, %v241, -inf
        %v1553 = vmax.f32 %v1548, %v1552
        %v1554 = vmax.f32 %v1553, %v1550
        %1555 = vmax.xlane.f32.xlu0 %v1554
        %v1556 = vpop.xlane.xlu0 %1555
        %v1557 = vsel %vm1076, %v242, -inf
        %v1558 = vsel %vm1076, %v719, -inf
        %v1559 = vsel %vm1076, %v243, -inf
        %v1560 = vmax.f32 %v1557, %v1559
        %v1561 = vsel %vm1076, %v720, -inf
        %v1562 = vmax.f32 %v1558, %v1561
        %v1563 = vsel %vm1076, %v244, -inf
        %v1564 = vmax.f32 %v1560, %v1563
        %v1565 = vsel %vm1076, %v721, -inf
        %v1566 = vmax.f32 %v1562, %v1565
        %v1567 = vsel %vm1076, %v245, -inf
        %v1568 = vmax.f32 %v1564, %v1567
        %v1569 = vsel %vm1076, %v722, -inf
        %v1570 = vmax.f32 %v1566, %v1569
        %v1571 = vsel %vm1076, %v246, -inf
        %v1572 = vmax.f32 %v1568, %v1571
        %v1573 = vsel %vm1076, %v723, -inf
        %v1574 = vmax.f32 %v1570, %v1573
        %v1575 = vsel %vm1076, %v247, -inf
        %v1576 = vmax.f32 %v1572, %v1575
        %v1577 = vsel %vm1076, %v724, -inf
        %v1578 = vmax.f32 %v1574, %v1577
        %v1579 = vsel %vm1076, %v248, -inf
        %v1580 = vmax.f32 %v1576, %v1579
        %v1581 = vsel %vm1076, %v725, -inf
        %v1582 = vmax.f32 %v1578, %v1581
        %v1583 = vsel %vm1076, %v249, -inf
        %v1584 = vmax.f32 %v1580, %v1583
        %v1585 = vsel %vm1076, %v726, -inf
        %v1586 = vmax.f32 %v1582, %v1585
        %v1587 = vsel %vm1076, %v250, -inf
        %v1588 = vmax.f32 %v1584, %v1587
        %v1589 = vsel %vm1076, %v727, -inf
        %v1590 = vmax.f32 %v1586, %v1589
        %v1591 = vsel %vm1076, %v251, -inf
        %v1592 = vmax.f32 %v1588, %v1591
        %v1593 = vsel %vm1076, %v728, -inf
        %v1594 = vmax.f32 %v1590, %v1593
        %v1595 = vsel %vm1076, %v252, -inf
        %v1596 = vmax.f32 %v1592, %v1595
        %v1597 = vsel %vm1076, %v729, -inf
        %v1598 = vmax.f32 %v1594, %v1597
        %v1599 = vsel %vm1076, %v253, -inf
        %v1600 = vmax.f32 %v1596, %v1599
        %v1601 = vsel %vm1076, %v730, -inf
        %v1602 = vmax.f32 %v1598, %v1601
        %v1603 = vsel %vm1076, %v254, -inf
        %v1604 = vmax.f32 %v1600, %v1603
        %v1605 = vsel %vm1076, %v731, -inf
        %v1606 = vmax.f32 %v1602, %v1605
        %v1607 = vsel %vm1076, %v255, -inf
        %v1608 = vmax.f32 %v1604, %v1607
        %v1609 = vsel %vm1076, %v732, -inf
        %v1610 = vmax.f32 %v1606, %v1609
        %v1611 = vsel %vm1076, %v256, -inf
        %v1612 = vmax.f32 %v1608, %v1611
        %v1613 = vsel %vm1076, %v733, -inf
        %v1614 = vmax.f32 %v1610, %v1613
        %v1615 = vsel %vm1076, %v257, -inf
        %v1616 = vmax.f32 %v1612, %v1615
        %v1617 = vsel %vm1076, %v734, -inf
        %v1618 = vmax.f32 %v1614, %v1617
        %v1619 = vsel %vm1076, %v258, -inf
        %v1620 = vmax.f32 %v1616, %v1619
        %v1621 = vsel %vm1076, %v735, -inf
        %v1622 = vmax.f32 %v1618, %v1621
        %v1623 = vsel %vm1076, %v259, -inf
        %v1624 = vmax.f32 %v1620, %v1623
        %v1625 = vsel %vm1076, %v736, -inf
        %v1626 = vmax.f32 %v1622, %v1625
        %v1627 = vsel %vm1076, %v260, -inf
        %v1628 = vmax.f32 %v1624, %v1627
        %v1629 = vsel %vm1076, %v737, -inf
        %v1630 = vmax.f32 %v1626, %v1629
        %v1631 = vsel %vm1076, %v261, -inf
        %v1632 = vmax.f32 %v1628, %v1631
        %v1633 = vsel %vm1076, %v738, -inf
        %v1634 = vmax.f32 %v1630, %v1633
        %v1635 = vsel %vm1076, %v262, -inf
        %v1636 = vmax.f32 %v1632, %v1635
        %v1637 = vsel %vm1076, %v739, -inf
        %v1638 = vmax.f32 %v1634, %v1637
        %v1639 = vsel %vm1076, %v263, -inf
        %v1640 = vmax.f32 %v1636, %v1639
        %v1641 = vsel %vm1076, %v740, -inf
        %v1642 = vmax.f32 %v1638, %v1641
        %v1643 = vsel %vm1076, %v264, -inf
        %v1644 = vmax.f32 %v1640, %v1643
        %v1645 = vsel %vm1076, %v741, -inf
        %v1646 = vmax.f32 %v1642, %v1645
        %v1647 = vsel %vm1076, %v265, -inf
        %v1648 = vmax.f32 %v1644, %v1647
        %v1649 = vsel %vm1076, %v742, -inf
        %v1650 = vmax.f32 %v1646, %v1649
        %v1651 = vsel %vm1076, %v266, -inf
        %v1652 = vmax.f32 %v1648, %v1651
        %v1653 = vsel %vm1076, %v743, -inf
        %v1654 = vmax.f32 %v1650, %v1653
        %v1655 = vsel %vm1076, %v267, -inf
        %v1656 = vmax.f32 %v1652, %v1655
        %v1657 = vsel %vm1076, %v744, -inf
        %v1658 = vmax.f32 %v1654, %v1657
        %v1659 = vsel %vm1076, %v268, -inf
        %v1660 = vmax.f32 %v1656, %v1659
        %v1661 = vsel %vm1076, %v745, -inf
        %v1662 = vmax.f32 %v1658, %v1661
        %v1663 = vsel %vm1076, %v269, -inf
        %v1664 = vmax.f32 %v1660, %v1663
        %v1665 = vsel %vm1076, %v746, -inf
        %v1666 = vmax.f32 %v1662, %v1665
        %v1667 = vsel %vm1076, %v270, -inf
        %v1668 = vmax.f32 %v1664, %v1667
        %v1669 = vsel %vm1076, %v747, -inf
        %v1670 = vmax.f32 %v1666, %v1669
        %v1671 = vsel %vm1076, %v271, -inf
        %v1672 = vmax.f32 %v1668, %v1671
        %v1673 = vsel %vm1076, %v748, -inf
        %v1674 = vmax.f32 %v1670, %v1673
        %v1675 = vsel %vm1076, %v272, -inf
        %v1676 = vmax.f32 %v1672, %v1675
        %v1677 = vsel %vm1076, %v749, -inf
        %v1678 = vmax.f32 %v1674, %v1677
        %v1679 = vsel %vm1076, %v273, -inf
        %v1680 = vmax.f32 %v1676, %v1679
        %v1681 = vsel %vm1076, %v750, -inf
        %v1682 = vmax.f32 %v1678, %v1681
        %v1683 = vsel %vm1076, %v274, -inf
        %v1684 = vmax.f32 %v1680, %v1683
        %v1685 = vsel %vm1076, %v751, -inf
        %v1686 = vmax.f32 %v1682, %v1685
        %v1687 = vsel %vm1076, %v275, -inf
        %v1688 = vmax.f32 %v1684, %v1687
        %v1689 = vsel %vm1076, %v752, -inf
        %v1690 = vmax.f32 %v1686, %v1689
        %v1691 = vsel %vm1076, %v276, -inf
        %v1692 = vmax.f32 %v1688, %v1691
        %v1693 = vsel %vm1076, %v753, -inf
        %v1694 = vmax.f32 %v1690, %v1693
        %v1695 = vsel %vm1076, %v277, -inf
        %v1696 = vmax.f32 %v1692, %v1695
        %v1697 = vsel %vm1076, %v754, -inf
        %v1698 = vmax.f32 %v1694, %v1697
        %v1699 = vsel %vm1076, %v278, -inf
        %v1700 = vmax.f32 %v1696, %v1699
        %v1701 = vsel %vm1076, %v755, -inf
        %v1702 = vmax.f32 %v1698, %v1701
        %v1703 = vsel %vm1076, %v279, -inf
        %v1704 = vmax.f32 %v1700, %v1703
        %v1705 = vsel %vm1076, %v756, -inf
        %v1706 = vmax.f32 %v1702, %v1705
        %v1707 = vsel %vm1076, %v280, -inf
        %v1708 = vmax.f32 %v1704, %v1707
        %v1709 = vsel %vm1076, %v757, -inf
        %v1710 = vmax.f32 %v1706, %v1709
        %v1711 = vsel %vm1076, %v281, -inf
        %v1712 = vmax.f32 %v1708, %v1711
        %v1713 = vsel %vm1076, %v758, -inf
        %v1714 = vmax.f32 %v1710, %v1713
        %v1715 = vsel %vm1076, %v282, -inf
        %v1716 = vmax.f32 %v1712, %v1715
        %v1717 = vsel %vm1076, %v759, -inf
        %v1718 = vmax.f32 %v1714, %v1717
        %v1719 = vsel %vm1076, %v283, -inf
        %v1720 = vmax.f32 %v1716, %v1719
        %v1721 = vsel %vm1076, %v760, -inf
        %v1722 = vmax.f32 %v1718, %v1721
        %v1723 = vsel %vm1076, %v284, -inf
        %v1724 = vmax.f32 %v1720, %v1723
        %v1725 = vsel %vm1076, %v761, -inf
        %v1726 = vmax.f32 %v1722, %v1725
        %v1727 = vsel %vm1076, %v285, -inf
        %v1728 = vmax.f32 %v1724, %v1727
        %v1729 = vsel %vm1076, %v762, -inf
        %v1730 = vmax.f32 %v1726, %v1729
        %v1731 = vsel %vm1076, %v286, -inf
        %v1732 = vmax.f32 %v1728, %v1731
        %v1733 = vsel %vm1076, %v763, -inf
        %v1734 = vmax.f32 %v1730, %v1733
        %v1735 = vsel %vm1076, %v287, -inf
        %v1736 = vmax.f32 %v1732, %v1735
        %v1737 = vsel %vm1076, %v764, -inf
        %v1738 = vmax.f32 %v1734, %v1737
        %v1739 = vsel %vm1076, %v288, -inf
        %v1740 = vmax.f32 %v1736, %v1739
        %v1741 = vsel %vm1076, %v765, -inf
        %v1742 = vmax.f32 %v1738, %v1741
        %v1743 = vsel %vm1076, %v289, -inf
        %v1744 = vmax.f32 %v1740, %v1743
        %v1745 = vsel %vm1076, %v766, -inf
        %v1746 = vmax.f32 %v1742, %v1745
        %v1747 = vsel %vm1076, %v290, -inf
        %v1748 = vmax.f32 %v1744, %v1747
        %v1749 = vsel %vm1076, %v767, -inf
        %v1750 = vmax.f32 %v1746, %v1749
        %v1751 = vsel %vm1076, %v291, -inf
        %v1752 = vmax.f32 %v1748, %v1751
        %v1753 = vsel %vm1076, %v768, -inf
        %v1754 = vmax.f32 %v1750, %v1753
        %v1755 = vsel %vm1076, %v292, -inf
        %v1756 = vmax.f32 %v1752, %v1755
        %v1757 = vsel %vm1076, %v769, -inf
        %v1758 = vmax.f32 %v1754, %v1757
        %v1759 = vsel %vm1076, %v293, -inf
        %v1760 = vmax.f32 %v1756, %v1759
        %v1761 = vsel %vm1076, %v770, -inf
        %v1762 = vmax.f32 %v1758, %v1761
        %v1763 = vsel %vm1076, %v294, -inf
        %v1764 = vmax.f32 %v1760, %v1763
        %v1765 = vsel %vm1076, %v771, -inf
        %v1766 = vmax.f32 %v1762, %v1765
        %v1767 = vsel %vm1076, %v295, -inf
        %v1768 = vmax.f32 %v1764, %v1767
        %v1769 = vsel %vm1076, %v772, -inf
        %v1770 = vmax.f32 %v1766, %v1769
        %v1771 = vsel %vm1076, %v296, -inf
        %v1772 = vmax.f32 %v1768, %v1771
        %v1773 = vsel %vm1076, %v773, -inf
        %v1774 = vmax.f32 %v1770, %v1773
        %v1775 = vsel %vm1076, %v297, -inf
        %v1776 = vmax.f32 %v1772, %v1775
        %v1777 = vsel %vm1076, %v774, -inf
        %v1778 = vmax.f32 %v1774, %v1777
        %v1779 = vsel %vm1076, %v298, -inf
        %v1780 = vmax.f32 %v1776, %v1779
        %v1781 = vsel %vm1076, %v775, -inf
        %v1782 = vmax.f32 %v1778, %v1781
        %v1783 = vsel %vm1076, %v299, -inf
        %v1784 = vmax.f32 %v1780, %v1783
        %v1785 = vsel %vm1076, %v776, -inf
        %v1786 = vmax.f32 %v1782, %v1785
        %v1787 = vsel %vm1076, %v300, -inf
        %v1788 = vmax.f32 %v1784, %v1787
        %v1789 = vsel %vm1076, %v777, -inf
        %v1790 = vmax.f32 %v1786, %v1789
        %v1791 = vsel %vm1076, %v301, -inf
        %v1792 = vmax.f32 %v1788, %v1791
        %v1793 = vsel %vm1076, %v778, -inf
        %v1794 = vmax.f32 %v1790, %v1793
        %v1795 = vsel %vm1076, %v302, -inf
        %v1796 = vmax.f32 %v1792, %v1795
        %v1797 = vsel %vm1076, %v779, -inf
        %v1798 = vmax.f32 %v1794, %v1797
        %v1799 = vsel %vm1076, %v303, -inf
        %v1800 = vmax.f32 %v1796, %v1799
        %v1801 = vsel %vm1076, %v780, -inf
        %v1802 = vmax.f32 %v1798, %v1801
        %v1803 = vsel %vm1076, %v304, -inf
        %v1804 = vmax.f32 %v1800, %v1803
        %v1805 = vsel %vm1076, %v781, -inf
        %v1806 = vmax.f32 %v1802, %v1805
        %v1807 = vsel %vm1076, %v305, -inf
        %v1808 = vmax.f32 %v1804, %v1807
        %v1809 = vsel %vm1076, %v782, -inf
        %v1810 = vmax.f32 %v1806, %v1809
        %v1811 = vsel %vm1076, %v306, -inf
        %v1812 = vmax.f32 %v1808, %v1811
        %v1813 = vsel %vm1076, %v783, -inf
        %v1814 = vmax.f32 %v1810, %v1813
        %v1815 = vsel %vm1076, %v307, -inf
        %v1816 = vmax.f32 %v1812, %v1815
        %v1817 = vsel %vm1076, %v784, -inf
        %v1818 = vmax.f32 %v1814, %v1817
        %v1819 = vsel %vm1076, %v308, -inf
        %v1820 = vmax.f32 %v1816, %v1819
        %v1821 = vsel %vm1076, %v785, -inf
        %v1822 = vmax.f32 %v1818, %v1821
        %v1823 = vsel %vm1076, %v309, -inf
        %v1824 = vmax.f32 %v1820, %v1823
        %v1825 = vsel %vm1076, %v786, -inf
        %v1826 = vmax.f32 %v1822, %v1825
        %v1827 = vsel %vm1076, %v310, -inf
        %v1828 = vmax.f32 %v1824, %v1827
        %v1829 = vsel %vm1076, %v787, -inf
        %v1830 = vmax.f32 %v1826, %v1829
        %v1831 = vsel %vm1076, %v311, -inf
        %v1832 = vmax.f32 %v1828, %v1831
        %v1833 = vsel %vm1076, %v788, -inf
        %v1834 = vmax.f32 %v1830, %v1833
        %v1835 = vsel %vm1076, %v312, -inf
        %v1836 = vmax.f32 %v1832, %v1835
        %v1837 = vsel %vm1076, %v789, -inf
        %v1838 = vmax.f32 %v1834, %v1837
        %v1839 = vsel %vm1076, %v313, -inf
        %v1840 = vmax.f32 %v1836, %v1839
        %v1841 = vsel %vm1076, %v790, -inf
        %v1842 = vmax.f32 %v1838, %v1841
        %v1843 = vsel %vm1076, %v314, -inf
        %v1844 = vmax.f32 %v1840, %v1843
        %v1845 = vsel %vm1076, %v791, -inf
        %v1846 = vmax.f32 %v1842, %v1845
        %v1847 = vsel %vm1076, %v315, -inf
        %v1848 = vmax.f32 %v1844, %v1847
        %v1849 = vsel %vm1076, %v792, -inf
        %v1850 = vmax.f32 %v1846, %v1849
        %v1851 = vsel %vm1076, %v316, -inf
        %v1852 = vmax.f32 %v1848, %v1851
        %v1853 = vsel %vm1076, %v793, -inf
        %v1854 = vmax.f32 %v1850, %v1853
        %v1855 = vsel %vm1076, %v317, -inf
        %v1856 = vmax.f32 %v1852, %v1855
        %v1857 = vsel %vm1076, %v794, -inf
        %v1858 = vmax.f32 %v1854, %v1857
        %v1859 = vsel %vm1076, %v318, -inf
        %v1860 = vmax.f32 %v1856, %v1859
        %v1861 = vsel %vm1076, %v795, -inf
        %v1862 = vmax.f32 %v1858, %v1861
        %v1863 = vsel %vm1076, %v319, -inf
        %v1864 = vmax.f32 %v1860, %v1863
        %v1865 = vsel %vm1076, %v796, -inf
        %v1866 = vmax.f32 %v1862, %v1865
        %v1867 = vsel %vm1076, %v320, -inf
        %v1868 = vmax.f32 %v1864, %v1867
        %v1869 = vsel %vm1076, %v797, -inf
        %v1870 = vmax.f32 %v1866, %v1869
        %v1871 = vsel %vm1076, %v321, -inf
        %v1872 = vmax.f32 %v1868, %v1871
        %v1873 = vsel %vm1076, %v798, -inf
        %v1874 = vmax.f32 %v1870, %v1873
        %v1875 = vsel %vm1076, %v322, -inf
        %v1876 = vmax.f32 %v1872, %v1875
        %v1877 = vsel %vm1076, %v799, -inf
        %v1878 = vmax.f32 %v1874, %v1877
        %v1879 = vsel %vm1076, %v323, -inf
        %v1880 = vmax.f32 %v1876, %v1879
        %v1881 = vsel %vm1076, %v800, -inf
        %v1882 = vmax.f32 %v1878, %v1881
        %v1883 = vsel %vm1076, %v324, -inf
        %v1884 = vmax.f32 %v1880, %v1883
        %v1885 = vsel %vm1076, %v801, -inf
        %v1886 = vmax.f32 %v1882, %v1885
        %v1887 = vsel %vm1076, %v325, -inf
        %v1888 = vmax.f32 %v1884, %v1887
        %v1889 = vsel %vm1076, %v802, -inf
        %v1890 = vmax.f32 %v1886, %v1889
        %v1891 = vsel %vm1076, %v326, -inf
        %v1892 = vmax.f32 %v1888, %v1891
        %v1893 = vsel %vm1076, %v803, -inf
        %v1894 = vmax.f32 %v1890, %v1893
        %v1895 = vsel %vm1076, %v327, -inf
        %v1896 = vmax.f32 %v1892, %v1895
        %v1897 = vsel %vm1076, %v804, -inf
        %v1898 = vmax.f32 %v1894, %v1897
        %v1899 = vsel %vm1076, %v328, -inf
        %v1900 = vmax.f32 %v1896, %v1899
        %v1901 = vsel %vm1076, %v805, -inf
        %v1902 = vmax.f32 %v1898, %v1901
        %v1903 = vsel %vm1076, %v329, -inf
        %v1904 = vmax.f32 %v1900, %v1903
        %v1905 = vsel %vm1076, %v806, -inf
        %v1906 = vmax.f32 %v1902, %v1905
        %v1907 = vsel %vm1076, %v330, -inf
        %v1908 = vmax.f32 %v1904, %v1907
        %v1909 = vsel %vm1076, %v807, -inf
        %v1910 = vmax.f32 %v1906, %v1909
        %v1911 = vsel %vm1076, %v331, -inf
        %v1912 = vmax.f32 %v1908, %v1911
        %v1913 = vsel %vm1076, %v808, -inf
        %v1914 = vmax.f32 %v1910, %v1913
        %v1915 = vsel %vm1076, %v332, -inf
        %v1916 = vmax.f32 %v1912, %v1915
        %v1917 = vsel %vm1076, %v809, -inf
        %v1918 = vmax.f32 %v1914, %v1917
        %v1919 = vsel %vm1076, %v333, -inf
        %v1920 = vmax.f32 %v1916, %v1919
        %v1921 = vsel %vm1076, %v810, -inf
        %v1922 = vmax.f32 %v1918, %v1921
        %v1923 = vsel %vm1076, %v334, -inf
        %v1924 = vmax.f32 %v1920, %v1923
        %v1925 = vsel %vm1076, %v811, -inf
        %v1926 = vmax.f32 %v1922, %v1925
        %v1927 = vsel %vm1076, %v335, -inf
        %v1928 = vmax.f32 %v1924, %v1927
        %v1929 = vsel %vm1076, %v812, -inf
        %v1930 = vmax.f32 %v1926, %v1929
        %v1931 = vsel %vm1076, %v336, -inf
        %v1932 = vmax.f32 %v1928, %v1931
        %v1933 = vsel %vm1076, %v813, -inf
        %v1934 = vmax.f32 %v1930, %v1933
        %v1935 = vsel %vm1076, %v337, -inf
        %v1936 = vmax.f32 %v1932, %v1935
        %v1937 = vsel %vm1076, %v814, -inf
        %v1938 = vmax.f32 %v1934, %v1937
        %v1939 = vsel %vm1076, %v338, -inf
        %v1940 = vmax.f32 %v1936, %v1939
        %v1941 = vsel %vm1076, %v815, -inf
        %v1942 = vmax.f32 %v1938, %v1941
        %v1943 = vsel %vm1076, %v339, -inf
        %v1944 = vmax.f32 %v1940, %v1943
        %v1945 = vsel %vm1076, %v816, -inf
        %v1946 = vmax.f32 %v1942, %v1945
        %v1947 = vsel %vm1076, %v340, -inf
        %v1948 = vmax.f32 %v1944, %v1947
        %v1949 = vsel %vm1076, %v817, -inf
        %v1950 = vmax.f32 %v1946, %v1949
        %v1951 = vsel %vm1076, %v341, -inf
        %v1952 = vmax.f32 %v1948, %v1951
        %v1953 = vsel %vm1076, %v818, -inf
        %v1954 = vmax.f32 %v1950, %v1953
        %v1955 = vsel %vm1076, %v342, -inf
        %v1956 = vmax.f32 %v1952, %v1955
        %v1957 = vsel %vm1076, %v819, -inf
        %v1958 = vmax.f32 %v1954, %v1957
        %v1959 = vsel %vm1076, %v343, -inf
        %v1960 = vmax.f32 %v1956, %v1959
        %v1961 = vsel %vm1076, %v820, -inf
        %v1962 = vmax.f32 %v1958, %v1961
        %v1963 = vsel %vm1076, %v344, -inf
        %v1964 = vmax.f32 %v1960, %v1963
        %v1965 = vsel %vm1076, %v821, -inf
        %v1966 = vmax.f32 %v1962, %v1965
        %v1967 = vsel %vm1076, %v345, -inf
        %v1968 = vmax.f32 %v1964, %v1967
        %v1969 = vsel %vm1076, %v822, -inf
        %v1970 = vmax.f32 %v1966, %v1969
        %v1971 = vsel %vm1076, %v346, -inf
        %v1972 = vmax.f32 %v1968, %v1971
        %v1973 = vsel %vm1076, %v823, -inf
        %v1974 = vmax.f32 %v1970, %v1973
        %v1975 = vsel %vm1076, %v347, -inf
        %v1976 = vmax.f32 %v1972, %v1975
        %v1977 = vsel %vm1076, %v824, -inf
        %v1978 = vmax.f32 %v1974, %v1977
        %v1979 = vsel %vm1076, %v348, -inf
        %v1980 = vmax.f32 %v1976, %v1979
        %v1981 = vsel %vm1076, %v825, -inf
        %v1982 = vmax.f32 %v1978, %v1981
        %v1983 = vsel %vm1076, %v349, -inf
        %v1984 = vmax.f32 %v1980, %v1983
        %v1985 = vsel %vm1076, %v826, -inf
        %v1986 = vmax.f32 %v1982, %v1985
        %v1987 = vsel %vm1076, %v350, -inf
        %v1988 = vmax.f32 %v1984, %v1987
        %v1989 = vsel %vm1076, %v827, -inf
        %v1990 = vmax.f32 %v1986, %v1989
        %v1991 = vsel %vm1076, %v351, -inf
        %v1992 = vmax.f32 %v1988, %v1991
        %v1993 = vsel %vm1076, %v828, -inf
        %v1994 = vmax.f32 %v1990, %v1993
        %v1995 = vsel %vm1076, %v352, -inf
        %v1996 = vmax.f32 %v1992, %v1995
        %v1997 = vsel %vm1076, %v829, -inf
        %v1998 = vmax.f32 %v1994, %v1997
        %v1999 = vsel %vm1076, %v353, -inf
        %v2000 = vmax.f32 %v1996, %v1999
        %v2001 = vsel %vm1076, %v830, -inf
        %v2002 = vmax.f32 %v1998, %v2001
        %v2003 = vsel %vm1076, %v354, -inf
        %v2004 = vmax.f32 %v2000, %v2003
        %v2005 = vsel %vm1076, %v831, -inf
        %v2006 = vmax.f32 %v2002, %v2005
        %v2007 = vsel %vm1076, %v355, -inf
        %v2008 = vmax.f32 %v2004, %v2007
        %v2009 = vsel %vm1076, %v832, -inf
        %v2010 = vmax.f32 %v2006, %v2009
        %v2011 = vsel %vm1076, %v356, -inf
        %v2012 = vmax.f32 %v2008, %v2011
        %v2013 = vsel %vm1076, %v833, -inf
        %v2014 = vmax.f32 %v2010, %v2013
        %v2015 = vsel %vm1076, %v357, -inf
        %v2016 = vmax.f32 %v2012, %v2015
        %v2017 = vsel %vm1076, %v834, -inf
        %v2018 = vmax.f32 %v2014, %v2017
        %v2019 = vsel %vm1076, %v358, -inf
        %v2020 = vmax.f32 %v2016, %v2019
        %v2021 = vsel %vm1076, %v835, -inf
        %v2022 = vmax.f32 %v2018, %v2021
        %v2023 = vsel %vm1076, %v359, -inf
        %v2024 = vmax.f32 %v2020, %v2023
        %v2025 = vsel %vm1076, %v836, -inf
        %v2026 = vmax.f32 %v2022, %v2025
        %v2027 = vsel %vm1076, %v360, -inf
        %v2028 = vmax.f32 %v2024, %v2027
        %v2029 = vsel %vm1076, %v837, -inf
        %v2030 = vmax.f32 %v2026, %v2029
        %v2031 = vsel %vm1551, %v361, -inf
        %v2032 = vmax.f32 %v2028, %v2031
        %v2033 = vmax.f32 %v2032, %v2030
        %2034 = vmax.xlane.f32.xlu0 %v2033
        %v2035 = vpop.xlane.xlu0 %2034
        %v2039 = vunpack.c.l.s4 839922192
        %v2040 = vunpack.c.0.s8 %v2039
        %v2041 = vlaneseq
        %v2042 = vshrl.u32 %v2041, 7
        %v2043 = vsub.s32 %v2040, %v2042
        %v2044 = vrot.slane %v1556, %v2043
        %v2046 = vunpack.c.l.s4 839922192
        %v2047 = vunpack.c.0.s8 %v2046
        %v2048 = vlaneseq
        %v2049 = vshrl.u32 %v2048, 7
        %v2050 = vsub.s32 %v2047, %v2049
        %v2051 = vrot.slane %v2035, %v2050
        %v2054 = vsub.f32 %v122, %v2044
        %v2055 = vsub.f32 %v123, %v2044
        %v2056 = vsub.f32 %v124, %v2044
        %v2057 = vsub.f32 %v125, %v2044
        %v2058 = vsub.f32 %v126, %v2044
        %v2059 = vsub.f32 %v127, %v2044
        %v2060 = vsub.f32 %v128, %v2044
        %v2061 = vsub.f32 %v129, %v2044
        %v2062 = vsub.f32 %v130, %v2044
        %v2063 = vsub.f32 %v131, %v2044
        %v2064 = vsub.f32 %v132, %v2044
        %v2065 = vsub.f32 %v133, %v2044
        %v2066 = vsub.f32 %v134, %v2044
        %v2067 = vsub.f32 %v135, %v2044
        %v2068 = vsub.f32 %v136, %v2044
        %v2069 = vsub.f32 %v137, %v2044
        %v2070 = vsub.f32 %v138, %v2044
        %v2071 = vsub.f32 %v139, %v2044
        %v2072 = vsub.f32 %v140, %v2044
        %v2073 = vsub.f32 %v141, %v2044
        %v2074 = vsub.f32 %v142, %v2044
        %v2075 = vsub.f32 %v143, %v2044
        %v2076 = vsub.f32 %v144, %v2044
        %v2077 = vsub.f32 %v145, %v2044
        %v2078 = vsub.f32 %v146, %v2044
        %v2079 = vsub.f32 %v147, %v2044
        %v2080 = vsub.f32 %v148, %v2044
        %v2081 = vsub.f32 %v149, %v2044
        %v2082 = vsub.f32 %v150, %v2044
        %v2083 = vsub.f32 %v151, %v2044
        %v2084 = vsub.f32 %v152, %v2044
        %v2085 = vsub.f32 %v153, %v2044
        %v2086 = vsub.f32 %v154, %v2044
        %v2087 = vsub.f32 %v155, %v2044
        %v2088 = vsub.f32 %v156, %v2044
        %v2089 = vsub.f32 %v157, %v2044
        %v2090 = vsub.f32 %v158, %v2044
        %v2091 = vsub.f32 %v159, %v2044
        %v2092 = vsub.f32 %v160, %v2044
        %v2093 = vsub.f32 %v161, %v2044
        %v2094 = vsub.f32 %v162, %v2044
        %v2095 = vsub.f32 %v163, %v2044
        %v2096 = vsub.f32 %v164, %v2044
        %v2097 = vsub.f32 %v165, %v2044
        %v2098 = vsub.f32 %v166, %v2044
        %v2099 = vsub.f32 %v167, %v2044
        %v2100 = vsub.f32 %v168, %v2044
        %v2101 = vsub.f32 %v169, %v2044
        %v2102 = vsub.f32 %v170, %v2044
        %v2103 = vsub.f32 %v171, %v2044
        %v2104 = vsub.f32 %v172, %v2044
        %v2105 = vsub.f32 %v173, %v2044
        %v2106 = vsub.f32 %v174, %v2044
        %v2107 = vsub.f32 %v175, %v2044
        %v2108 = vsub.f32 %v176, %v2044
        %v2109 = vsub.f32 %v177, %v2044
        %v2110 = vsub.f32 %v178, %v2044
        %v2111 = vsub.f32 %v179, %v2044
        %v2112 = vsub.f32 %v180, %v2044
        %v2113 = vsub.f32 %v181, %v2044
        %v2114 = vsub.f32 %v182, %v2044
        %v2115 = vsub.f32 %v183, %v2044
        %v2116 = vsub.f32 %v184, %v2044
        %v2117 = vsub.f32 %v185, %v2044
        %v2118 = vsub.f32 %v186, %v2044
        %v2119 = vsub.f32 %v187, %v2044
        %v2120 = vsub.f32 %v188, %v2044
        %v2121 = vsub.f32 %v189, %v2044
        %v2122 = vsub.f32 %v190, %v2044
        %v2123 = vsub.f32 %v191, %v2044
        %v2124 = vsub.f32 %v192, %v2044
        %v2125 = vsub.f32 %v193, %v2044
        %v2126 = vsub.f32 %v194, %v2044
        %v2127 = vsub.f32 %v195, %v2044
        %v2128 = vsub.f32 %v196, %v2044
        %v2129 = vsub.f32 %v197, %v2044
        %v2130 = vsub.f32 %v198, %v2044
        %v2131 = vsub.f32 %v199, %v2044
        %v2132 = vsub.f32 %v200, %v2044
        %v2133 = vsub.f32 %v201, %v2044
        %v2134 = vsub.f32 %v202, %v2044
        %v2135 = vsub.f32 %v203, %v2044
        %v2136 = vsub.f32 %v204, %v2044
        %v2137 = vsub.f32 %v205, %v2044
        %v2138 = vsub.f32 %v206, %v2044
        %v2139 = vsub.f32 %v207, %v2044
        %v2140 = vsub.f32 %v208, %v2044
        %v2141 = vsub.f32 %v209, %v2044
        %v2142 = vsub.f32 %v210, %v2044
        %v2143 = vsub.f32 %v211, %v2044
        %v2144 = vsub.f32 %v212, %v2044
        %v2145 = vsub.f32 %v213, %v2044
        %v2146 = vsub.f32 %v214, %v2044
        %v2147 = vsub.f32 %v215, %v2044
        %v2148 = vsub.f32 %v216, %v2044
        %v2149 = vsub.f32 %v217, %v2044
        %v2150 = vsub.f32 %v218, %v2044
        %v2151 = vsub.f32 %v219, %v2044
        %v2152 = vsub.f32 %v220, %v2044
        %v2153 = vsub.f32 %v221, %v2044
        %v2154 = vsub.f32 %v222, %v2044
        %v2155 = vsub.f32 %v223, %v2044
        %v2156 = vsub.f32 %v224, %v2044
        %v2157 = vsub.f32 %v225, %v2044
        %v2158 = vsub.f32 %v226, %v2044
        %v2159 = vsub.f32 %v227, %v2044
        %v2160 = vsub.f32 %v228, %v2044
        %v2161 = vsub.f32 %v229, %v2044
        %v2162 = vsub.f32 %v230, %v2044
        %v2163 = vsub.f32 %v231, %v2044
        %v2164 = vsub.f32 %v232, %v2044
        %v2165 = vsub.f32 %v233, %v2044
        %v2166 = vsub.f32 %v234, %v2044
        %v2167 = vsub.f32 %v235, %v2044
        %v2168 = vsub.f32 %v236, %v2044
        %v2169 = vsub.f32 %v237, %v2044
        %v2170 = vsub.f32 %v238, %v2044
        %v2171 = vsub.f32 %v239, %v2044
        %v2172 = vsub.f32 %v240, %v2044
        %v2173 = vsub.f32 %v241, %v2044
        %v2174 = vsub.f32 %v242, %v2051
        %v2175 = vsub.f32 %v243, %v2051
        %v2176 = vsub.f32 %v244, %v2051
        %v2177 = vsub.f32 %v245, %v2051
        %v2178 = vsub.f32 %v246, %v2051
        %v2179 = vsub.f32 %v247, %v2051
        %v2180 = vsub.f32 %v248, %v2051
        %v2181 = vsub.f32 %v249, %v2051
        %v2182 = vsub.f32 %v250, %v2051
        %v2183 = vsub.f32 %v251, %v2051
        %v2184 = vsub.f32 %v252, %v2051
        %v2185 = vsub.f32 %v253, %v2051
        %v2186 = vsub.f32 %v254, %v2051
        %v2187 = vsub.f32 %v255, %v2051
        %v2188 = vsub.f32 %v256, %v2051
        %v2189 = vsub.f32 %v257, %v2051
        %v2190 = vsub.f32 %v258, %v2051
        %v2191 = vsub.f32 %v259, %v2051
        %v2192 = vsub.f32 %v260, %v2051
        %v2193 = vsub.f32 %v261, %v2051
        %v2194 = vsub.f32 %v262, %v2051
        %v2195 = vsub.f32 %v263, %v2051
        %v2196 = vsub.f32 %v264, %v2051
        %v2197 = vsub.f32 %v265, %v2051
        %v2198 = vsub.f32 %v266, %v2051
        %v2199 = vsub.f32 %v267, %v2051
        %v2200 = vsub.f32 %v268, %v2051
        %v2201 = vsub.f32 %v269, %v2051
        %v2202 = vsub.f32 %v270, %v2051
        %v2203 = vsub.f32 %v271, %v2051
        %v2204 = vsub.f32 %v272, %v2051
        %v2205 = vsub.f32 %v273, %v2051
        %v2206 = vsub.f32 %v274, %v2051
        %v2207 = vsub.f32 %v275, %v2051
        %v2208 = vsub.f32 %v276, %v2051
        %v2209 = vsub.f32 %v277, %v2051
        %v2210 = vsub.f32 %v278, %v2051
        %v2211 = vsub.f32 %v279, %v2051
        %v2212 = vsub.f32 %v280, %v2051
        %v2213 = vsub.f32 %v281, %v2051
        %v2214 = vsub.f32 %v282, %v2051
        %v2215 = vsub.f32 %v283, %v2051
        %v2216 = vsub.f32 %v284, %v2051
        %v2217 = vsub.f32 %v285, %v2051
        %v2218 = vsub.f32 %v286, %v2051
        %v2219 = vsub.f32 %v287, %v2051
        %v2220 = vsub.f32 %v288, %v2051
        %v2221 = vsub.f32 %v289, %v2051
        %v2222 = vsub.f32 %v290, %v2051
        %v2223 = vsub.f32 %v291, %v2051
        %v2224 = vsub.f32 %v292, %v2051
        %v2225 = vsub.f32 %v293, %v2051
        %v2226 = vsub.f32 %v294, %v2051
        %v2227 = vsub.f32 %v295, %v2051
        %v2228 = vsub.f32 %v296, %v2051
        %v2229 = vsub.f32 %v297, %v2051
        %v2230 = vsub.f32 %v298, %v2051
        %v2231 = vsub.f32 %v299, %v2051
        %v2232 = vsub.f32 %v300, %v2051
        %v2233 = vsub.f32 %v301, %v2051
        %v2234 = vsub.f32 %v302, %v2051
        %v2235 = vsub.f32 %v303, %v2051
        %v2236 = vsub.f32 %v304, %v2051
        %v2237 = vsub.f32 %v305, %v2051
        %v2238 = vsub.f32 %v306, %v2051
        %v2239 = vsub.f32 %v307, %v2051
        %v2240 = vsub.f32 %v308, %v2051
        %v2241 = vsub.f32 %v309, %v2051
        %v2242 = vsub.f32 %v310, %v2051
        %v2243 = vsub.f32 %v311, %v2051
        %v2244 = vsub.f32 %v312, %v2051
        %v2245 = vsub.f32 %v313, %v2051
        %v2246 = vsub.f32 %v314, %v2051
        %v2247 = vsub.f32 %v315, %v2051
        %v2248 = vsub.f32 %v316, %v2051
        %v2249 = vsub.f32 %v317, %v2051
        %v2250 = vsub.f32 %v318, %v2051
        %v2251 = vsub.f32 %v319, %v2051
        %v2252 = vsub.f32 %v320, %v2051
        %v2253 = vsub.f32 %v321, %v2051
        %v2254 = vsub.f32 %v322, %v2051
        %v2255 = vsub.f32 %v323, %v2051
        %v2256 = vsub.f32 %v324, %v2051
        %v2257 = vsub.f32 %v325, %v2051
        %v2258 = vsub.f32 %v326, %v2051
        %v2259 = vsub.f32 %v327, %v2051
        %v2260 = vsub.f32 %v328, %v2051
        %v2261 = vsub.f32 %v329, %v2051
        %v2262 = vsub.f32 %v330, %v2051
        %v2263 = vsub.f32 %v331, %v2051
        %v2264 = vsub.f32 %v332, %v2051
        %v2265 = vsub.f32 %v333, %v2051
        %v2266 = vsub.f32 %v334, %v2051
        %v2267 = vsub.f32 %v335, %v2051
        %v2268 = vsub.f32 %v336, %v2051
        %v2269 = vsub.f32 %v337, %v2051
        %v2270 = vsub.f32 %v338, %v2051
        %v2271 = vsub.f32 %v339, %v2051
        %v2272 = vsub.f32 %v340, %v2051
        %v2273 = vsub.f32 %v341, %v2051
        %v2274 = vsub.f32 %v342, %v2051
        %v2275 = vsub.f32 %v343, %v2051
        %v2276 = vsub.f32 %v344, %v2051
        %v2277 = vsub.f32 %v345, %v2051
        %v2278 = vsub.f32 %v346, %v2051
        %v2279 = vsub.f32 %v347, %v2051
        %v2280 = vsub.f32 %v348, %v2051
        %v2281 = vsub.f32 %v349, %v2051
        %v2282 = vsub.f32 %v350, %v2051
        %v2283 = vsub.f32 %v351, %v2051
        %v2284 = vsub.f32 %v352, %v2051
        %v2285 = vsub.f32 %v353, %v2051
        %v2286 = vsub.f32 %v354, %v2051
        %v2287 = vsub.f32 %v355, %v2051
        %v2288 = vsub.f32 %v356, %v2051
        %v2289 = vsub.f32 %v357, %v2051
        %v2290 = vsub.f32 %v358, %v2051
        %v2291 = vsub.f32 %v359, %v2051
        %v2292 = vsub.f32 %v360, %v2051
        %v2293 = vsub.f32 %v361, %v2051
        %v2294 = vmul.f32 %v2054, 1.442695
        %v2295 = vpow.pop %v2294
        %v2296 = vmul.f32 %v2055, 1.442695
        %v2297 = vpow.pop %v2296
        %v2298 = vmul.f32 %v2056, 1.442695
        %v2299 = vpow.pop %v2298
        %v2300 = vmul.f32 %v2057, 1.442695
        %v2301 = vpow.pop %v2300
        %v2302 = vmul.f32 %v2058, 1.442695
        %v2303 = vpow.pop %v2302
        %v2304 = vmul.f32 %v2059, 1.442695
        %v2305 = vpow.pop %v2304
        %v2306 = vmul.f32 %v2060, 1.442695
        %v2307 = vpow.pop %v2306
        %v2308 = vmul.f32 %v2061, 1.442695
        %v2309 = vpow.pop %v2308
        %v2310 = vmul.f32 %v2062, 1.442695
        %v2311 = vpow.pop %v2310
        %v2312 = vmul.f32 %v2063, 1.442695
        %v2313 = vpow.pop %v2312
        %v2314 = vmul.f32 %v2064, 1.442695
        %v2315 = vpow.pop %v2314
        %v2316 = vmul.f32 %v2065, 1.442695
        %v2317 = vpow.pop %v2316
        %v2318 = vmul.f32 %v2066, 1.442695
        %v2319 = vpow.pop %v2318
        %v2320 = vmul.f32 %v2067, 1.442695
        %v2321 = vpow.pop %v2320
        %v2322 = vmul.f32 %v2068, 1.442695
        %v2323 = vpow.pop %v2322
        %v2324 = vmul.f32 %v2069, 1.442695
        %v2325 = vpow.pop %v2324
        %v2326 = vmul.f32 %v2070, 1.442695
        %v2327 = vpow.pop %v2326
        %v2328 = vmul.f32 %v2071, 1.442695
        %v2329 = vpow.pop %v2328
        %v2330 = vmul.f32 %v2072, 1.442695
        %v2331 = vpow.pop %v2330
        %v2332 = vmul.f32 %v2073, 1.442695
        %v2333 = vpow.pop %v2332
        %v2334 = vmul.f32 %v2074, 1.442695
        %v2335 = vpow.pop %v2334
        %v2336 = vmul.f32 %v2075, 1.442695
        %v2337 = vpow.pop %v2336
        %v2338 = vmul.f32 %v2076, 1.442695
        %v2339 = vpow.pop %v2338
        %v2340 = vmul.f32 %v2077, 1.442695
        %v2341 = vpow.pop %v2340
        %v2342 = vmul.f32 %v2078, 1.442695
        %v2343 = vpow.pop %v2342
        %v2344 = vmul.f32 %v2079, 1.442695
        %v2345 = vpow.pop %v2344
        %v2346 = vmul.f32 %v2080, 1.442695
        %v2347 = vpow.pop %v2346
        %v2348 = vmul.f32 %v2081, 1.442695
        %v2349 = vpow.pop %v2348
        %v2350 = vmul.f32 %v2082, 1.442695
        %v2351 = vpow.pop %v2350
        %v2352 = vmul.f32 %v2083, 1.442695
        %v2353 = vpow.pop %v2352
        %v2354 = vmul.f32 %v2084, 1.442695
        %v2355 = vpow.pop %v2354
        %v2356 = vmul.f32 %v2085, 1.442695
        %v2357 = vpow.pop %v2356
        %v2358 = vmul.f32 %v2086, 1.442695
        %v2359 = vpow.pop %v2358
        %v2360 = vmul.f32 %v2087, 1.442695
        %v2361 = vpow.pop %v2360
        %v2362 = vmul.f32 %v2088, 1.442695
        %v2363 = vpow.pop %v2362
        %v2364 = vmul.f32 %v2089, 1.442695
        %v2365 = vpow.pop %v2364
        %v2366 = vmul.f32 %v2090, 1.442695
        %v2367 = vpow.pop %v2366
        %v2368 = vmul.f32 %v2091, 1.442695
        %v2369 = vpow.pop %v2368
        %v2370 = vmul.f32 %v2092, 1.442695
        %v2371 = vpow.pop %v2370
        %v2372 = vmul.f32 %v2093, 1.442695
        %v2373 = vpow.pop %v2372
        %v2374 = vmul.f32 %v2094, 1.442695
        %v2375 = vpow.pop %v2374
        %v2376 = vmul.f32 %v2095, 1.442695
        %v2377 = vpow.pop %v2376
        %v2378 = vmul.f32 %v2096, 1.442695
        %v2379 = vpow.pop %v2378
        %v2380 = vmul.f32 %v2097, 1.442695
        %v2381 = vpow.pop %v2380
        %v2382 = vmul.f32 %v2098, 1.442695
        %v2383 = vpow.pop %v2382
        %v2384 = vmul.f32 %v2099, 1.442695
        %v2385 = vpow.pop %v2384
        %v2386 = vmul.f32 %v2100, 1.442695
        %v2387 = vpow.pop %v2386
        %v2388 = vmul.f32 %v2101, 1.442695
        %v2389 = vpow.pop %v2388
        %v2390 = vmul.f32 %v2102, 1.442695
        %v2391 = vpow.pop %v2390
        %v2392 = vmul.f32 %v2103, 1.442695
        %v2393 = vpow.pop %v2392
        %v2394 = vmul.f32 %v2104, 1.442695
        %v2395 = vpow.pop %v2394
        %v2396 = vmul.f32 %v2105, 1.442695
        %v2397 = vpow.pop %v2396
        %v2398 = vmul.f32 %v2106, 1.442695
        %v2399 = vpow.pop %v2398
        %v2400 = vmul.f32 %v2107, 1.442695
        %v2401 = vpow.pop %v2400
        %v2402 = vmul.f32 %v2108, 1.442695
        %v2403 = vpow.pop %v2402
        %v2404 = vmul.f32 %v2109, 1.442695
        %v2405 = vpow.pop %v2404
        %v2406 = vmul.f32 %v2110, 1.442695
        %v2407 = vpow.pop %v2406
        %v2408 = vmul.f32 %v2111, 1.442695
        %v2409 = vpow.pop %v2408
        %v2410 = vmul.f32 %v2112, 1.442695
        %v2411 = vpow.pop %v2410
        %v2412 = vmul.f32 %v2113, 1.442695
        %v2413 = vpow.pop %v2412
        %v2414 = vmul.f32 %v2114, 1.442695
        %v2415 = vpow.pop %v2414
        %v2416 = vmul.f32 %v2115, 1.442695
        %v2417 = vpow.pop %v2416
        %v2418 = vmul.f32 %v2116, 1.442695
        %v2419 = vpow.pop %v2418
        %v2420 = vmul.f32 %v2117, 1.442695
        %v2421 = vpow.pop %v2420
        %v2422 = vmul.f32 %v2118, 1.442695
        %v2423 = vpow.pop %v2422
        %v2424 = vmul.f32 %v2119, 1.442695
        %v2425 = vpow.pop %v2424
        %v2426 = vmul.f32 %v2120, 1.442695
        %v2427 = vpow.pop %v2426
        %v2428 = vmul.f32 %v2121, 1.442695
        %v2429 = vpow.pop %v2428
        %v2430 = vmul.f32 %v2122, 1.442695
        %v2431 = vpow.pop %v2430
        %v2432 = vmul.f32 %v2123, 1.442695
        %v2433 = vpow.pop %v2432
        %v2434 = vmul.f32 %v2124, 1.442695
        %v2435 = vpow.pop %v2434
        %v2436 = vmul.f32 %v2125, 1.442695
        %v2437 = vpow.pop %v2436
        %v2438 = vmul.f32 %v2126, 1.442695
        %v2439 = vpow.pop %v2438
        %v2440 = vmul.f32 %v2127, 1.442695
        %v2441 = vpow.pop %v2440
        %v2442 = vmul.f32 %v2128, 1.442695
        %v2443 = vpow.pop %v2442
        %v2444 = vmul.f32 %v2129, 1.442695
        %v2445 = vpow.pop %v2444
        %v2446 = vmul.f32 %v2130, 1.442695
        %v2447 = vpow.pop %v2446
        %v2448 = vmul.f32 %v2131, 1.442695
        %v2449 = vpow.pop %v2448
        %v2450 = vmul.f32 %v2132, 1.442695
        %v2451 = vpow.pop %v2450
        %v2452 = vmul.f32 %v2133, 1.442695
        %v2453 = vpow.pop %v2452
        %v2454 = vmul.f32 %v2134, 1.442695
        %v2455 = vpow.pop %v2454
        %v2456 = vmul.f32 %v2135, 1.442695
        %v2457 = vpow.pop %v2456
        %v2458 = vmul.f32 %v2136, 1.442695
        %v2459 = vpow.pop %v2458
        %v2460 = vmul.f32 %v2137, 1.442695
        %v2461 = vpow.pop %v2460
        %v2462 = vmul.f32 %v2138, 1.442695
        %v2463 = vpow.pop %v2462
        %v2464 = vmul.f32 %v2139, 1.442695
        %v2465 = vpow.pop %v2464
        %v2466 = vmul.f32 %v2140, 1.442695
        %v2467 = vpow.pop %v2466
        %v2468 = vmul.f32 %v2141, 1.442695
        %v2469 = vpow.pop %v2468
        %v2470 = vmul.f32 %v2142, 1.442695
        %v2471 = vpow.pop %v2470
        %v2472 = vmul.f32 %v2143, 1.442695
        %v2473 = vpow.pop %v2472
        %v2474 = vmul.f32 %v2144, 1.442695
        %v2475 = vpow.pop %v2474
        %v2476 = vmul.f32 %v2145, 1.442695
        %v2477 = vpow.pop %v2476
        %v2478 = vmul.f32 %v2146, 1.442695
        %v2479 = vpow.pop %v2478
        %v2480 = vmul.f32 %v2147, 1.442695
        %v2481 = vpow.pop %v2480
        %v2482 = vmul.f32 %v2148, 1.442695
        %v2483 = vpow.pop %v2482
        %v2484 = vmul.f32 %v2149, 1.442695
        %v2485 = vpow.pop %v2484
        %v2486 = vmul.f32 %v2150, 1.442695
        %v2487 = vpow.pop %v2486
        %v2488 = vmul.f32 %v2151, 1.442695
        %v2489 = vpow.pop %v2488
        %v2490 = vmul.f32 %v2152, 1.442695
        %v2491 = vpow.pop %v2490
        %v2492 = vmul.f32 %v2153, 1.442695
        %v2493 = vpow.pop %v2492
        %v2494 = vmul.f32 %v2154, 1.442695
        %v2495 = vpow.pop %v2494
        %v2496 = vmul.f32 %v2155, 1.442695
        %v2497 = vpow.pop %v2496
        %v2498 = vmul.f32 %v2156, 1.442695
        %v2499 = vpow.pop %v2498
        %v2500 = vmul.f32 %v2157, 1.442695
        %v2501 = vpow.pop %v2500
        %v2502 = vmul.f32 %v2158, 1.442695
        %v2503 = vpow.pop %v2502
        %v2504 = vmul.f32 %v2159, 1.442695
        %v2505 = vpow.pop %v2504
        %v2506 = vmul.f32 %v2160, 1.442695
        %v2507 = vpow.pop %v2506
        %v2508 = vmul.f32 %v2161, 1.442695
        %v2509 = vpow.pop %v2508
        %v2510 = vmul.f32 %v2162, 1.442695
        %v2511 = vpow.pop %v2510
        %v2512 = vmul.f32 %v2163, 1.442695
        %v2513 = vpow.pop %v2512
        %v2514 = vmul.f32 %v2164, 1.442695
        %v2515 = vpow.pop %v2514
        %v2516 = vmul.f32 %v2165, 1.442695
        %v2517 = vpow.pop %v2516
        %v2518 = vmul.f32 %v2166, 1.442695
        %v2519 = vpow.pop %v2518
        %v2520 = vmul.f32 %v2167, 1.442695
        %v2521 = vpow.pop %v2520
        %v2522 = vmul.f32 %v2168, 1.442695
        %v2523 = vpow.pop %v2522
        %v2524 = vmul.f32 %v2169, 1.442695
        %v2525 = vpow.pop %v2524
        %v2526 = vmul.f32 %v2170, 1.442695
        %v2527 = vpow.pop %v2526
        %v2528 = vmul.f32 %v2171, 1.442695
        %v2529 = vpow.pop %v2528
        %v2530 = vmul.f32 %v2172, 1.442695
        %v2531 = vpow.pop %v2530
        %v2532 = vmul.f32 %v2173, 1.442695
        %v2533 = vpow.pop %v2532
        %v2534 = vmul.f32 %v2174, 1.442695
        %v2535 = vpow.pop %v2534
        %v2536 = vmul.f32 %v2175, 1.442695
        %v2537 = vpow.pop %v2536
        %v2538 = vmul.f32 %v2176, 1.442695
        %v2539 = vpow.pop %v2538
        %v2540 = vmul.f32 %v2177, 1.442695
        %v2541 = vpow.pop %v2540
        %v2542 = vmul.f32 %v2178, 1.442695
        %v2543 = vpow.pop %v2542
        %v2544 = vmul.f32 %v2179, 1.442695
        %v2545 = vpow.pop %v2544
        %v2546 = vmul.f32 %v2180, 1.442695
        %v2547 = vpow.pop %v2546
        %v2548 = vmul.f32 %v2181, 1.442695
        %v2549 = vpow.pop %v2548
        %v2550 = vmul.f32 %v2182, 1.442695
        %v2551 = vpow.pop %v2550
        %v2552 = vmul.f32 %v2183, 1.442695
        %v2553 = vpow.pop %v2552
        %v2554 = vmul.f32 %v2184, 1.442695
        %v2555 = vpow.pop %v2554
        %v2556 = vmul.f32 %v2185, 1.442695
        %v2557 = vpow.pop %v2556
        %v2558 = vmul.f32 %v2186, 1.442695
        %v2559 = vpow.pop %v2558
        %v2560 = vmul.f32 %v2187, 1.442695
        %v2561 = vpow.pop %v2560
        %v2562 = vmul.f32 %v2188, 1.442695
        %v2563 = vpow.pop %v2562
        %v2564 = vmul.f32 %v2189, 1.442695
        %v2565 = vpow.pop %v2564
        %v2566 = vmul.f32 %v2190, 1.442695
        %v2567 = vpow.pop %v2566
        %v2568 = vmul.f32 %v2191, 1.442695
        %v2569 = vpow.pop %v2568
        %v2570 = vmul.f32 %v2192, 1.442695
        %v2571 = vpow.pop %v2570
        %v2572 = vmul.f32 %v2193, 1.442695
        %v2573 = vpow.pop %v2572
        %v2574 = vmul.f32 %v2194, 1.442695
        %v2575 = vpow.pop %v2574
        %v2576 = vmul.f32 %v2195, 1.442695
        %v2577 = vpow.pop %v2576
        %v2578 = vmul.f32 %v2196, 1.442695
        %v2579 = vpow.pop %v2578
        %v2580 = vmul.f32 %v2197, 1.442695
        %v2581 = vpow.pop %v2580
        %v2582 = vmul.f32 %v2198, 1.442695
        %v2583 = vpow.pop %v2582
        %v2584 = vmul.f32 %v2199, 1.442695
        %v2585 = vpow.pop %v2584
        %v2586 = vmul.f32 %v2200, 1.442695
        %v2587 = vpow.pop %v2586
        %v2588 = vmul.f32 %v2201, 1.442695
        %v2589 = vpow.pop %v2588
        %v2590 = vmul.f32 %v2202, 1.442695
        %v2591 = vpow.pop %v2590
        %v2592 = vmul.f32 %v2203, 1.442695
        %v2593 = vpow.pop %v2592
        %v2594 = vmul.f32 %v2204, 1.442695
        %v2595 = vpow.pop %v2594
        %v2596 = vmul.f32 %v2205, 1.442695
        %v2597 = vpow.pop %v2596
        %v2598 = vmul.f32 %v2206, 1.442695
        %v2599 = vpow.pop %v2598
        %v2600 = vmul.f32 %v2207, 1.442695
        %v2601 = vpow.pop %v2600
        %v2602 = vmul.f32 %v2208, 1.442695
        %v2603 = vpow.pop %v2602
        %v2604 = vmul.f32 %v2209, 1.442695
        %v2605 = vpow.pop %v2604
        %v2606 = vmul.f32 %v2210, 1.442695
        %v2607 = vpow.pop %v2606
        %v2608 = vmul.f32 %v2211, 1.442695
        %v2609 = vpow.pop %v2608
        %v2610 = vmul.f32 %v2212, 1.442695
        %v2611 = vpow.pop %v2610
        %v2612 = vmul.f32 %v2213, 1.442695
        %v2613 = vpow.pop %v2612
        %v2614 = vmul.f32 %v2214, 1.442695
        %v2615 = vpow.pop %v2614
        %v2616 = vmul.f32 %v2215, 1.442695
        %v2617 = vpow.pop %v2616
        %v2618 = vmul.f32 %v2216, 1.442695
        %v2619 = vpow.pop %v2618
        %v2620 = vmul.f32 %v2217, 1.442695
        %v2621 = vpow.pop %v2620
        %v2622 = vmul.f32 %v2218, 1.442695
        %v2623 = vpow.pop %v2622
        %v2624 = vmul.f32 %v2219, 1.442695
        %v2625 = vpow.pop %v2624
        %v2626 = vmul.f32 %v2220, 1.442695
        %v2627 = vpow.pop %v2626
        %v2628 = vmul.f32 %v2221, 1.442695
        %v2629 = vpow.pop %v2628
        %v2630 = vmul.f32 %v2222, 1.442695
        %v2631 = vpow.pop %v2630
        %v2632 = vmul.f32 %v2223, 1.442695
        %v2633 = vpow.pop %v2632
        %v2634 = vmul.f32 %v2224, 1.442695
        %v2635 = vpow.pop %v2634
        %v2636 = vmul.f32 %v2225, 1.442695
        %v2637 = vpow.pop %v2636
        %v2638 = vmul.f32 %v2226, 1.442695
        %v2639 = vpow.pop %v2638
        %v2640 = vmul.f32 %v2227, 1.442695
        %v2641 = vpow.pop %v2640
        %v2642 = vmul.f32 %v2228, 1.442695
        %v2643 = vpow.pop %v2642
        %v2644 = vmul.f32 %v2229, 1.442695
        %v2645 = vpow.pop %v2644
        %v2646 = vmul.f32 %v2230, 1.442695
        %v2647 = vpow.pop %v2646
        %v2648 = vmul.f32 %v2231, 1.442695
        %v2649 = vpow.pop %v2648
        %v2650 = vmul.f32 %v2232, 1.442695
        %v2651 = vpow.pop %v2650
        %v2652 = vmul.f32 %v2233, 1.442695
        %v2653 = vpow.pop %v2652
        %v2654 = vmul.f32 %v2234, 1.442695
        %v2655 = vpow.pop %v2654
        %v2656 = vmul.f32 %v2235, 1.442695
        %v2657 = vpow.pop %v2656
        %v2658 = vmul.f32 %v2236, 1.442695
        %v2659 = vpow.pop %v2658
        %v2660 = vmul.f32 %v2237, 1.442695
        %v2661 = vpow.pop %v2660
        %v2662 = vmul.f32 %v2238, 1.442695
        %v2663 = vpow.pop %v2662
        %v2664 = vmul.f32 %v2239, 1.442695
        %v2665 = vpow.pop %v2664
        %v2666 = vmul.f32 %v2240, 1.442695
        %v2667 = vpow.pop %v2666
        %v2668 = vmul.f32 %v2241, 1.442695
        %v2669 = vpow.pop %v2668
        %v2670 = vmul.f32 %v2242, 1.442695
        %v2671 = vpow.pop %v2670
        %v2672 = vmul.f32 %v2243, 1.442695
        %v2673 = vpow.pop %v2672
        %v2674 = vmul.f32 %v2244, 1.442695
        %v2675 = vpow.pop %v2674
        %v2676 = vmul.f32 %v2245, 1.442695
        %v2677 = vpow.pop %v2676
        %v2678 = vmul.f32 %v2246, 1.442695
        %v2679 = vpow.pop %v2678
        %v2680 = vmul.f32 %v2247, 1.442695
        %v2681 = vpow.pop %v2680
        %v2682 = vmul.f32 %v2248, 1.442695
        %v2683 = vpow.pop %v2682
        %v2684 = vmul.f32 %v2249, 1.442695
        %v2685 = vpow.pop %v2684
        %v2686 = vmul.f32 %v2250, 1.442695
        %v2687 = vpow.pop %v2686
        %v2688 = vmul.f32 %v2251, 1.442695
        %v2689 = vpow.pop %v2688
        %v2690 = vmul.f32 %v2252, 1.442695
        %v2691 = vpow.pop %v2690
        %v2692 = vmul.f32 %v2253, 1.442695
        %v2693 = vpow.pop %v2692
        %v2694 = vmul.f32 %v2254, 1.442695
        %v2695 = vpow.pop %v2694
        %v2696 = vmul.f32 %v2255, 1.442695
        %v2697 = vpow.pop %v2696
        %v2698 = vmul.f32 %v2256, 1.442695
        %v2699 = vpow.pop %v2698
        %v2700 = vmul.f32 %v2257, 1.442695
        %v2701 = vpow.pop %v2700
        %v2702 = vmul.f32 %v2258, 1.442695
        %v2703 = vpow.pop %v2702
        %v2704 = vmul.f32 %v2259, 1.442695
        %v2705 = vpow.pop %v2704
        %v2706 = vmul.f32 %v2260, 1.442695
        %v2707 = vpow.pop %v2706
        %v2708 = vmul.f32 %v2261, 1.442695
        %v2709 = vpow.pop %v2708
        %v2710 = vmul.f32 %v2262, 1.442695
        %v2711 = vpow.pop %v2710
        %v2712 = vmul.f32 %v2263, 1.442695
        %v2713 = vpow.pop %v2712
        %v2714 = vmul.f32 %v2264, 1.442695
        %v2715 = vpow.pop %v2714
        %v2716 = vmul.f32 %v2265, 1.442695
        %v2717 = vpow.pop %v2716
        %v2718 = vmul.f32 %v2266, 1.442695
        %v2719 = vpow.pop %v2718
        %v2720 = vmul.f32 %v2267, 1.442695
        %v2721 = vpow.pop %v2720
        %v2722 = vmul.f32 %v2268, 1.442695
        %v2723 = vpow.pop %v2722
        %v2724 = vmul.f32 %v2269, 1.442695
        %v2725 = vpow.pop %v2724
        %v2726 = vmul.f32 %v2270, 1.442695
        %v2727 = vpow.pop %v2726
        %v2728 = vmul.f32 %v2271, 1.442695
        %v2729 = vpow.pop %v2728
        %v2730 = vmul.f32 %v2272, 1.442695
        %v2731 = vpow.pop %v2730
        %v2732 = vmul.f32 %v2273, 1.442695
        %v2733 = vpow.pop %v2732
        %v2734 = vmul.f32 %v2274, 1.442695
        %v2735 = vpow.pop %v2734
        %v2736 = vmul.f32 %v2275, 1.442695
        %v2737 = vpow.pop %v2736
        %v2738 = vmul.f32 %v2276, 1.442695
        %v2739 = vpow.pop %v2738
        %v2740 = vmul.f32 %v2277, 1.442695
        %v2741 = vpow.pop %v2740
        %v2742 = vmul.f32 %v2278, 1.442695
        %v2743 = vpow.pop %v2742
        %v2744 = vmul.f32 %v2279, 1.442695
        %v2745 = vpow.pop %v2744
        %v2746 = vmul.f32 %v2280, 1.442695
        %v2747 = vpow.pop %v2746
        %v2748 = vmul.f32 %v2281, 1.442695
        %v2749 = vpow.pop %v2748
        %v2750 = vmul.f32 %v2282, 1.442695
        %v2751 = vpow.pop %v2750
        %v2752 = vmul.f32 %v2283, 1.442695
        %v2753 = vpow.pop %v2752
        %v2754 = vmul.f32 %v2284, 1.442695
        %v2755 = vpow.pop %v2754
        %v2756 = vmul.f32 %v2285, 1.442695
        %v2757 = vpow.pop %v2756
        %v2758 = vmul.f32 %v2286, 1.442695
        %v2759 = vpow.pop %v2758
        %v2760 = vmul.f32 %v2287, 1.442695
        %v2761 = vpow.pop %v2760
        %v2762 = vmul.f32 %v2288, 1.442695
        %v2763 = vpow.pop %v2762
        %v2764 = vmul.f32 %v2289, 1.442695
        %v2765 = vpow.pop %v2764
        %v2766 = vmul.f32 %v2290, 1.442695
        %v2767 = vpow.pop %v2766
        %v2768 = vmul.f32 %v2291, 1.442695
        %v2769 = vpow.pop %v2768
        %v2770 = vmul.f32 %v2292, 1.442695
        %v2771 = vpow.pop %v2770
        %v2772 = vmul.f32 %v2293, 1.442695
        %v2773 = vpow.pop %v2772
        %v3012 = vcombine.high %v2295, %v2295
        %v3013 = vcombine.high %v2297, %v2297
        %v3014 = vcombine.high %v2299, %v2299
        %v3015 = vcombine.high %v2301, %v2301
        %v3016 = vcombine.high %v2303, %v2303
        %v3017 = vcombine.high %v2305, %v2305
        %v3018 = vcombine.high %v2307, %v2307
        %v3019 = vcombine.high %v2309, %v2309
        %v3020 = vcombine.high %v2311, %v2311
        %v3021 = vcombine.high %v2313, %v2313
        %v3022 = vcombine.high %v2315, %v2315
        %v3023 = vcombine.high %v2317, %v2317
        %v3024 = vcombine.high %v2319, %v2319
        %v3025 = vcombine.high %v2321, %v2321
        %v3026 = vcombine.high %v2323, %v2323
        %v3027 = vcombine.high %v2325, %v2325
        %v3028 = vcombine.high %v2327, %v2327
        %v3029 = vcombine.high %v2329, %v2329
        %v3030 = vcombine.high %v2331, %v2331
        %v3031 = vcombine.high %v2333, %v2333
        %v3032 = vcombine.high %v2335, %v2335
        %v3033 = vcombine.high %v2337, %v2337
        %v3034 = vcombine.high %v2339, %v2339
        %v3035 = vcombine.high %v2341, %v2341
        %v3036 = vcombine.high %v2343, %v2343
        %v3037 = vcombine.high %v2345, %v2345
        %v3038 = vcombine.high %v2347, %v2347
        %v3039 = vcombine.high %v2349, %v2349
        %v3040 = vcombine.high %v2351, %v2351
        %v3041 = vcombine.high %v2353, %v2353
        %v3042 = vcombine.high %v2355, %v2355
        %v3043 = vcombine.high %v2357, %v2357
        %v3044 = vcombine.high %v2359, %v2359
        %v3045 = vcombine.high %v2361, %v2361
        %v3046 = vcombine.high %v2363, %v2363
        %v3047 = vcombine.high %v2365, %v2365
        %v3048 = vcombine.high %v2367, %v2367
        %v3049 = vcombine.high %v2369, %v2369
        %v3050 = vcombine.high %v2371, %v2371
        %v3051 = vcombine.high %v2373, %v2373
        %v3052 = vcombine.high %v2375, %v2375
        %v3053 = vcombine.high %v2377, %v2377
        %v3054 = vcombine.high %v2379, %v2379
        %v3055 = vcombine.high %v2381, %v2381
        %v3056 = vcombine.high %v2383, %v2383
        %v3057 = vcombine.high %v2385, %v2385
        %v3058 = vcombine.high %v2387, %v2387
        %v3059 = vcombine.high %v2389, %v2389
        %v3060 = vcombine.high %v2391, %v2391
        %v3061 = vcombine.high %v2393, %v2393
        %v3062 = vcombine.high %v2395, %v2395
        %v3063 = vcombine.high %v2397, %v2397
        %v3064 = vcombine.high %v2399, %v2399
        %v3065 = vcombine.high %v2401, %v2401
        %v3066 = vcombine.high %v2403, %v2403
        %v3067 = vcombine.high %v2405, %v2405
        %v3068 = vcombine.high %v2407, %v2407
        %v3069 = vcombine.high %v2409, %v2409
        %v3070 = vcombine.high %v2411, %v2411
        %v3071 = vcombine.high %v2413, %v2413
        %v3072 = vcombine.high %v2415, %v2415
        %v3073 = vcombine.high %v2417, %v2417
        %v3074 = vcombine.high %v2419, %v2419
        %v3075 = vcombine.high %v2421, %v2421
        %v3076 = vcombine.high %v2423, %v2423
        %v3077 = vcombine.high %v2425, %v2425
        %v3078 = vcombine.high %v2427, %v2427
        %v3079 = vcombine.high %v2429, %v2429
        %v3080 = vcombine.high %v2431, %v2431
        %v3081 = vcombine.high %v2433, %v2433
        %v3082 = vcombine.high %v2435, %v2435
        %v3083 = vcombine.high %v2437, %v2437
        %v3084 = vcombine.high %v2439, %v2439
        %v3085 = vcombine.high %v2441, %v2441
        %v3086 = vcombine.high %v2443, %v2443
        %v3087 = vcombine.high %v2445, %v2445
        %v3088 = vcombine.high %v2447, %v2447
        %v3089 = vcombine.high %v2449, %v2449
        %v3090 = vcombine.high %v2451, %v2451
        %v3091 = vcombine.high %v2453, %v2453
        %v3092 = vcombine.high %v2455, %v2455
        %v3093 = vcombine.high %v2457, %v2457
        %v3094 = vcombine.high %v2459, %v2459
        %v3095 = vcombine.high %v2461, %v2461
        %v3096 = vcombine.high %v2463, %v2463
        %v3097 = vcombine.high %v2465, %v2465
        %v3098 = vcombine.high %v2467, %v2467
        %v3099 = vcombine.high %v2469, %v2469
        %v3100 = vcombine.high %v2471, %v2471
        %v3101 = vcombine.high %v2473, %v2473
        %v3102 = vcombine.high %v2475, %v2475
        %v3103 = vcombine.high %v2477, %v2477
        %v3104 = vcombine.high %v2479, %v2479
        %v3105 = vcombine.high %v2481, %v2481
        %v3106 = vcombine.high %v2483, %v2483
        %v3107 = vcombine.high %v2485, %v2485
        %v3108 = vcombine.high %v2487, %v2487
        %v3109 = vcombine.high %v2489, %v2489
        %v3110 = vcombine.high %v2491, %v2491
        %v3111 = vcombine.high %v2493, %v2493
        %v3112 = vcombine.high %v2495, %v2495
        %v3113 = vcombine.high %v2497, %v2497
        %v3114 = vcombine.high %v2499, %v2499
        %v3115 = vcombine.high %v2501, %v2501
        %v3116 = vcombine.high %v2503, %v2503
        %v3117 = vcombine.high %v2505, %v2505
        %v3118 = vcombine.high %v2507, %v2507
        %v3119 = vcombine.high %v2509, %v2509
        %v3120 = vcombine.high %v2511, %v2511
        %v3121 = vcombine.high %v2513, %v2513
        %v3122 = vcombine.high %v2515, %v2515
        %v3123 = vcombine.high %v2517, %v2517
        %v3124 = vcombine.high %v2519, %v2519
        %v3125 = vcombine.high %v2521, %v2521
        %v3126 = vcombine.high %v2523, %v2523
        %v3127 = vcombine.high %v2525, %v2525
        %v3128 = vcombine.high %v2527, %v2527
        %v3129 = vcombine.high %v2529, %v2529
        %v3130 = vcombine.high %v2531, %v2531
        %v3131 = vcombine.high %v2535, %v2535
        %v3132 = vcombine.high %v2537, %v2537
        %v3133 = vcombine.high %v2539, %v2539
        %v3134 = vcombine.high %v2541, %v2541
        %v3135 = vcombine.high %v2543, %v2543
        %v3136 = vcombine.high %v2545, %v2545
        %v3137 = vcombine.high %v2547, %v2547
        %v3138 = vcombine.high %v2549, %v2549
        %v3139 = vcombine.high %v2551, %v2551
        %v3140 = vcombine.high %v2553, %v2553
        %v3141 = vcombine.high %v2555, %v2555
        %v3142 = vcombine.high %v2557, %v2557
        %v3143 = vcombine.high %v2559, %v2559
        %v3144 = vcombine.high %v2561, %v2561
        %v3145 = vcombine.high %v2563, %v2563
        %v3146 = vcombine.high %v2565, %v2565
        %v3147 = vcombine.high %v2567, %v2567
        %v3148 = vcombine.high %v2569, %v2569
        %v3149 = vcombine.high %v2571, %v2571
        %v3150 = vcombine.high %v2573, %v2573
        %v3151 = vcombine.high %v2575, %v2575
        %v3152 = vcombine.high %v2577, %v2577
        %v3153 = vcombine.high %v2579, %v2579
        %v3154 = vcombine.high %v2581, %v2581
        %v3155 = vcombine.high %v2583, %v2583
        %v3156 = vcombine.high %v2585, %v2585
        %v3157 = vcombine.high %v2587, %v2587
        %v3158 = vcombine.high %v2589, %v2589
        %v3159 = vcombine.high %v2591, %v2591
        %v3160 = vcombine.high %v2593, %v2593
        %v3161 = vcombine.high %v2595, %v2595
        %v3162 = vcombine.high %v2597, %v2597
        %v3163 = vcombine.high %v2599, %v2599
        %v3164 = vcombine.high %v2601, %v2601
        %v3165 = vcombine.high %v2603, %v2603
        %v3166 = vcombine.high %v2605, %v2605
        %v3167 = vcombine.high %v2607, %v2607
        %v3168 = vcombine.high %v2609, %v2609
        %v3169 = vcombine.high %v2611, %v2611
        %v3170 = vcombine.high %v2613, %v2613
        %v3171 = vcombine.high %v2615, %v2615
        %v3172 = vcombine.high %v2617, %v2617
        %v3173 = vcombine.high %v2619, %v2619
        %v3174 = vcombine.high %v2621, %v2621
        %v3175 = vcombine.high %v2623, %v2623
        %v3176 = vcombine.high %v2625, %v2625
        %v3177 = vcombine.high %v2627, %v2627
        %v3178 = vcombine.high %v2629, %v2629
        %v3179 = vcombine.high %v2631, %v2631
        %v3180 = vcombine.high %v2633, %v2633
        %v3181 = vcombine.high %v2635, %v2635
        %v3182 = vcombine.high %v2637, %v2637
        %v3183 = vcombine.high %v2639, %v2639
        %v3184 = vcombine.high %v2641, %v2641
        %v3185 = vcombine.high %v2643, %v2643
        %v3186 = vcombine.high %v2645, %v2645
        %v3187 = vcombine.high %v2647, %v2647
        %v3188 = vcombine.high %v2649, %v2649
        %v3189 = vcombine.high %v2651, %v2651
        %v3190 = vcombine.high %v2653, %v2653
        %v3191 = vcombine.high %v2655, %v2655
        %v3192 = vcombine.high %v2657, %v2657
        %v3193 = vcombine.high %v2659, %v2659
        %v3194 = vcombine.high %v2661, %v2661
        %v3195 = vcombine.high %v2663, %v2663
        %v3196 = vcombine.high %v2665, %v2665
        %v3197 = vcombine.high %v2667, %v2667
        %v3198 = vcombine.high %v2669, %v2669
        %v3199 = vcombine.high %v2671, %v2671
        %v3200 = vcombine.high %v2673, %v2673
        %v3201 = vcombine.high %v2675, %v2675
        %v3202 = vcombine.high %v2677, %v2677
        %v3203 = vcombine.high %v2679, %v2679
        %v3204 = vcombine.high %v2681, %v2681
        %v3205 = vcombine.high %v2683, %v2683
        %v3206 = vcombine.high %v2685, %v2685
        %v3207 = vcombine.high %v2687, %v2687
        %v3208 = vcombine.high %v2689, %v2689
        %v3209 = vcombine.high %v2691, %v2691
        %v3210 = vcombine.high %v2693, %v2693
        %v3211 = vcombine.high %v2695, %v2695
        %v3212 = vcombine.high %v2697, %v2697
        %v3213 = vcombine.high %v2699, %v2699
        %v3214 = vcombine.high %v2701, %v2701
        %v3215 = vcombine.high %v2703, %v2703
        %v3216 = vcombine.high %v2705, %v2705
        %v3217 = vcombine.high %v2707, %v2707
        %v3218 = vcombine.high %v2709, %v2709
        %v3219 = vcombine.high %v2711, %v2711
        %v3220 = vcombine.high %v2713, %v2713
        %v3221 = vcombine.high %v2715, %v2715
        %v3222 = vcombine.high %v2717, %v2717
        %v3223 = vcombine.high %v2719, %v2719
        %v3224 = vcombine.high %v2721, %v2721
        %v3225 = vcombine.high %v2723, %v2723
        %v3226 = vcombine.high %v2725, %v2725
        %v3227 = vcombine.high %v2727, %v2727
        %v3228 = vcombine.high %v2729, %v2729
        %v3229 = vcombine.high %v2731, %v2731
        %v3230 = vcombine.high %v2733, %v2733
        %v3231 = vcombine.high %v2735, %v2735
        %v3232 = vcombine.high %v2737, %v2737
        %v3233 = vcombine.high %v2739, %v2739
        %v3234 = vcombine.high %v2741, %v2741
        %v3235 = vcombine.high %v2743, %v2743
        %v3236 = vcombine.high %v2745, %v2745
        %v3237 = vcombine.high %v2747, %v2747
        %v3238 = vcombine.high %v2749, %v2749
        %v3239 = vcombine.high %v2751, %v2751
        %v3240 = vcombine.high %v2753, %v2753
        %v3241 = vcombine.high %v2755, %v2755
        %v3242 = vcombine.high %v2757, %v2757
        %v3243 = vcombine.high %v2759, %v2759
        %v3244 = vcombine.high %v2761, %v2761
        %v3245 = vcombine.high %v2763, %v2763
        %v3246 = vcombine.high %v2765, %v2765
        %v3247 = vcombine.high %v2767, %v2767
        %v3248 = vcombine.high %v2769, %v2769
        %v3249 = vcombine.high %v2771, %v2771
        %v3488 = vsel %vm1076, %v2295, 0.0
        %v3489 = vsel %vm1076, %v3012, 0.0
        %v3490 = vadd.f32 %v3488, %v3489
        %v3491 = vsel %vm1076, %v2297, 0.0
        %v3492 = vadd.f32 %v3490, %v3491
        %v3493 = vsel %vm1076, %v3013, 0.0
        %v3494 = vadd.f32 %v3492, %v3493
        %v3495 = vsel %vm1076, %v2299, 0.0
        %v3496 = vadd.f32 %v3494, %v3495
        %v3497 = vsel %vm1076, %v3014, 0.0
        %v3498 = vadd.f32 %v3496, %v3497
        %v3499 = vsel %vm1076, %v2301, 0.0
        %v3500 = vadd.f32 %v3498, %v3499
        %v3501 = vsel %vm1076, %v3015, 0.0
        %v3502 = vadd.f32 %v3500, %v3501
        %v3503 = vsel %vm1076, %v2303, 0.0
        %v3504 = vadd.f32 %v3502, %v3503
        %v3505 = vsel %vm1076, %v3016, 0.0
        %v3506 = vadd.f32 %v3504, %v3505
        %v3507 = vsel %vm1076, %v2305, 0.0
        %v3508 = vadd.f32 %v3506, %v3507
        %v3509 = vsel %vm1076, %v3017, 0.0
        %v3510 = vadd.f32 %v3508, %v3509
        %v3511 = vsel %vm1076, %v2307, 0.0
        %v3512 = vadd.f32 %v3510, %v3511
        %v3513 = vsel %vm1076, %v3018, 0.0
        %v3514 = vadd.f32 %v3512, %v3513
        %v3515 = vsel %vm1076, %v2309, 0.0
        %v3516 = vadd.f32 %v3514, %v3515
        %v3517 = vsel %vm1076, %v3019, 0.0
        %v3518 = vadd.f32 %v3516, %v3517
        %v3519 = vsel %vm1076, %v2311, 0.0
        %v3520 = vadd.f32 %v3518, %v3519
        %v3521 = vsel %vm1076, %v3020, 0.0
        %v3522 = vadd.f32 %v3520, %v3521
        %v3523 = vsel %vm1076, %v2313, 0.0
        %v3524 = vadd.f32 %v3522, %v3523
        %v3525 = vsel %vm1076, %v3021, 0.0
        %v3526 = vadd.f32 %v3524, %v3525
        %v3527 = vsel %vm1076, %v2315, 0.0
        %v3528 = vadd.f32 %v3526, %v3527
        %v3529 = vsel %vm1076, %v3022, 0.0
        %v3530 = vadd.f32 %v3528, %v3529
        %v3531 = vsel %vm1076, %v2317, 0.0
        %v3532 = vadd.f32 %v3530, %v3531
        %v3533 = vsel %vm1076, %v3023, 0.0
        %v3534 = vadd.f32 %v3532, %v3533
        %v3535 = vsel %vm1076, %v2319, 0.0
        %v3536 = vadd.f32 %v3534, %v3535
        %v3537 = vsel %vm1076, %v3024, 0.0
        %v3538 = vadd.f32 %v3536, %v3537
        %v3539 = vsel %vm1076, %v2321, 0.0
        %v3540 = vadd.f32 %v3538, %v3539
        %v3541 = vsel %vm1076, %v3025, 0.0
        %v3542 = vadd.f32 %v3540, %v3541
        %v3543 = vsel %vm1076, %v2323, 0.0
        %v3544 = vadd.f32 %v3542, %v3543
        %v3545 = vsel %vm1076, %v3026, 0.0
        %v3546 = vadd.f32 %v3544, %v3545
        %v3547 = vsel %vm1076, %v2325, 0.0
        %v3548 = vadd.f32 %v3546, %v3547
        %v3549 = vsel %vm1076, %v3027, 0.0
        %v3550 = vadd.f32 %v3548, %v3549
        %v3551 = vsel %vm1076, %v2327, 0.0
        %v3552 = vadd.f32 %v3550, %v3551
        %v3553 = vsel %vm1076, %v3028, 0.0
        %v3554 = vadd.f32 %v3552, %v3553
        %v3555 = vsel %vm1076, %v2329, 0.0
        %v3556 = vadd.f32 %v3554, %v3555
        %v3557 = vsel %vm1076, %v3029, 0.0
        %v3558 = vadd.f32 %v3556, %v3557
        %v3559 = vsel %vm1076, %v2331, 0.0
        %v3560 = vadd.f32 %v3558, %v3559
        %v3561 = vsel %vm1076, %v3030, 0.0
        %v3562 = vadd.f32 %v3560, %v3561
        %v3563 = vsel %vm1076, %v2333, 0.0
        %v3564 = vadd.f32 %v3562, %v3563
        %v3565 = vsel %vm1076, %v3031, 0.0
        %v3566 = vadd.f32 %v3564, %v3565
        %v3567 = vsel %vm1076, %v2335, 0.0
        %v3568 = vadd.f32 %v3566, %v3567
        %v3569 = vsel %vm1076, %v3032, 0.0
        %v3570 = vadd.f32 %v3568, %v3569
        %v3571 = vsel %vm1076, %v2337, 0.0
        %v3572 = vadd.f32 %v3570, %v3571
        %v3573 = vsel %vm1076, %v3033, 0.0
        %v3574 = vadd.f32 %v3572, %v3573
        %v3575 = vsel %vm1076, %v2339, 0.0
        %v3576 = vadd.f32 %v3574, %v3575
        %v3577 = vsel %vm1076, %v3034, 0.0
        %v3578 = vadd.f32 %v3576, %v3577
        %v3579 = vsel %vm1076, %v2341, 0.0
        %v3580 = vadd.f32 %v3578, %v3579
        %v3581 = vsel %vm1076, %v3035, 0.0
        %v3582 = vadd.f32 %v3580, %v3581
        %v3583 = vsel %vm1076, %v2343, 0.0
        %v3584 = vadd.f32 %v3582, %v3583
        %v3585 = vsel %vm1076, %v3036, 0.0
        %v3586 = vadd.f32 %v3584, %v3585
        %v3587 = vsel %vm1076, %v2345, 0.0
        %v3588 = vadd.f32 %v3586, %v3587
        %v3589 = vsel %vm1076, %v3037, 0.0
        %v3590 = vadd.f32 %v3588, %v3589
        %v3591 = vsel %vm1076, %v2347, 0.0
        %v3592 = vadd.f32 %v3590, %v3591
        %v3593 = vsel %vm1076, %v3038, 0.0
        %v3594 = vadd.f32 %v3592, %v3593
        %v3595 = vsel %vm1076, %v2349, 0.0
        %v3596 = vadd.f32 %v3594, %v3595
        %v3597 = vsel %vm1076, %v3039, 0.0
        %v3598 = vadd.f32 %v3596, %v3597
        %v3599 = vsel %vm1076, %v2351, 0.0
        %v3600 = vadd.f32 %v3598, %v3599
        %v3601 = vsel %vm1076, %v3040, 0.0
        %v3602 = vadd.f32 %v3600, %v3601
        %v3603 = vsel %vm1076, %v2353, 0.0
        %v3604 = vadd.f32 %v3602, %v3603
        %v3605 = vsel %vm1076, %v3041, 0.0
        %v3606 = vadd.f32 %v3604, %v3605
        %v3607 = vsel %vm1076, %v2355, 0.0
        %v3608 = vadd.f32 %v3606, %v3607
        %v3609 = vsel %vm1076, %v3042, 0.0
        %v3610 = vadd.f32 %v3608, %v3609
        %v3611 = vsel %vm1076, %v2357, 0.0
        %v3612 = vadd.f32 %v3610, %v3611
        %v3613 = vsel %vm1076, %v3043, 0.0
        %v3614 = vadd.f32 %v3612, %v3613
        %v3615 = vsel %vm1076, %v2359, 0.0
        %v3616 = vadd.f32 %v3614, %v3615
        %v3617 = vsel %vm1076, %v3044, 0.0
        %v3618 = vadd.f32 %v3616, %v3617
        %v3619 = vsel %vm1076, %v2361, 0.0
        %v3620 = vadd.f32 %v3618, %v3619
        %v3621 = vsel %vm1076, %v3045, 0.0
        %v3622 = vadd.f32 %v3620, %v3621
        %v3623 = vsel %vm1076, %v2363, 0.0
        %v3624 = vadd.f32 %v3622, %v3623
        %v3625 = vsel %vm1076, %v3046, 0.0
        %v3626 = vadd.f32 %v3624, %v3625
        %v3627 = vsel %vm1076, %v2365, 0.0
        %v3628 = vadd.f32 %v3626, %v3627
        %v3629 = vsel %vm1076, %v3047, 0.0
        %v3630 = vadd.f32 %v3628, %v3629
        %v3631 = vsel %vm1076, %v2367, 0.0
        %v3632 = vadd.f32 %v3630, %v3631
        %v3633 = vsel %vm1076, %v3048, 0.0
        %v3634 = vadd.f32 %v3632, %v3633
        %v3635 = vsel %vm1076, %v2369, 0.0
        %v3636 = vadd.f32 %v3634, %v3635
        %v3637 = vsel %vm1076, %v3049, 0.0
        %v3638 = vadd.f32 %v3636, %v3637
        %v3639 = vsel %vm1076, %v2371, 0.0
        %v3640 = vadd.f32 %v3638, %v3639
        %v3641 = vsel %vm1076, %v3050, 0.0
        %v3642 = vadd.f32 %v3640, %v3641
        %v3643 = vsel %vm1076, %v2373, 0.0
        %v3644 = vadd.f32 %v3642, %v3643
        %v3645 = vsel %vm1076, %v3051, 0.0
        %v3646 = vadd.f32 %v3644, %v3645
        %v3647 = vsel %vm1076, %v2375, 0.0
        %v3648 = vadd.f32 %v3646, %v3647
        %v3649 = vsel %vm1076, %v3052, 0.0
        %v3650 = vadd.f32 %v3648, %v3649
        %v3651 = vsel %vm1076, %v2377, 0.0
        %v3652 = vadd.f32 %v3650, %v3651
        %v3653 = vsel %vm1076, %v3053, 0.0
        %v3654 = vadd.f32 %v3652, %v3653
        %v3655 = vsel %vm1076, %v2379, 0.0
        %v3656 = vadd.f32 %v3654, %v3655
        %v3657 = vsel %vm1076, %v3054, 0.0
        %v3658 = vadd.f32 %v3656, %v3657
        %v3659 = vsel %vm1076, %v2381, 0.0
        %v3660 = vadd.f32 %v3658, %v3659
        %v3661 = vsel %vm1076, %v3055, 0.0
        %v3662 = vadd.f32 %v3660, %v3661
        %v3663 = vsel %vm1076, %v2383, 0.0
        %v3664 = vadd.f32 %v3662, %v3663
        %v3665 = vsel %vm1076, %v3056, 0.0
        %v3666 = vadd.f32 %v3664, %v3665
        %v3667 = vsel %vm1076, %v2385, 0.0
        %v3668 = vadd.f32 %v3666, %v3667
        %v3669 = vsel %vm1076, %v3057, 0.0
        %v3670 = vadd.f32 %v3668, %v3669
        %v3671 = vsel %vm1076, %v2387, 0.0
        %v3672 = vadd.f32 %v3670, %v3671
        %v3673 = vsel %vm1076, %v3058, 0.0
        %v3674 = vadd.f32 %v3672, %v3673
        %v3675 = vsel %vm1076, %v2389, 0.0
        %v3676 = vadd.f32 %v3674, %v3675
        %v3677 = vsel %vm1076, %v3059, 0.0
        %v3678 = vadd.f32 %v3676, %v3677
        %v3679 = vsel %vm1076, %v2391, 0.0
        %v3680 = vadd.f32 %v3678, %v3679
        %v3681 = vsel %vm1076, %v3060, 0.0
        %v3682 = vadd.f32 %v3680, %v3681
        %v3683 = vsel %vm1076, %v2393, 0.0
        %v3684 = vadd.f32 %v3682, %v3683
        %v3685 = vsel %vm1076, %v3061, 0.0
        %v3686 = vadd.f32 %v3684, %v3685
        %v3687 = vsel %vm1076, %v2395, 0.0
        %v3688 = vadd.f32 %v3686, %v3687
        %v3689 = vsel %vm1076, %v3062, 0.0
        %v3690 = vadd.f32 %v3688, %v3689
        %v3691 = vsel %vm1076, %v2397, 0.0
        %v3692 = vadd.f32 %v3690, %v3691
        %v3693 = vsel %vm1076, %v3063, 0.0
        %v3694 = vadd.f32 %v3692, %v3693
        %v3695 = vsel %vm1076, %v2399, 0.0
        %v3696 = vadd.f32 %v3694, %v3695
        %v3697 = vsel %vm1076, %v3064, 0.0
        %v3698 = vadd.f32 %v3696, %v3697
        %v3699 = vsel %vm1076, %v2401, 0.0
        %v3700 = vadd.f32 %v3698, %v3699
        %v3701 = vsel %vm1076, %v3065, 0.0
        %v3702 = vadd.f32 %v3700, %v3701
        %v3703 = vsel %vm1076, %v2403, 0.0
        %v3704 = vadd.f32 %v3702, %v3703
        %v3705 = vsel %vm1076, %v3066, 0.0
        %v3706 = vadd.f32 %v3704, %v3705
        %v3707 = vsel %vm1076, %v2405, 0.0
        %v3708 = vadd.f32 %v3706, %v3707
        %v3709 = vsel %vm1076, %v3067, 0.0
        %v3710 = vadd.f32 %v3708, %v3709
        %v3711 = vsel %vm1076, %v2407, 0.0
        %v3712 = vadd.f32 %v3710, %v3711
        %v3713 = vsel %vm1076, %v3068, 0.0
        %v3714 = vadd.f32 %v3712, %v3713
        %v3715 = vsel %vm1076, %v2409, 0.0
        %v3716 = vadd.f32 %v3714, %v3715
        %v3717 = vsel %vm1076, %v3069, 0.0
        %v3718 = vadd.f32 %v3716, %v3717
        %v3719 = vsel %vm1076, %v2411, 0.0
        %v3720 = vadd.f32 %v3718, %v3719
        %v3721 = vsel %vm1076, %v3070, 0.0
        %v3722 = vadd.f32 %v3720, %v3721
        %v3723 = vsel %vm1076, %v2413, 0.0
        %v3724 = vadd.f32 %v3722, %v3723
        %v3725 = vsel %vm1076, %v3071, 0.0
        %v3726 = vadd.f32 %v3724, %v3725
        %v3727 = vsel %vm1076, %v2415, 0.0
        %v3728 = vadd.f32 %v3726, %v3727
        %v3729 = vsel %vm1076, %v3072, 0.0
        %v3730 = vadd.f32 %v3728, %v3729
        %v3731 = vsel %vm1076, %v2417, 0.0
        %v3732 = vadd.f32 %v3730, %v3731
        %v3733 = vsel %vm1076, %v3073, 0.0
        %v3734 = vadd.f32 %v3732, %v3733
        %v3735 = vsel %vm1076, %v2419, 0.0
        %v3736 = vadd.f32 %v3734, %v3735
        %v3737 = vsel %vm1076, %v3074, 0.0
        %v3738 = vadd.f32 %v3736, %v3737
        %v3739 = vsel %vm1076, %v2421, 0.0
        %v3740 = vadd.f32 %v3738, %v3739
        %v3741 = vsel %vm1076, %v3075, 0.0
        %v3742 = vadd.f32 %v3740, %v3741
        %v3743 = vsel %vm1076, %v2423, 0.0
        %v3744 = vadd.f32 %v3742, %v3743
        %v3745 = vsel %vm1076, %v3076, 0.0
        %v3746 = vadd.f32 %v3744, %v3745
        %v3747 = vsel %vm1076, %v2425, 0.0
        %v3748 = vadd.f32 %v3746, %v3747
        %v3749 = vsel %vm1076, %v3077, 0.0
        %v3750 = vadd.f32 %v3748, %v3749
        %v3751 = vsel %vm1076, %v2427, 0.0
        %v3752 = vadd.f32 %v3750, %v3751
        %v3753 = vsel %vm1076, %v3078, 0.0
        %v3754 = vadd.f32 %v3752, %v3753
        %v3755 = vsel %vm1076, %v2429, 0.0
        %v3756 = vadd.f32 %v3754, %v3755
        %v3757 = vsel %vm1076, %v3079, 0.0
        %v3758 = vadd.f32 %v3756, %v3757
        %v3759 = vsel %vm1076, %v2431, 0.0
        %v3760 = vadd.f32 %v3758, %v3759
        %v3761 = vsel %vm1076, %v3080, 0.0
        %v3762 = vadd.f32 %v3760, %v3761
        %v3763 = vsel %vm1076, %v2433, 0.0
        %v3764 = vadd.f32 %v3762, %v3763
        %v3765 = vsel %vm1076, %v3081, 0.0
        %v3766 = vadd.f32 %v3764, %v3765
        %v3767 = vsel %vm1076, %v2435, 0.0
        %v3768 = vadd.f32 %v3766, %v3767
        %v3769 = vsel %vm1076, %v3082, 0.0
        %v3770 = vadd.f32 %v3768, %v3769
        %v3771 = vsel %vm1076, %v2437, 0.0
        %v3772 = vadd.f32 %v3770, %v3771
        %v3773 = vsel %vm1076, %v3083, 0.0
        %v3774 = vadd.f32 %v3772, %v3773
        %v3775 = vsel %vm1076, %v2439, 0.0
        %v3776 = vadd.f32 %v3774, %v3775
        %v3777 = vsel %vm1076, %v3084, 0.0
        %v3778 = vadd.f32 %v3776, %v3777
        %v3779 = vsel %vm1076, %v2441, 0.0
        %v3780 = vadd.f32 %v3778, %v3779
        %v3781 = vsel %vm1076, %v3085, 0.0
        %v3782 = vadd.f32 %v3780, %v3781
        %v3783 = vsel %vm1076, %v2443, 0.0
        %v3784 = vadd.f32 %v3782, %v3783
        %v3785 = vsel %vm1076, %v3086, 0.0
        %v3786 = vadd.f32 %v3784, %v3785
        %v3787 = vsel %vm1076, %v2445, 0.0
        %v3788 = vadd.f32 %v3786, %v3787
        %v3789 = vsel %vm1076, %v3087, 0.0
        %v3790 = vadd.f32 %v3788, %v3789
        %v3791 = vsel %vm1076, %v2447, 0.0
        %v3792 = vadd.f32 %v3790, %v3791
        %v3793 = vsel %vm1076, %v3088, 0.0
        %v3794 = vadd.f32 %v3792, %v3793
        %v3795 = vsel %vm1076, %v2449, 0.0
        %v3796 = vadd.f32 %v3794, %v3795
        %v3797 = vsel %vm1076, %v3089, 0.0
        %v3798 = vadd.f32 %v3796, %v3797
        %v3799 = vsel %vm1076, %v2451, 0.0
        %v3800 = vadd.f32 %v3798, %v3799
        %v3801 = vsel %vm1076, %v3090, 0.0
        %v3802 = vadd.f32 %v3800, %v3801
        %v3803 = vsel %vm1076, %v2453, 0.0
        %v3804 = vadd.f32 %v3802, %v3803
        %v3805 = vsel %vm1076, %v3091, 0.0
        %v3806 = vadd.f32 %v3804, %v3805
        %v3807 = vsel %vm1076, %v2455, 0.0
        %v3808 = vadd.f32 %v3806, %v3807
        %v3809 = vsel %vm1076, %v3092, 0.0
        %v3810 = vadd.f32 %v3808, %v3809
        %v3811 = vsel %vm1076, %v2457, 0.0
        %v3812 = vadd.f32 %v3810, %v3811
        %v3813 = vsel %vm1076, %v3093, 0.0
        %v3814 = vadd.f32 %v3812, %v3813
        %v3815 = vsel %vm1076, %v2459, 0.0
        %v3816 = vadd.f32 %v3814, %v3815
        %v3817 = vsel %vm1076, %v3094, 0.0
        %v3818 = vadd.f32 %v3816, %v3817
        %v3819 = vsel %vm1076, %v2461, 0.0
        %v3820 = vadd.f32 %v3818, %v3819
        %v3821 = vsel %vm1076, %v3095, 0.0
        %v3822 = vadd.f32 %v3820, %v3821
        %v3823 = vsel %vm1076, %v2463, 0.0
        %v3824 = vadd.f32 %v3822, %v3823
        %v3825 = vsel %vm1076, %v3096, 0.0
        %v3826 = vadd.f32 %v3824, %v3825
        %v3827 = vsel %vm1076, %v2465, 0.0
        %v3828 = vadd.f32 %v3826, %v3827
        %v3829 = vsel %vm1076, %v3097, 0.0
        %v3830 = vadd.f32 %v3828, %v3829
        %v3831 = vsel %vm1076, %v2467, 0.0
        %v3832 = vadd.f32 %v3830, %v3831
        %v3833 = vsel %vm1076, %v3098, 0.0
        %v3834 = vadd.f32 %v3832, %v3833
        %v3835 = vsel %vm1076, %v2469, 0.0
        %v3836 = vadd.f32 %v3834, %v3835
        %v3837 = vsel %vm1076, %v3099, 0.0
        %v3838 = vadd.f32 %v3836, %v3837
        %v3839 = vsel %vm1076, %v2471, 0.0
        %v3840 = vadd.f32 %v3838, %v3839
        %v3841 = vsel %vm1076, %v3100, 0.0
        %v3842 = vadd.f32 %v3840, %v3841
        %v3843 = vsel %vm1076, %v2473, 0.0
        %v3844 = vadd.f32 %v3842, %v3843
        %v3845 = vsel %vm1076, %v3101, 0.0
        %v3846 = vadd.f32 %v3844, %v3845
        %v3847 = vsel %vm1076, %v2475, 0.0
        %v3848 = vadd.f32 %v3846, %v3847
        %v3849 = vsel %vm1076, %v3102, 0.0
        %v3850 = vadd.f32 %v3848, %v3849
        %v3851 = vsel %vm1076, %v2477, 0.0
        %v3852 = vadd.f32 %v3850, %v3851
        %v3853 = vsel %vm1076, %v3103, 0.0
        %v3854 = vadd.f32 %v3852, %v3853
        %v3855 = vsel %vm1076, %v2479, 0.0
        %v3856 = vadd.f32 %v3854, %v3855
        %v3857 = vsel %vm1076, %v3104, 0.0
        %v3858 = vadd.f32 %v3856, %v3857
        %v3859 = vsel %vm1076, %v2481, 0.0
        %v3860 = vadd.f32 %v3858, %v3859
        %v3861 = vsel %vm1076, %v3105, 0.0
        %v3862 = vadd.f32 %v3860, %v3861
        %v3863 = vsel %vm1076, %v2483, 0.0
        %v3864 = vadd.f32 %v3862, %v3863
        %v3865 = vsel %vm1076, %v3106, 0.0
        %v3866 = vadd.f32 %v3864, %v3865
        %v3867 = vsel %vm1076, %v2485, 0.0
        %v3868 = vadd.f32 %v3866, %v3867
        %v3869 = vsel %vm1076, %v3107, 0.0
        %v3870 = vadd.f32 %v3868, %v3869
        %v3871 = vsel %vm1076, %v2487, 0.0
        %v3872 = vadd.f32 %v3870, %v3871
        %v3873 = vsel %vm1076, %v3108, 0.0
        %v3874 = vadd.f32 %v3872, %v3873
        %v3875 = vsel %vm1076, %v2489, 0.0
        %v3876 = vadd.f32 %v3874, %v3875
        %v3877 = vsel %vm1076, %v3109, 0.0
        %v3878 = vadd.f32 %v3876, %v3877
        %v3879 = vsel %vm1076, %v2491, 0.0
        %v3880 = vadd.f32 %v3878, %v3879
        %v3881 = vsel %vm1076, %v3110, 0.0
        %v3882 = vadd.f32 %v3880, %v3881
        %v3883 = vsel %vm1076, %v2493, 0.0
        %v3884 = vadd.f32 %v3882, %v3883
        %v3885 = vsel %vm1076, %v3111, 0.0
        %v3886 = vadd.f32 %v3884, %v3885
        %v3887 = vsel %vm1076, %v2495, 0.0
        %v3888 = vadd.f32 %v3886, %v3887
        %v3889 = vsel %vm1076, %v3112, 0.0
        %v3890 = vadd.f32 %v3888, %v3889
        %v3891 = vsel %vm1076, %v2497, 0.0
        %v3892 = vadd.f32 %v3890, %v3891
        %v3893 = vsel %vm1076, %v3113, 0.0
        %v3894 = vadd.f32 %v3892, %v3893
        %v3895 = vsel %vm1076, %v2499, 0.0
        %v3896 = vadd.f32 %v3894, %v3895
        %v3897 = vsel %vm1076, %v3114, 0.0
        %v3898 = vadd.f32 %v3896, %v3897
        %v3899 = vsel %vm1076, %v2501, 0.0
        %v3900 = vadd.f32 %v3898, %v3899
        %v3901 = vsel %vm1076, %v3115, 0.0
        %v3902 = vadd.f32 %v3900, %v3901
        %v3903 = vsel %vm1076, %v2503, 0.0
        %v3904 = vadd.f32 %v3902, %v3903
        %v3905 = vsel %vm1076, %v3116, 0.0
        %v3906 = vadd.f32 %v3904, %v3905
        %v3907 = vsel %vm1076, %v2505, 0.0
        %v3908 = vadd.f32 %v3906, %v3907
        %v3909 = vsel %vm1076, %v3117, 0.0
        %v3910 = vadd.f32 %v3908, %v3909
        %v3911 = vsel %vm1076, %v2507, 0.0
        %v3912 = vadd.f32 %v3910, %v3911
        %v3913 = vsel %vm1076, %v3118, 0.0
        %v3914 = vadd.f32 %v3912, %v3913
        %v3915 = vsel %vm1076, %v2509, 0.0
        %v3916 = vadd.f32 %v3914, %v3915
        %v3917 = vsel %vm1076, %v3119, 0.0
        %v3918 = vadd.f32 %v3916, %v3917
        %v3919 = vsel %vm1076, %v2511, 0.0
        %v3920 = vadd.f32 %v3918, %v3919
        %v3921 = vsel %vm1076, %v3120, 0.0
        %v3922 = vadd.f32 %v3920, %v3921
        %v3923 = vsel %vm1076, %v2513, 0.0
        %v3924 = vadd.f32 %v3922, %v3923
        %v3925 = vsel %vm1076, %v3121, 0.0
        %v3926 = vadd.f32 %v3924, %v3925
        %v3927 = vsel %vm1076, %v2515, 0.0
        %v3928 = vadd.f32 %v3926, %v3927
        %v3929 = vsel %vm1076, %v3122, 0.0
        %v3930 = vadd.f32 %v3928, %v3929
        %v3931 = vsel %vm1076, %v2517, 0.0
        %v3932 = vadd.f32 %v3930, %v3931
        %v3933 = vsel %vm1076, %v3123, 0.0
        %v3934 = vadd.f32 %v3932, %v3933
        %v3935 = vsel %vm1076, %v2519, 0.0
        %v3936 = vadd.f32 %v3934, %v3935
        %v3937 = vsel %vm1076, %v3124, 0.0
        %v3938 = vadd.f32 %v3936, %v3937
        %v3939 = vsel %vm1076, %v2521, 0.0
        %v3940 = vadd.f32 %v3938, %v3939
        %v3941 = vsel %vm1076, %v3125, 0.0
        %v3942 = vadd.f32 %v3940, %v3941
        %v3943 = vsel %vm1076, %v2523, 0.0
        %v3944 = vadd.f32 %v3942, %v3943
        %v3945 = vsel %vm1076, %v3126, 0.0
        %v3946 = vadd.f32 %v3944, %v3945
        %v3947 = vsel %vm1076, %v2525, 0.0
        %v3948 = vadd.f32 %v3946, %v3947
        %v3949 = vsel %vm1076, %v3127, 0.0
        %v3950 = vadd.f32 %v3948, %v3949
        %v3951 = vsel %vm1076, %v2527, 0.0
        %v3952 = vadd.f32 %v3950, %v3951
        %v3953 = vsel %vm1076, %v3128, 0.0
        %v3954 = vadd.f32 %v3952, %v3953
        %v3955 = vsel %vm1076, %v2529, 0.0
        %v3956 = vadd.f32 %v3954, %v3955
        %v3957 = vsel %vm1076, %v3129, 0.0
        %v3958 = vadd.f32 %v3956, %v3957
        %v3959 = vsel %vm1076, %v2531, 0.0
        %v3960 = vadd.f32 %v3958, %v3959
        %v3961 = vsel %vm1076, %v3130, 0.0
        %v3962 = vadd.f32 %v3960, %v3961
        %v3963 = vsel %vm1551, %v2533, 0.0
        %v3964 = vadd.f32 %v3962, %v3963
        %3965 = vadd.xlane.f32.xlu0 %v3964
        %v3966 = vpop.xlane.xlu0 %3965
        %v3967 = vsel %vm1076, %v2535, 0.0
        %v3968 = vsel %vm1076, %v3131, 0.0
        %v3969 = vadd.f32 %v3967, %v3968
        %v3970 = vsel %vm1076, %v2537, 0.0
        %v3971 = vadd.f32 %v3969, %v3970
        %v3972 = vsel %vm1076, %v3132, 0.0
        %v3973 = vadd.f32 %v3971, %v3972
        %v3974 = vsel %vm1076, %v2539, 0.0
        %v3975 = vadd.f32 %v3973, %v3974
        %v3976 = vsel %vm1076, %v3133, 0.0
        %v3977 = vadd.f32 %v3975, %v3976
        %v3978 = vsel %vm1076, %v2541, 0.0
        %v3979 = vadd.f32 %v3977, %v3978
        %v3980 = vsel %vm1076, %v3134, 0.0
        %v3981 = vadd.f32 %v3979, %v3980
        %v3982 = vsel %vm1076, %v2543, 0.0
        %v3983 = vadd.f32 %v3981, %v3982
        %v3984 = vsel %vm1076, %v3135, 0.0
        %v3985 = vadd.f32 %v3983, %v3984
        %v3986 = vsel %vm1076, %v2545, 0.0
        %v3987 = vadd.f32 %v3985, %v3986
        %v3988 = vsel %vm1076, %v3136, 0.0
        %v3989 = vadd.f32 %v3987, %v3988
        %v3990 = vsel %vm1076, %v2547, 0.0
        %v3991 = vadd.f32 %v3989, %v3990
        %v3992 = vsel %vm1076, %v3137, 0.0
        %v3993 = vadd.f32 %v3991, %v3992
        %v3994 = vsel %vm1076, %v2549, 0.0
        %v3995 = vadd.f32 %v3993, %v3994
        %v3996 = vsel %vm1076, %v3138, 0.0
        %v3997 = vadd.f32 %v3995, %v3996
        %v3998 = vsel %vm1076, %v2551, 0.0
        %v3999 = vadd.f32 %v3997, %v3998
        %v4000 = vsel %vm1076, %v3139, 0.0
        %v4001 = vadd.f32 %v3999, %v4000
        %v4002 = vsel %vm1076, %v2553, 0.0
        %v4003 = vadd.f32 %v4001, %v4002
        %v4004 = vsel %vm1076, %v3140, 0.0
        %v4005 = vadd.f32 %v4003, %v4004
        %v4006 = vsel %vm1076, %v2555, 0.0
        %v4007 = vadd.f32 %v4005, %v4006
        %v4008 = vsel %vm1076, %v3141, 0.0
        %v4009 = vadd.f32 %v4007, %v4008
        %v4010 = vsel %vm1076, %v2557, 0.0
        %v4011 = vadd.f32 %v4009, %v4010
        %v4012 = vsel %vm1076, %v3142, 0.0
        %v4013 = vadd.f32 %v4011, %v4012
        %v4014 = vsel %vm1076, %v2559, 0.0
        %v4015 = vadd.f32 %v4013, %v4014
        %v4016 = vsel %vm1076, %v3143, 0.0
        %v4017 = vadd.f32 %v4015, %v4016
        %v4018 = vsel %vm1076, %v2561, 0.0
        %v4019 = vadd.f32 %v4017, %v4018
        %v4020 = vsel %vm1076, %v3144, 0.0
        %v4021 = vadd.f32 %v4019, %v4020
        %v4022 = vsel %vm1076, %v2563, 0.0
        %v4023 = vadd.f32 %v4021, %v4022
        %v4024 = vsel %vm1076, %v3145, 0.0
        %v4025 = vadd.f32 %v4023, %v4024
        %v4026 = vsel %vm1076, %v2565, 0.0
        %v4027 = vadd.f32 %v4025, %v4026
        %v4028 = vsel %vm1076, %v3146, 0.0
        %v4029 = vadd.f32 %v4027, %v4028
        %v4030 = vsel %vm1076, %v2567, 0.0
        %v4031 = vadd.f32 %v4029, %v4030
        %v4032 = vsel %vm1076, %v3147, 0.0
        %v4033 = vadd.f32 %v4031, %v4032
        %v4034 = vsel %vm1076, %v2569, 0.0
        %v4035 = vadd.f32 %v4033, %v4034
        %v4036 = vsel %vm1076, %v3148, 0.0
        %v4037 = vadd.f32 %v4035, %v4036
        %v4038 = vsel %vm1076, %v2571, 0.0
        %v4039 = vadd.f32 %v4037, %v4038
        %v4040 = vsel %vm1076, %v3149, 0.0
        %v4041 = vadd.f32 %v4039, %v4040
        %v4042 = vsel %vm1076, %v2573, 0.0
        %v4043 = vadd.f32 %v4041, %v4042
        %v4044 = vsel %vm1076, %v3150, 0.0
        %v4045 = vadd.f32 %v4043, %v4044
        %v4046 = vsel %vm1076, %v2575, 0.0
        %v4047 = vadd.f32 %v4045, %v4046
        %v4048 = vsel %vm1076, %v3151, 0.0
        %v4049 = vadd.f32 %v4047, %v4048
        %v4050 = vsel %vm1076, %v2577, 0.0
        %v4051 = vadd.f32 %v4049, %v4050
        %v4052 = vsel %vm1076, %v3152, 0.0
        %v4053 = vadd.f32 %v4051, %v4052
        %v4054 = vsel %vm1076, %v2579, 0.0
        %v4055 = vadd.f32 %v4053, %v4054
        %v4056 = vsel %vm1076, %v3153, 0.0
        %v4057 = vadd.f32 %v4055, %v4056
        %v4058 = vsel %vm1076, %v2581, 0.0
        %v4059 = vadd.f32 %v4057, %v4058
        %v4060 = vsel %vm1076, %v3154, 0.0
        %v4061 = vadd.f32 %v4059, %v4060
        %v4062 = vsel %vm1076, %v2583, 0.0
        %v4063 = vadd.f32 %v4061, %v4062
        %v4064 = vsel %vm1076, %v3155, 0.0
        %v4065 = vadd.f32 %v4063, %v4064
        %v4066 = vsel %vm1076, %v2585, 0.0
        %v4067 = vadd.f32 %v4065, %v4066
        %v4068 = vsel %vm1076, %v3156, 0.0
        %v4069 = vadd.f32 %v4067, %v4068
        %v4070 = vsel %vm1076, %v2587, 0.0
        %v4071 = vadd.f32 %v4069, %v4070
        %v4072 = vsel %vm1076, %v3157, 0.0
        %v4073 = vadd.f32 %v4071, %v4072
        %v4074 = vsel %vm1076, %v2589, 0.0
        %v4075 = vadd.f32 %v4073, %v4074
        %v4076 = vsel %vm1076, %v3158, 0.0
        %v4077 = vadd.f32 %v4075, %v4076
        %v4078 = vsel %vm1076, %v2591, 0.0
        %v4079 = vadd.f32 %v4077, %v4078
        %v4080 = vsel %vm1076, %v3159, 0.0
        %v4081 = vadd.f32 %v4079, %v4080
        %v4082 = vsel %vm1076, %v2593, 0.0
        %v4083 = vadd.f32 %v4081, %v4082
        %v4084 = vsel %vm1076, %v3160, 0.0
        %v4085 = vadd.f32 %v4083, %v4084
        %v4086 = vsel %vm1076, %v2595, 0.0
        %v4087 = vadd.f32 %v4085, %v4086
        %v4088 = vsel %vm1076, %v3161, 0.0
        %v4089 = vadd.f32 %v4087, %v4088
        %v4090 = vsel %vm1076, %v2597, 0.0
        %v4091 = vadd.f32 %v4089, %v4090
        %v4092 = vsel %vm1076, %v3162, 0.0
        %v4093 = vadd.f32 %v4091, %v4092
        %v4094 = vsel %vm1076, %v2599, 0.0
        %v4095 = vadd.f32 %v4093, %v4094
        %v4096 = vsel %vm1076, %v3163, 0.0
        %v4097 = vadd.f32 %v4095, %v4096
        %v4098 = vsel %vm1076, %v2601, 0.0
        %v4099 = vadd.f32 %v4097, %v4098
        %v4100 = vsel %vm1076, %v3164, 0.0
        %v4101 = vadd.f32 %v4099, %v4100
        %v4102 = vsel %vm1076, %v2603, 0.0
        %v4103 = vadd.f32 %v4101, %v4102
        %v4104 = vsel %vm1076, %v3165, 0.0
        %v4105 = vadd.f32 %v4103, %v4104
        %v4106 = vsel %vm1076, %v2605, 0.0
        %v4107 = vadd.f32 %v4105, %v4106
        %v4108 = vsel %vm1076, %v3166, 0.0
        %v4109 = vadd.f32 %v4107, %v4108
        %v4110 = vsel %vm1076, %v2607, 0.0
        %v4111 = vadd.f32 %v4109, %v4110
        %v4112 = vsel %vm1076, %v3167, 0.0
        %v4113 = vadd.f32 %v4111, %v4112
        %v4114 = vsel %vm1076, %v2609, 0.0
        %v4115 = vadd.f32 %v4113, %v4114
        %v4116 = vsel %vm1076, %v3168, 0.0
        %v4117 = vadd.f32 %v4115, %v4116
        %v4118 = vsel %vm1076, %v2611, 0.0
        %v4119 = vadd.f32 %v4117, %v4118
        %v4120 = vsel %vm1076, %v3169, 0.0
        %v4121 = vadd.f32 %v4119, %v4120
        %v4122 = vsel %vm1076, %v2613, 0.0
        %v4123 = vadd.f32 %v4121, %v4122
        %v4124 = vsel %vm1076, %v3170, 0.0
        %v4125 = vadd.f32 %v4123, %v4124
        %v4126 = vsel %vm1076, %v2615, 0.0
        %v4127 = vadd.f32 %v4125, %v4126
        %v4128 = vsel %vm1076, %v3171, 0.0
        %v4129 = vadd.f32 %v4127, %v4128
        %v4130 = vsel %vm1076, %v2617, 0.0
        %v4131 = vadd.f32 %v4129, %v4130
        %v4132 = vsel %vm1076, %v3172, 0.0
        %v4133 = vadd.f32 %v4131, %v4132
        %v4134 = vsel %vm1076, %v2619, 0.0
        %v4135 = vadd.f32 %v4133, %v4134
        %v4136 = vsel %vm1076, %v3173, 0.0
        %v4137 = vadd.f32 %v4135, %v4136
        %v4138 = vsel %vm1076, %v2621, 0.0
        %v4139 = vadd.f32 %v4137, %v4138
        %v4140 = vsel %vm1076, %v3174, 0.0
        %v4141 = vadd.f32 %v4139, %v4140
        %v4142 = vsel %vm1076, %v2623, 0.0
        %v4143 = vadd.f32 %v4141, %v4142
        %v4144 = vsel %vm1076, %v3175, 0.0
        %v4145 = vadd.f32 %v4143, %v4144
        %v4146 = vsel %vm1076, %v2625, 0.0
        %v4147 = vadd.f32 %v4145, %v4146
        %v4148 = vsel %vm1076, %v3176, 0.0
        %v4149 = vadd.f32 %v4147, %v4148
        %v4150 = vsel %vm1076, %v2627, 0.0
        %v4151 = vadd.f32 %v4149, %v4150
        %v4152 = vsel %vm1076, %v3177, 0.0
        %v4153 = vadd.f32 %v4151, %v4152
        %v4154 = vsel %vm1076, %v2629, 0.0
        %v4155 = vadd.f32 %v4153, %v4154
        %v4156 = vsel %vm1076, %v3178, 0.0
        %v4157 = vadd.f32 %v4155, %v4156
        %v4158 = vsel %vm1076, %v2631, 0.0
        %v4159 = vadd.f32 %v4157, %v4158
        %v4160 = vsel %vm1076, %v3179, 0.0
        %v4161 = vadd.f32 %v4159, %v4160
        %v4162 = vsel %vm1076, %v2633, 0.0
        %v4163 = vadd.f32 %v4161, %v4162
        %v4164 = vsel %vm1076, %v3180, 0.0
        %v4165 = vadd.f32 %v4163, %v4164
        %v4166 = vsel %vm1076, %v2635, 0.0
        %v4167 = vadd.f32 %v4165, %v4166
        %v4168 = vsel %vm1076, %v3181, 0.0
        %v4169 = vadd.f32 %v4167, %v4168
        %v4170 = vsel %vm1076, %v2637, 0.0
        %v4171 = vadd.f32 %v4169, %v4170
        %v4172 = vsel %vm1076, %v3182, 0.0
        %v4173 = vadd.f32 %v4171, %v4172
        %v4174 = vsel %vm1076, %v2639, 0.0
        %v4175 = vadd.f32 %v4173, %v4174
        %v4176 = vsel %vm1076, %v3183, 0.0
        %v4177 = vadd.f32 %v4175, %v4176
        %v4178 = vsel %vm1076, %v2641, 0.0
        %v4179 = vadd.f32 %v4177, %v4178
        %v4180 = vsel %vm1076, %v3184, 0.0
        %v4181 = vadd.f32 %v4179, %v4180
        %v4182 = vsel %vm1076, %v2643, 0.0
        %v4183 = vadd.f32 %v4181, %v4182
        %v4184 = vsel %vm1076, %v3185, 0.0
        %v4185 = vadd.f32 %v4183, %v4184
        %v4186 = vsel %vm1076, %v2645, 0.0
        %v4187 = vadd.f32 %v4185, %v4186
        %v4188 = vsel %vm1076, %v3186, 0.0
        %v4189 = vadd.f32 %v4187, %v4188
        %v4190 = vsel %vm1076, %v2647, 0.0
        %v4191 = vadd.f32 %v4189, %v4190
        %v4192 = vsel %vm1076, %v3187, 0.0
        %v4193 = vadd.f32 %v4191, %v4192
        %v4194 = vsel %vm1076, %v2649, 0.0
        %v4195 = vadd.f32 %v4193, %v4194
        %v4196 = vsel %vm1076, %v3188, 0.0
        %v4197 = vadd.f32 %v4195, %v4196
        %v4198 = vsel %vm1076, %v2651, 0.0
        %v4199 = vadd.f32 %v4197, %v4198
        %v4200 = vsel %vm1076, %v3189, 0.0
        %v4201 = vadd.f32 %v4199, %v4200
        %v4202 = vsel %vm1076, %v2653, 0.0
        %v4203 = vadd.f32 %v4201, %v4202
        %v4204 = vsel %vm1076, %v3190, 0.0
        %v4205 = vadd.f32 %v4203, %v4204
        %v4206 = vsel %vm1076, %v2655, 0.0
        %v4207 = vadd.f32 %v4205, %v4206
        %v4208 = vsel %vm1076, %v3191, 0.0
        %v4209 = vadd.f32 %v4207, %v4208
        %v4210 = vsel %vm1076, %v2657, 0.0
        %v4211 = vadd.f32 %v4209, %v4210
        %v4212 = vsel %vm1076, %v3192, 0.0
        %v4213 = vadd.f32 %v4211, %v4212
        %v4214 = vsel %vm1076, %v2659, 0.0
        %v4215 = vadd.f32 %v4213, %v4214
        %v4216 = vsel %vm1076, %v3193, 0.0
        %v4217 = vadd.f32 %v4215, %v4216
        %v4218 = vsel %vm1076, %v2661, 0.0
        %v4219 = vadd.f32 %v4217, %v4218
        %v4220 = vsel %vm1076, %v3194, 0.0
        %v4221 = vadd.f32 %v4219, %v4220
        %v4222 = vsel %vm1076, %v2663, 0.0
        %v4223 = vadd.f32 %v4221, %v4222
        %v4224 = vsel %vm1076, %v3195, 0.0
        %v4225 = vadd.f32 %v4223, %v4224
        %v4226 = vsel %vm1076, %v2665, 0.0
        %v4227 = vadd.f32 %v4225, %v4226
        %v4228 = vsel %vm1076, %v3196, 0.0
        %v4229 = vadd.f32 %v4227, %v4228
        %v4230 = vsel %vm1076, %v2667, 0.0
        %v4231 = vadd.f32 %v4229, %v4230
        %v4232 = vsel %vm1076, %v3197, 0.0
        %v4233 = vadd.f32 %v4231, %v4232
        %v4234 = vsel %vm1076, %v2669, 0.0
        %v4235 = vadd.f32 %v4233, %v4234
        %v4236 = vsel %vm1076, %v3198, 0.0
        %v4237 = vadd.f32 %v4235, %v4236
        %v4238 = vsel %vm1076, %v2671, 0.0
        %v4239 = vadd.f32 %v4237, %v4238
        %v4240 = vsel %vm1076, %v3199, 0.0
        %v4241 = vadd.f32 %v4239, %v4240
        %v4242 = vsel %vm1076, %v2673, 0.0
        %v4243 = vadd.f32 %v4241, %v4242
        %v4244 = vsel %vm1076, %v3200, 0.0
        %v4245 = vadd.f32 %v4243, %v4244
        %v4246 = vsel %vm1076, %v2675, 0.0
        %v4247 = vadd.f32 %v4245, %v4246
        %v4248 = vsel %vm1076, %v3201, 0.0
        %v4249 = vadd.f32 %v4247, %v4248
        %v4250 = vsel %vm1076, %v2677, 0.0
        %v4251 = vadd.f32 %v4249, %v4250
        %v4252 = vsel %vm1076, %v3202, 0.0
        %v4253 = vadd.f32 %v4251, %v4252
        %v4254 = vsel %vm1076, %v2679, 0.0
        %v4255 = vadd.f32 %v4253, %v4254
        %v4256 = vsel %vm1076, %v3203, 0.0
        %v4257 = vadd.f32 %v4255, %v4256
        %v4258 = vsel %vm1076, %v2681, 0.0
        %v4259 = vadd.f32 %v4257, %v4258
        %v4260 = vsel %vm1076, %v3204, 0.0
        %v4261 = vadd.f32 %v4259, %v4260
        %v4262 = vsel %vm1076, %v2683, 0.0
        %v4263 = vadd.f32 %v4261, %v4262
        %v4264 = vsel %vm1076, %v3205, 0.0
        %v4265 = vadd.f32 %v4263, %v4264
        %v4266 = vsel %vm1076, %v2685, 0.0
        %v4267 = vadd.f32 %v4265, %v4266
        %v4268 = vsel %vm1076, %v3206, 0.0
        %v4269 = vadd.f32 %v4267, %v4268
        %v4270 = vsel %vm1076, %v2687, 0.0
        %v4271 = vadd.f32 %v4269, %v4270
        %v4272 = vsel %vm1076, %v3207, 0.0
        %v4273 = vadd.f32 %v4271, %v4272
        %v4274 = vsel %vm1076, %v2689, 0.0
        %v4275 = vadd.f32 %v4273, %v4274
        %v4276 = vsel %vm1076, %v3208, 0.0
        %v4277 = vadd.f32 %v4275, %v4276
        %v4278 = vsel %vm1076, %v2691, 0.0
        %v4279 = vadd.f32 %v4277, %v4278
        %v4280 = vsel %vm1076, %v3209, 0.0
        %v4281 = vadd.f32 %v4279, %v4280
        %v4282 = vsel %vm1076, %v2693, 0.0
        %v4283 = vadd.f32 %v4281, %v4282
        %v4284 = vsel %vm1076, %v3210, 0.0
        %v4285 = vadd.f32 %v4283, %v4284
        %v4286 = vsel %vm1076, %v2695, 0.0
        %v4287 = vadd.f32 %v4285, %v4286
        %v4288 = vsel %vm1076, %v3211, 0.0
        %v4289 = vadd.f32 %v4287, %v4288
        %v4290 = vsel %vm1076, %v2697, 0.0
        %v4291 = vadd.f32 %v4289, %v4290
        %v4292 = vsel %vm1076, %v3212, 0.0
        %v4293 = vadd.f32 %v4291, %v4292
        %v4294 = vsel %vm1076, %v2699, 0.0
        %v4295 = vadd.f32 %v4293, %v4294
        %v4296 = vsel %vm1076, %v3213, 0.0
        %v4297 = vadd.f32 %v4295, %v4296
        %v4298 = vsel %vm1076, %v2701, 0.0
        %v4299 = vadd.f32 %v4297, %v4298
        %v4300 = vsel %vm1076, %v3214, 0.0
        %v4301 = vadd.f32 %v4299, %v4300
        %v4302 = vsel %vm1076, %v2703, 0.0
        %v4303 = vadd.f32 %v4301, %v4302
        %v4304 = vsel %vm1076, %v3215, 0.0
        %v4305 = vadd.f32 %v4303, %v4304
        %v4306 = vsel %vm1076, %v2705, 0.0
        %v4307 = vadd.f32 %v4305, %v4306
        %v4308 = vsel %vm1076, %v3216, 0.0
        %v4309 = vadd.f32 %v4307, %v4308
        %v4310 = vsel %vm1076, %v2707, 0.0
        %v4311 = vadd.f32 %v4309, %v4310
        %v4312 = vsel %vm1076, %v3217, 0.0
        %v4313 = vadd.f32 %v4311, %v4312
        %v4314 = vsel %vm1076, %v2709, 0.0
        %v4315 = vadd.f32 %v4313, %v4314
        %v4316 = vsel %vm1076, %v3218, 0.0
        %v4317 = vadd.f32 %v4315, %v4316
        %v4318 = vsel %vm1076, %v2711, 0.0
        %v4319 = vadd.f32 %v4317, %v4318
        %v4320 = vsel %vm1076, %v3219, 0.0
        %v4321 = vadd.f32 %v4319, %v4320
        %v4322 = vsel %vm1076, %v2713, 0.0
        %v4323 = vadd.f32 %v4321, %v4322
        %v4324 = vsel %vm1076, %v3220, 0.0
        %v4325 = vadd.f32 %v4323, %v4324
        %v4326 = vsel %vm1076, %v2715, 0.0
        %v4327 = vadd.f32 %v4325, %v4326
        %v4328 = vsel %vm1076, %v3221, 0.0
        %v4329 = vadd.f32 %v4327, %v4328
        %v4330 = vsel %vm1076, %v2717, 0.0
        %v4331 = vadd.f32 %v4329, %v4330
        %v4332 = vsel %vm1076, %v3222, 0.0
        %v4333 = vadd.f32 %v4331, %v4332
        %v4334 = vsel %vm1076, %v2719, 0.0
        %v4335 = vadd.f32 %v4333, %v4334
        %v4336 = vsel %vm1076, %v3223, 0.0
        %v4337 = vadd.f32 %v4335, %v4336
        %v4338 = vsel %vm1076, %v2721, 0.0
        %v4339 = vadd.f32 %v4337, %v4338
        %v4340 = vsel %vm1076, %v3224, 0.0
        %v4341 = vadd.f32 %v4339, %v4340
        %v4342 = vsel %vm1076, %v2723, 0.0
        %v4343 = vadd.f32 %v4341, %v4342
        %v4344 = vsel %vm1076, %v3225, 0.0
        %v4345 = vadd.f32 %v4343, %v4344
        %v4346 = vsel %vm1076, %v2725, 0.0
        %v4347 = vadd.f32 %v4345, %v4346
        %v4348 = vsel %vm1076, %v3226, 0.0
        %v4349 = vadd.f32 %v4347, %v4348
        %v4350 = vsel %vm1076, %v2727, 0.0
        %v4351 = vadd.f32 %v4349, %v4350
        %v4352 = vsel %vm1076, %v3227, 0.0
        %v4353 = vadd.f32 %v4351, %v4352
        %v4354 = vsel %vm1076, %v2729, 0.0
        %v4355 = vadd.f32 %v4353, %v4354
        %v4356 = vsel %vm1076, %v3228, 0.0
        %v4357 = vadd.f32 %v4355, %v4356
        %v4358 = vsel %vm1076, %v2731, 0.0
        %v4359 = vadd.f32 %v4357, %v4358
        %v4360 = vsel %vm1076, %v3229, 0.0
        %v4361 = vadd.f32 %v4359, %v4360
        %v4362 = vsel %vm1076, %v2733, 0.0
        %v4363 = vadd.f32 %v4361, %v4362
        %v4364 = vsel %vm1076, %v3230, 0.0
        %v4365 = vadd.f32 %v4363, %v4364
        %v4366 = vsel %vm1076, %v2735, 0.0
        %v4367 = vadd.f32 %v4365, %v4366
        %v4368 = vsel %vm1076, %v3231, 0.0
        %v4369 = vadd.f32 %v4367, %v4368
        %v4370 = vsel %vm1076, %v2737, 0.0
        %v4371 = vadd.f32 %v4369, %v4370
        %v4372 = vsel %vm1076, %v3232, 0.0
        %v4373 = vadd.f32 %v4371, %v4372
        %v4374 = vsel %vm1076, %v2739, 0.0
        %v4375 = vadd.f32 %v4373, %v4374
        %v4376 = vsel %vm1076, %v3233, 0.0
        %v4377 = vadd.f32 %v4375, %v4376
        %v4378 = vsel %vm1076, %v2741, 0.0
        %v4379 = vadd.f32 %v4377, %v4378
        %v4380 = vsel %vm1076, %v3234, 0.0
        %v4381 = vadd.f32 %v4379, %v4380
        %v4382 = vsel %vm1076, %v2743, 0.0
        %v4383 = vadd.f32 %v4381, %v4382
        %v4384 = vsel %vm1076, %v3235, 0.0
        %v4385 = vadd.f32 %v4383, %v4384
        %v4386 = vsel %vm1076, %v2745, 0.0
        %v4387 = vadd.f32 %v4385, %v4386
        %v4388 = vsel %vm1076, %v3236, 0.0
        %v4389 = vadd.f32 %v4387, %v4388
        %v4390 = vsel %vm1076, %v2747, 0.0
        %v4391 = vadd.f32 %v4389, %v4390
        %v4392 = vsel %vm1076, %v3237, 0.0
        %v4393 = vadd.f32 %v4391, %v4392
        %v4394 = vsel %vm1076, %v2749, 0.0
        %v4395 = vadd.f32 %v4393, %v4394
        %v4396 = vsel %vm1076, %v3238, 0.0
        %v4397 = vadd.f32 %v4395, %v4396
        %v4398 = vsel %vm1076, %v2751, 0.0
        %v4399 = vadd.f32 %v4397, %v4398
        %v4400 = vsel %vm1076, %v3239, 0.0
        %v4401 = vadd.f32 %v4399, %v4400
        %v4402 = vsel %vm1076, %v2753, 0.0
        %v4403 = vadd.f32 %v4401, %v4402
        %v4404 = vsel %vm1076, %v3240, 0.0
        %v4405 = vadd.f32 %v4403, %v4404
        %v4406 = vsel %vm1076, %v2755, 0.0
        %v4407 = vadd.f32 %v4405, %v4406
        %v4408 = vsel %vm1076, %v3241, 0.0
        %v4409 = vadd.f32 %v4407, %v4408
        %v4410 = vsel %vm1076, %v2757, 0.0
        %v4411 = vadd.f32 %v4409, %v4410
        %v4412 = vsel %vm1076, %v3242, 0.0
        %v4413 = vadd.f32 %v4411, %v4412
        %v4414 = vsel %vm1076, %v2759, 0.0
        %v4415 = vadd.f32 %v4413, %v4414
        %v4416 = vsel %vm1076, %v3243, 0.0
        %v4417 = vadd.f32 %v4415, %v4416
        %v4418 = vsel %vm1076, %v2761, 0.0
        %v4419 = vadd.f32 %v4417, %v4418
        %v4420 = vsel %vm1076, %v3244, 0.0
        %v4421 = vadd.f32 %v4419, %v4420
        %v4422 = vsel %vm1076, %v2763, 0.0
        %v4423 = vadd.f32 %v4421, %v4422
        %v4424 = vsel %vm1076, %v3245, 0.0
        %v4425 = vadd.f32 %v4423, %v4424
        %v4426 = vsel %vm1076, %v2765, 0.0
        %v4427 = vadd.f32 %v4425, %v4426
        %v4428 = vsel %vm1076, %v3246, 0.0
        %v4429 = vadd.f32 %v4427, %v4428
        %v4430 = vsel %vm1076, %v2767, 0.0
        %v4431 = vadd.f32 %v4429, %v4430
        %v4432 = vsel %vm1076, %v3247, 0.0
        %v4433 = vadd.f32 %v4431, %v4432
        %v4434 = vsel %vm1076, %v2769, 0.0
        %v4435 = vadd.f32 %v4433, %v4434
        %v4436 = vsel %vm1076, %v3248, 0.0
        %v4437 = vadd.f32 %v4435, %v4436
        %v4438 = vsel %vm1076, %v2771, 0.0
        %v4439 = vadd.f32 %v4437, %v4438
        %v4440 = vsel %vm1076, %v3249, 0.0
        %v4441 = vadd.f32 %v4439, %v4440
        %v4442 = vsel %vm1551, %v2773, 0.0
        %v4443 = vadd.f32 %v4441, %v4442
        %4444 = vadd.xlane.f32.xlu0 %v4443
        %v4445 = vpop.xlane.xlu0 %4444
        %v4446 = vlog2.pop %v3966
        %v4447 = vmul.f32 %v4446, 0.6931472
        %v4448 = vlog2.pop %v4445
        %v4449 = vmul.f32 %v4448, 0.6931472
        %v4453 = vunpack.c.l.s4 839922192
        %v4454 = vunpack.c.0.s8 %v4453
        %v4455 = vlaneseq
        %v4456 = vshrl.u32 %v4455, 7
        %v4457 = vsub.s32 %v4454, %v4456
        %v4458 = vrot.slane %v4447, %v4457
        %v4460 = vunpack.c.l.s4 839922192
        %v4461 = vunpack.c.0.s8 %v4460
        %v4462 = vlaneseq
        %v4463 = vshrl.u32 %v4462, 7
        %v4464 = vsub.s32 %v4461, %v4463
        %v4465 = vrot.slane %v4449, %v4464
        %v4468 = vsub.f32 %v2054, %v4458
        %v4469 = vsub.f32 %v2055, %v4458
        %v4470 = vsub.f32 %v2056, %v4458
        %v4471 = vsub.f32 %v2057, %v4458
        %v4472 = vsub.f32 %v2058, %v4458
        %v4473 = vsub.f32 %v2059, %v4458
        %v4474 = vsub.f32 %v2060, %v4458
        %v4475 = vsub.f32 %v2061, %v4458
        %v4476 = vsub.f32 %v2062, %v4458
        %v4477 = vsub.f32 %v2063, %v4458
        %v4478 = vsub.f32 %v2064, %v4458
        %v4479 = vsub.f32 %v2065, %v4458
        %v4480 = vsub.f32 %v2066, %v4458
        %v4481 = vsub.f32 %v2067, %v4458
        %v4482 = vsub.f32 %v2068, %v4458
        %v4483 = vsub.f32 %v2069, %v4458
        %v4484 = vsub.f32 %v2070, %v4458
        %v4485 = vsub.f32 %v2071, %v4458
        %v4486 = vsub.f32 %v2072, %v4458
        %v4487 = vsub.f32 %v2073, %v4458
        %v4488 = vsub.f32 %v2074, %v4458
        %v4489 = vsub.f32 %v2075, %v4458
        %v4490 = vsub.f32 %v2076, %v4458
        %v4491 = vsub.f32 %v2077, %v4458
        %v4492 = vsub.f32 %v2078, %v4458
        %v4493 = vsub.f32 %v2079, %v4458
        %v4494 = vsub.f32 %v2080, %v4458
        %v4495 = vsub.f32 %v2081, %v4458
        %v4496 = vsub.f32 %v2082, %v4458
        %v4497 = vsub.f32 %v2083, %v4458
        %v4498 = vsub.f32 %v2084, %v4458
        %v4499 = vsub.f32 %v2085, %v4458
        %v4500 = vsub.f32 %v2086, %v4458
        %v4501 = vsub.f32 %v2087, %v4458
        %v4502 = vsub.f32 %v2088, %v4458
        %v4503 = vsub.f32 %v2089, %v4458
        %v4504 = vsub.f32 %v2090, %v4458
        %v4505 = vsub.f32 %v2091, %v4458
        %v4506 = vsub.f32 %v2092, %v4458
        %v4507 = vsub.f32 %v2093, %v4458
        %v4508 = vsub.f32 %v2094, %v4458
        %v4509 = vsub.f32 %v2095, %v4458
        %v4510 = vsub.f32 %v2096, %v4458
        %v4511 = vsub.f32 %v2097, %v4458
        %v4512 = vsub.f32 %v2098, %v4458
        %v4513 = vsub.f32 %v2099, %v4458
        %v4514 = vsub.f32 %v2100, %v4458
        %v4515 = vsub.f32 %v2101, %v4458
        %v4516 = vsub.f32 %v2102, %v4458
        %v4517 = vsub.f32 %v2103, %v4458
        %v4518 = vsub.f32 %v2104, %v4458
        %v4519 = vsub.f32 %v2105, %v4458
        %v4520 = vsub.f32 %v2106, %v4458
        %v4521 = vsub.f32 %v2107, %v4458
        %v4522 = vsub.f32 %v2108, %v4458
        %v4523 = vsub.f32 %v2109, %v4458
        %v4524 = vsub.f32 %v2110, %v4458
        %v4525 = vsub.f32 %v2111, %v4458
        %v4526 = vsub.f32 %v2112, %v4458
        %v4527 = vsub.f32 %v2113, %v4458
        %v4528 = vsub.f32 %v2114, %v4458
        %v4529 = vsub.f32 %v2115, %v4458
        %v4530 = vsub.f32 %v2116, %v4458
        %v4531 = vsub.f32 %v2117, %v4458
        %v4532 = vsub.f32 %v2118, %v4458
        %v4533 = vsub.f32 %v2119, %v4458
        %v4534 = vsub.f32 %v2120, %v4458
        %v4535 = vsub.f32 %v2121, %v4458
        %v4536 = vsub.f32 %v2122, %v4458
        %v4537 = vsub.f32 %v2123, %v4458
        %v4538 = vsub.f32 %v2124, %v4458
        %v4539 = vsub.f32 %v2125, %v4458
        %v4540 = vsub.f32 %v2126, %v4458
        %v4541 = vsub.f32 %v2127, %v4458
        %v4542 = vsub.f32 %v2128, %v4458
        %v4543 = vsub.f32 %v2129, %v4458
        %v4544 = vsub.f32 %v2130, %v4458
        %v4545 = vsub.f32 %v2131, %v4458
        %v4546 = vsub.f32 %v2132, %v4458
        %v4547 = vsub.f32 %v2133, %v4458
        %v4548 = vsub.f32 %v2134, %v4458
        %v4549 = vsub.f32 %v2135, %v4458
        %v4550 = vsub.f32 %v2136, %v4458
        %v4551 = vsub.f32 %v2137, %v4458
        %v4552 = vsub.f32 %v2138, %v4458
        %v4553 = vsub.f32 %v2139, %v4458
        %v4554 = vsub.f32 %v2140, %v4458
        %v4555 = vsub.f32 %v2141, %v4458
        %v4556 = vsub.f32 %v2142, %v4458
        %v4557 = vsub.f32 %v2143, %v4458
        %v4558 = vsub.f32 %v2144, %v4458
        %v4559 = vsub.f32 %v2145, %v4458
        %v4560 = vsub.f32 %v2146, %v4458
        %v4561 = vsub.f32 %v2147, %v4458
        %v4562 = vsub.f32 %v2148, %v4458
        %v4563 = vsub.f32 %v2149, %v4458
        %v4564 = vsub.f32 %v2150, %v4458
        %v4565 = vsub.f32 %v2151, %v4458
        %v4566 = vsub.f32 %v2152, %v4458
        %v4567 = vsub.f32 %v2153, %v4458
        %v4568 = vsub.f32 %v2154, %v4458
        %v4569 = vsub.f32 %v2155, %v4458
        %v4570 = vsub.f32 %v2156, %v4458
        %v4571 = vsub.f32 %v2157, %v4458
        %v4572 = vsub.f32 %v2158, %v4458
        %v4573 = vsub.f32 %v2159, %v4458
        %v4574 = vsub.f32 %v2160, %v4458
        %v4575 = vsub.f32 %v2161, %v4458
        %v4576 = vsub.f32 %v2162, %v4458
        %v4577 = vsub.f32 %v2163, %v4458
        %v4578 = vsub.f32 %v2164, %v4458
        %v4579 = vsub.f32 %v2165, %v4458
        %v4580 = vsub.f32 %v2166, %v4458
        %v4581 = vsub.f32 %v2167, %v4458
        %v4582 = vsub.f32 %v2168, %v4458
        %v4583 = vsub.f32 %v2169, %v4458
        %v4584 = vsub.f32 %v2170, %v4458
        %v4585 = vsub.f32 %v2171, %v4458
        %v4586 = vsub.f32 %v2172, %v4458
        %v4587 = vsub.f32 %v2173, %v4458
        %v4588 = vsub.f32 %v2174, %v4465
        %v4589 = vsub.f32 %v2175, %v4465
        %v4590 = vsub.f32 %v2176, %v4465
        %v4591 = vsub.f32 %v2177, %v4465
        %v4592 = vsub.f32 %v2178, %v4465
        %v4593 = vsub.f32 %v2179, %v4465
        %v4594 = vsub.f32 %v2180, %v4465
        %v4595 = vsub.f32 %v2181, %v4465
        %v4596 = vsub.f32 %v2182, %v4465
        %v4597 = vsub.f32 %v2183, %v4465
        %v4598 = vsub.f32 %v2184, %v4465
        %v4599 = vsub.f32 %v2185, %v4465
        %v4600 = vsub.f32 %v2186, %v4465
        %v4601 = vsub.f32 %v2187, %v4465
        %v4602 = vsub.f32 %v2188, %v4465
        %v4603 = vsub.f32 %v2189, %v4465
        %v4604 = vsub.f32 %v2190, %v4465
        %v4605 = vsub.f32 %v2191, %v4465
        %v4606 = vsub.f32 %v2192, %v4465
        %v4607 = vsub.f32 %v2193, %v4465
        %v4608 = vsub.f32 %v2194, %v4465
        %v4609 = vsub.f32 %v2195, %v4465
        %v4610 = vsub.f32 %v2196, %v4465
        %v4611 = vsub.f32 %v2197, %v4465
        %v4612 = vsub.f32 %v2198, %v4465
        %v4613 = vsub.f32 %v2199, %v4465
        %v4614 = vsub.f32 %v2200, %v4465
        %v4615 = vsub.f32 %v2201, %v4465
        %v4616 = vsub.f32 %v2202, %v4465
        %v4617 = vsub.f32 %v2203, %v4465
        %v4618 = vsub.f32 %v2204, %v4465
        %v4619 = vsub.f32 %v2205, %v4465
        %v4620 = vsub.f32 %v2206, %v4465
        %v4621 = vsub.f32 %v2207, %v4465
        %v4622 = vsub.f32 %v2208, %v4465
        %v4623 = vsub.f32 %v2209, %v4465
        %v4624 = vsub.f32 %v2210, %v4465
        %v4625 = vsub.f32 %v2211, %v4465
        %v4626 = vsub.f32 %v2212, %v4465
        %v4627 = vsub.f32 %v2213, %v4465
        %v4628 = vsub.f32 %v2214, %v4465
        %v4629 = vsub.f32 %v2215, %v4465
        %v4630 = vsub.f32 %v2216, %v4465
        %v4631 = vsub.f32 %v2217, %v4465
        %v4632 = vsub.f32 %v2218, %v4465
        %v4633 = vsub.f32 %v2219, %v4465
        %v4634 = vsub.f32 %v2220, %v4465
        %v4635 = vsub.f32 %v2221, %v4465
        %v4636 = vsub.f32 %v2222, %v4465
        %v4637 = vsub.f32 %v2223, %v4465
        %v4638 = vsub.f32 %v2224, %v4465
        %v4639 = vsub.f32 %v2225, %v4465
        %v4640 = vsub.f32 %v2226, %v4465
        %v4641 = vsub.f32 %v2227, %v4465
        %v4642 = vsub.f32 %v2228, %v4465
        %v4643 = vsub.f32 %v2229, %v4465
        %v4644 = vsub.f32 %v2230, %v4465
        %v4645 = vsub.f32 %v2231, %v4465
        %v4646 = vsub.f32 %v2232, %v4465
        %v4647 = vsub.f32 %v2233, %v4465
        %v4648 = vsub.f32 %v2234, %v4465
        %v4649 = vsub.f32 %v2235, %v4465
        %v4650 = vsub.f32 %v2236, %v4465
        %v4651 = vsub.f32 %v2237, %v4465
        %v4652 = vsub.f32 %v2238, %v4465
        %v4653 = vsub.f32 %v2239, %v4465
        %v4654 = vsub.f32 %v2240, %v4465
        %v4655 = vsub.f32 %v2241, %v4465
        %v4656 = vsub.f32 %v2242, %v4465
        %v4657 = vsub.f32 %v2243, %v4465
        %v4658 = vsub.f32 %v2244, %v4465
        %v4659 = vsub.f32 %v2245, %v4465
        %v4660 = vsub.f32 %v2246, %v4465
        %v4661 = vsub.f32 %v2247, %v4465
        %v4662 = vsub.f32 %v2248, %v4465
        %v4663 = vsub.f32 %v2249, %v4465
        %v4664 = vsub.f32 %v2250, %v4465
        %v4665 = vsub.f32 %v2251, %v4465
        %v4666 = vsub.f32 %v2252, %v4465
        %v4667 = vsub.f32 %v2253, %v4465
        %v4668 = vsub.f32 %v2254, %v4465
        %v4669 = vsub.f32 %v2255, %v4465
        %v4670 = vsub.f32 %v2256, %v4465
        %v4671 = vsub.f32 %v2257, %v4465
        %v4672 = vsub.f32 %v2258, %v4465
        %v4673 = vsub.f32 %v2259, %v4465
        %v4674 = vsub.f32 %v2260, %v4465
        %v4675 = vsub.f32 %v2261, %v4465
        %v4676 = vsub.f32 %v2262, %v4465
        %v4677 = vsub.f32 %v2263, %v4465
        %v4678 = vsub.f32 %v2264, %v4465
        %v4679 = vsub.f32 %v2265, %v4465
        %v4680 = vsub.f32 %v2266, %v4465
        %v4681 = vsub.f32 %v2267, %v4465
        %v4682 = vsub.f32 %v2268, %v4465
        %v4683 = vsub.f32 %v2269, %v4465
        %v4684 = vsub.f32 %v2270, %v4465
        %v4685 = vsub.f32 %v2271, %v4465
        %v4686 = vsub.f32 %v2272, %v4465
        %v4687 = vsub.f32 %v2273, %v4465
        %v4688 = vsub.f32 %v2274, %v4465
        %v4689 = vsub.f32 %v2275, %v4465
        %v4690 = vsub.f32 %v2276, %v4465
        %v4691 = vsub.f32 %v2277, %v4465
        %v4692 = vsub.f32 %v2278, %v4465
        %v4693 = vsub.f32 %v2279, %v4465
        %v4694 = vsub.f32 %v2280, %v4465
        %v4695 = vsub.f32 %v2281, %v4465
        %v4696 = vsub.f32 %v2282, %v4465
        %v4697 = vsub.f32 %v2283, %v4465
        %v4698 = vsub.f32 %v2284, %v4465
        %v4699 = vsub.f32 %v2285, %v4465
        %v4700 = vsub.f32 %v2286, %v4465
        %v4701 = vsub.f32 %v2287, %v4465
        %v4702 = vsub.f32 %v2288, %v4465
        %v4703 = vsub.f32 %v2289, %v4465
        %v4704 = vsub.f32 %v2290, %v4465
        %v4705 = vsub.f32 %v2291, %v4465
        %v4706 = vsub.f32 %v2292, %v4465
        %v4707 = vsub.f32 %v2293, %v4465
        %v4708 = vlaneseq
        %v4709 = vshrl.u32 %v4708, 7
        %v4710 = vstv %s121
        %v4711 = vadd.s32 %v4710, 1
        %vm4712 = vcmp.lt.s32.totalorder %v4710, 2
        %vm4713 = vcmp.lt.s32.totalorder %v4711, 2
        %v4714 = vsel %vm4712, 23032, 6019
        %v4715 = vsel %vm4713, 23032, 6019
        %vm4716 = vcmp.eq.s32.totalorder %v4709, 0
        %vm4717 = vcmp.eq.s32.totalorder %v4709, 1
        %v4718 = vsel %vm4717, %v4714, 1024
        %v4719 = vsel %vm4717, %v4715, 1024
        %v4720 = vsel %vm4716, 101, %v4718
        %v4721 = vsel %vm4716, 101, %v4719
        %v4722 = vlaneseq
        %v4723 = vand.u32 %v4722, 127
        %v4724 = vadd.s32 %v4723, 128
        %v4725 = vadd.s32 %v4723, 256
        %v4726 = vadd.s32 %v4723, 384
        %v4727 = vadd.s32 %v4723, 512
        %v4728 = vadd.s32 %v4723, 640
        %v4729 = vadd.s32 %v4723, 768
        %v4730 = vadd.s32 %v4723, 896
        %v4731 = vadd.s32 %v4723, 1024
        %v4732 = vadd.s32 %v4723, 1152
        %v4733 = vadd.s32 %v4723, 1280
        %v4734 = vadd.s32 %v4723, 1408
        %v4735 = vadd.s32 %v4723, 1536
        %v4736 = vadd.s32 %v4723, 1664
        %v4737 = vadd.s32 %v4723, 1792
        %v4738 = vadd.s32 %v4723, 1920
        %v4739 = vadd.s32 %v4723, 2048
        %v4740 = vadd.s32 %v4723, 2176
        %v4741 = vadd.s32 %v4723, 2304
        %v4742 = vadd.s32 %v4723, 2432
        %v4743 = vadd.s32 %v4723, 2560
        %v4744 = vadd.s32 %v4723, 2688
        %v4745 = vadd.s32 %v4723, 2816
        %v4746 = vadd.s32 %v4723, 2944
        %v4747 = vadd.s32 %v4723, 3072
        %v4748 = vadd.s32 %v4723, 3200
        %v4749 = vadd.s32 %v4723, 3328
        %v4750 = vadd.s32 %v4723, 3456
        %v4751 = vadd.s32 %v4723, 3584
        %v4752 = vadd.s32 %v4723, 3712
        %v4753 = vadd.s32 %v4723, 3840
        %v4754 = vadd.s32 %v4723, 3968
        %v4755 = vadd.s32 %v4723, 4096
        %v4756 = vadd.s32 %v4723, 4224
        %v4757 = vadd.s32 %v4723, 4352
        %v4758 = vadd.s32 %v4723, 4480
        %v4759 = vadd.s32 %v4723, 4608
        %v4760 = vadd.s32 %v4723, 4736
        %v4761 = vadd.s32 %v4723, 4864
        %v4762 = vadd.s32 %v4723, 4992
        %v4763 = vadd.s32 %v4723, 5120
        %v4764 = vadd.s32 %v4723, 5248
        %v4765 = vadd.s32 %v4723, 5376
        %v4766 = vadd.s32 %v4723, 5504
        %v4767 = vadd.s32 %v4723, 5632
        %v4768 = vadd.s32 %v4723, 5760
        %v4769 = vadd.s32 %v4723, 5888
        %v4770 = vadd.s32 %v4723, 6016
        %v4771 = vadd.s32 %v4723, 6144
        %v4772 = vadd.s32 %v4723, 6272
        %v4773 = vadd.s32 %v4723, 6400
        %v4774 = vadd.s32 %v4723, 6528
        %v4775 = vadd.s32 %v4723, 6656
        %v4776 = vadd.s32 %v4723, 6784
        %v4777 = vadd.s32 %v4723, 6912
        %v4778 = vadd.s32 %v4723, 7040
        %v4779 = vadd.s32 %v4723, 7168
        %v4780 = vadd.s32 %v4723, 7296
        %v4781 = vadd.s32 %v4723, 7424
        %v4782 = vadd.s32 %v4723, 7552
        %v4783 = vadd.s32 %v4723, 7680
        %v4784 = vadd.s32 %v4723, 7808
        %v4785 = vadd.s32 %v4723, 7936
        %v4786 = vadd.s32 %v4723, 8064
        %v4787 = vadd.s32 %v4723, 8192
        %v4788 = vadd.s32 %v4723, 8320
        %v4789 = vadd.s32 %v4723, 8448
        %v4790 = vadd.s32 %v4723, 8576
        %v4791 = vadd.s32 %v4723, 8704
        %v4792 = vadd.s32 %v4723, 8832
        %v4793 = vadd.s32 %v4723, 8960
        %v4794 = vadd.s32 %v4723, 9088
        %v4795 = vadd.s32 %v4723, 9216
        %v4796 = vadd.s32 %v4723, 9344
        %v4797 = vadd.s32 %v4723, 9472
        %v4798 = vadd.s32 %v4723, 9600
        %v4799 = vadd.s32 %v4723, 9728
        %v4800 = vadd.s32 %v4723, 9856
        %v4801 = vadd.s32 %v4723, 9984
        %v4802 = vadd.s32 %v4723, 10112
        %v4803 = vadd.s32 %v4723, 10240
        %v4804 = vadd.s32 %v4723, 10368
        %v4805 = vadd.s32 %v4723, 10496
        %v4806 = vadd.s32 %v4723, 10624
        %v4807 = vadd.s32 %v4723, 10752
        %v4808 = vadd.s32 %v4723, 10880
        %v4809 = vadd.s32 %v4723, 11008
        %v4810 = vadd.s32 %v4723, 11136
        %v4811 = vadd.s32 %v4723, 11264
        %v4812 = vadd.s32 %v4723, 11392
        %v4813 = vadd.s32 %v4723, 11520
        %v4814 = vadd.s32 %v4723, 11648
        %v4815 = vadd.s32 %v4723, 11776
        %v4816 = vadd.s32 %v4723, 11904
        %v4817 = vadd.s32 %v4723, 12032
        %v4818 = vadd.s32 %v4723, 12160
        %v4819 = vadd.s32 %v4723, 12288
        %v4820 = vadd.s32 %v4723, 12416
        %v4821 = vadd.s32 %v4723, 12544
        %v4822 = vadd.s32 %v4723, 12672
        %v4823 = vadd.s32 %v4723, 12800
        %v4824 = vadd.s32 %v4723, 12928
        %v4825 = vadd.s32 %v4723, 13056
        %v4826 = vadd.s32 %v4723, 13184
        %v4827 = vadd.s32 %v4723, 13312
        %v4828 = vadd.s32 %v4723, 13440
        %v4829 = vadd.s32 %v4723, 13568
        %v4830 = vadd.s32 %v4723, 13696
        %v4831 = vadd.s32 %v4723, 13824
        %v4832 = vadd.s32 %v4723, 13952
        %v4833 = vadd.s32 %v4723, 14080
        %v4834 = vadd.s32 %v4723, 14208
        %v4835 = vadd.s32 %v4723, 14336
        %v4836 = vadd.s32 %v4723, 14464
        %v4837 = vadd.s32 %v4723, 14592
        %v4838 = vadd.s32 %v4723, 14720
        %v4839 = vadd.s32 %v4723, 14848
        %v4840 = vadd.s32 %v4723, 14976
        %v4841 = vadd.s32 %v4723, 15104
        %v4842 = vadd.s32 %v4723, 15232
        %v4843 = vadd.s32 %v4723, 15360
        %v4844 = vadd.s32 %v4723, 15488
        %v4845 = vadd.s32 %v4723, 15616
        %v4846 = vadd.s32 %v4723, 15744
        %v4847 = vadd.s32 %v4723, 15872
        %v4848 = vadd.s32 %v4723, 16000
        %v4849 = vadd.s32 %v4723, 16128
        %v4850 = vadd.s32 %v4723, 16256
        %v4851 = vadd.s32 %v4723, 16384
        %v4852 = vadd.s32 %v4723, 16512
        %v4853 = vadd.s32 %v4723, 16640
        %v4854 = vadd.s32 %v4723, 16768
        %v4855 = vadd.s32 %v4723, 16896
        %v4856 = vadd.s32 %v4723, 17024
        %v4857 = vadd.s32 %v4723, 17152
        %v4858 = vadd.s32 %v4723, 17280
        %v4859 = vadd.s32 %v4723, 17408
        %v4860 = vadd.s32 %v4723, 17536
        %v4861 = vadd.s32 %v4723, 17664
        %v4862 = vadd.s32 %v4723, 17792
        %v4863 = vadd.s32 %v4723, 17920
        %v4864 = vadd.s32 %v4723, 18048
        %v4865 = vadd.s32 %v4723, 18176
        %v4866 = vadd.s32 %v4723, 18304
        %v4867 = vadd.s32 %v4723, 18432
        %v4868 = vadd.s32 %v4723, 18560
        %v4869 = vadd.s32 %v4723, 18688
        %v4870 = vadd.s32 %v4723, 18816
        %v4871 = vadd.s32 %v4723, 18944
        %v4872 = vadd.s32 %v4723, 19072
        %v4873 = vadd.s32 %v4723, 19200
        %v4874 = vadd.s32 %v4723, 19328
        %v4875 = vadd.s32 %v4723, 19456
        %v4876 = vadd.s32 %v4723, 19584
        %v4877 = vadd.s32 %v4723, 19712
        %v4878 = vadd.s32 %v4723, 19840
        %v4879 = vadd.s32 %v4723, 19968
        %v4880 = vadd.s32 %v4723, 20096
        %v4881 = vadd.s32 %v4723, 20224
        %v4882 = vadd.s32 %v4723, 20352
        %v4883 = vadd.s32 %v4723, 20480
        %v4884 = vadd.s32 %v4723, 20608
        %v4885 = vadd.s32 %v4723, 20736
        %v4886 = vadd.s32 %v4723, 20864
        %v4887 = vadd.s32 %v4723, 20992
        %v4888 = vadd.s32 %v4723, 21120
        %v4889 = vadd.s32 %v4723, 21248
        %v4890 = vadd.s32 %v4723, 21376
        %v4891 = vadd.s32 %v4723, 21504
        %v4892 = vadd.s32 %v4723, 21632
        %v4893 = vadd.s32 %v4723, 21760
        %v4894 = vadd.s32 %v4723, 21888
        %v4895 = vadd.s32 %v4723, 22016
        %v4896 = vadd.s32 %v4723, 22144
        %v4897 = vadd.s32 %v4723, 22272
        %v4898 = vadd.s32 %v4723, 22400
        %v4899 = vadd.s32 %v4723, 22528
        %v4900 = vadd.s32 %v4723, 22656
        %v4901 = vadd.s32 %v4723, 22784
        %v4902 = vadd.s32 %v4723, 22912
        %v4903 = vadd.s32 %v4723, 23040
        %v4904 = vadd.s32 %v4723, 23168
        %v4905 = vadd.s32 %v4723, 23296
        %v4906 = vadd.s32 %v4723, 23424
        %v4907 = vadd.s32 %v4723, 23552
        %v4908 = vadd.s32 %v4723, 23680
        %v4909 = vadd.s32 %v4723, 23808
        %v4910 = vadd.s32 %v4723, 23936
        %v4911 = vadd.s32 %v4723, 24064
        %v4912 = vadd.s32 %v4723, 24192
        %v4913 = vadd.s32 %v4723, 24320
        %v4914 = vadd.s32 %v4723, 24448
        %v4915 = vadd.s32 %v4723, 24576
        %v4916 = vadd.s32 %v4723, 24704
        %v4917 = vadd.s32 %v4723, 24832
        %v4918 = vadd.s32 %v4723, 24960
        %v4919 = vadd.s32 %v4723, 25088
        %v4920 = vadd.s32 %v4723, 25216
        %v4921 = vadd.s32 %v4723, 25344
        %v4922 = vadd.s32 %v4723, 25472
        %v4923 = vadd.s32 %v4723, 25600
        %v4924 = vadd.s32 %v4723, 25728
        %v4925 = vadd.s32 %v4723, 25856
        %v4926 = vadd.s32 %v4723, 25984
        %v4927 = vadd.s32 %v4723, 26112
        %v4928 = vadd.s32 %v4723, 26240
        %v4929 = vadd.s32 %v4723, 26368
        %v4930 = vadd.s32 %v4723, 26496
        %v4931 = vadd.s32 %v4723, 26624
        %v4932 = vadd.s32 %v4723, 26752
        %v4933 = vadd.s32 %v4723, 26880
        %v4934 = vadd.s32 %v4723, 27008
        %v4935 = vadd.s32 %v4723, 27136
        %v4936 = vadd.s32 %v4723, 27264
        %v4937 = vadd.s32 %v4723, 27392
        %v4938 = vadd.s32 %v4723, 27520
        %v4939 = vadd.s32 %v4723, 27648
        %v4940 = vadd.s32 %v4723, 27776
        %v4941 = vadd.s32 %v4723, 27904
        %v4942 = vadd.s32 %v4723, 28032
        %v4943 = vadd.s32 %v4723, 28160
        %v4944 = vadd.s32 %v4723, 28288
        %v4945 = vadd.s32 %v4723, 28416
        %v4946 = vadd.s32 %v4723, 28544
        %v4947 = vadd.s32 %v4723, 28672
        %v4948 = vadd.s32 %v4723, 28800
        %v4949 = vadd.s32 %v4723, 28928
        %v4950 = vadd.s32 %v4723, 29056
        %v4951 = vadd.s32 %v4723, 29184
        %v4952 = vadd.s32 %v4723, 29312
        %v4953 = vadd.s32 %v4723, 29440
        %v4954 = vadd.s32 %v4723, 29568
        %v4955 = vadd.s32 %v4723, 29696
        %v4956 = vadd.s32 %v4723, 29824
        %v4957 = vadd.s32 %v4723, 29952
        %v4958 = vadd.s32 %v4723, 30080
        %v4959 = vadd.s32 %v4723, 30208
        %v4960 = vadd.s32 %v4723, 30336
        %v4961 = vadd.s32 %v4723, 30464
        %vm4962 = vcmp.eq.s32.totalorder %v4723, %v4720
        %vm4963 = vcmp.eq.s32.totalorder %v4724, %v4720
        %vm4964 = vcmp.eq.s32.totalorder %v4725, %v4720
        %vm4965 = vcmp.eq.s32.totalorder %v4726, %v4720
        %vm4966 = vcmp.eq.s32.totalorder %v4727, %v4720
        %vm4967 = vcmp.eq.s32.totalorder %v4728, %v4720
        %vm4968 = vcmp.eq.s32.totalorder %v4729, %v4720
        %vm4969 = vcmp.eq.s32.totalorder %v4730, %v4720
        %vm4970 = vcmp.eq.s32.totalorder %v4731, %v4720
        %vm4971 = vcmp.eq.s32.totalorder %v4732, %v4720
        %vm4972 = vcmp.eq.s32.totalorder %v4733, %v4720
        %vm4973 = vcmp.eq.s32.totalorder %v4734, %v4720
        %vm4974 = vcmp.eq.s32.totalorder %v4735, %v4720
        %vm4975 = vcmp.eq.s32.totalorder %v4736, %v4720
        %vm4976 = vcmp.eq.s32.totalorder %v4737, %v4720
        %vm4977 = vcmp.eq.s32.totalorder %v4738, %v4720
        %vm4978 = vcmp.eq.s32.totalorder %v4739, %v4720
        %vm4979 = vcmp.eq.s32.totalorder %v4740, %v4720
        %vm4980 = vcmp.eq.s32.totalorder %v4741, %v4720
        %vm4981 = vcmp.eq.s32.totalorder %v4742, %v4720
        %vm4982 = vcmp.eq.s32.totalorder %v4743, %v4720
        %vm4983 = vcmp.eq.s32.totalorder %v4744, %v4720
        %vm4984 = vcmp.eq.s32.totalorder %v4745, %v4720
        %vm4985 = vcmp.eq.s32.totalorder %v4746, %v4720
        %vm4986 = vcmp.eq.s32.totalorder %v4747, %v4720
        %vm4987 = vcmp.eq.s32.totalorder %v4748, %v4720
        %vm4988 = vcmp.eq.s32.totalorder %v4749, %v4720
        %vm4989 = vcmp.eq.s32.totalorder %v4750, %v4720
        %vm4990 = vcmp.eq.s32.totalorder %v4751, %v4720
        %vm4991 = vcmp.eq.s32.totalorder %v4752, %v4720
        %vm4992 = vcmp.eq.s32.totalorder %v4753, %v4720
        %vm4993 = vcmp.eq.s32.totalorder %v4754, %v4720
        %vm4994 = vcmp.eq.s32.totalorder %v4755, %v4720
        %vm4995 = vcmp.eq.s32.totalorder %v4756, %v4720
        %vm4996 = vcmp.eq.s32.totalorder %v4757, %v4720
        %vm4997 = vcmp.eq.s32.totalorder %v4758, %v4720
        %vm4998 = vcmp.eq.s32.totalorder %v4759, %v4720
        %vm4999 = vcmp.eq.s32.totalorder %v4760, %v4720
        %vm5000 = vcmp.eq.s32.totalorder %v4761, %v4720
        %vm5001 = vcmp.eq.s32.totalorder %v4762, %v4720
        %vm5002 = vcmp.eq.s32.totalorder %v4763, %v4720
        %vm5003 = vcmp.eq.s32.totalorder %v4764, %v4720
        %vm5004 = vcmp.eq.s32.totalorder %v4765, %v4720
        %vm5005 = vcmp.eq.s32.totalorder %v4766, %v4720
        %vm5006 = vcmp.eq.s32.totalorder %v4767, %v4720
        %vm5007 = vcmp.eq.s32.totalorder %v4768, %v4720
        %vm5008 = vcmp.eq.s32.totalorder %v4769, %v4720
        %vm5009 = vcmp.eq.s32.totalorder %v4770, %v4720
        %vm5010 = vcmp.eq.s32.totalorder %v4771, %v4720
        %vm5011 = vcmp.eq.s32.totalorder %v4772, %v4720
        %vm5012 = vcmp.eq.s32.totalorder %v4773, %v4720
        %vm5013 = vcmp.eq.s32.totalorder %v4774, %v4720
        %vm5014 = vcmp.eq.s32.totalorder %v4775, %v4720
        %vm5015 = vcmp.eq.s32.totalorder %v4776, %v4720
        %vm5016 = vcmp.eq.s32.totalorder %v4777, %v4720
        %vm5017 = vcmp.eq.s32.totalorder %v4778, %v4720
        %vm5018 = vcmp.eq.s32.totalorder %v4779, %v4720
        %vm5019 = vcmp.eq.s32.totalorder %v4780, %v4720
        %vm5020 = vcmp.eq.s32.totalorder %v4781, %v4720
        %vm5021 = vcmp.eq.s32.totalorder %v4782, %v4720
        %vm5022 = vcmp.eq.s32.totalorder %v4783, %v4720
        %vm5023 = vcmp.eq.s32.totalorder %v4784, %v4720
        %vm5024 = vcmp.eq.s32.totalorder %v4785, %v4720
        %vm5025 = vcmp.eq.s32.totalorder %v4786, %v4720
        %vm5026 = vcmp.eq.s32.totalorder %v4787, %v4720
        %vm5027 = vcmp.eq.s32.totalorder %v4788, %v4720
        %vm5028 = vcmp.eq.s32.totalorder %v4789, %v4720
        %vm5029 = vcmp.eq.s32.totalorder %v4790, %v4720
        %vm5030 = vcmp.eq.s32.totalorder %v4791, %v4720
        %vm5031 = vcmp.eq.s32.totalorder %v4792, %v4720
        %vm5032 = vcmp.eq.s32.totalorder %v4793, %v4720
        %vm5033 = vcmp.eq.s32.totalorder %v4794, %v4720
        %vm5034 = vcmp.eq.s32.totalorder %v4795, %v4720
        %vm5035 = vcmp.eq.s32.totalorder %v4796, %v4720
        %vm5036 = vcmp.eq.s32.totalorder %v4797, %v4720
        %vm5037 = vcmp.eq.s32.totalorder %v4798, %v4720
        %vm5038 = vcmp.eq.s32.totalorder %v4799, %v4720
        %vm5039 = vcmp.eq.s32.totalorder %v4800, %v4720
        %vm5040 = vcmp.eq.s32.totalorder %v4801, %v4720
        %vm5041 = vcmp.eq.s32.totalorder %v4802, %v4720
        %vm5042 = vcmp.eq.s32.totalorder %v4803, %v4720
        %vm5043 = vcmp.eq.s32.totalorder %v4804, %v4720
        %vm5044 = vcmp.eq.s32.totalorder %v4805, %v4720
        %vm5045 = vcmp.eq.s32.totalorder %v4806, %v4720
        %vm5046 = vcmp.eq.s32.totalorder %v4807, %v4720
        %vm5047 = vcmp.eq.s32.totalorder %v4808, %v4720
        %vm5048 = vcmp.eq.s32.totalorder %v4809, %v4720
        %vm5049 = vcmp.eq.s32.totalorder %v4810, %v4720
        %vm5050 = vcmp.eq.s32.totalorder %v4811, %v4720
        %vm5051 = vcmp.eq.s32.totalorder %v4812, %v4720
        %vm5052 = vcmp.eq.s32.totalorder %v4813, %v4720
        %vm5053 = vcmp.eq.s32.totalorder %v4814, %v4720
        %vm5054 = vcmp.eq.s32.totalorder %v4815, %v4720
        %vm5055 = vcmp.eq.s32.totalorder %v4816, %v4720
        %vm5056 = vcmp.eq.s32.totalorder %v4817, %v4720
        %vm5057 = vcmp.eq.s32.totalorder %v4818, %v4720
        %vm5058 = vcmp.eq.s32.totalorder %v4819, %v4720
        %vm5059 = vcmp.eq.s32.totalorder %v4820, %v4720
        %vm5060 = vcmp.eq.s32.totalorder %v4821, %v4720
        %vm5061 = vcmp.eq.s32.totalorder %v4822, %v4720
        %vm5062 = vcmp.eq.s32.totalorder %v4823, %v4720
        %vm5063 = vcmp.eq.s32.totalorder %v4824, %v4720
        %vm5064 = vcmp.eq.s32.totalorder %v4825, %v4720
        %vm5065 = vcmp.eq.s32.totalorder %v4826, %v4720
        %vm5066 = vcmp.eq.s32.totalorder %v4827, %v4720
        %vm5067 = vcmp.eq.s32.totalorder %v4828, %v4720
        %vm5068 = vcmp.eq.s32.totalorder %v4829, %v4720
        %vm5069 = vcmp.eq.s32.totalorder %v4830, %v4720
        %vm5070 = vcmp.eq.s32.totalorder %v4831, %v4720
        %vm5071 = vcmp.eq.s32.totalorder %v4832, %v4720
        %vm5072 = vcmp.eq.s32.totalorder %v4833, %v4720
        %vm5073 = vcmp.eq.s32.totalorder %v4834, %v4720
        %vm5074 = vcmp.eq.s32.totalorder %v4835, %v4720
        %vm5075 = vcmp.eq.s32.totalorder %v4836, %v4720
        %vm5076 = vcmp.eq.s32.totalorder %v4837, %v4720
        %vm5077 = vcmp.eq.s32.totalorder %v4838, %v4720
        %vm5078 = vcmp.eq.s32.totalorder %v4839, %v4720
        %vm5079 = vcmp.eq.s32.totalorder %v4840, %v4720
        %vm5080 = vcmp.eq.s32.totalorder %v4841, %v4720
        %vm5081 = vcmp.eq.s32.totalorder %v4842, %v4720
        %vm5082 = vcmp.eq.s32.totalorder %v4843, %v4720
        %vm5083 = vcmp.eq.s32.totalorder %v4844, %v4720
        %vm5084 = vcmp.eq.s32.totalorder %v4845, %v4720
        %vm5085 = vcmp.eq.s32.totalorder %v4846, %v4720
        %vm5086 = vcmp.eq.s32.totalorder %v4847, %v4720
        %vm5087 = vcmp.eq.s32.totalorder %v4848, %v4720
        %vm5088 = vcmp.eq.s32.totalorder %v4849, %v4720
        %vm5089 = vcmp.eq.s32.totalorder %v4850, %v4720
        %vm5090 = vcmp.eq.s32.totalorder %v4851, %v4720
        %vm5091 = vcmp.eq.s32.totalorder %v4852, %v4720
        %vm5092 = vcmp.eq.s32.totalorder %v4853, %v4720
        %vm5093 = vcmp.eq.s32.totalorder %v4854, %v4720
        %vm5094 = vcmp.eq.s32.totalorder %v4855, %v4720
        %vm5095 = vcmp.eq.s32.totalorder %v4856, %v4720
        %vm5096 = vcmp.eq.s32.totalorder %v4857, %v4720
        %vm5097 = vcmp.eq.s32.totalorder %v4858, %v4720
        %vm5098 = vcmp.eq.s32.totalorder %v4859, %v4720
        %vm5099 = vcmp.eq.s32.totalorder %v4860, %v4720
        %vm5100 = vcmp.eq.s32.totalorder %v4861, %v4720
        %vm5101 = vcmp.eq.s32.totalorder %v4862, %v4720
        %vm5102 = vcmp.eq.s32.totalorder %v4863, %v4720
        %vm5103 = vcmp.eq.s32.totalorder %v4864, %v4720
        %vm5104 = vcmp.eq.s32.totalorder %v4865, %v4720
        %vm5105 = vcmp.eq.s32.totalorder %v4866, %v4720
        %vm5106 = vcmp.eq.s32.totalorder %v4867, %v4720
        %vm5107 = vcmp.eq.s32.totalorder %v4868, %v4720
        %vm5108 = vcmp.eq.s32.totalorder %v4869, %v4720
        %vm5109 = vcmp.eq.s32.totalorder %v4870, %v4720
        %vm5110 = vcmp.eq.s32.totalorder %v4871, %v4720
        %vm5111 = vcmp.eq.s32.totalorder %v4872, %v4720
        %vm5112 = vcmp.eq.s32.totalorder %v4873, %v4720
        %vm5113 = vcmp.eq.s32.totalorder %v4874, %v4720
        %vm5114 = vcmp.eq.s32.totalorder %v4875, %v4720
        %vm5115 = vcmp.eq.s32.totalorder %v4876, %v4720
        %vm5116 = vcmp.eq.s32.totalorder %v4877, %v4720
        %vm5117 = vcmp.eq.s32.totalorder %v4878, %v4720
        %vm5118 = vcmp.eq.s32.totalorder %v4879, %v4720
        %vm5119 = vcmp.eq.s32.totalorder %v4880, %v4720
        %vm5120 = vcmp.eq.s32.totalorder %v4881, %v4720
        %vm5121 = vcmp.eq.s32.totalorder %v4882, %v4720
        %vm5122 = vcmp.eq.s32.totalorder %v4883, %v4720
        %vm5123 = vcmp.eq.s32.totalorder %v4884, %v4720
        %vm5124 = vcmp.eq.s32.totalorder %v4885, %v4720
        %vm5125 = vcmp.eq.s32.totalorder %v4886, %v4720
        %vm5126 = vcmp.eq.s32.totalorder %v4887, %v4720
        %vm5127 = vcmp.eq.s32.totalorder %v4888, %v4720
        %vm5128 = vcmp.eq.s32.totalorder %v4889, %v4720
        %vm5129 = vcmp.eq.s32.totalorder %v4890, %v4720
        %vm5130 = vcmp.eq.s32.totalorder %v4891, %v4720
        %vm5131 = vcmp.eq.s32.totalorder %v4892, %v4720
        %vm5132 = vcmp.eq.s32.totalorder %v4893, %v4720
        %vm5133 = vcmp.eq.s32.totalorder %v4894, %v4720
        %vm5134 = vcmp.eq.s32.totalorder %v4895, %v4720
        %vm5135 = vcmp.eq.s32.totalorder %v4896, %v4720
        %vm5136 = vcmp.eq.s32.totalorder %v4897, %v4720
        %vm5137 = vcmp.eq.s32.totalorder %v4898, %v4720
        %vm5138 = vcmp.eq.s32.totalorder %v4899, %v4720
        %vm5139 = vcmp.eq.s32.totalorder %v4900, %v4720
        %vm5140 = vcmp.eq.s32.totalorder %v4901, %v4720
        %vm5141 = vcmp.eq.s32.totalorder %v4902, %v4720
        %vm5142 = vcmp.eq.s32.totalorder %v4903, %v4720
        %vm5143 = vcmp.eq.s32.totalorder %v4904, %v4720
        %vm5144 = vcmp.eq.s32.totalorder %v4905, %v4720
        %vm5145 = vcmp.eq.s32.totalorder %v4906, %v4720
        %vm5146 = vcmp.eq.s32.totalorder %v4907, %v4720
        %vm5147 = vcmp.eq.s32.totalorder %v4908, %v4720
        %vm5148 = vcmp.eq.s32.totalorder %v4909, %v4720
        %vm5149 = vcmp.eq.s32.totalorder %v4910, %v4720
        %vm5150 = vcmp.eq.s32.totalorder %v4911, %v4720
        %vm5151 = vcmp.eq.s32.totalorder %v4912, %v4720
        %vm5152 = vcmp.eq.s32.totalorder %v4913, %v4720
        %vm5153 = vcmp.eq.s32.totalorder %v4914, %v4720
        %vm5154 = vcmp.eq.s32.totalorder %v4915, %v4720
        %vm5155 = vcmp.eq.s32.totalorder %v4916, %v4720
        %vm5156 = vcmp.eq.s32.totalorder %v4917, %v4720
        %vm5157 = vcmp.eq.s32.totalorder %v4918, %v4720
        %vm5158 = vcmp.eq.s32.totalorder %v4919, %v4720
        %vm5159 = vcmp.eq.s32.totalorder %v4920, %v4720
        %vm5160 = vcmp.eq.s32.totalorder %v4921, %v4720
        %vm5161 = vcmp.eq.s32.totalorder %v4922, %v4720
        %vm5162 = vcmp.eq.s32.totalorder %v4923, %v4720
        %vm5163 = vcmp.eq.s32.totalorder %v4924, %v4720
        %vm5164 = vcmp.eq.s32.totalorder %v4925, %v4720
        %vm5165 = vcmp.eq.s32.totalorder %v4926, %v4720
        %vm5166 = vcmp.eq.s32.totalorder %v4927, %v4720
        %vm5167 = vcmp.eq.s32.totalorder %v4928, %v4720
        %vm5168 = vcmp.eq.s32.totalorder %v4929, %v4720
        %vm5169 = vcmp.eq.s32.totalorder %v4930, %v4720
        %vm5170 = vcmp.eq.s32.totalorder %v4931, %v4720
        %vm5171 = vcmp.eq.s32.totalorder %v4932, %v4720
        %vm5172 = vcmp.eq.s32.totalorder %v4933, %v4720
        %vm5173 = vcmp.eq.s32.totalorder %v4934, %v4720
        %vm5174 = vcmp.eq.s32.totalorder %v4935, %v4720
        %vm5175 = vcmp.eq.s32.totalorder %v4936, %v4720
        %vm5176 = vcmp.eq.s32.totalorder %v4937, %v4720
        %vm5177 = vcmp.eq.s32.totalorder %v4938, %v4720
        %vm5178 = vcmp.eq.s32.totalorder %v4939, %v4720
        %vm5179 = vcmp.eq.s32.totalorder %v4940, %v4720
        %vm5180 = vcmp.eq.s32.totalorder %v4941, %v4720
        %vm5181 = vcmp.eq.s32.totalorder %v4942, %v4720
        %vm5182 = vcmp.eq.s32.totalorder %v4943, %v4720
        %vm5183 = vcmp.eq.s32.totalorder %v4944, %v4720
        %vm5184 = vcmp.eq.s32.totalorder %v4945, %v4720
        %vm5185 = vcmp.eq.s32.totalorder %v4946, %v4720
        %vm5186 = vcmp.eq.s32.totalorder %v4947, %v4720
        %vm5187 = vcmp.eq.s32.totalorder %v4948, %v4720
        %vm5188 = vcmp.eq.s32.totalorder %v4949, %v4720
        %vm5189 = vcmp.eq.s32.totalorder %v4950, %v4720
        %vm5190 = vcmp.eq.s32.totalorder %v4951, %v4720
        %vm5191 = vcmp.eq.s32.totalorder %v4952, %v4720
        %vm5192 = vcmp.eq.s32.totalorder %v4953, %v4720
        %vm5193 = vcmp.eq.s32.totalorder %v4954, %v4720
        %vm5194 = vcmp.eq.s32.totalorder %v4955, %v4720
        %vm5195 = vcmp.eq.s32.totalorder %v4956, %v4720
        %vm5196 = vcmp.eq.s32.totalorder %v4957, %v4720
        %vm5197 = vcmp.eq.s32.totalorder %v4958, %v4720
        %vm5198 = vcmp.eq.s32.totalorder %v4959, %v4720
        %vm5199 = vcmp.eq.s32.totalorder %v4960, %v4720
        %vm5200 = vcmp.eq.s32.totalorder %v4961, %v4720
        %vm5201 = vcmp.eq.s32.totalorder %v4723, %v4721
        %vm5202 = vcmp.eq.s32.totalorder %v4724, %v4721
        %vm5203 = vcmp.eq.s32.totalorder %v4725, %v4721
        %vm5204 = vcmp.eq.s32.totalorder %v4726, %v4721
        %vm5205 = vcmp.eq.s32.totalorder %v4727, %v4721
        %vm5206 = vcmp.eq.s32.totalorder %v4728, %v4721
        %vm5207 = vcmp.eq.s32.totalorder %v4729, %v4721
        %vm5208 = vcmp.eq.s32.totalorder %v4730, %v4721
        %vm5209 = vcmp.eq.s32.totalorder %v4731, %v4721
        %vm5210 = vcmp.eq.s32.totalorder %v4732, %v4721
        %vm5211 = vcmp.eq.s32.totalorder %v4733, %v4721
        %vm5212 = vcmp.eq.s32.totalorder %v4734, %v4721
        %vm5213 = vcmp.eq.s32.totalorder %v4735, %v4721
        %vm5214 = vcmp.eq.s32.totalorder %v4736, %v4721
        %vm5215 = vcmp.eq.s32.totalorder %v4737, %v4721
        %vm5216 = vcmp.eq.s32.totalorder %v4738, %v4721
        %vm5217 = vcmp.eq.s32.totalorder %v4739, %v4721
        %vm5218 = vcmp.eq.s32.totalorder %v4740, %v4721
        %vm5219 = vcmp.eq.s32.totalorder %v4741, %v4721
        %vm5220 = vcmp.eq.s32.totalorder %v4742, %v4721
        %vm5221 = vcmp.eq.s32.totalorder %v4743, %v4721
        %vm5222 = vcmp.eq.s32.totalorder %v4744, %v4721
        %vm5223 = vcmp.eq.s32.totalorder %v4745, %v4721
        %vm5224 = vcmp.eq.s32.totalorder %v4746, %v4721
        %vm5225 = vcmp.eq.s32.totalorder %v4747, %v4721
        %vm5226 = vcmp.eq.s32.totalorder %v4748, %v4721
        %vm5227 = vcmp.eq.s32.totalorder %v4749, %v4721
        %vm5228 = vcmp.eq.s32.totalorder %v4750, %v4721
        %vm5229 = vcmp.eq.s32.totalorder %v4751, %v4721
        %vm5230 = vcmp.eq.s32.totalorder %v4752, %v4721
        %vm5231 = vcmp.eq.s32.totalorder %v4753, %v4721
        %vm5232 = vcmp.eq.s32.totalorder %v4754, %v4721
        %vm5233 = vcmp.eq.s32.totalorder %v4755, %v4721
        %vm5234 = vcmp.eq.s32.totalorder %v4756, %v4721
        %vm5235 = vcmp.eq.s32.totalorder %v4757, %v4721
        %vm5236 = vcmp.eq.s32.totalorder %v4758, %v4721
        %vm5237 = vcmp.eq.s32.totalorder %v4759, %v4721
        %vm5238 = vcmp.eq.s32.totalorder %v4760, %v4721
        %vm5239 = vcmp.eq.s32.totalorder %v4761, %v4721
        %vm5240 = vcmp.eq.s32.totalorder %v4762, %v4721
        %vm5241 = vcmp.eq.s32.totalorder %v4763, %v4721
        %vm5242 = vcmp.eq.s32.totalorder %v4764, %v4721
        %vm5243 = vcmp.eq.s32.totalorder %v4765, %v4721
        %vm5244 = vcmp.eq.s32.totalorder %v4766, %v4721
        %vm5245 = vcmp.eq.s32.totalorder %v4767, %v4721
        %vm5246 = vcmp.eq.s32.totalorder %v4768, %v4721
        %vm5247 = vcmp.eq.s32.totalorder %v4769, %v4721
        %vm5248 = vcmp.eq.s32.totalorder %v4770, %v4721
        %vm5249 = vcmp.eq.s32.totalorder %v4771, %v4721
        %vm5250 = vcmp.eq.s32.totalorder %v4772, %v4721
        %vm5251 = vcmp.eq.s32.totalorder %v4773, %v4721
        %vm5252 = vcmp.eq.s32.totalorder %v4774, %v4721
        %vm5253 = vcmp.eq.s32.totalorder %v4775, %v4721
        %vm5254 = vcmp.eq.s32.totalorder %v4776, %v4721
        %vm5255 = vcmp.eq.s32.totalorder %v4777, %v4721
        %vm5256 = vcmp.eq.s32.totalorder %v4778, %v4721
        %vm5257 = vcmp.eq.s32.totalorder %v4779, %v4721
        %vm5258 = vcmp.eq.s32.totalorder %v4780, %v4721
        %vm5259 = vcmp.eq.s32.totalorder %v4781, %v4721
        %vm5260 = vcmp.eq.s32.totalorder %v4782, %v4721
        %vm5261 = vcmp.eq.s32.totalorder %v4783, %v4721
        %vm5262 = vcmp.eq.s32.totalorder %v4784, %v4721
        %vm5263 = vcmp.eq.s32.totalorder %v4785, %v4721
        %vm5264 = vcmp.eq.s32.totalorder %v4786, %v4721
        %vm5265 = vcmp.eq.s32.totalorder %v4787, %v4721
        %vm5266 = vcmp.eq.s32.totalorder %v4788, %v4721
        %vm5267 = vcmp.eq.s32.totalorder %v4789, %v4721
        %vm5268 = vcmp.eq.s32.totalorder %v4790, %v4721
        %vm5269 = vcmp.eq.s32.totalorder %v4791, %v4721
        %vm5270 = vcmp.eq.s32.totalorder %v4792, %v4721
        %vm5271 = vcmp.eq.s32.totalorder %v4793, %v4721
        %vm5272 = vcmp.eq.s32.totalorder %v4794, %v4721
        %vm5273 = vcmp.eq.s32.totalorder %v4795, %v4721
        %vm5274 = vcmp.eq.s32.totalorder %v4796, %v4721
        %vm5275 = vcmp.eq.s32.totalorder %v4797, %v4721
        %vm5276 = vcmp.eq.s32.totalorder %v4798, %v4721
        %vm5277 = vcmp.eq.s32.totalorder %v4799, %v4721
        %vm5278 = vcmp.eq.s32.totalorder %v4800, %v4721
        %vm5279 = vcmp.eq.s32.totalorder %v4801, %v4721
        %vm5280 = vcmp.eq.s32.totalorder %v4802, %v4721
        %vm5281 = vcmp.eq.s32.totalorder %v4803, %v4721
        %vm5282 = vcmp.eq.s32.totalorder %v4804, %v4721
        %vm5283 = vcmp.eq.s32.totalorder %v4805, %v4721
        %vm5284 = vcmp.eq.s32.totalorder %v4806, %v4721
        %vm5285 = vcmp.eq.s32.totalorder %v4807, %v4721
        %vm5286 = vcmp.eq.s32.totalorder %v4808, %v4721
        %vm5287 = vcmp.eq.s32.totalorder %v4809, %v4721
        %vm5288 = vcmp.eq.s32.totalorder %v4810, %v4721
        %vm5289 = vcmp.eq.s32.totalorder %v4811, %v4721
        %vm5290 = vcmp.eq.s32.totalorder %v4812, %v4721
        %vm5291 = vcmp.eq.s32.totalorder %v4813, %v4721
        %vm5292 = vcmp.eq.s32.totalorder %v4814, %v4721
        %vm5293 = vcmp.eq.s32.totalorder %v4815, %v4721
        %vm5294 = vcmp.eq.s32.totalorder %v4816, %v4721
        %vm5295 = vcmp.eq.s32.totalorder %v4817, %v4721
        %vm5296 = vcmp.eq.s32.totalorder %v4818, %v4721
        %vm5297 = vcmp.eq.s32.totalorder %v4819, %v4721
        %vm5298 = vcmp.eq.s32.totalorder %v4820, %v4721
        %vm5299 = vcmp.eq.s32.totalorder %v4821, %v4721
        %vm5300 = vcmp.eq.s32.totalorder %v4822, %v4721
        %vm5301 = vcmp.eq.s32.totalorder %v4823, %v4721
        %vm5302 = vcmp.eq.s32.totalorder %v4824, %v4721
        %vm5303 = vcmp.eq.s32.totalorder %v4825, %v4721
        %vm5304 = vcmp.eq.s32.totalorder %v4826, %v4721
        %vm5305 = vcmp.eq.s32.totalorder %v4827, %v4721
        %vm5306 = vcmp.eq.s32.totalorder %v4828, %v4721
        %vm5307 = vcmp.eq.s32.totalorder %v4829, %v4721
        %vm5308 = vcmp.eq.s32.totalorder %v4830, %v4721
        %vm5309 = vcmp.eq.s32.totalorder %v4831, %v4721
        %vm5310 = vcmp.eq.s32.totalorder %v4832, %v4721
        %vm5311 = vcmp.eq.s32.totalorder %v4833, %v4721
        %vm5312 = vcmp.eq.s32.totalorder %v4834, %v4721
        %vm5313 = vcmp.eq.s32.totalorder %v4835, %v4721
        %vm5314 = vcmp.eq.s32.totalorder %v4836, %v4721
        %vm5315 = vcmp.eq.s32.totalorder %v4837, %v4721
        %vm5316 = vcmp.eq.s32.totalorder %v4838, %v4721
        %vm5317 = vcmp.eq.s32.totalorder %v4839, %v4721
        %vm5318 = vcmp.eq.s32.totalorder %v4840, %v4721
        %vm5319 = vcmp.eq.s32.totalorder %v4841, %v4721
        %vm5320 = vcmp.eq.s32.totalorder %v4842, %v4721
        %vm5321 = vcmp.eq.s32.totalorder %v4843, %v4721
        %vm5322 = vcmp.eq.s32.totalorder %v4844, %v4721
        %vm5323 = vcmp.eq.s32.totalorder %v4845, %v4721
        %vm5324 = vcmp.eq.s32.totalorder %v4846, %v4721
        %vm5325 = vcmp.eq.s32.totalorder %v4847, %v4721
        %vm5326 = vcmp.eq.s32.totalorder %v4848, %v4721
        %vm5327 = vcmp.eq.s32.totalorder %v4849, %v4721
        %vm5328 = vcmp.eq.s32.totalorder %v4850, %v4721
        %vm5329 = vcmp.eq.s32.totalorder %v4851, %v4721
        %vm5330 = vcmp.eq.s32.totalorder %v4852, %v4721
        %vm5331 = vcmp.eq.s32.totalorder %v4853, %v4721
        %vm5332 = vcmp.eq.s32.totalorder %v4854, %v4721
        %vm5333 = vcmp.eq.s32.totalorder %v4855, %v4721
        %vm5334 = vcmp.eq.s32.totalorder %v4856, %v4721
        %vm5335 = vcmp.eq.s32.totalorder %v4857, %v4721
        %vm5336 = vcmp.eq.s32.totalorder %v4858, %v4721
        %vm5337 = vcmp.eq.s32.totalorder %v4859, %v4721
        %vm5338 = vcmp.eq.s32.totalorder %v4860, %v4721
        %vm5339 = vcmp.eq.s32.totalorder %v4861, %v4721
        %vm5340 = vcmp.eq.s32.totalorder %v4862, %v4721
        %vm5341 = vcmp.eq.s32.totalorder %v4863, %v4721
        %vm5342 = vcmp.eq.s32.totalorder %v4864, %v4721
        %vm5343 = vcmp.eq.s32.totalorder %v4865, %v4721
        %vm5344 = vcmp.eq.s32.totalorder %v4866, %v4721
        %vm5345 = vcmp.eq.s32.totalorder %v4867, %v4721
        %vm5346 = vcmp.eq.s32.totalorder %v4868, %v4721
        %vm5347 = vcmp.eq.s32.totalorder %v4869, %v4721
        %vm5348 = vcmp.eq.s32.totalorder %v4870, %v4721
        %vm5349 = vcmp.eq.s32.totalorder %v4871, %v4721
        %vm5350 = vcmp.eq.s32.totalorder %v4872, %v4721
        %vm5351 = vcmp.eq.s32.totalorder %v4873, %v4721
        %vm5352 = vcmp.eq.s32.totalorder %v4874, %v4721
        %vm5353 = vcmp.eq.s32.totalorder %v4875, %v4721
        %vm5354 = vcmp.eq.s32.totalorder %v4876, %v4721
        %vm5355 = vcmp.eq.s32.totalorder %v4877, %v4721
        %vm5356 = vcmp.eq.s32.totalorder %v4878, %v4721
        %vm5357 = vcmp.eq.s32.totalorder %v4879, %v4721
        %vm5358 = vcmp.eq.s32.totalorder %v4880, %v4721
        %vm5359 = vcmp.eq.s32.totalorder %v4881, %v4721
        %vm5360 = vcmp.eq.s32.totalorder %v4882, %v4721
        %vm5361 = vcmp.eq.s32.totalorder %v4883, %v4721
        %vm5362 = vcmp.eq.s32.totalorder %v4884, %v4721
        %vm5363 = vcmp.eq.s32.totalorder %v4885, %v4721
        %vm5364 = vcmp.eq.s32.totalorder %v4886, %v4721
        %vm5365 = vcmp.eq.s32.totalorder %v4887, %v4721
        %vm5366 = vcmp.eq.s32.totalorder %v4888, %v4721
        %vm5367 = vcmp.eq.s32.totalorder %v4889, %v4721
        %vm5368 = vcmp.eq.s32.totalorder %v4890, %v4721
        %vm5369 = vcmp.eq.s32.totalorder %v4891, %v4721
        %vm5370 = vcmp.eq.s32.totalorder %v4892, %v4721
        %vm5371 = vcmp.eq.s32.totalorder %v4893, %v4721
        %vm5372 = vcmp.eq.s32.totalorder %v4894, %v4721
        %vm5373 = vcmp.eq.s32.totalorder %v4895, %v4721
        %vm5374 = vcmp.eq.s32.totalorder %v4896, %v4721
        %vm5375 = vcmp.eq.s32.totalorder %v4897, %v4721
        %vm5376 = vcmp.eq.s32.totalorder %v4898, %v4721
        %vm5377 = vcmp.eq.s32.totalorder %v4899, %v4721
        %vm5378 = vcmp.eq.s32.totalorder %v4900, %v4721
        %vm5379 = vcmp.eq.s32.totalorder %v4901, %v4721
        %vm5380 = vcmp.eq.s32.totalorder %v4902, %v4721
        %vm5381 = vcmp.eq.s32.totalorder %v4903, %v4721
        %vm5382 = vcmp.eq.s32.totalorder %v4904, %v4721
        %vm5383 = vcmp.eq.s32.totalorder %v4905, %v4721
        %vm5384 = vcmp.eq.s32.totalorder %v4906, %v4721
        %vm5385 = vcmp.eq.s32.totalorder %v4907, %v4721
        %vm5386 = vcmp.eq.s32.totalorder %v4908, %v4721
        %vm5387 = vcmp.eq.s32.totalorder %v4909, %v4721
        %vm5388 = vcmp.eq.s32.totalorder %v4910, %v4721
        %vm5389 = vcmp.eq.s32.totalorder %v4911, %v4721
        %vm5390 = vcmp.eq.s32.totalorder %v4912, %v4721
        %vm5391 = vcmp.eq.s32.totalorder %v4913, %v4721
        %vm5392 = vcmp.eq.s32.totalorder %v4914, %v4721
        %vm5393 = vcmp.eq.s32.totalorder %v4915, %v4721
        %vm5394 = vcmp.eq.s32.totalorder %v4916, %v4721
        %vm5395 = vcmp.eq.s32.totalorder %v4917, %v4721
        %vm5396 = vcmp.eq.s32.totalorder %v4918, %v4721
        %vm5397 = vcmp.eq.s32.totalorder %v4919, %v4721
        %vm5398 = vcmp.eq.s32.totalorder %v4920, %v4721
        %vm5399 = vcmp.eq.s32.totalorder %v4921, %v4721
        %vm5400 = vcmp.eq.s32.totalorder %v4922, %v4721
        %vm5401 = vcmp.eq.s32.totalorder %v4923, %v4721
        %vm5402 = vcmp.eq.s32.totalorder %v4924, %v4721
        %vm5403 = vcmp.eq.s32.totalorder %v4925, %v4721
        %vm5404 = vcmp.eq.s32.totalorder %v4926, %v4721
        %vm5405 = vcmp.eq.s32.totalorder %v4927, %v4721
        %vm5406 = vcmp.eq.s32.totalorder %v4928, %v4721
        %vm5407 = vcmp.eq.s32.totalorder %v4929, %v4721
        %vm5408 = vcmp.eq.s32.totalorder %v4930, %v4721
        %vm5409 = vcmp.eq.s32.totalorder %v4931, %v4721
        %vm5410 = vcmp.eq.s32.totalorder %v4932, %v4721
        %vm5411 = vcmp.eq.s32.totalorder %v4933, %v4721
        %vm5412 = vcmp.eq.s32.totalorder %v4934, %v4721
        %vm5413 = vcmp.eq.s32.totalorder %v4935, %v4721
        %vm5414 = vcmp.eq.s32.totalorder %v4936, %v4721
        %vm5415 = vcmp.eq.s32.totalorder %v4937, %v4721
        %vm5416 = vcmp.eq.s32.totalorder %v4938, %v4721
        %vm5417 = vcmp.eq.s32.totalorder %v4939, %v4721
        %vm5418 = vcmp.eq.s32.totalorder %v4940, %v4721
        %vm5419 = vcmp.eq.s32.totalorder %v4941, %v4721
        %vm5420 = vcmp.eq.s32.totalorder %v4942, %v4721
        %vm5421 = vcmp.eq.s32.totalorder %v4943, %v4721
        %vm5422 = vcmp.eq.s32.totalorder %v4944, %v4721
        %vm5423 = vcmp.eq.s32.totalorder %v4945, %v4721
        %vm5424 = vcmp.eq.s32.totalorder %v4946, %v4721
        %vm5425 = vcmp.eq.s32.totalorder %v4947, %v4721
        %vm5426 = vcmp.eq.s32.totalorder %v4948, %v4721
        %vm5427 = vcmp.eq.s32.totalorder %v4949, %v4721
        %vm5428 = vcmp.eq.s32.totalorder %v4950, %v4721
        %vm5429 = vcmp.eq.s32.totalorder %v4951, %v4721
        %vm5430 = vcmp.eq.s32.totalorder %v4952, %v4721
        %vm5431 = vcmp.eq.s32.totalorder %v4953, %v4721
        %vm5432 = vcmp.eq.s32.totalorder %v4954, %v4721
        %vm5433 = vcmp.eq.s32.totalorder %v4955, %v4721
        %vm5434 = vcmp.eq.s32.totalorder %v4956, %v4721
        %vm5435 = vcmp.eq.s32.totalorder %v4957, %v4721
        %vm5436 = vcmp.eq.s32.totalorder %v4958, %v4721
        %vm5437 = vcmp.eq.s32.totalorder %v4959, %v4721
        %vm5438 = vcmp.eq.s32.totalorder %v4960, %v4721
        %vm5439 = vcmp.eq.s32.totalorder %v4961, %v4721
        %v5440 = vsel %vm4962, -9.32626, -10.32626
        %v5441 = vsel %vm4963, -9.32626, -10.32626
        %v5442 = vsel %vm4964, -9.32626, -10.32626
        %v5443 = vsel %vm4965, -9.32626, -10.32626
        %v5444 = vsel %vm4966, -9.32626, -10.32626
        %v5445 = vsel %vm4967, -9.32626, -10.32626
        %v5446 = vsel %vm4968, -9.32626, -10.32626
        %v5447 = vsel %vm4969, -9.32626, -10.32626
        %v5448 = vsel %vm4970, -9.32626, -10.32626
        %v5449 = vsel %vm4971, -9.32626, -10.32626
        %v5450 = vsel %vm4972, -9.32626, -10.32626
        %v5451 = vsel %vm4973, -9.32626, -10.32626
        %v5452 = vsel %vm4974, -9.32626, -10.32626
        %v5453 = vsel %vm4975, -9.32626, -10.32626
        %v5454 = vsel %vm4976, -9.32626, -10.32626
        %v5455 = vsel %vm4977, -9.32626, -10.32626
        %v5456 = vsel %vm4978, -9.32626, -10.32626
        %v5457 = vsel %vm4979, -9.32626, -10.32626
        %v5458 = vsel %vm4980, -9.32626, -10.32626
        %v5459 = vsel %vm4981, -9.32626, -10.32626
        %v5460 = vsel %vm4982, -9.32626, -10.32626
        %v5461 = vsel %vm4983, -9.32626, -10.32626
        %v5462 = vsel %vm4984, -9.32626, -10.32626
        %v5463 = vsel %vm4985, -9.32626, -10.32626
        %v5464 = vsel %vm4986, -9.32626, -10.32626
        %v5465 = vsel %vm4987, -9.32626, -10.32626
        %v5466 = vsel %vm4988, -9.32626, -10.32626
        %v5467 = vsel %vm4989, -9.32626, -10.32626
        %v5468 = vsel %vm4990, -9.32626, -10.32626
        %v5469 = vsel %vm4991, -9.32626, -10.32626
        %v5470 = vsel %vm4992, -9.32626, -10.32626
        %v5471 = vsel %vm4993, -9.32626, -10.32626
        %v5472 = vsel %vm4994, -9.32626, -10.32626
        %v5473 = vsel %vm4995, -9.32626, -10.32626
        %v5474 = vsel %vm4996, -9.32626, -10.32626
        %v5475 = vsel %vm4997, -9.32626, -10.32626
        %v5476 = vsel %vm4998, -9.32626, -10.32626
        %v5477 = vsel %vm4999, -9.32626, -10.32626
        %v5478 = vsel %vm5000, -9.32626, -10.32626
        %v5479 = vsel %vm5001, -9.32626, -10.32626
        %v5480 = vsel %vm5002, -9.32626, -10.32626
        %v5481 = vsel %vm5003, -9.32626, -10.32626
        %v5482 = vsel %vm5004, -9.32626, -10.32626
        %v5483 = vsel %vm5005, -9.32626, -10.32626
        %v5484 = vsel %vm5006, -9.32626, -10.32626
        %v5485 = vsel %vm5007, -9.32626, -10.32626
        %v5486 = vsel %vm5008, -9.32626, -10.32626
        %v5487 = vsel %vm5009, -9.32626, -10.32626
        %v5488 = vsel %vm5010, -9.32626, -10.32626
        %v5489 = vsel %vm5011, -9.32626, -10.32626
        %v5490 = vsel %vm5012, -9.32626, -10.32626
        %v5491 = vsel %vm5013, -9.32626, -10.32626
        %v5492 = vsel %vm5014, -9.32626, -10.32626
        %v5493 = vsel %vm5015, -9.32626, -10.32626
        %v5494 = vsel %vm5016, -9.32626, -10.32626
        %v5495 = vsel %vm5017, -9.32626, -10.32626
        %v5496 = vsel %vm5018, -9.32626, -10.32626
        %v5497 = vsel %vm5019, -9.32626, -10.32626
        %v5498 = vsel %vm5020, -9.32626, -10.32626
        %v5499 = vsel %vm5021, -9.32626, -10.32626
        %v5500 = vsel %vm5022, -9.32626, -10.32626
        %v5501 = vsel %vm5023, -9.32626, -10.32626
        %v5502 = vsel %vm5024, -9.32626, -10.32626
        %v5503 = vsel %vm5025, -9.32626, -10.32626
        %v5504 = vsel %vm5026, -9.32626, -10.32626
        %v5505 = vsel %vm5027, -9.32626, -10.32626
        %v5506 = vsel %vm5028, -9.32626, -10.32626
        %v5507 = vsel %vm5029, -9.32626, -10.32626
        %v5508 = vsel %vm5030, -9.32626, -10.32626
        %v5509 = vsel %vm5031, -9.32626, -10.32626
        %v5510 = vsel %vm5032, -9.32626, -10.32626
        %v5511 = vsel %vm5033, -9.32626, -10.32626
        %v5512 = vsel %vm5034, -9.32626, -10.32626
        %v5513 = vsel %vm5035, -9.32626, -10.32626
        %v5514 = vsel %vm5036, -9.32626, -10.32626
        %v5515 = vsel %vm5037, -9.32626, -10.32626
        %v5516 = vsel %vm5038, -9.32626, -10.32626
        %v5517 = vsel %vm5039, -9.32626, -10.32626
        %v5518 = vsel %vm5040, -9.32626, -10.32626
        %v5519 = vsel %vm5041, -9.32626, -10.32626
        %v5520 = vsel %vm5042, -9.32626, -10.32626
        %v5521 = vsel %vm5043, -9.32626, -10.32626
        %v5522 = vsel %vm5044, -9.32626, -10.32626
        %v5523 = vsel %vm5045, -9.32626, -10.32626
        %v5524 = vsel %vm5046, -9.32626, -10.32626
        %v5525 = vsel %vm5047, -9.32626, -10.32626
        %v5526 = vsel %vm5048, -9.32626, -10.32626
        %v5527 = vsel %vm5049, -9.32626, -10.32626
        %v5528 = vsel %vm5050, -9.32626, -10.32626
        %v5529 = vsel %vm5051, -9.32626, -10.32626
        %v5530 = vsel %vm5052, -9.32626, -10.32626
        %v5531 = vsel %vm5053, -9.32626, -10.32626
        %v5532 = vsel %vm5054, -9.32626, -10.32626
        %v5533 = vsel %vm5055, -9.32626, -10.32626
        %v5534 = vsel %vm5056, -9.32626, -10.32626
        %v5535 = vsel %vm5057, -9.32626, -10.32626
        %v5536 = vsel %vm5058, -9.32626, -10.32626
        %v5537 = vsel %vm5059, -9.32626, -10.32626
        %v5538 = vsel %vm5060, -9.32626, -10.32626
        %v5539 = vsel %vm5061, -9.32626, -10.32626
        %v5540 = vsel %vm5062, -9.32626, -10.32626
        %v5541 = vsel %vm5063, -9.32626, -10.32626
        %v5542 = vsel %vm5064, -9.32626, -10.32626
        %v5543 = vsel %vm5065, -9.32626, -10.32626
        %v5544 = vsel %vm5066, -9.32626, -10.32626
        %v5545 = vsel %vm5067, -9.32626, -10.32626
        %v5546 = vsel %vm5068, -9.32626, -10.32626
        %v5547 = vsel %vm5069, -9.32626, -10.32626
        %v5548 = vsel %vm5070, -9.32626, -10.32626
        %v5549 = vsel %vm5071, -9.32626, -10.32626
        %v5550 = vsel %vm5072, -9.32626, -10.32626
        %v5551 = vsel %vm5073, -9.32626, -10.32626
        %v5552 = vsel %vm5074, -9.32626, -10.32626
        %v5553 = vsel %vm5075, -9.32626, -10.32626
        %v5554 = vsel %vm5076, -9.32626, -10.32626
        %v5555 = vsel %vm5077, -9.32626, -10.32626
        %v5556 = vsel %vm5078, -9.32626, -10.32626
        %v5557 = vsel %vm5079, -9.32626, -10.32626
        %v5558 = vsel %vm5080, -9.32626, -10.32626
        %v5559 = vsel %vm5081, -9.32626, -10.32626
        %v5560 = vsel %vm5082, -9.32626, -10.32626
        %v5561 = vsel %vm5083, -9.32626, -10.32626
        %v5562 = vsel %vm5084, -9.32626, -10.32626
        %v5563 = vsel %vm5085, -9.32626, -10.32626
        %v5564 = vsel %vm5086, -9.32626, -10.32626
        %v5565 = vsel %vm5087, -9.32626, -10.32626
        %v5566 = vsel %vm5088, -9.32626, -10.32626
        %v5567 = vsel %vm5089, -9.32626, -10.32626
        %v5568 = vsel %vm5090, -9.32626, -10.32626
        %v5569 = vsel %vm5091, -9.32626, -10.32626
        %v5570 = vsel %vm5092, -9.32626, -10.32626
        %v5571 = vsel %vm5093, -9.32626, -10.32626
        %v5572 = vsel %vm5094, -9.32626, -10.32626
        %v5573 = vsel %vm5095, -9.32626, -10.32626
        %v5574 = vsel %vm5096, -9.32626, -10.32626
        %v5575 = vsel %vm5097, -9.32626, -10.32626
        %v5576 = vsel %vm5098, -9.32626, -10.32626
        %v5577 = vsel %vm5099, -9.32626, -10.32626
        %v5578 = vsel %vm5100, -9.32626, -10.32626
        %v5579 = vsel %vm5101, -9.32626, -10.32626
        %v5580 = vsel %vm5102, -9.32626, -10.32626
        %v5581 = vsel %vm5103, -9.32626, -10.32626
        %v5582 = vsel %vm5104, -9.32626, -10.32626
        %v5583 = vsel %vm5105, -9.32626, -10.32626
        %v5584 = vsel %vm5106, -9.32626, -10.32626
        %v5585 = vsel %vm5107, -9.32626, -10.32626
        %v5586 = vsel %vm5108, -9.32626, -10.32626
        %v5587 = vsel %vm5109, -9.32626, -10.32626
        %v5588 = vsel %vm5110, -9.32626, -10.32626
        %v5589 = vsel %vm5111, -9.32626, -10.32626
        %v5590 = vsel %vm5112, -9.32626, -10.32626
        %v5591 = vsel %vm5113, -9.32626, -10.32626
        %v5592 = vsel %vm5114, -9.32626, -10.32626
        %v5593 = vsel %vm5115, -9.32626, -10.32626
        %v5594 = vsel %vm5116, -9.32626, -10.32626
        %v5595 = vsel %vm5117, -9.32626, -10.32626
        %v5596 = vsel %vm5118, -9.32626, -10.32626
        %v5597 = vsel %vm5119, -9.32626, -10.32626
        %v5598 = vsel %vm5120, -9.32626, -10.32626
        %v5599 = vsel %vm5121, -9.32626, -10.32626
        %v5600 = vsel %vm5122, -9.32626, -10.32626
        %v5601 = vsel %vm5123, -9.32626, -10.32626
        %v5602 = vsel %vm5124, -9.32626, -10.32626
        %v5603 = vsel %vm5125, -9.32626, -10.32626
        %v5604 = vsel %vm5126, -9.32626, -10.32626
        %v5605 = vsel %vm5127, -9.32626, -10.32626
        %v5606 = vsel %vm5128, -9.32626, -10.32626
        %v5607 = vsel %vm5129, -9.32626, -10.32626
        %v5608 = vsel %vm5130, -9.32626, -10.32626
        %v5609 = vsel %vm5131, -9.32626, -10.32626
        %v5610 = vsel %vm5132, -9.32626, -10.32626
        %v5611 = vsel %vm5133, -9.32626, -10.32626
        %v5612 = vsel %vm5134, -9.32626, -10.32626
        %v5613 = vsel %vm5135, -9.32626, -10.32626
        %v5614 = vsel %vm5136, -9.32626, -10.32626
        %v5615 = vsel %vm5137, -9.32626, -10.32626
        %v5616 = vsel %vm5138, -9.32626, -10.32626
        %v5617 = vsel %vm5139, -9.32626, -10.32626
        %v5618 = vsel %vm5140, -9.32626, -10.32626
        %v5619 = vsel %vm5141, -9.32626, -10.32626
        %v5620 = vsel %vm5142, -9.32626, -10.32626
        %v5621 = vsel %vm5143, -9.32626, -10.32626
        %v5622 = vsel %vm5144, -9.32626, -10.32626
        %v5623 = vsel %vm5145, -9.32626, -10.32626
        %v5624 = vsel %vm5146, -9.32626, -10.32626
        %v5625 = vsel %vm5147, -9.32626, -10.32626
        %v5626 = vsel %vm5148, -9.32626, -10.32626
        %v5627 = vsel %vm5149, -9.32626, -10.32626
        %v5628 = vsel %vm5150, -9.32626, -10.32626
        %v5629 = vsel %vm5151, -9.32626, -10.32626
        %v5630 = vsel %vm5152, -9.32626, -10.32626
        %v5631 = vsel %vm5153, -9.32626, -10.32626
        %v5632 = vsel %vm5154, -9.32626, -10.32626
        %v5633 = vsel %vm5155, -9.32626, -10.32626
        %v5634 = vsel %vm5156, -9.32626, -10.32626
        %v5635 = vsel %vm5157, -9.32626, -10.32626
        %v5636 = vsel %vm5158, -9.32626, -10.32626
        %v5637 = vsel %vm5159, -9.32626, -10.32626
        %v5638 = vsel %vm5160, -9.32626, -10.32626
        %v5639 = vsel %vm5161, -9.32626, -10.32626
        %v5640 = vsel %vm5162, -9.32626, -10.32626
        %v5641 = vsel %vm5163, -9.32626, -10.32626
        %v5642 = vsel %vm5164, -9.32626, -10.32626
        %v5643 = vsel %vm5165, -9.32626, -10.32626
        %v5644 = vsel %vm5166, -9.32626, -10.32626
        %v5645 = vsel %vm5167, -9.32626, -10.32626
        %v5646 = vsel %vm5168, -9.32626, -10.32626
        %v5647 = vsel %vm5169, -9.32626, -10.32626
        %v5648 = vsel %vm5170, -9.32626, -10.32626
        %v5649 = vsel %vm5171, -9.32626, -10.32626
        %v5650 = vsel %vm5172, -9.32626, -10.32626
        %v5651 = vsel %vm5173, -9.32626, -10.32626
        %v5652 = vsel %vm5174, -9.32626, -10.32626
        %v5653 = vsel %vm5175, -9.32626, -10.32626
        %v5654 = vsel %vm5176, -9.32626, -10.32626
        %v5655 = vsel %vm5177, -9.32626, -10.32626
        %v5656 = vsel %vm5178, -9.32626, -10.32626
        %v5657 = vsel %vm5179, -9.32626, -10.32626
        %v5658 = vsel %vm5180, -9.32626, -10.32626
        %v5659 = vsel %vm5181, -9.32626, -10.32626
        %v5660 = vsel %vm5182, -9.32626, -10.32626
        %v5661 = vsel %vm5183, -9.32626, -10.32626
        %v5662 = vsel %vm5184, -9.32626, -10.32626
        %v5663 = vsel %vm5185, -9.32626, -10.32626
        %v5664 = vsel %vm5186, -9.32626, -10.32626
        %v5665 = vsel %vm5187, -9.32626, -10.32626
        %v5666 = vsel %vm5188, -9.32626, -10.32626
        %v5667 = vsel %vm5189, -9.32626, -10.32626
        %v5668 = vsel %vm5190, -9.32626, -10.32626
        %v5669 = vsel %vm5191, -9.32626, -10.32626
        %v5670 = vsel %vm5192, -9.32626, -10.32626
        %v5671 = vsel %vm5193, -9.32626, -10.32626
        %v5672 = vsel %vm5194, -9.32626, -10.32626
        %v5673 = vsel %vm5195, -9.32626, -10.32626
        %v5674 = vsel %vm5196, -9.32626, -10.32626
        %v5675 = vsel %vm5197, -9.32626, -10.32626
        %v5676 = vsel %vm5198, -9.32626, -10.32626
        %v5677 = vsel %vm5199, -9.32626, -10.32626
        %v5678 = vsel %vm5200, -9.32626, -10.32626
        %v5679 = vsel %vm5201, -9.32626, -10.32626
        %v5680 = vsel %vm5202, -9.32626, -10.32626
        %v5681 = vsel %vm5203, -9.32626, -10.32626
        %v5682 = vsel %vm5204, -9.32626, -10.32626
        %v5683 = vsel %vm5205, -9.32626, -10.32626
        %v5684 = vsel %vm5206, -9.32626, -10.32626
        %v5685 = vsel %vm5207, -9.32626, -10.32626
        %v5686 = vsel %vm5208, -9.32626, -10.32626
        %v5687 = vsel %vm5209, -9.32626, -10.32626
        %v5688 = vsel %vm5210, -9.32626, -10.32626
        %v5689 = vsel %vm5211, -9.32626, -10.32626
        %v5690 = vsel %vm5212, -9.32626, -10.32626
        %v5691 = vsel %vm5213, -9.32626, -10.32626
        %v5692 = vsel %vm5214, -9.32626, -10.32626
        %v5693 = vsel %vm5215, -9.32626, -10.32626
        %v5694 = vsel %vm5216, -9.32626, -10.32626
        %v5695 = vsel %vm5217, -9.32626, -10.32626
        %v5696 = vsel %vm5218, -9.32626, -10.32626
        %v5697 = vsel %vm5219, -9.32626, -10.32626
        %v5698 = vsel %vm5220, -9.32626, -10.32626
        %v5699 = vsel %vm5221, -9.32626, -10.32626
        %v5700 = vsel %vm5222, -9.32626, -10.32626
        %v5701 = vsel %vm5223, -9.32626, -10.32626
        %v5702 = vsel %vm5224, -9.32626, -10.32626
        %v5703 = vsel %vm5225, -9.32626, -10.32626
        %v5704 = vsel %vm5226, -9.32626, -10.32626
        %v5705 = vsel %vm5227, -9.32626, -10.32626
        %v5706 = vsel %vm5228, -9.32626, -10.32626
        %v5707 = vsel %vm5229, -9.32626, -10.32626
        %v5708 = vsel %vm5230, -9.32626, -10.32626
        %v5709 = vsel %vm5231, -9.32626, -10.32626
        %v5710 = vsel %vm5232, -9.32626, -10.32626
        %v5711 = vsel %vm5233, -9.32626, -10.32626
        %v5712 = vsel %vm5234, -9.32626, -10.32626
        %v5713 = vsel %vm5235, -9.32626, -10.32626
        %v5714 = vsel %vm5236, -9.32626, -10.32626
        %v5715 = vsel %vm5237, -9.32626, -10.32626
        %v5716 = vsel %vm5238, -9.32626, -10.32626
        %v5717 = vsel %vm5239, -9.32626, -10.32626
        %v5718 = vsel %vm5240, -9.32626, -10.32626
        %v5719 = vsel %vm5241, -9.32626, -10.32626
        %v5720 = vsel %vm5242, -9.32626, -10.32626
        %v5721 = vsel %vm5243, -9.32626, -10.32626
        %v5722 = vsel %vm5244, -9.32626, -10.32626
        %v5723 = vsel %vm5245, -9.32626, -10.32626
        %v5724 = vsel %vm5246, -9.32626, -10.32626
        %v5725 = vsel %vm5247, -9.32626, -10.32626
        %v5726 = vsel %vm5248, -9.32626, -10.32626
        %v5727 = vsel %vm5249, -9.32626, -10.32626
        %v5728 = vsel %vm5250, -9.32626, -10.32626
        %v5729 = vsel %vm5251, -9.32626, -10.32626
        %v5730 = vsel %vm5252, -9.32626, -10.32626
        %v5731 = vsel %vm5253, -9.32626, -10.32626
        %v5732 = vsel %vm5254, -9.32626, -10.32626
        %v5733 = vsel %vm5255, -9.32626, -10.32626
        %v5734 = vsel %vm5256, -9.32626, -10.32626
        %v5735 = vsel %vm5257, -9.32626, -10.32626
        %v5736 = vsel %vm5258, -9.32626, -10.32626
        %v5737 = vsel %vm5259, -9.32626, -10.32626
        %v5738 = vsel %vm5260, -9.32626, -10.32626
        %v5739 = vsel %vm5261, -9.32626, -10.32626
        %v5740 = vsel %vm5262, -9.32626, -10.32626
        %v5741 = vsel %vm5263, -9.32626, -10.32626
        %v5742 = vsel %vm5264, -9.32626, -10.32626
        %v5743 = vsel %vm5265, -9.32626, -10.32626
        %v5744 = vsel %vm5266, -9.32626, -10.32626
        %v5745 = vsel %vm5267, -9.32626, -10.32626
        %v5746 = vsel %vm5268, -9.32626, -10.32626
        %v5747 = vsel %vm5269, -9.32626, -10.32626
        %v5748 = vsel %vm5270, -9.32626, -10.32626
        %v5749 = vsel %vm5271, -9.32626, -10.32626
        %v5750 = vsel %vm5272, -9.32626, -10.32626
        %v5751 = vsel %vm5273, -9.32626, -10.32626
        %v5752 = vsel %vm5274, -9.32626, -10.32626
        %v5753 = vsel %vm5275, -9.32626, -10.32626
        %v5754 = vsel %vm5276, -9.32626, -10.32626
        %v5755 = vsel %vm5277, -9.32626, -10.32626
        %v5756 = vsel %vm5278, -9.32626, -10.32626
        %v5757 = vsel %vm5279, -9.32626, -10.32626
        %v5758 = vsel %vm5280, -9.32626, -10.32626
        %v5759 = vsel %vm5281, -9.32626, -10.32626
        %v5760 = vsel %vm5282, -9.32626, -10.32626
        %v5761 = vsel %vm5283, -9.32626, -10.32626
        %v5762 = vsel %vm5284, -9.32626, -10.32626
        %v5763 = vsel %vm5285, -9.32626, -10.32626
        %v5764 = vsel %vm5286, -9.32626, -10.32626
        %v5765 = vsel %vm5287, -9.32626, -10.32626
        %v5766 = vsel %vm5288, -9.32626, -10.32626
        %v5767 = vsel %vm5289, -9.32626, -10.32626
        %v5768 = vsel %vm5290, -9.32626, -10.32626
        %v5769 = vsel %vm5291, -9.32626, -10.32626
        %v5770 = vsel %vm5292, -9.32626, -10.32626
        %v5771 = vsel %vm5293, -9.32626, -10.32626
        %v5772 = vsel %vm5294, -9.32626, -10.32626
        %v5773 = vsel %vm5295, -9.32626, -10.32626
        %v5774 = vsel %vm5296, -9.32626, -10.32626
        %v5775 = vsel %vm5297, -9.32626, -10.32626
        %v5776 = vsel %vm5298, -9.32626, -10.32626
        %v5777 = vsel %vm5299, -9.32626, -10.32626
        %v5778 = vsel %vm5300, -9.32626, -10.32626
        %v5779 = vsel %vm5301, -9.32626, -10.32626
        %v5780 = vsel %vm5302, -9.32626, -10.32626
        %v5781 = vsel %vm5303, -9.32626, -10.32626
        %v5782 = vsel %vm5304, -9.32626, -10.32626
        %v5783 = vsel %vm5305, -9.32626, -10.32626
        %v5784 = vsel %vm5306, -9.32626, -10.32626
        %v5785 = vsel %vm5307, -9.32626, -10.32626
        %v5786 = vsel %vm5308, -9.32626, -10.32626
        %v5787 = vsel %vm5309, -9.32626, -10.32626
        %v5788 = vsel %vm5310, -9.32626, -10.32626
        %v5789 = vsel %vm5311, -9.32626, -10.32626
        %v5790 = vsel %vm5312, -9.32626, -10.32626
        %v5791 = vsel %vm5313, -9.32626, -10.32626
        %v5792 = vsel %vm5314, -9.32626, -10.32626
        %v5793 = vsel %vm5315, -9.32626, -10.32626
        %v5794 = vsel %vm5316, -9.32626, -10.32626
        %v5795 = vsel %vm5317, -9.32626, -10.32626
        %v5796 = vsel %vm5318, -9.32626, -10.32626
        %v5797 = vsel %vm5319, -9.32626, -10.32626
        %v5798 = vsel %vm5320, -9.32626, -10.32626
        %v5799 = vsel %vm5321, -9.32626, -10.32626
        %v5800 = vsel %vm5322, -9.32626, -10.32626
        %v5801 = vsel %vm5323, -9.32626, -10.32626
        %v5802 = vsel %vm5324, -9.32626, -10.32626
        %v5803 = vsel %vm5325, -9.32626, -10.32626
        %v5804 = vsel %vm5326, -9.32626, -10.32626
        %v5805 = vsel %vm5327, -9.32626, -10.32626
        %v5806 = vsel %vm5328, -9.32626, -10.32626
        %v5807 = vsel %vm5329, -9.32626, -10.32626
        %v5808 = vsel %vm5330, -9.32626, -10.32626
        %v5809 = vsel %vm5331, -9.32626, -10.32626
        %v5810 = vsel %vm5332, -9.32626, -10.32626
        %v5811 = vsel %vm5333, -9.32626, -10.32626
        %v5812 = vsel %vm5334, -9.32626, -10.32626
        %v5813 = vsel %vm5335, -9.32626, -10.32626
        %v5814 = vsel %vm5336, -9.32626, -10.32626
        %v5815 = vsel %vm5337, -9.32626, -10.32626
        %v5816 = vsel %vm5338, -9.32626, -10.32626
        %v5817 = vsel %vm5339, -9.32626, -10.32626
        %v5818 = vsel %vm5340, -9.32626, -10.32626
        %v5819 = vsel %vm5341, -9.32626, -10.32626
        %v5820 = vsel %vm5342, -9.32626, -10.32626
        %v5821 = vsel %vm5343, -9.32626, -10.32626
        %v5822 = vsel %vm5344, -9.32626, -10.32626
        %v5823 = vsel %vm5345, -9.32626, -10.32626
        %v5824 = vsel %vm5346, -9.32626, -10.32626
        %v5825 = vsel %vm5347, -9.32626, -10.32626
        %v5826 = vsel %vm5348, -9.32626, -10.32626
        %v5827 = vsel %vm5349, -9.32626, -10.32626
        %v5828 = vsel %vm5350, -9.32626, -10.32626
        %v5829 = vsel %vm5351, -9.32626, -10.32626
        %v5830 = vsel %vm5352, -9.32626, -10.32626
        %v5831 = vsel %vm5353, -9.32626, -10.32626
        %v5832 = vsel %vm5354, -9.32626, -10.32626
        %v5833 = vsel %vm5355, -9.32626, -10.32626
        %v5834 = vsel %vm5356, -9.32626, -10.32626
        %v5835 = vsel %vm5357, -9.32626, -10.32626
        %v5836 = vsel %vm5358, -9.32626, -10.32626
        %v5837 = vsel %vm5359, -9.32626, -10.32626
        %v5838 = vsel %vm5360, -9.32626, -10.32626
        %v5839 = vsel %vm5361, -9.32626, -10.32626
        %v5840 = vsel %vm5362, -9.32626, -10.32626
        %v5841 = vsel %vm5363, -9.32626, -10.32626
        %v5842 = vsel %vm5364, -9.32626, -10.32626
        %v5843 = vsel %vm5365, -9.32626, -10.32626
        %v5844 = vsel %vm5366, -9.32626, -10.32626
        %v5845 = vsel %vm5367, -9.32626, -10.32626
        %v5846 = vsel %vm5368, -9.32626, -10.32626
        %v5847 = vsel %vm5369, -9.32626, -10.32626
        %v5848 = vsel %vm5370, -9.32626, -10.32626
        %v5849 = vsel %vm5371, -9.32626, -10.32626
        %v5850 = vsel %vm5372, -9.32626, -10.32626
        %v5851 = vsel %vm5373, -9.32626, -10.32626
        %v5852 = vsel %vm5374, -9.32626, -10.32626
        %v5853 = vsel %vm5375, -9.32626, -10.32626
        %v5854 = vsel %vm5376, -9.32626, -10.32626
        %v5855 = vsel %vm5377, -9.32626, -10.32626
        %v5856 = vsel %vm5378, -9.32626, -10.32626
        %v5857 = vsel %vm5379, -9.32626, -10.32626
        %v5858 = vsel %vm5380, -9.32626, -10.32626
        %v5859 = vsel %vm5381, -9.32626, -10.32626
        %v5860 = vsel %vm5382, -9.32626, -10.32626
        %v5861 = vsel %vm5383, -9.32626, -10.32626
        %v5862 = vsel %vm5384, -9.32626, -10.32626
        %v5863 = vsel %vm5385, -9.32626, -10.32626
        %v5864 = vsel %vm5386, -9.32626, -10.32626
        %v5865 = vsel %vm5387, -9.32626, -10.32626
        %v5866 = vsel %vm5388, -9.32626, -10.32626
        %v5867 = vsel %vm5389, -9.32626, -10.32626
        %v5868 = vsel %vm5390, -9.32626, -10.32626
        %v5869 = vsel %vm5391, -9.32626, -10.32626
        %v5870 = vsel %vm5392, -9.32626, -10.32626
        %v5871 = vsel %vm5393, -9.32626, -10.32626
        %v5872 = vsel %vm5394, -9.32626, -10.32626
        %v5873 = vsel %vm5395, -9.32626, -10.32626
        %v5874 = vsel %vm5396, -9.32626, -10.32626
        %v5875 = vsel %vm5397, -9.32626, -10.32626
        %v5876 = vsel %vm5398, -9.32626, -10.32626
        %v5877 = vsel %vm5399, -9.32626, -10.32626
        %v5878 = vsel %vm5400, -9.32626, -10.32626
        %v5879 = vsel %vm5401, -9.32626, -10.32626
        %v5880 = vsel %vm5402, -9.32626, -10.32626
        %v5881 = vsel %vm5403, -9.32626, -10.32626
        %v5882 = vsel %vm5404, -9.32626, -10.32626
        %v5883 = vsel %vm5405, -9.32626, -10.32626
        %v5884 = vsel %vm5406, -9.32626, -10.32626
        %v5885 = vsel %vm5407, -9.32626, -10.32626
        %v5886 = vsel %vm5408, -9.32626, -10.32626
        %v5887 = vsel %vm5409, -9.32626, -10.32626
        %v5888 = vsel %vm5410, -9.32626, -10.32626
        %v5889 = vsel %vm5411, -9.32626, -10.32626
        %v5890 = vsel %vm5412, -9.32626, -10.32626
        %v5891 = vsel %vm5413, -9.32626, -10.32626
        %v5892 = vsel %vm5414, -9.32626, -10.32626
        %v5893 = vsel %vm5415, -9.32626, -10.32626
        %v5894 = vsel %vm5416, -9.32626, -10.32626
        %v5895 = vsel %vm5417, -9.32626, -10.32626
        %v5896 = vsel %vm5418, -9.32626, -10.32626
        %v5897 = vsel %vm5419, -9.32626, -10.32626
        %v5898 = vsel %vm5420, -9.32626, -10.32626
        %v5899 = vsel %vm5421, -9.32626, -10.32626
        %v5900 = vsel %vm5422, -9.32626, -10.32626
        %v5901 = vsel %vm5423, -9.32626, -10.32626
        %v5902 = vsel %vm5424, -9.32626, -10.32626
        %v5903 = vsel %vm5425, -9.32626, -10.32626
        %v5904 = vsel %vm5426, -9.32626, -10.32626
        %v5905 = vsel %vm5427, -9.32626, -10.32626
        %v5906 = vsel %vm5428, -9.32626, -10.32626
        %v5907 = vsel %vm5429, -9.32626, -10.32626
        %v5908 = vsel %vm5430, -9.32626, -10.32626
        %v5909 = vsel %vm5431, -9.32626, -10.32626
        %v5910 = vsel %vm5432, -9.32626, -10.32626
        %v5911 = vsel %vm5433, -9.32626, -10.32626
        %v5912 = vsel %vm5434, -9.32626, -10.32626
        %v5913 = vsel %vm5435, -9.32626, -10.32626
        %v5914 = vsel %vm5436, -9.32626, -10.32626
        %v5915 = vsel %vm5437, -9.32626, -10.32626
        %v5916 = vsel %vm5438, -9.32626, -10.32626
        %v5917 = vsel %vm5439, -9.32626, -10.32626
        %v5918 = vsel %vm4716, 102, 0
        %vm5919 = vcmp.eq.s32.totalorder %v4723, %v5918
        %vm5920 = vcmp.eq.s32.totalorder %v4724, %v5918
        %vm5921 = vcmp.eq.s32.totalorder %v4725, %v5918
        %vm5922 = vcmp.eq.s32.totalorder %v4726, %v5918
        %vm5923 = vcmp.eq.s32.totalorder %v4727, %v5918
        %vm5924 = vcmp.eq.s32.totalorder %v4728, %v5918
        %vm5925 = vcmp.eq.s32.totalorder %v4729, %v5918
        %vm5926 = vcmp.eq.s32.totalorder %v4730, %v5918
        %vm5927 = vcmp.eq.s32.totalorder %v4731, %v5918
        %vm5928 = vcmp.eq.s32.totalorder %v4732, %v5918
        %vm5929 = vcmp.eq.s32.totalorder %v4733, %v5918
        %vm5930 = vcmp.eq.s32.totalorder %v4734, %v5918
        %vm5931 = vcmp.eq.s32.totalorder %v4735, %v5918
        %vm5932 = vcmp.eq.s32.totalorder %v4736, %v5918
        %vm5933 = vcmp.eq.s32.totalorder %v4737, %v5918
        %vm5934 = vcmp.eq.s32.totalorder %v4738, %v5918
        %vm5935 = vcmp.eq.s32.totalorder %v4739, %v5918
        %vm5936 = vcmp.eq.s32.totalorder %v4740, %v5918
        %vm5937 = vcmp.eq.s32.totalorder %v4741, %v5918
        %vm5938 = vcmp.eq.s32.totalorder %v4742, %v5918
        %vm5939 = vcmp.eq.s32.totalorder %v4743, %v5918
        %vm5940 = vcmp.eq.s32.totalorder %v4744, %v5918
        %vm5941 = vcmp.eq.s32.totalorder %v4745, %v5918
        %vm5942 = vcmp.eq.s32.totalorder %v4746, %v5918
        %vm5943 = vcmp.eq.s32.totalorder %v4747, %v5918
        %vm5944 = vcmp.eq.s32.totalorder %v4748, %v5918
        %vm5945 = vcmp.eq.s32.totalorder %v4749, %v5918
        %vm5946 = vcmp.eq.s32.totalorder %v4750, %v5918
        %vm5947 = vcmp.eq.s32.totalorder %v4751, %v5918
        %vm5948 = vcmp.eq.s32.totalorder %v4752, %v5918
        %vm5949 = vcmp.eq.s32.totalorder %v4753, %v5918
        %vm5950 = vcmp.eq.s32.totalorder %v4754, %v5918
        %vm5951 = vcmp.eq.s32.totalorder %v4755, %v5918
        %vm5952 = vcmp.eq.s32.totalorder %v4756, %v5918
        %vm5953 = vcmp.eq.s32.totalorder %v4757, %v5918
        %vm5954 = vcmp.eq.s32.totalorder %v4758, %v5918
        %vm5955 = vcmp.eq.s32.totalorder %v4759, %v5918
        %vm5956 = vcmp.eq.s32.totalorder %v4760, %v5918
        %vm5957 = vcmp.eq.s32.totalorder %v4761, %v5918
        %vm5958 = vcmp.eq.s32.totalorder %v4762, %v5918
        %vm5959 = vcmp.eq.s32.totalorder %v4763, %v5918
        %vm5960 = vcmp.eq.s32.totalorder %v4764, %v5918
        %vm5961 = vcmp.eq.s32.totalorder %v4765, %v5918
        %vm5962 = vcmp.eq.s32.totalorder %v4766, %v5918
        %vm5963 = vcmp.eq.s32.totalorder %v4767, %v5918
        %vm5964 = vcmp.eq.s32.totalorder %v4768, %v5918
        %vm5965 = vcmp.eq.s32.totalorder %v4769, %v5918
        %vm5966 = vcmp.eq.s32.totalorder %v4770, %v5918
        %vm5967 = vcmp.eq.s32.totalorder %v4771, %v5918
        %vm5968 = vcmp.eq.s32.totalorder %v4772, %v5918
        %vm5969 = vcmp.eq.s32.totalorder %v4773, %v5918
        %vm5970 = vcmp.eq.s32.totalorder %v4774, %v5918
        %vm5971 = vcmp.eq.s32.totalorder %v4775, %v5918
        %vm5972 = vcmp.eq.s32.totalorder %v4776, %v5918
        %vm5973 = vcmp.eq.s32.totalorder %v4777, %v5918
        %vm5974 = vcmp.eq.s32.totalorder %v4778, %v5918
        %vm5975 = vcmp.eq.s32.totalorder %v4779, %v5918
        %vm5976 = vcmp.eq.s32.totalorder %v4780, %v5918
        %vm5977 = vcmp.eq.s32.totalorder %v4781, %v5918
        %vm5978 = vcmp.eq.s32.totalorder %v4782, %v5918
        %vm5979 = vcmp.eq.s32.totalorder %v4783, %v5918
        %vm5980 = vcmp.eq.s32.totalorder %v4784, %v5918
        %vm5981 = vcmp.eq.s32.totalorder %v4785, %v5918
        %vm5982 = vcmp.eq.s32.totalorder %v4786, %v5918
        %vm5983 = vcmp.eq.s32.totalorder %v4787, %v5918
        %vm5984 = vcmp.eq.s32.totalorder %v4788, %v5918
        %vm5985 = vcmp.eq.s32.totalorder %v4789, %v5918
        %vm5986 = vcmp.eq.s32.totalorder %v4790, %v5918
        %vm5987 = vcmp.eq.s32.totalorder %v4791, %v5918
        %vm5988 = vcmp.eq.s32.totalorder %v4792, %v5918
        %vm5989 = vcmp.eq.s32.totalorder %v4793, %v5918
        %vm5990 = vcmp.eq.s32.totalorder %v4794, %v5918
        %vm5991 = vcmp.eq.s32.totalorder %v4795, %v5918
        %vm5992 = vcmp.eq.s32.totalorder %v4796, %v5918
        %vm5993 = vcmp.eq.s32.totalorder %v4797, %v5918
        %vm5994 = vcmp.eq.s32.totalorder %v4798, %v5918
        %vm5995 = vcmp.eq.s32.totalorder %v4799, %v5918
        %vm5996 = vcmp.eq.s32.totalorder %v4800, %v5918
        %vm5997 = vcmp.eq.s32.totalorder %v4801, %v5918
        %vm5998 = vcmp.eq.s32.totalorder %v4802, %v5918
        %vm5999 = vcmp.eq.s32.totalorder %v4803, %v5918
        %vm6000 = vcmp.eq.s32.totalorder %v4804, %v5918
        %vm6001 = vcmp.eq.s32.totalorder %v4805, %v5918
        %vm6002 = vcmp.eq.s32.totalorder %v4806, %v5918
        %vm6003 = vcmp.eq.s32.totalorder %v4807, %v5918
        %vm6004 = vcmp.eq.s32.totalorder %v4808, %v5918
        %vm6005 = vcmp.eq.s32.totalorder %v4809, %v5918
        %vm6006 = vcmp.eq.s32.totalorder %v4810, %v5918
        %vm6007 = vcmp.eq.s32.totalorder %v4811, %v5918
        %vm6008 = vcmp.eq.s32.totalorder %v4812, %v5918
        %vm6009 = vcmp.eq.s32.totalorder %v4813, %v5918
        %vm6010 = vcmp.eq.s32.totalorder %v4814, %v5918
        %vm6011 = vcmp.eq.s32.totalorder %v4815, %v5918
        %vm6012 = vcmp.eq.s32.totalorder %v4816, %v5918
        %vm6013 = vcmp.eq.s32.totalorder %v4817, %v5918
        %vm6014 = vcmp.eq.s32.totalorder %v4818, %v5918
        %vm6015 = vcmp.eq.s32.totalorder %v4819, %v5918
        %vm6016 = vcmp.eq.s32.totalorder %v4820, %v5918
        %vm6017 = vcmp.eq.s32.totalorder %v4821, %v5918
        %vm6018 = vcmp.eq.s32.totalorder %v4822, %v5918
        %vm6019 = vcmp.eq.s32.totalorder %v4823, %v5918
        %vm6020 = vcmp.eq.s32.totalorder %v4824, %v5918
        %vm6021 = vcmp.eq.s32.totalorder %v4825, %v5918
        %vm6022 = vcmp.eq.s32.totalorder %v4826, %v5918
        %vm6023 = vcmp.eq.s32.totalorder %v4827, %v5918
        %vm6024 = vcmp.eq.s32.totalorder %v4828, %v5918
        %vm6025 = vcmp.eq.s32.totalorder %v4829, %v5918
        %vm6026 = vcmp.eq.s32.totalorder %v4830, %v5918
        %vm6027 = vcmp.eq.s32.totalorder %v4831, %v5918
        %vm6028 = vcmp.eq.s32.totalorder %v4832, %v5918
        %vm6029 = vcmp.eq.s32.totalorder %v4833, %v5918
        %vm6030 = vcmp.eq.s32.totalorder %v4834, %v5918
        %vm6031 = vcmp.eq.s32.totalorder %v4835, %v5918
        %vm6032 = vcmp.eq.s32.totalorder %v4836, %v5918
        %vm6033 = vcmp.eq.s32.totalorder %v4837, %v5918
        %vm6034 = vcmp.eq.s32.totalorder %v4838, %v5918
        %vm6035 = vcmp.eq.s32.totalorder %v4839, %v5918
        %vm6036 = vcmp.eq.s32.totalorder %v4840, %v5918
        %vm6037 = vcmp.eq.s32.totalorder %v4841, %v5918
        %vm6038 = vcmp.eq.s32.totalorder %v4842, %v5918
        %vm6039 = vcmp.eq.s32.totalorder %v4843, %v5918
        %vm6040 = vcmp.eq.s32.totalorder %v4844, %v5918
        %vm6041 = vcmp.eq.s32.totalorder %v4845, %v5918
        %vm6042 = vcmp.eq.s32.totalorder %v4846, %v5918
        %vm6043 = vcmp.eq.s32.totalorder %v4847, %v5918
        %vm6044 = vcmp.eq.s32.totalorder %v4848, %v5918
        %vm6045 = vcmp.eq.s32.totalorder %v4849, %v5918
        %vm6046 = vcmp.eq.s32.totalorder %v4850, %v5918
        %vm6047 = vcmp.eq.s32.totalorder %v4851, %v5918
        %vm6048 = vcmp.eq.s32.totalorder %v4852, %v5918
        %vm6049 = vcmp.eq.s32.totalorder %v4853, %v5918
        %vm6050 = vcmp.eq.s32.totalorder %v4854, %v5918
        %vm6051 = vcmp.eq.s32.totalorder %v4855, %v5918
        %vm6052 = vcmp.eq.s32.totalorder %v4856, %v5918
        %vm6053 = vcmp.eq.s32.totalorder %v4857, %v5918
        %vm6054 = vcmp.eq.s32.totalorder %v4858, %v5918
        %vm6055 = vcmp.eq.s32.totalorder %v4859, %v5918
        %vm6056 = vcmp.eq.s32.totalorder %v4860, %v5918
        %vm6057 = vcmp.eq.s32.totalorder %v4861, %v5918
        %vm6058 = vcmp.eq.s32.totalorder %v4862, %v5918
        %vm6059 = vcmp.eq.s32.totalorder %v4863, %v5918
        %vm6060 = vcmp.eq.s32.totalorder %v4864, %v5918
        %vm6061 = vcmp.eq.s32.totalorder %v4865, %v5918
        %vm6062 = vcmp.eq.s32.totalorder %v4866, %v5918
        %vm6063 = vcmp.eq.s32.totalorder %v4867, %v5918
        %vm6064 = vcmp.eq.s32.totalorder %v4868, %v5918
        %vm6065 = vcmp.eq.s32.totalorder %v4869, %v5918
        %vm6066 = vcmp.eq.s32.totalorder %v4870, %v5918
        %vm6067 = vcmp.eq.s32.totalorder %v4871, %v5918
        %vm6068 = vcmp.eq.s32.totalorder %v4872, %v5918
        %vm6069 = vcmp.eq.s32.totalorder %v4873, %v5918
        %vm6070 = vcmp.eq.s32.totalorder %v4874, %v5918
        %vm6071 = vcmp.eq.s32.totalorder %v4875, %v5918
        %vm6072 = vcmp.eq.s32.totalorder %v4876, %v5918
        %vm6073 = vcmp.eq.s32.totalorder %v4877, %v5918
        %vm6074 = vcmp.eq.s32.totalorder %v4878, %v5918
        %vm6075 = vcmp.eq.s32.totalorder %v4879, %v5918
        %vm6076 = vcmp.eq.s32.totalorder %v4880, %v5918
        %vm6077 = vcmp.eq.s32.totalorder %v4881, %v5918
        %vm6078 = vcmp.eq.s32.totalorder %v4882, %v5918
        %vm6079 = vcmp.eq.s32.totalorder %v4883, %v5918
        %vm6080 = vcmp.eq.s32.totalorder %v4884, %v5918
        %vm6081 = vcmp.eq.s32.totalorder %v4885, %v5918
        %vm6082 = vcmp.eq.s32.totalorder %v4886, %v5918
        %vm6083 = vcmp.eq.s32.totalorder %v4887, %v5918
        %vm6084 = vcmp.eq.s32.totalorder %v4888, %v5918
        %vm6085 = vcmp.eq.s32.totalorder %v4889, %v5918
        %vm6086 = vcmp.eq.s32.totalorder %v4890, %v5918
        %vm6087 = vcmp.eq.s32.totalorder %v4891, %v5918
        %vm6088 = vcmp.eq.s32.totalorder %v4892, %v5918
        %vm6089 = vcmp.eq.s32.totalorder %v4893, %v5918
        %vm6090 = vcmp.eq.s32.totalorder %v4894, %v5918
        %vm6091 = vcmp.eq.s32.totalorder %v4895, %v5918
        %vm6092 = vcmp.eq.s32.totalorder %v4896, %v5918
        %vm6093 = vcmp.eq.s32.totalorder %v4897, %v5918
        %vm6094 = vcmp.eq.s32.totalorder %v4898, %v5918
        %vm6095 = vcmp.eq.s32.totalorder %v4899, %v5918
        %vm6096 = vcmp.eq.s32.totalorder %v4900, %v5918
        %vm6097 = vcmp.eq.s32.totalorder %v4901, %v5918
        %vm6098 = vcmp.eq.s32.totalorder %v4902, %v5918
        %vm6099 = vcmp.eq.s32.totalorder %v4903, %v5918
        %vm6100 = vcmp.eq.s32.totalorder %v4904, %v5918
        %vm6101 = vcmp.eq.s32.totalorder %v4905, %v5918
        %vm6102 = vcmp.eq.s32.totalorder %v4906, %v5918
        %vm6103 = vcmp.eq.s32.totalorder %v4907, %v5918
        %vm6104 = vcmp.eq.s32.totalorder %v4908, %v5918
        %vm6105 = vcmp.eq.s32.totalorder %v4909, %v5918
        %vm6106 = vcmp.eq.s32.totalorder %v4910, %v5918
        %vm6107 = vcmp.eq.s32.totalorder %v4911, %v5918
        %vm6108 = vcmp.eq.s32.totalorder %v4912, %v5918
        %vm6109 = vcmp.eq.s32.totalorder %v4913, %v5918
        %vm6110 = vcmp.eq.s32.totalorder %v4914, %v5918
        %vm6111 = vcmp.eq.s32.totalorder %v4915, %v5918
        %vm6112 = vcmp.eq.s32.totalorder %v4916, %v5918
        %vm6113 = vcmp.eq.s32.totalorder %v4917, %v5918
        %vm6114 = vcmp.eq.s32.totalorder %v4918, %v5918
        %vm6115 = vcmp.eq.s32.totalorder %v4919, %v5918
        %vm6116 = vcmp.eq.s32.totalorder %v4920, %v5918
        %vm6117 = vcmp.eq.s32.totalorder %v4921, %v5918
        %vm6118 = vcmp.eq.s32.totalorder %v4922, %v5918
        %vm6119 = vcmp.eq.s32.totalorder %v4923, %v5918
        %vm6120 = vcmp.eq.s32.totalorder %v4924, %v5918
        %vm6121 = vcmp.eq.s32.totalorder %v4925, %v5918
        %vm6122 = vcmp.eq.s32.totalorder %v4926, %v5918
        %vm6123 = vcmp.eq.s32.totalorder %v4927, %v5918
        %vm6124 = vcmp.eq.s32.totalorder %v4928, %v5918
        %vm6125 = vcmp.eq.s32.totalorder %v4929, %v5918
        %vm6126 = vcmp.eq.s32.totalorder %v4930, %v5918
        %vm6127 = vcmp.eq.s32.totalorder %v4931, %v5918
        %vm6128 = vcmp.eq.s32.totalorder %v4932, %v5918
        %vm6129 = vcmp.eq.s32.totalorder %v4933, %v5918
        %vm6130 = vcmp.eq.s32.totalorder %v4934, %v5918
        %vm6131 = vcmp.eq.s32.totalorder %v4935, %v5918
        %vm6132 = vcmp.eq.s32.totalorder %v4936, %v5918
        %vm6133 = vcmp.eq.s32.totalorder %v4937, %v5918
        %vm6134 = vcmp.eq.s32.totalorder %v4938, %v5918
        %vm6135 = vcmp.eq.s32.totalorder %v4939, %v5918
        %vm6136 = vcmp.eq.s32.totalorder %v4940, %v5918
        %vm6137 = vcmp.eq.s32.totalorder %v4941, %v5918
        %vm6138 = vcmp.eq.s32.totalorder %v4942, %v5918
        %vm6139 = vcmp.eq.s32.totalorder %v4943, %v5918
        %vm6140 = vcmp.eq.s32.totalorder %v4944, %v5918
        %vm6141 = vcmp.eq.s32.totalorder %v4945, %v5918
        %vm6142 = vcmp.eq.s32.totalorder %v4946, %v5918
        %vm6143 = vcmp.eq.s32.totalorder %v4947, %v5918
        %vm6144 = vcmp.eq.s32.totalorder %v4948, %v5918
        %vm6145 = vcmp.eq.s32.totalorder %v4949, %v5918
        %vm6146 = vcmp.eq.s32.totalorder %v4950, %v5918
        %vm6147 = vcmp.eq.s32.totalorder %v4951, %v5918
        %vm6148 = vcmp.eq.s32.totalorder %v4952, %v5918
        %vm6149 = vcmp.eq.s32.totalorder %v4953, %v5918
        %vm6150 = vcmp.eq.s32.totalorder %v4954, %v5918
        %vm6151 = vcmp.eq.s32.totalorder %v4955, %v5918
        %vm6152 = vcmp.eq.s32.totalorder %v4956, %v5918
        %vm6153 = vcmp.eq.s32.totalorder %v4957, %v5918
        %vm6154 = vcmp.eq.s32.totalorder %v4958, %v5918
        %vm6155 = vcmp.eq.s32.totalorder %v4959, %v5918
        %vm6156 = vcmp.eq.s32.totalorder %v4960, %v5918
        %vm6157 = vcmp.eq.s32.totalorder %v4961, %v5918
        %v6158 = vsel %vm5919, -9.32626, -10.32626
        %v6159 = vsel %vm5920, -9.32626, -10.32626
        %v6160 = vsel %vm5921, -9.32626, -10.32626
        %v6161 = vsel %vm5922, -9.32626, -10.32626
        %v6162 = vsel %vm5923, -9.32626, -10.32626
        %v6163 = vsel %vm5924, -9.32626, -10.32626
        %v6164 = vsel %vm5925, -9.32626, -10.32626
        %v6165 = vsel %vm5926, -9.32626, -10.32626
        %v6166 = vsel %vm5927, -9.32626, -10.32626
        %v6167 = vsel %vm5928, -9.32626, -10.32626
        %v6168 = vsel %vm5929, -9.32626, -10.32626
        %v6169 = vsel %vm5930, -9.32626, -10.32626
        %v6170 = vsel %vm5931, -9.32626, -10.32626
        %v6171 = vsel %vm5932, -9.32626, -10.32626
        %v6172 = vsel %vm5933, -9.32626, -10.32626
        %v6173 = vsel %vm5934, -9.32626, -10.32626
        %v6174 = vsel %vm5935, -9.32626, -10.32626
        %v6175 = vsel %vm5936, -9.32626, -10.32626
        %v6176 = vsel %vm5937, -9.32626, -10.32626
        %v6177 = vsel %vm5938, -9.32626, -10.32626
        %v6178 = vsel %vm5939, -9.32626, -10.32626
        %v6179 = vsel %vm5940, -9.32626, -10.32626
        %v6180 = vsel %vm5941, -9.32626, -10.32626
        %v6181 = vsel %vm5942, -9.32626, -10.32626
        %v6182 = vsel %vm5943, -9.32626, -10.32626
        %v6183 = vsel %vm5944, -9.32626, -10.32626
        %v6184 = vsel %vm5945, -9.32626, -10.32626
        %v6185 = vsel %vm5946, -9.32626, -10.32626
        %v6186 = vsel %vm5947, -9.32626, -10.32626
        %v6187 = vsel %vm5948, -9.32626, -10.32626
        %v6188 = vsel %vm5949, -9.32626, -10.32626
        %v6189 = vsel %vm5950, -9.32626, -10.32626
        %v6190 = vsel %vm5951, -9.32626, -10.32626
        %v6191 = vsel %vm5952, -9.32626, -10.32626
        %v6192 = vsel %vm5953, -9.32626, -10.32626
        %v6193 = vsel %vm5954, -9.32626, -10.32626
        %v6194 = vsel %vm5955, -9.32626, -10.32626
        %v6195 = vsel %vm5956, -9.32626, -10.32626
        %v6196 = vsel %vm5957, -9.32626, -10.32626
        %v6197 = vsel %vm5958, -9.32626, -10.32626
        %v6198 = vsel %vm5959, -9.32626, -10.32626
        %v6199 = vsel %vm5960, -9.32626, -10.32626
        %v6200 = vsel %vm5961, -9.32626, -10.32626
        %v6201 = vsel %vm5962, -9.32626, -10.32626
        %v6202 = vsel %vm5963, -9.32626, -10.32626
        %v6203 = vsel %vm5964, -9.32626, -10.32626
        %v6204 = vsel %vm5965, -9.32626, -10.32626
        %v6205 = vsel %vm5966, -9.32626, -10.32626
        %v6206 = vsel %vm5967, -9.32626, -10.32626
        %v6207 = vsel %vm5968, -9.32626, -10.32626
        %v6208 = vsel %vm5969, -9.32626, -10.32626
        %v6209 = vsel %vm5970, -9.32626, -10.32626
        %v6210 = vsel %vm5971, -9.32626, -10.32626
        %v6211 = vsel %vm5972, -9.32626, -10.32626
        %v6212 = vsel %vm5973, -9.32626, -10.32626
        %v6213 = vsel %vm5974, -9.32626, -10.32626
        %v6214 = vsel %vm5975, -9.32626, -10.32626
        %v6215 = vsel %vm5976, -9.32626, -10.32626
        %v6216 = vsel %vm5977, -9.32626, -10.32626
        %v6217 = vsel %vm5978, -9.32626, -10.32626
        %v6218 = vsel %vm5979, -9.32626, -10.32626
        %v6219 = vsel %vm5980, -9.32626, -10.32626
        %v6220 = vsel %vm5981, -9.32626, -10.32626
        %v6221 = vsel %vm5982, -9.32626, -10.32626
        %v6222 = vsel %vm5983, -9.32626, -10.32626
        %v6223 = vsel %vm5984, -9.32626, -10.32626
        %v6224 = vsel %vm5985, -9.32626, -10.32626
        %v6225 = vsel %vm5986, -9.32626, -10.32626
        %v6226 = vsel %vm5987, -9.32626, -10.32626
        %v6227 = vsel %vm5988, -9.32626, -10.32626
        %v6228 = vsel %vm5989, -9.32626, -10.32626
        %v6229 = vsel %vm5990, -9.32626, -10.32626
        %v6230 = vsel %vm5991, -9.32626, -10.32626
        %v6231 = vsel %vm5992, -9.32626, -10.32626
        %v6232 = vsel %vm5993, -9.32626, -10.32626
        %v6233 = vsel %vm5994, -9.32626, -10.32626
        %v6234 = vsel %vm5995, -9.32626, -10.32626
        %v6235 = vsel %vm5996, -9.32626, -10.32626
        %v6236 = vsel %vm5997, -9.32626, -10.32626
        %v6237 = vsel %vm5998, -9.32626, -10.32626
        %v6238 = vsel %vm5999, -9.32626, -10.32626
        %v6239 = vsel %vm6000, -9.32626, -10.32626
        %v6240 = vsel %vm6001, -9.32626, -10.32626
        %v6241 = vsel %vm6002, -9.32626, -10.32626
        %v6242 = vsel %vm6003, -9.32626, -10.32626
        %v6243 = vsel %vm6004, -9.32626, -10.32626
        %v6244 = vsel %vm6005, -9.32626, -10.32626
        %v6245 = vsel %vm6006, -9.32626, -10.32626
        %v6246 = vsel %vm6007, -9.32626, -10.32626
        %v6247 = vsel %vm6008, -9.32626, -10.32626
        %v6248 = vsel %vm6009, -9.32626, -10.32626
        %v6249 = vsel %vm6010, -9.32626, -10.32626
        %v6250 = vsel %vm6011, -9.32626, -10.32626
        %v6251 = vsel %vm6012, -9.32626, -10.32626
        %v6252 = vsel %vm6013, -9.32626, -10.32626
        %v6253 = vsel %vm6014, -9.32626, -10.32626
        %v6254 = vsel %vm6015, -9.32626, -10.32626
        %v6255 = vsel %vm6016, -9.32626, -10.32626
        %v6256 = vsel %vm6017, -9.32626, -10.32626
        %v6257 = vsel %vm6018, -9.32626, -10.32626
        %v6258 = vsel %vm6019, -9.32626, -10.32626
        %v6259 = vsel %vm6020, -9.32626, -10.32626
        %v6260 = vsel %vm6021, -9.32626, -10.32626
        %v6261 = vsel %vm6022, -9.32626, -10.32626
        %v6262 = vsel %vm6023, -9.32626, -10.32626
        %v6263 = vsel %vm6024, -9.32626, -10.32626
        %v6264 = vsel %vm6025, -9.32626, -10.32626
        %v6265 = vsel %vm6026, -9.32626, -10.32626
        %v6266 = vsel %vm6027, -9.32626, -10.32626
        %v6267 = vsel %vm6028, -9.32626, -10.32626
        %v6268 = vsel %vm6029, -9.32626, -10.32626
        %v6269 = vsel %vm6030, -9.32626, -10.32626
        %v6270 = vsel %vm6031, -9.32626, -10.32626
        %v6271 = vsel %vm6032, -9.32626, -10.32626
        %v6272 = vsel %vm6033, -9.32626, -10.32626
        %v6273 = vsel %vm6034, -9.32626, -10.32626
        %v6274 = vsel %vm6035, -9.32626, -10.32626
        %v6275 = vsel %vm6036, -9.32626, -10.32626
        %v6276 = vsel %vm6037, -9.32626, -10.32626
        %v6277 = vsel %vm6038, -9.32626, -10.32626
        %v6278 = vsel %vm6039, -9.32626, -10.32626
        %v6279 = vsel %vm6040, -9.32626, -10.32626
        %v6280 = vsel %vm6041, -9.32626, -10.32626
        %v6281 = vsel %vm6042, -9.32626, -10.32626
        %v6282 = vsel %vm6043, -9.32626, -10.32626
        %v6283 = vsel %vm6044, -9.32626, -10.32626
        %v6284 = vsel %vm6045, -9.32626, -10.32626
        %v6285 = vsel %vm6046, -9.32626, -10.32626
        %v6286 = vsel %vm6047, -9.32626, -10.32626
        %v6287 = vsel %vm6048, -9.32626, -10.32626
        %v6288 = vsel %vm6049, -9.32626, -10.32626
        %v6289 = vsel %vm6050, -9.32626, -10.32626
        %v6290 = vsel %vm6051, -9.32626, -10.32626
        %v6291 = vsel %vm6052, -9.32626, -10.32626
        %v6292 = vsel %vm6053, -9.32626, -10.32626
        %v6293 = vsel %vm6054, -9.32626, -10.32626
        %v6294 = vsel %vm6055, -9.32626, -10.32626
        %v6295 = vsel %vm6056, -9.32626, -10.32626
        %v6296 = vsel %vm6057, -9.32626, -10.32626
        %v6297 = vsel %vm6058, -9.32626, -10.32626
        %v6298 = vsel %vm6059, -9.32626, -10.32626
        %v6299 = vsel %vm6060, -9.32626, -10.32626
        %v6300 = vsel %vm6061, -9.32626, -10.32626
        %v6301 = vsel %vm6062, -9.32626, -10.32626
        %v6302 = vsel %vm6063, -9.32626, -10.32626
        %v6303 = vsel %vm6064, -9.32626, -10.32626
        %v6304 = vsel %vm6065, -9.32626, -10.32626
        %v6305 = vsel %vm6066, -9.32626, -10.32626
        %v6306 = vsel %vm6067, -9.32626, -10.32626
        %v6307 = vsel %vm6068, -9.32626, -10.32626
        %v6308 = vsel %vm6069, -9.32626, -10.32626
        %v6309 = vsel %vm6070, -9.32626, -10.32626
        %v6310 = vsel %vm6071, -9.32626, -10.32626
        %v6311 = vsel %vm6072, -9.32626, -10.32626
        %v6312 = vsel %vm6073, -9.32626, -10.32626
        %v6313 = vsel %vm6074, -9.32626, -10.32626
        %v6314 = vsel %vm6075, -9.32626, -10.32626
        %v6315 = vsel %vm6076, -9.32626, -10.32626
        %v6316 = vsel %vm6077, -9.32626, -10.32626
        %v6317 = vsel %vm6078, -9.32626, -10.32626
        %v6318 = vsel %vm6079, -9.32626, -10.32626
        %v6319 = vsel %vm6080, -9.32626, -10.32626
        %v6320 = vsel %vm6081, -9.32626, -10.32626
        %v6321 = vsel %vm6082, -9.32626, -10.32626
        %v6322 = vsel %vm6083, -9.32626, -10.32626
        %v6323 = vsel %vm6084, -9.32626, -10.32626
        %v6324 = vsel %vm6085, -9.32626, -10.32626
        %v6325 = vsel %vm6086, -9.32626, -10.32626
        %v6326 = vsel %vm6087, -9.32626, -10.32626
        %v6327 = vsel %vm6088, -9.32626, -10.32626
        %v6328 = vsel %vm6089, -9.32626, -10.32626
        %v6329 = vsel %vm6090, -9.32626, -10.32626
        %v6330 = vsel %vm6091, -9.32626, -10.32626
        %v6331 = vsel %vm6092, -9.32626, -10.32626
        %v6332 = vsel %vm6093, -9.32626, -10.32626
        %v6333 = vsel %vm6094, -9.32626, -10.32626
        %v6334 = vsel %vm6095, -9.32626, -10.32626
        %v6335 = vsel %vm6096, -9.32626, -10.32626
        %v6336 = vsel %vm6097, -9.32626, -10.32626
        %v6337 = vsel %vm6098, -9.32626, -10.32626
        %v6338 = vsel %vm6099, -9.32626, -10.32626
        %v6339 = vsel %vm6100, -9.32626, -10.32626
        %v6340 = vsel %vm6101, -9.32626, -10.32626
        %v6341 = vsel %vm6102, -9.32626, -10.32626
        %v6342 = vsel %vm6103, -9.32626, -10.32626
        %v6343 = vsel %vm6104, -9.32626, -10.32626
        %v6344 = vsel %vm6105, -9.32626, -10.32626
        %v6345 = vsel %vm6106, -9.32626, -10.32626
        %v6346 = vsel %vm6107, -9.32626, -10.32626
        %v6347 = vsel %vm6108, -9.32626, -10.32626
        %v6348 = vsel %vm6109, -9.32626, -10.32626
        %v6349 = vsel %vm6110, -9.32626, -10.32626
        %v6350 = vsel %vm6111, -9.32626, -10.32626
        %v6351 = vsel %vm6112, -9.32626, -10.32626
        %v6352 = vsel %vm6113, -9.32626, -10.32626
        %v6353 = vsel %vm6114, -9.32626, -10.32626
        %v6354 = vsel %vm6115, -9.32626, -10.32626
        %v6355 = vsel %vm6116, -9.32626, -10.32626
        %v6356 = vsel %vm6117, -9.32626, -10.32626
        %v6357 = vsel %vm6118, -9.32626, -10.32626
        %v6358 = vsel %vm6119, -9.32626, -10.32626
        %v6359 = vsel %vm6120, -9.32626, -10.32626
        %v6360 = vsel %vm6121, -9.32626, -10.32626
        %v6361 = vsel %vm6122, -9.32626, -10.32626
        %v6362 = vsel %vm6123, -9.32626, -10.32626
        %v6363 = vsel %vm6124, -9.32626, -10.32626
        %v6364 = vsel %vm6125, -9.32626, -10.32626
        %v6365 = vsel %vm6126, -9.32626, -10.32626
        %v6366 = vsel %vm6127, -9.32626, -10.32626
        %v6367 = vsel %vm6128, -9.32626, -10.32626
        %v6368 = vsel %vm6129, -9.32626, -10.32626
        %v6369 = vsel %vm6130, -9.32626, -10.32626
        %v6370 = vsel %vm6131, -9.32626, -10.32626
        %v6371 = vsel %vm6132, -9.32626, -10.32626
        %v6372 = vsel %vm6133, -9.32626, -10.32626
        %v6373 = vsel %vm6134, -9.32626, -10.32626
        %v6374 = vsel %vm6135, -9.32626, -10.32626
        %v6375 = vsel %vm6136, -9.32626, -10.32626
        %v6376 = vsel %vm6137, -9.32626, -10.32626
        %v6377 = vsel %vm6138, -9.32626, -10.32626
        %v6378 = vsel %vm6139, -9.32626, -10.32626
        %v6379 = vsel %vm6140, -9.32626, -10.32626
        %v6380 = vsel %vm6141, -9.32626, -10.32626
        %v6381 = vsel %vm6142, -9.32626, -10.32626
        %v6382 = vsel %vm6143, -9.32626, -10.32626
        %v6383 = vsel %vm6144, -9.32626, -10.32626
        %v6384 = vsel %vm6145, -9.32626, -10.32626
        %v6385 = vsel %vm6146, -9.32626, -10.32626
        %v6386 = vsel %vm6147, -9.32626, -10.32626
        %v6387 = vsel %vm6148, -9.32626, -10.32626
        %v6388 = vsel %vm6149, -9.32626, -10.32626
        %v6389 = vsel %vm6150, -9.32626, -10.32626
        %v6390 = vsel %vm6151, -9.32626, -10.32626
        %v6391 = vsel %vm6152, -9.32626, -10.32626
        %v6392 = vsel %vm6153, -9.32626, -10.32626
        %v6393 = vsel %vm6154, -9.32626, -10.32626
        %v6394 = vsel %vm6155, -9.32626, -10.32626
        %v6395 = vsel %vm6156, -9.32626, -10.32626
        %v6396 = vsel %vm6157, -9.32626, -10.32626
        %v6637 = vcombine.high %v4468, %v4468
        %v6638 = vcombine.high %v4469, %v4469
        %v6639 = vcombine.high %v4470, %v4470
        %v6640 = vcombine.high %v4471, %v4471
        %v6641 = vcombine.high %v4472, %v4472
        %v6642 = vcombine.high %v4473, %v4473
        %v6643 = vcombine.high %v4474, %v4474
        %v6644 = vcombine.high %v4475, %v4475
        %v6645 = vcombine.high %v4476, %v4476
        %v6646 = vcombine.high %v4477, %v4477
        %v6647 = vcombine.high %v4478, %v4478
        %v6648 = vcombine.high %v4479, %v4479
        %v6649 = vcombine.high %v4480, %v4480
        %v6650 = vcombine.high %v4481, %v4481
        %v6651 = vcombine.high %v4482, %v4482
        %v6652 = vcombine.high %v4483, %v4483
        %v6653 = vcombine.high %v4484, %v4484
        %v6654 = vcombine.high %v4485, %v4485
        %v6655 = vcombine.high %v4486, %v4486
        %v6656 = vcombine.high %v4487, %v4487
        %v6657 = vcombine.high %v4488, %v4488
        %v6658 = vcombine.high %v4489, %v4489
        %v6659 = vcombine.high %v4490, %v4490
        %v6660 = vcombine.high %v4491, %v4491
        %v6661 = vcombine.high %v4492, %v4492
        %v6662 = vcombine.high %v4493, %v4493
        %v6663 = vcombine.high %v4494, %v4494
        %v6664 = vcombine.high %v4495, %v4495
        %v6665 = vcombine.high %v4496, %v4496
        %v6666 = vcombine.high %v4497, %v4497
        %v6667 = vcombine.high %v4498, %v4498
        %v6668 = vcombine.high %v4499, %v4499
        %v6669 = vcombine.high %v4500, %v4500
        %v6670 = vcombine.high %v4501, %v4501
        %v6671 = vcombine.high %v4502, %v4502
        %v6672 = vcombine.high %v4503, %v4503
        %v6673 = vcombine.high %v4504, %v4504
        %v6674 = vcombine.high %v4505, %v4505
        %v6675 = vcombine.high %v4506, %v4506
        %v6676 = vcombine.high %v4507, %v4507
        %v6677 = vcombine.high %v4508, %v4508
        %v6678 = vcombine.high %v4509, %v4509
        %v6679 = vcombine.high %v4510, %v4510
        %v6680 = vcombine.high %v4511, %v4511
        %v6681 = vcombine.high %v4512, %v4512
        %v6682 = vcombine.high %v4513, %v4513
        %v6683 = vcombine.high %v4514, %v4514
        %v6684 = vcombine.high %v4515, %v4515
        %v6685 = vcombine.high %v4516, %v4516
        %v6686 = vcombine.high %v4517, %v4517
        %v6687 = vcombine.high %v4518, %v4518
        %v6688 = vcombine.high %v4519, %v4519
        %v6689 = vcombine.high %v4520, %v4520
        %v6690 = vcombine.high %v4521, %v4521
        %v6691 = vcombine.high %v4522, %v4522
        %v6692 = vcombine.high %v4523, %v4523
        %v6693 = vcombine.high %v4524, %v4524
        %v6694 = vcombine.high %v4525, %v4525
        %v6695 = vcombine.high %v4526, %v4526
        %v6696 = vcombine.high %v4527, %v4527
        %v6697 = vcombine.high %v4528, %v4528
        %v6698 = vcombine.high %v4529, %v4529
        %v6699 = vcombine.high %v4530, %v4530
        %v6700 = vcombine.high %v4531, %v4531
        %v6701 = vcombine.high %v4532, %v4532
        %v6702 = vcombine.high %v4533, %v4533
        %v6703 = vcombine.high %v4534, %v4534
        %v6704 = vcombine.high %v4535, %v4535
        %v6705 = vcombine.high %v4536, %v4536
        %v6706 = vcombine.high %v4537, %v4537
        %v6707 = vcombine.high %v4538, %v4538
        %v6708 = vcombine.high %v4539, %v4539
        %v6709 = vcombine.high %v4540, %v4540
        %v6710 = vcombine.high %v4541, %v4541
        %v6711 = vcombine.high %v4542, %v4542
        %v6712 = vcombine.high %v4543, %v4543
        %v6713 = vcombine.high %v4544, %v4544
        %v6714 = vcombine.high %v4545, %v4545
        %v6715 = vcombine.high %v4546, %v4546
        %v6716 = vcombine.high %v4547, %v4547
        %v6717 = vcombine.high %v4548, %v4548
        %v6718 = vcombine.high %v4549, %v4549
        %v6719 = vcombine.high %v4550, %v4550
        %v6720 = vcombine.high %v4551, %v4551
        %v6721 = vcombine.high %v4552, %v4552
        %v6722 = vcombine.high %v4553, %v4553
        %v6723 = vcombine.high %v4554, %v4554
        %v6724 = vcombine.high %v4555, %v4555
        %v6725 = vcombine.high %v4556, %v4556
        %v6726 = vcombine.high %v4557, %v4557
        %v6727 = vcombine.high %v4558, %v4558
        %v6728 = vcombine.high %v4559, %v4559
        %v6729 = vcombine.high %v4560, %v4560
        %v6730 = vcombine.high %v4561, %v4561
        %v6731 = vcombine.high %v4562, %v4562
        %v6732 = vcombine.high %v4563, %v4563
        %v6733 = vcombine.high %v4564, %v4564
        %v6734 = vcombine.high %v4565, %v4565
        %v6735 = vcombine.high %v4566, %v4566
        %v6736 = vcombine.high %v4567, %v4567
        %v6737 = vcombine.high %v4568, %v4568
        %v6738 = vcombine.high %v4569, %v4569
        %v6739 = vcombine.high %v4570, %v4570
        %v6740 = vcombine.high %v4571, %v4571
        %v6741 = vcombine.high %v4572, %v4572
        %v6742 = vcombine.high %v4573, %v4573
        %v6743 = vcombine.high %v4574, %v4574
        %v6744 = vcombine.high %v4575, %v4575
        %v6745 = vcombine.high %v4576, %v4576
        %v6746 = vcombine.high %v4577, %v4577
        %v6747 = vcombine.high %v4578, %v4578
        %v6748 = vcombine.high %v4579, %v4579
        %v6749 = vcombine.high %v4580, %v4580
        %v6750 = vcombine.high %v4581, %v4581
        %v6751 = vcombine.high %v4582, %v4582
        %v6752 = vcombine.high %v4583, %v4583
        %v6753 = vcombine.high %v4584, %v4584
        %v6754 = vcombine.high %v4585, %v4585
        %v6755 = vcombine.high %v4586, %v4586
        %v6756 = vcombine.high %v4588, %v4588
        %v6757 = vcombine.high %v4589, %v4589
        %v6758 = vcombine.high %v4590, %v4590
        %v6759 = vcombine.high %v4591, %v4591
        %v6760 = vcombine.high %v4592, %v4592
        %v6761 = vcombine.high %v4593, %v4593
        %v6762 = vcombine.high %v4594, %v4594
        %v6763 = vcombine.high %v4595, %v4595
        %v6764 = vcombine.high %v4596, %v4596
        %v6765 = vcombine.high %v4597, %v4597
        %v6766 = vcombine.high %v4598, %v4598
        %v6767 = vcombine.high %v4599, %v4599
        %v6768 = vcombine.high %v4600, %v4600
        %v6769 = vcombine.high %v4601, %v4601
        %v6770 = vcombine.high %v4602, %v4602
        %v6771 = vcombine.high %v4603, %v4603
        %v6772 = vcombine.high %v4604, %v4604
        %v6773 = vcombine.high %v4605, %v4605
        %v6774 = vcombine.high %v4606, %v4606
        %v6775 = vcombine.high %v4607, %v4607
        %v6776 = vcombine.high %v4608, %v4608
        %v6777 = vcombine.high %v4609, %v4609
        %v6778 = vcombine.high %v4610, %v4610
        %v6779 = vcombine.high %v4611, %v4611
        %v6780 = vcombine.high %v4612, %v4612
        %v6781 = vcombine.high %v4613, %v4613
        %v6782 = vcombine.high %v4614, %v4614
        %v6783 = vcombine.high %v4615, %v4615
        %v6784 = vcombine.high %v4616, %v4616
        %v6785 = vcombine.high %v4617, %v4617
        %v6786 = vcombine.high %v4618, %v4618
        %v6787 = vcombine.high %v4619, %v4619
        %v6788 = vcombine.high %v4620, %v4620
        %v6789 = vcombine.high %v4621, %v4621
        %v6790 = vcombine.high %v4622, %v4622
        %v6791 = vcombine.high %v4623, %v4623
        %v6792 = vcombine.high %v4624, %v4624
        %v6793 = vcombine.high %v4625, %v4625
        %v6794 = vcombine.high %v4626, %v4626
        %v6795 = vcombine.high %v4627, %v4627
        %v6796 = vcombine.high %v4628, %v4628
        %v6797 = vcombine.high %v4629, %v4629
        %v6798 = vcombine.high %v4630, %v4630
        %v6799 = vcombine.high %v4631, %v4631
        %v6800 = vcombine.high %v4632, %v4632
        %v6801 = vcombine.high %v4633, %v4633
        %v6802 = vcombine.high %v4634, %v4634
        %v6803 = vcombine.high %v4635, %v4635
        %v6804 = vcombine.high %v4636, %v4636
        %v6805 = vcombine.high %v4637, %v4637
        %v6806 = vcombine.high %v4638, %v4638
        %v6807 = vcombine.high %v4639, %v4639
        %v6808 = vcombine.high %v4640, %v4640
        %v6809 = vcombine.high %v4641, %v4641
        %v6810 = vcombine.high %v4642, %v4642
        %v6811 = vcombine.high %v4643, %v4643
        %v6812 = vcombine.high %v4644, %v4644
        %v6813 = vcombine.high %v4645, %v4645
        %v6814 = vcombine.high %v4646, %v4646
        %v6815 = vcombine.high %v4647, %v4647
        %v6816 = vcombine.high %v4648, %v4648
        %v6817 = vcombine.high %v4649, %v4649
        %v6818 = vcombine.high %v4650, %v4650
        %v6819 = vcombine.high %v4651, %v4651
        %v6820 = vcombine.high %v4652, %v4652
        %v6821 = vcombine.high %v4653, %v4653
        %v6822 = vcombine.high %v4654, %v4654
        %v6823 = vcombine.high %v4655, %v4655
        %v6824 = vcombine.high %v4656, %v4656
        %v6825 = vcombine.high %v4657, %v4657
        %v6826 = vcombine.high %v4658, %v4658
        %v6827 = vcombine.high %v4659, %v4659
        %v6828 = vcombine.high %v4660, %v4660
        %v6829 = vcombine.high %v4661, %v4661
        %v6830 = vcombine.high %v4662, %v4662
        %v6831 = vcombine.high %v4663, %v4663
        %v6832 = vcombine.high %v4664, %v4664
        %v6833 = vcombine.high %v4665, %v4665
        %v6834 = vcombine.high %v4666, %v4666
        %v6835 = vcombine.high %v4667, %v4667
        %v6836 = vcombine.high %v4668, %v4668
        %v6837 = vcombine.high %v4669, %v4669
        %v6838 = vcombine.high %v4670, %v4670
        %v6839 = vcombine.high %v4671, %v4671
        %v6840 = vcombine.high %v4672, %v4672
        %v6841 = vcombine.high %v4673, %v4673
        %v6842 = vcombine.high %v4674, %v4674
        %v6843 = vcombine.high %v4675, %v4675
        %v6844 = vcombine.high %v4676, %v4676
        %v6845 = vcombine.high %v4677, %v4677
        %v6846 = vcombine.high %v4678, %v4678
        %v6847 = vcombine.high %v4679, %v4679
        %v6848 = vcombine.high %v4680, %v4680
        %v6849 = vcombine.high %v4681, %v4681
        %v6850 = vcombine.high %v4682, %v4682
        %v6851 = vcombine.high %v4683, %v4683
        %v6852 = vcombine.high %v4684, %v4684
        %v6853 = vcombine.high %v4685, %v4685
        %v6854 = vcombine.high %v4686, %v4686
        %v6855 = vcombine.high %v4687, %v4687
        %v6856 = vcombine.high %v4688, %v4688
        %v6857 = vcombine.high %v4689, %v4689
        %v6858 = vcombine.high %v4690, %v4690
        %v6859 = vcombine.high %v4691, %v4691
        %v6860 = vcombine.high %v4692, %v4692
        %v6861 = vcombine.high %v4693, %v4693
        %v6862 = vcombine.high %v4694, %v4694
        %v6863 = vcombine.high %v4695, %v4695
        %v6864 = vcombine.high %v4696, %v4696
        %v6865 = vcombine.high %v4697, %v4697
        %v6866 = vcombine.high %v4698, %v4698
        %v6867 = vcombine.high %v4699, %v4699
        %v6868 = vcombine.high %v4700, %v4700
        %v6869 = vcombine.high %v4701, %v4701
        %v6870 = vcombine.high %v4702, %v4702
        %v6871 = vcombine.high %v4703, %v4703
        %v6872 = vcombine.high %v4704, %v4704
        %v6873 = vcombine.high %v4705, %v4705
        %v6874 = vcombine.high %v4706, %v4706
        %v6875 = vrot.slane %v4468, 5
        %v6876 = vrot.slane %v6637, 5
        %v6877 = vrot.slane %v4469, 5
        %v6878 = vrot.slane %v6638, 5
        %v6879 = vrot.slane %v4470, 5
        %v6880 = vrot.slane %v6639, 5
        %v6881 = vrot.slane %v4471, 5
        %v6882 = vrot.slane %v6640, 5
        %v6883 = vrot.slane %v4472, 5
        %v6884 = vrot.slane %v6641, 5
        %v6885 = vrot.slane %v4473, 5
        %v6886 = vrot.slane %v6642, 5
        %v6887 = vrot.slane %v4474, 5
        %v6888 = vrot.slane %v6643, 5
        %v6889 = vrot.slane %v4475, 5
        %v6890 = vrot.slane %v6644, 5
        %v6891 = vrot.slane %v4476, 5
        %v6892 = vrot.slane %v6645, 5
        %v6893 = vrot.slane %v4477, 5
        %v6894 = vrot.slane %v6646, 5
        %v6895 = vrot.slane %v4478, 5
        %v6896 = vrot.slane %v6647, 5
        %v6897 = vrot.slane %v4479, 5
        %v6898 = vrot.slane %v6648, 5
        %v6899 = vrot.slane %v4480, 5
        %v6900 = vrot.slane %v6649, 5
        %v6901 = vrot.slane %v4481, 5
        %v6902 = vrot.slane %v6650, 5
        %v6903 = vrot.slane %v4482, 5
        %v6904 = vrot.slane %v6651, 5
        %v6905 = vrot.slane %v4483, 5
        %v6906 = vrot.slane %v6652, 5
        %v6907 = vrot.slane %v4484, 5
        %v6908 = vrot.slane %v6653, 5
        %v6909 = vrot.slane %v4485, 5
        %v6910 = vrot.slane %v6654, 5
        %v6911 = vrot.slane %v4486, 5
        %v6912 = vrot.slane %v6655, 5
        %v6913 = vrot.slane %v4487, 5
        %v6914 = vrot.slane %v6656, 5
        %v6915 = vrot.slane %v4488, 5
        %v6916 = vrot.slane %v6657, 5
        %v6917 = vrot.slane %v4489, 5
        %v6918 = vrot.slane %v6658, 5
        %v6919 = vrot.slane %v4490, 5
        %v6920 = vrot.slane %v6659, 5
        %v6921 = vrot.slane %v4491, 5
        %v6922 = vrot.slane %v6660, 5
        %v6923 = vrot.slane %v4492, 5
        %v6924 = vrot.slane %v6661, 5
        %v6925 = vrot.slane %v4493, 5
        %v6926 = vrot.slane %v6662, 5
        %v6927 = vrot.slane %v4494, 5
        %v6928 = vrot.slane %v6663, 5
        %v6929 = vrot.slane %v4495, 5
        %v6930 = vrot.slane %v6664, 5
        %v6931 = vrot.slane %v4496, 5
        %v6932 = vrot.slane %v6665, 5
        %v6933 = vrot.slane %v4497, 5
        %v6934 = vrot.slane %v6666, 5
        %v6935 = vrot.slane %v4498, 5
        %v6936 = vrot.slane %v6667, 5
        %v6937 = vrot.slane %v4499, 5
        %v6938 = vrot.slane %v6668, 5
        %v6939 = vrot.slane %v4500, 5
        %v6940 = vrot.slane %v6669, 5
        %v6941 = vrot.slane %v4501, 5
        %v6942 = vrot.slane %v6670, 5
        %v6943 = vrot.slane %v4502, 5
        %v6944 = vrot.slane %v6671, 5
        %v6945 = vrot.slane %v4503, 5
        %v6946 = vrot.slane %v6672, 5
        %v6947 = vrot.slane %v4504, 5
        %v6948 = vrot.slane %v6673, 5
        %v6949 = vrot.slane %v4505, 5
        %v6950 = vrot.slane %v6674, 5
        %v6951 = vrot.slane %v4506, 5
        %v6952 = vrot.slane %v6675, 5
        %v6953 = vrot.slane %v4507, 5
        %v6954 = vrot.slane %v6676, 5
        %v6955 = vrot.slane %v4508, 5
        %v6956 = vrot.slane %v6677, 5
        %v6957 = vrot.slane %v4509, 5
        %v6958 = vrot.slane %v6678, 5
        %v6959 = vrot.slane %v4510, 5
        %v6960 = vrot.slane %v6679, 5
        %v6961 = vrot.slane %v4511, 5
        %v6962 = vrot.slane %v6680, 5
        %v6963 = vrot.slane %v4512, 5
        %v6964 = vrot.slane %v6681, 5
        %v6965 = vrot.slane %v4513, 5
        %v6966 = vrot.slane %v6682, 5
        %v6967 = vrot.slane %v4514, 5
        %v6968 = vrot.slane %v6683, 5
        %v6969 = vrot.slane %v4515, 5
        %v6970 = vrot.slane %v6684, 5
        %v6971 = vrot.slane %v4516, 5
        %v6972 = vrot.slane %v6685, 5
        %v6973 = vrot.slane %v4517, 5
        %v6974 = vrot.slane %v6686, 5
        %v6975 = vrot.slane %v4518, 5
        %v6976 = vrot.slane %v6687, 5
        %v6977 = vrot.slane %v4519, 5
        %v6978 = vrot.slane %v6688, 5
        %v6979 = vrot.slane %v4520, 5
        %v6980 = vrot.slane %v6689, 5
        %v6981 = vrot.slane %v4521, 5
        %v6982 = vrot.slane %v6690, 5
        %v6983 = vrot.slane %v4522, 5
        %v6984 = vrot.slane %v6691, 5
        %v6985 = vrot.slane %v4523, 5
        %v6986 = vrot.slane %v6692, 5
        %v6987 = vrot.slane %v4524, 5
        %v6988 = vrot.slane %v6693, 5
        %v6989 = vrot.slane %v4525, 5
        %v6990 = vrot.slane %v6694, 5
        %v6991 = vrot.slane %v4526, 5
        %v6992 = vrot.slane %v6695, 5
        %v6993 = vrot.slane %v4527, 5
        %v6994 = vrot.slane %v6696, 5
        %v6995 = vrot.slane %v4528, 5
        %v6996 = vrot.slane %v6697, 5
        %v6997 = vrot.slane %v4529, 5
        %v6998 = vrot.slane %v6698, 5
        %v6999 = vrot.slane %v4530, 5
        %v7000 = vrot.slane %v6699, 5
        %v7001 = vrot.slane %v4531, 5
        %v7002 = vrot.slane %v6700, 5
        %v7003 = vrot.slane %v4532, 5
        %v7004 = vrot.slane %v6701, 5
        %v7005 = vrot.slane %v4533, 5
        %v7006 = vrot.slane %v6702, 5
        %v7007 = vrot.slane %v4534, 5
        %v7008 = vrot.slane %v6703, 5
        %v7009 = vrot.slane %v4535, 5
        %v7010 = vrot.slane %v6704, 5
        %v7011 = vrot.slane %v4536, 5
        %v7012 = vrot.slane %v6705, 5
        %v7013 = vrot.slane %v4537, 5
        %v7014 = vrot.slane %v6706, 5
        %v7015 = vrot.slane %v4538, 5
        %v7016 = vrot.slane %v6707, 5
        %v7017 = vrot.slane %v4539, 5
        %v7018 = vrot.slane %v6708, 5
        %v7019 = vrot.slane %v4540, 5
        %v7020 = vrot.slane %v6709, 5
        %v7021 = vrot.slane %v4541, 5
        %v7022 = vrot.slane %v6710, 5
        %v7023 = vrot.slane %v4542, 5
        %v7024 = vrot.slane %v6711, 5
        %v7025 = vrot.slane %v4543, 5
        %v7026 = vrot.slane %v6712, 5
        %v7027 = vrot.slane %v4544, 5
        %v7028 = vrot.slane %v6713, 5
        %v7029 = vrot.slane %v4545, 5
        %v7030 = vrot.slane %v6714, 5
        %v7031 = vrot.slane %v4546, 5
        %v7032 = vrot.slane %v6715, 5
        %v7033 = vrot.slane %v4547, 5
        %v7034 = vrot.slane %v6716, 5
        %v7035 = vrot.slane %v4548, 5
        %v7036 = vrot.slane %v6717, 5
        %v7037 = vrot.slane %v4549, 5
        %v7038 = vrot.slane %v6718, 5
        %v7039 = vrot.slane %v4550, 5
        %v7040 = vrot.slane %v6719, 5
        %v7041 = vrot.slane %v4551, 5
        %v7042 = vrot.slane %v6720, 5
        %v7043 = vrot.slane %v4552, 5
        %v7044 = vrot.slane %v6721, 5
        %v7045 = vrot.slane %v4553, 5
        %v7046 = vrot.slane %v6722, 5
        %v7047 = vrot.slane %v4554, 5
        %v7048 = vrot.slane %v6723, 5
        %v7049 = vrot.slane %v4555, 5
        %v7050 = vrot.slane %v6724, 5
        %v7051 = vrot.slane %v4556, 5
        %v7052 = vrot.slane %v6725, 5
        %v7053 = vrot.slane %v4557, 5
        %v7054 = vrot.slane %v6726, 5
        %v7055 = vrot.slane %v4558, 5
        %v7056 = vrot.slane %v6727, 5
        %v7057 = vrot.slane %v4559, 5
        %v7058 = vrot.slane %v6728, 5
        %v7059 = vrot.slane %v4560, 5
        %v7060 = vrot.slane %v6729, 5
        %v7061 = vrot.slane %v4561, 5
        %v7062 = vrot.slane %v6730, 5
        %v7063 = vrot.slane %v4562, 5
        %v7064 = vrot.slane %v6731, 5
        %v7065 = vrot.slane %v4563, 5
        %v7066 = vrot.slane %v6732, 5
        %v7067 = vrot.slane %v4564, 5
        %v7068 = vrot.slane %v6733, 5
        %v7069 = vrot.slane %v4565, 5
        %v7070 = vrot.slane %v6734, 5
        %v7071 = vrot.slane %v4566, 5
        %v7072 = vrot.slane %v6735, 5
        %v7073 = vrot.slane %v4567, 5
        %v7074 = vrot.slane %v6736, 5
        %v7075 = vrot.slane %v4568, 5
        %v7076 = vrot.slane %v6737, 5
        %v7077 = vrot.slane %v4569, 5
        %v7078 = vrot.slane %v6738, 5
        %v7079 = vrot.slane %v4570, 5
        %v7080 = vrot.slane %v6739, 5
        %v7081 = vrot.slane %v4571, 5
        %v7082 = vrot.slane %v6740, 5
        %v7083 = vrot.slane %v4572, 5
        %v7084 = vrot.slane %v6741, 5
        %v7085 = vrot.slane %v4573, 5
        %v7086 = vrot.slane %v6742, 5
        %v7087 = vrot.slane %v4574, 5
        %v7088 = vrot.slane %v6743, 5
        %v7089 = vrot.slane %v4575, 5
        %v7090 = vrot.slane %v6744, 5
        %v7091 = vrot.slane %v4576, 5
        %v7092 = vrot.slane %v6745, 5
        %v7093 = vrot.slane %v4577, 5
        %v7094 = vrot.slane %v6746, 5
        %v7095 = vrot.slane %v4578, 5
        %v7096 = vrot.slane %v6747, 5
        %v7097 = vrot.slane %v4579, 5
        %v7098 = vrot.slane %v6748, 5
        %v7099 = vrot.slane %v4580, 5
        %v7100 = vrot.slane %v6749, 5
        %v7101 = vrot.slane %v4581, 5
        %v7102 = vrot.slane %v6750, 5
        %v7103 = vrot.slane %v4582, 5
        %v7104 = vrot.slane %v6751, 5
        %v7105 = vrot.slane %v4583, 5
        %v7106 = vrot.slane %v6752, 5
        %v7107 = vrot.slane %v4584, 5
        %v7108 = vrot.slane %v6753, 5
        %v7109 = vrot.slane %v4585, 5
        %v7110 = vrot.slane %v6754, 5
        %v7111 = vrot.slane %v4586, 5
        %v7112 = vrot.slane %v6755, 5
        %v7113 = vrot.slane %v4587, 5
        %v7114 = vrot.slane %v4588, 5
        %v7115 = vrot.slane %v6756, 5
        %v7116 = vrot.slane %v4589, 5
        %v7117 = vrot.slane %v6757, 5
        %v7118 = vrot.slane %v4590, 5
        %v7119 = vrot.slane %v6758, 5
        %v7120 = vrot.slane %v4591, 5
        %v7121 = vrot.slane %v6759, 5
        %v7122 = vrot.slane %v4592, 5
        %v7123 = vrot.slane %v6760, 5
        %v7124 = vrot.slane %v4593, 5
        %v7125 = vrot.slane %v6761, 5
        %v7126 = vrot.slane %v4594, 5
        %v7127 = vrot.slane %v6762, 5
        %v7128 = vrot.slane %v4595, 5
        %v7129 = vrot.slane %v6763, 5
        %v7130 = vrot.slane %v4596, 5
        %v7131 = vrot.slane %v6764, 5
        %v7132 = vrot.slane %v4597, 5
        %v7133 = vrot.slane %v6765, 5
        %v7134 = vrot.slane %v4598, 5
        %v7135 = vrot.slane %v6766, 5
        %v7136 = vrot.slane %v4599, 5
        %v7137 = vrot.slane %v6767, 5
        %v7138 = vrot.slane %v4600, 5
        %v7139 = vrot.slane %v6768, 5
        %v7140 = vrot.slane %v4601, 5
        %v7141 = vrot.slane %v6769, 5
        %v7142 = vrot.slane %v4602, 5
        %v7143 = vrot.slane %v6770, 5
        %v7144 = vrot.slane %v4603, 5
        %v7145 = vrot.slane %v6771, 5
        %v7146 = vrot.slane %v4604, 5
        %v7147 = vrot.slane %v6772, 5
        %v7148 = vrot.slane %v4605, 5
        %v7149 = vrot.slane %v6773, 5
        %v7150 = vrot.slane %v4606, 5
        %v7151 = vrot.slane %v6774, 5
        %v7152 = vrot.slane %v4607, 5
        %v7153 = vrot.slane %v6775, 5
        %v7154 = vrot.slane %v4608, 5
        %v7155 = vrot.slane %v6776, 5
        %v7156 = vrot.slane %v4609, 5
        %v7157 = vrot.slane %v6777, 5
        %v7158 = vrot.slane %v4610, 5
        %v7159 = vrot.slane %v6778, 5
        %v7160 = vrot.slane %v4611, 5
        %v7161 = vrot.slane %v6779, 5
        %v7162 = vrot.slane %v4612, 5
        %v7163 = vrot.slane %v6780, 5
        %v7164 = vrot.slane %v4613, 5
        %v7165 = vrot.slane %v6781, 5
        %v7166 = vrot.slane %v4614, 5
        %v7167 = vrot.slane %v6782, 5
        %v7168 = vrot.slane %v4615, 5
        %v7169 = vrot.slane %v6783, 5
        %v7170 = vrot.slane %v4616, 5
        %v7171 = vrot.slane %v6784, 5
        %v7172 = vrot.slane %v4617, 5
        %v7173 = vrot.slane %v6785, 5
        %v7174 = vrot.slane %v4618, 5
        %v7175 = vrot.slane %v6786, 5
        %v7176 = vrot.slane %v4619, 5
        %v7177 = vrot.slane %v6787, 5
        %v7178 = vrot.slane %v4620, 5
        %v7179 = vrot.slane %v6788, 5
        %v7180 = vrot.slane %v4621, 5
        %v7181 = vrot.slane %v6789, 5
        %v7182 = vrot.slane %v4622, 5
        %v7183 = vrot.slane %v6790, 5
        %v7184 = vrot.slane %v4623, 5
        %v7185 = vrot.slane %v6791, 5
        %v7186 = vrot.slane %v4624, 5
        %v7187 = vrot.slane %v6792, 5
        %v7188 = vrot.slane %v4625, 5
        %v7189 = vrot.slane %v6793, 5
        %v7190 = vrot.slane %v4626, 5
        %v7191 = vrot.slane %v6794, 5
        %v7192 = vrot.slane %v4627, 5
        %v7193 = vrot.slane %v6795, 5
        %v7194 = vrot.slane %v4628, 5
        %v7195 = vrot.slane %v6796, 5
        %v7196 = vrot.slane %v4629, 5
        %v7197 = vrot.slane %v6797, 5
        %v7198 = vrot.slane %v4630, 5
        %v7199 = vrot.slane %v6798, 5
        %v7200 = vrot.slane %v4631, 5
        %v7201 = vrot.slane %v6799, 5
        %v7202 = vrot.slane %v4632, 5
        %v7203 = vrot.slane %v6800, 5
        %v7204 = vrot.slane %v4633, 5
        %v7205 = vrot.slane %v6801, 5
        %v7206 = vrot.slane %v4634, 5
        %v7207 = vrot.slane %v6802, 5
        %v7208 = vrot.slane %v4635, 5
        %v7209 = vrot.slane %v6803, 5
        %v7210 = vrot.slane %v4636, 5
        %v7211 = vrot.slane %v6804, 5
        %v7212 = vrot.slane %v4637, 5
        %v7213 = vrot.slane %v6805, 5
        %v7214 = vrot.slane %v4638, 5
        %v7215 = vrot.slane %v6806, 5
        %v7216 = vrot.slane %v4639, 5
        %v7217 = vrot.slane %v6807, 5
        %v7218 = vrot.slane %v4640, 5
        %v7219 = vrot.slane %v6808, 5
        %v7220 = vrot.slane %v4641, 5
        %v7221 = vrot.slane %v6809, 5
        %v7222 = vrot.slane %v4642, 5
        %v7223 = vrot.slane %v6810, 5
        %v7224 = vrot.slane %v4643, 5
        %v7225 = vrot.slane %v6811, 5
        %v7226 = vrot.slane %v4644, 5
        %v7227 = vrot.slane %v6812, 5
        %v7228 = vrot.slane %v4645, 5
        %v7229 = vrot.slane %v6813, 5
        %v7230 = vrot.slane %v4646, 5
        %v7231 = vrot.slane %v6814, 5
        %v7232 = vrot.slane %v4647, 5
        %v7233 = vrot.slane %v6815, 5
        %v7234 = vrot.slane %v4648, 5
        %v7235 = vrot.slane %v6816, 5
        %v7236 = vrot.slane %v4649, 5
        %v7237 = vrot.slane %v6817, 5
        %v7238 = vrot.slane %v4650, 5
        %v7239 = vrot.slane %v6818, 5
        %v7240 = vrot.slane %v4651, 5
        %v7241 = vrot.slane %v6819, 5
        %v7242 = vrot.slane %v4652, 5
        %v7243 = vrot.slane %v6820, 5
        %v7244 = vrot.slane %v4653, 5
        %v7245 = vrot.slane %v6821, 5
        %v7246 = vrot.slane %v4654, 5
        %v7247 = vrot.slane %v6822, 5
        %v7248 = vrot.slane %v4655, 5
        %v7249 = vrot.slane %v6823, 5
        %v7250 = vrot.slane %v4656, 5
        %v7251 = vrot.slane %v6824, 5
        %v7252 = vrot.slane %v4657, 5
        %v7253 = vrot.slane %v6825, 5
        %v7254 = vrot.slane %v4658, 5
        %v7255 = vrot.slane %v6826, 5
        %v7256 = vrot.slane %v4659, 5
        %v7257 = vrot.slane %v6827, 5
        %v7258 = vrot.slane %v4660, 5
        %v7259 = vrot.slane %v6828, 5
        %v7260 = vrot.slane %v4661, 5
        %v7261 = vrot.slane %v6829, 5
        %v7262 = vrot.slane %v4662, 5
        %v7263 = vrot.slane %v6830, 5
        %v7264 = vrot.slane %v4663, 5
        %v7265 = vrot.slane %v6831, 5
        %v7266 = vrot.slane %v4664, 5
        %v7267 = vrot.slane %v6832, 5
        %v7268 = vrot.slane %v4665, 5
        %v7269 = vrot.slane %v6833, 5
        %v7270 = vrot.slane %v4666, 5
        %v7271 = vrot.slane %v6834, 5
        %v7272 = vrot.slane %v4667, 5
        %v7273 = vrot.slane %v6835, 5
        %v7274 = vrot.slane %v4668, 5
        %v7275 = vrot.slane %v6836, 5
        %v7276 = vrot.slane %v4669, 5
        %v7277 = vrot.slane %v6837, 5
        %v7278 = vrot.slane %v4670, 5
        %v7279 = vrot.slane %v6838, 5
        %v7280 = vrot.slane %v4671, 5
        %v7281 = vrot.slane %v6839, 5
        %v7282 = vrot.slane %v4672, 5
        %v7283 = vrot.slane %v6840, 5
        %v7284 = vrot.slane %v4673, 5
        %v7285 = vrot.slane %v6841, 5
        %v7286 = vrot.slane %v4674, 5
        %v7287 = vrot.slane %v6842, 5
        %v7288 = vrot.slane %v4675, 5
        %v7289 = vrot.slane %v6843, 5
        %v7290 = vrot.slane %v4676, 5
        %v7291 = vrot.slane %v6844, 5
        %v7292 = vrot.slane %v4677, 5
        %v7293 = vrot.slane %v6845, 5
        %v7294 = vrot.slane %v4678, 5
        %v7295 = vrot.slane %v6846, 5
        %v7296 = vrot.slane %v4679, 5
        %v7297 = vrot.slane %v6847, 5
        %v7298 = vrot.slane %v4680, 5
        %v7299 = vrot.slane %v6848, 5
        %v7300 = vrot.slane %v4681, 5
        %v7301 = vrot.slane %v6849, 5
        %v7302 = vrot.slane %v4682, 5
        %v7303 = vrot.slane %v6850, 5
        %v7304 = vrot.slane %v4683, 5
        %v7305 = vrot.slane %v6851, 5
        %v7306 = vrot.slane %v4684, 5
        %v7307 = vrot.slane %v6852, 5
        %v7308 = vrot.slane %v4685, 5
        %v7309 = vrot.slane %v6853, 5
        %v7310 = vrot.slane %v4686, 5
        %v7311 = vrot.slane %v6854, 5
        %v7312 = vrot.slane %v4687, 5
        %v7313 = vrot.slane %v6855, 5
        %v7314 = vrot.slane %v4688, 5
        %v7315 = vrot.slane %v6856, 5
        %v7316 = vrot.slane %v4689, 5
        %v7317 = vrot.slane %v6857, 5
        %v7318 = vrot.slane %v4690, 5
        %v7319 = vrot.slane %v6858, 5
        %v7320 = vrot.slane %v4691, 5
        %v7321 = vrot.slane %v6859, 5
        %v7322 = vrot.slane %v4692, 5
        %v7323 = vrot.slane %v6860, 5
        %v7324 = vrot.slane %v4693, 5
        %v7325 = vrot.slane %v6861, 5
        %v7326 = vrot.slane %v4694, 5
        %v7327 = vrot.slane %v6862, 5
        %v7328 = vrot.slane %v4695, 5
        %v7329 = vrot.slane %v6863, 5
        %v7330 = vrot.slane %v4696, 5
        %v7331 = vrot.slane %v6864, 5
        %v7332 = vrot.slane %v4697, 5
        %v7333 = vrot.slane %v6865, 5
        %v7334 = vrot.slane %v4698, 5
        %v7335 = vrot.slane %v6866, 5
        %v7336 = vrot.slane %v4699, 5
        %v7337 = vrot.slane %v6867, 5
        %v7338 = vrot.slane %v4700, 5
        %v7339 = vrot.slane %v6868, 5
        %v7340 = vrot.slane %v4701, 5
        %v7341 = vrot.slane %v6869, 5
        %v7342 = vrot.slane %v4702, 5
        %v7343 = vrot.slane %v6870, 5
        %v7344 = vrot.slane %v4703, 5
        %v7345 = vrot.slane %v6871, 5
        %v7346 = vrot.slane %v4704, 5
        %v7347 = vrot.slane %v6872, 5
        %v7348 = vrot.slane %v4705, 5
        %v7349 = vrot.slane %v6873, 5
        %v7350 = vrot.slane %v4706, 5
        %v7351 = vrot.slane %v6874, 5
        %v7352 = vrot.slane %v4707, 5
        %v8070 = vrot.slane %v6158, 2
        %v8071 = vrot.slane %v6159, 2
        %v8072 = vrot.slane %v6160, 2
        %v8073 = vrot.slane %v6161, 2
        %v8074 = vrot.slane %v6162, 2
        %v8075 = vrot.slane %v6163, 2
        %v8076 = vrot.slane %v6164, 2
        %v8077 = vrot.slane %v6165, 2
        %v8078 = vrot.slane %v6166, 2
        %v8079 = vrot.slane %v6167, 2
        %v8080 = vrot.slane %v6168, 2
        %v8081 = vrot.slane %v6169, 2
        %v8082 = vrot.slane %v6170, 2
        %v8083 = vrot.slane %v6171, 2
        %v8084 = vrot.slane %v6172, 2
        %v8085 = vrot.slane %v6173, 2
        %v8086 = vrot.slane %v6174, 2
        %v8087 = vrot.slane %v6175, 2
        %v8088 = vrot.slane %v6176, 2
        %v8089 = vrot.slane %v6177, 2
        %v8090 = vrot.slane %v6178, 2
        %v8091 = vrot.slane %v6179, 2
        %v8092 = vrot.slane %v6180, 2
        %v8093 = vrot.slane %v6181, 2
        %v8094 = vrot.slane %v6182, 2
        %v8095 = vrot.slane %v6183, 2
        %v8096 = vrot.slane %v6184, 2
        %v8097 = vrot.slane %v6185, 2
        %v8098 = vrot.slane %v6186, 2
        %v8099 = vrot.slane %v6187, 2
        %v8100 = vrot.slane %v6188, 2
        %v8101 = vrot.slane %v6189, 2
        %v8102 = vrot.slane %v6190, 2
        %v8103 = vrot.slane %v6191, 2
        %v8104 = vrot.slane %v6192, 2
        %v8105 = vrot.slane %v6193, 2
        %v8106 = vrot.slane %v6194, 2
        %v8107 = vrot.slane %v6195, 2
        %v8108 = vrot.slane %v6196, 2
        %v8109 = vrot.slane %v6197, 2
        %v8110 = vrot.slane %v6198, 2
        %v8111 = vrot.slane %v6199, 2
        %v8112 = vrot.slane %v6200, 2
        %v8113 = vrot.slane %v6201, 2
        %v8114 = vrot.slane %v6202, 2
        %v8115 = vrot.slane %v6203, 2
        %v8116 = vrot.slane %v6204, 2
        %v8117 = vrot.slane %v6205, 2
        %v8118 = vrot.slane %v6206, 2
        %v8119 = vrot.slane %v6207, 2
        %v8120 = vrot.slane %v6208, 2
        %v8121 = vrot.slane %v6209, 2
        %v8122 = vrot.slane %v6210, 2
        %v8123 = vrot.slane %v6211, 2
        %v8124 = vrot.slane %v6212, 2
        %v8125 = vrot.slane %v6213, 2
        %v8126 = vrot.slane %v6214, 2
        %v8127 = vrot.slane %v6215, 2
        %v8128 = vrot.slane %v6216, 2
        %v8129 = vrot.slane %v6217, 2
        %v8130 = vrot.slane %v6218, 2
        %v8131 = vrot.slane %v6219, 2
        %v8132 = vrot.slane %v6220, 2
        %v8133 = vrot.slane %v6221, 2
        %v8134 = vrot.slane %v6222, 2
        %v8135 = vrot.slane %v6223, 2
        %v8136 = vrot.slane %v6224, 2
        %v8137 = vrot.slane %v6225, 2
        %v8138 = vrot.slane %v6226, 2
        %v8139 = vrot.slane %v6227, 2
        %v8140 = vrot.slane %v6228, 2
        %v8141 = vrot.slane %v6229, 2
        %v8142 = vrot.slane %v6230, 2
        %v8143 = vrot.slane %v6231, 2
        %v8144 = vrot.slane %v6232, 2
        %v8145 = vrot.slane %v6233, 2
        %v8146 = vrot.slane %v6234, 2
        %v8147 = vrot.slane %v6235, 2
        %v8148 = vrot.slane %v6236, 2
        %v8149 = vrot.slane %v6237, 2
        %v8150 = vrot.slane %v6238, 2
        %v8151 = vrot.slane %v6239, 2
        %v8152 = vrot.slane %v6240, 2
        %v8153 = vrot.slane %v6241, 2
        %v8154 = vrot.slane %v6242, 2
        %v8155 = vrot.slane %v6243, 2
        %v8156 = vrot.slane %v6244, 2
        %v8157 = vrot.slane %v6245, 2
        %v8158 = vrot.slane %v6246, 2
        %v8159 = vrot.slane %v6247, 2
        %v8160 = vrot.slane %v6248, 2
        %v8161 = vrot.slane %v6249, 2
        %v8162 = vrot.slane %v6250, 2
        %v8163 = vrot.slane %v6251, 2
        %v8164 = vrot.slane %v6252, 2
        %v8165 = vrot.slane %v6253, 2
        %v8166 = vrot.slane %v6254, 2
        %v8167 = vrot.slane %v6255, 2
        %v8168 = vrot.slane %v6256, 2
        %v8169 = vrot.slane %v6257, 2
        %v8170 = vrot.slane %v6258, 2
        %v8171 = vrot.slane %v6259, 2
        %v8172 = vrot.slane %v6260, 2
        %v8173 = vrot.slane %v6261, 2
        %v8174 = vrot.slane %v6262, 2
        %v8175 = vrot.slane %v6263, 2
        %v8176 = vrot.slane %v6264, 2
        %v8177 = vrot.slane %v6265, 2
        %v8178 = vrot.slane %v6266, 2
        %v8179 = vrot.slane %v6267, 2
        %v8180 = vrot.slane %v6268, 2
        %v8181 = vrot.slane %v6269, 2
        %v8182 = vrot.slane %v6270, 2
        %v8183 = vrot.slane %v6271, 2
        %v8184 = vrot.slane %v6272, 2
        %v8185 = vrot.slane %v6273, 2
        %v8186 = vrot.slane %v6274, 2
        %v8187 = vrot.slane %v6275, 2
        %v8188 = vrot.slane %v6276, 2
        %v8189 = vrot.slane %v6277, 2
        %v8190 = vrot.slane %v6278, 2
        %v8191 = vrot.slane %v6279, 2
        %v8192 = vrot.slane %v6280, 2
        %v8193 = vrot.slane %v6281, 2
        %v8194 = vrot.slane %v6282, 2
        %v8195 = vrot.slane %v6283, 2
        %v8196 = vrot.slane %v6284, 2
        %v8197 = vrot.slane %v6285, 2
        %v8198 = vrot.slane %v6286, 2
        %v8199 = vrot.slane %v6287, 2
        %v8200 = vrot.slane %v6288, 2
        %v8201 = vrot.slane %v6289, 2
        %v8202 = vrot.slane %v6290, 2
        %v8203 = vrot.slane %v6291, 2
        %v8204 = vrot.slane %v6292, 2
        %v8205 = vrot.slane %v6293, 2
        %v8206 = vrot.slane %v6294, 2
        %v8207 = vrot.slane %v6295, 2
        %v8208 = vrot.slane %v6296, 2
        %v8209 = vrot.slane %v6297, 2
        %v8210 = vrot.slane %v6298, 2
        %v8211 = vrot.slane %v6299, 2
        %v8212 = vrot.slane %v6300, 2
        %v8213 = vrot.slane %v6301, 2
        %v8214 = vrot.slane %v6302, 2
        %v8215 = vrot.slane %v6303, 2
        %v8216 = vrot.slane %v6304, 2
        %v8217 = vrot.slane %v6305, 2
        %v8218 = vrot.slane %v6306, 2
        %v8219 = vrot.slane %v6307, 2
        %v8220 = vrot.slane %v6308, 2
        %v8221 = vrot.slane %v6309, 2
        %v8222 = vrot.slane %v6310, 2
        %v8223 = vrot.slane %v6311, 2
        %v8224 = vrot.slane %v6312, 2
        %v8225 = vrot.slane %v6313, 2
        %v8226 = vrot.slane %v6314, 2
        %v8227 = vrot.slane %v6315, 2
        %v8228 = vrot.slane %v6316, 2
        %v8229 = vrot.slane %v6317, 2
        %v8230 = vrot.slane %v6318, 2
        %v8231 = vrot.slane %v6319, 2
        %v8232 = vrot.slane %v6320, 2
        %v8233 = vrot.slane %v6321, 2
        %v8234 = vrot.slane %v6322, 2
        %v8235 = vrot.slane %v6323, 2
        %v8236 = vrot.slane %v6324, 2
        %v8237 = vrot.slane %v6325, 2
        %v8238 = vrot.slane %v6326, 2
        %v8239 = vrot.slane %v6327, 2
        %v8240 = vrot.slane %v6328, 2
        %v8241 = vrot.slane %v6329, 2
        %v8242 = vrot.slane %v6330, 2
        %v8243 = vrot.slane %v6331, 2
        %v8244 = vrot.slane %v6332, 2
        %v8245 = vrot.slane %v6333, 2
        %v8246 = vrot.slane %v6334, 2
        %v8247 = vrot.slane %v6335, 2
        %v8248 = vrot.slane %v6336, 2
        %v8249 = vrot.slane %v6337, 2
        %v8250 = vrot.slane %v6338, 2
        %v8251 = vrot.slane %v6339, 2
        %v8252 = vrot.slane %v6340, 2
        %v8253 = vrot.slane %v6341, 2
        %v8254 = vrot.slane %v6342, 2
        %v8255 = vrot.slane %v6343, 2
        %v8256 = vrot.slane %v6344, 2
        %v8257 = vrot.slane %v6345, 2
        %v8258 = vrot.slane %v6346, 2
        %v8259 = vrot.slane %v6347, 2
        %v8260 = vrot.slane %v6348, 2
        %v8261 = vrot.slane %v6349, 2
        %v8262 = vrot.slane %v6350, 2
        %v8263 = vrot.slane %v6351, 2
        %v8264 = vrot.slane %v6352, 2
        %v8265 = vrot.slane %v6353, 2
        %v8266 = vrot.slane %v6354, 2
        %v8267 = vrot.slane %v6355, 2
        %v8268 = vrot.slane %v6356, 2
        %v8269 = vrot.slane %v6357, 2
        %v8270 = vrot.slane %v6358, 2
        %v8271 = vrot.slane %v6359, 2
        %v8272 = vrot.slane %v6360, 2
        %v8273 = vrot.slane %v6361, 2
        %v8274 = vrot.slane %v6362, 2
        %v8275 = vrot.slane %v6363, 2
        %v8276 = vrot.slane %v6364, 2
        %v8277 = vrot.slane %v6365, 2
        %v8278 = vrot.slane %v6366, 2
        %v8279 = vrot.slane %v6367, 2
        %v8280 = vrot.slane %v6368, 2
        %v8281 = vrot.slane %v6369, 2
        %v8282 = vrot.slane %v6370, 2
        %v8283 = vrot.slane %v6371, 2
        %v8284 = vrot.slane %v6372, 2
        %v8285 = vrot.slane %v6373, 2
        %v8286 = vrot.slane %v6374, 2
        %v8287 = vrot.slane %v6375, 2
        %v8288 = vrot.slane %v6376, 2
        %v8289 = vrot.slane %v6377, 2
        %v8290 = vrot.slane %v6378, 2
        %v8291 = vrot.slane %v6379, 2
        %v8292 = vrot.slane %v6380, 2
        %v8293 = vrot.slane %v6381, 2
        %v8294 = vrot.slane %v6382, 2
        %v8295 = vrot.slane %v6383, 2
        %v8296 = vrot.slane %v6384, 2
        %v8297 = vrot.slane %v6385, 2
        %v8298 = vrot.slane %v6386, 2
        %v8299 = vrot.slane %v6387, 2
        %v8300 = vrot.slane %v6388, 2
        %v8301 = vrot.slane %v6389, 2
        %v8302 = vrot.slane %v6390, 2
        %v8303 = vrot.slane %v6391, 2
        %v8304 = vrot.slane %v6392, 2
        %v8305 = vrot.slane %v6393, 2
        %v8306 = vrot.slane %v6394, 2
        %v8307 = vrot.slane %v6395, 2
        %v8308 = vrot.slane %v6396, 2
        %v8548 = vsel %vm1076, %v5440, %v6875
        %v8549 = vsel %vm1076, %v5441, %v6876
        %v8550 = vsel %vm1076, %v5442, %v6877
        %v8551 = vsel %vm1076, %v5443, %v6878
        %v8552 = vsel %vm1076, %v5444, %v6879
        %v8553 = vsel %vm1076, %v5445, %v6880
        %v8554 = vsel %vm1076, %v5446, %v6881
        %v8555 = vsel %vm1076, %v5447, %v6882
        %v8556 = vsel %vm1076, %v5448, %v6883
        %v8557 = vsel %vm1076, %v5449, %v6884
        %v8558 = vsel %vm1076, %v5450, %v6885
        %v8559 = vsel %vm1076, %v5451, %v6886
        %v8560 = vsel %vm1076, %v5452, %v6887
        %v8561 = vsel %vm1076, %v5453, %v6888
        %v8562 = vsel %vm1076, %v5454, %v6889
        %v8563 = vsel %vm1076, %v5455, %v6890
        %v8564 = vsel %vm1076, %v5456, %v6891
        %v8565 = vsel %vm1076, %v5457, %v6892
        %v8566 = vsel %vm1076, %v5458, %v6893
        %v8567 = vsel %vm1076, %v5459, %v6894
        %v8568 = vsel %vm1076, %v5460, %v6895
        %v8569 = vsel %vm1076, %v5461, %v6896
        %v8570 = vsel %vm1076, %v5462, %v6897
        %v8571 = vsel %vm1076, %v5463, %v6898
        %v8572 = vsel %vm1076, %v5464, %v6899
        %v8573 = vsel %vm1076, %v5465, %v6900
        %v8574 = vsel %vm1076, %v5466, %v6901
        %v8575 = vsel %vm1076, %v5467, %v6902
        %v8576 = vsel %vm1076, %v5468, %v6903
        %v8577 = vsel %vm1076, %v5469, %v6904
        %v8578 = vsel %vm1076, %v5470, %v6905
        %v8579 = vsel %vm1076, %v5471, %v6906
        %v8580 = vsel %vm1076, %v5472, %v6907
        %v8581 = vsel %vm1076, %v5473, %v6908
        %v8582 = vsel %vm1076, %v5474, %v6909
        %v8583 = vsel %vm1076, %v5475, %v6910
        %v8584 = vsel %vm1076, %v5476, %v6911
        %v8585 = vsel %vm1076, %v5477, %v6912
        %v8586 = vsel %vm1076, %v5478, %v6913
        %v8587 = vsel %vm1076, %v5479, %v6914
        %v8588 = vsel %vm1076, %v5480, %v6915
        %v8589 = vsel %vm1076, %v5481, %v6916
        %v8590 = vsel %vm1076, %v5482, %v6917
        %v8591 = vsel %vm1076, %v5483, %v6918
        %v8592 = vsel %vm1076, %v5484, %v6919
        %v8593 = vsel %vm1076, %v5485, %v6920
        %v8594 = vsel %vm1076, %v5486, %v6921
        %v8595 = vsel %vm1076, %v5487, %v6922
        %v8596 = vsel %vm1076, %v5488, %v6923
        %v8597 = vsel %vm1076, %v5489, %v6924
        %v8598 = vsel %vm1076, %v5490, %v6925
        %v8599 = vsel %vm1076, %v5491, %v6926
        %v8600 = vsel %vm1076, %v5492, %v6927
        %v8601 = vsel %vm1076, %v5493, %v6928
        %v8602 = vsel %vm1076, %v5494, %v6929
        %v8603 = vsel %vm1076, %v5495, %v6930
        %v8604 = vsel %vm1076, %v5496, %v6931
        %v8605 = vsel %vm1076, %v5497, %v6932
        %v8606 = vsel %vm1076, %v5498, %v6933
        %v8607 = vsel %vm1076, %v5499, %v6934
        %v8608 = vsel %vm1076, %v5500, %v6935
        %v8609 = vsel %vm1076, %v5501, %v6936
        %v8610 = vsel %vm1076, %v5502, %v6937
        %v8611 = vsel %vm1076, %v5503, %v6938
        %v8612 = vsel %vm1076, %v5504, %v6939
        %v8613 = vsel %vm1076, %v5505, %v6940
        %v8614 = vsel %vm1076, %v5506, %v6941
        %v8615 = vsel %vm1076, %v5507, %v6942
        %v8616 = vsel %vm1076, %v5508, %v6943
        %v8617 = vsel %vm1076, %v5509, %v6944
        %v8618 = vsel %vm1076, %v5510, %v6945
        %v8619 = vsel %vm1076, %v5511, %v6946
        %v8620 = vsel %vm1076, %v5512, %v6947
        %v8621 = vsel %vm1076, %v5513, %v6948
        %v8622 = vsel %vm1076, %v5514, %v6949
        %v8623 = vsel %vm1076, %v5515, %v6950
        %v8624 = vsel %vm1076, %v5516, %v6951
        %v8625 = vsel %vm1076, %v5517, %v6952
        %v8626 = vsel %vm1076, %v5518, %v6953
        %v8627 = vsel %vm1076, %v5519, %v6954
        %v8628 = vsel %vm1076, %v5520, %v6955
        %v8629 = vsel %vm1076, %v5521, %v6956
        %v8630 = vsel %vm1076, %v5522, %v6957
        %v8631 = vsel %vm1076, %v5523, %v6958
        %v8632 = vsel %vm1076, %v5524, %v6959
        %v8633 = vsel %vm1076, %v5525, %v6960
        %v8634 = vsel %vm1076, %v5526, %v6961
        %v8635 = vsel %vm1076, %v5527, %v6962
        %v8636 = vsel %vm1076, %v5528, %v6963
        %v8637 = vsel %vm1076, %v5529, %v6964
        %v8638 = vsel %vm1076, %v5530, %v6965
        %v8639 = vsel %vm1076, %v5531, %v6966
        %v8640 = vsel %vm1076, %v5532, %v6967
        %v8641 = vsel %vm1076, %v5533, %v6968
        %v8642 = vsel %vm1076, %v5534, %v6969
        %v8643 = vsel %vm1076, %v5535, %v6970
        %v8644 = vsel %vm1076, %v5536, %v6971
        %v8645 = vsel %vm1076, %v5537, %v6972
        %v8646 = vsel %vm1076, %v5538, %v6973
        %v8647 = vsel %vm1076, %v5539, %v6974
        %v8648 = vsel %vm1076, %v5540, %v6975
        %v8649 = vsel %vm1076, %v5541, %v6976
        %v8650 = vsel %vm1076, %v5542, %v6977
        %v8651 = vsel %vm1076, %v5543, %v6978
        %v8652 = vsel %vm1076, %v5544, %v6979
        %v8653 = vsel %vm1076, %v5545, %v6980
        %v8654 = vsel %vm1076, %v5546, %v6981
        %v8655 = vsel %vm1076, %v5547, %v6982
        %v8656 = vsel %vm1076, %v5548, %v6983
        %v8657 = vsel %vm1076, %v5549, %v6984
        %v8658 = vsel %vm1076, %v5550, %v6985
        %v8659 = vsel %vm1076, %v5551, %v6986
        %v8660 = vsel %vm1076, %v5552, %v6987
        %v8661 = vsel %vm1076, %v5553, %v6988
        %v8662 = vsel %vm1076, %v5554, %v6989
        %v8663 = vsel %vm1076, %v5555, %v6990
        %v8664 = vsel %vm1076, %v5556, %v6991
        %v8665 = vsel %vm1076, %v5557, %v6992
        %v8666 = vsel %vm1076, %v5558, %v6993
        %v8667 = vsel %vm1076, %v5559, %v6994
        %v8668 = vsel %vm1076, %v5560, %v6995
        %v8669 = vsel %vm1076, %v5561, %v6996
        %v8670 = vsel %vm1076, %v5562, %v6997
        %v8671 = vsel %vm1076, %v5563, %v6998
        %v8672 = vsel %vm1076, %v5564, %v6999
        %v8673 = vsel %vm1076, %v5565, %v7000
        %v8674 = vsel %vm1076, %v5566, %v7001
        %v8675 = vsel %vm1076, %v5567, %v7002
        %v8676 = vsel %vm1076, %v5568, %v7003
        %v8677 = vsel %vm1076, %v5569, %v7004
        %v8678 = vsel %vm1076, %v5570, %v7005
        %v8679 = vsel %vm1076, %v5571, %v7006
        %v8680 = vsel %vm1076, %v5572, %v7007
        %v8681 = vsel %vm1076, %v5573, %v7008
        %v8682 = vsel %vm1076, %v5574, %v7009
        %v8683 = vsel %vm1076, %v5575, %v7010
        %v8684 = vsel %vm1076, %v5576, %v7011
        %v8685 = vsel %vm1076, %v5577, %v7012
        %v8686 = vsel %vm1076, %v5578, %v7013
        %v8687 = vsel %vm1076, %v5579, %v7014
        %v8688 = vsel %vm1076, %v5580, %v7015
        %v8689 = vsel %vm1076, %v5581, %v7016
        %v8690 = vsel %vm1076, %v5582, %v7017
        %v8691 = vsel %vm1076, %v5583, %v7018
        %v8692 = vsel %vm1076, %v5584, %v7019
        %v8693 = vsel %vm1076, %v5585, %v7020
        %v8694 = vsel %vm1076, %v5586, %v7021
        %v8695 = vsel %vm1076, %v5587, %v7022
        %v8696 = vsel %vm1076, %v5588, %v7023
        %v8697 = vsel %vm1076, %v5589, %v7024
        %v8698 = vsel %vm1076, %v5590, %v7025
        %v8699 = vsel %vm1076, %v5591, %v7026
        %v8700 = vsel %vm1076, %v5592, %v7027
        %v8701 = vsel %vm1076, %v5593, %v7028
        %v8702 = vsel %vm1076, %v5594, %v7029
        %v8703 = vsel %vm1076, %v5595, %v7030
        %v8704 = vsel %vm1076, %v5596, %v7031
        %v8705 = vsel %vm1076, %v5597, %v7032
        %v8706 = vsel %vm1076, %v5598, %v7033
        %v8707 = vsel %vm1076, %v5599, %v7034
        %v8708 = vsel %vm1076, %v5600, %v7035
        %v8709 = vsel %vm1076, %v5601, %v7036
        %v8710 = vsel %vm1076, %v5602, %v7037
        %v8711 = vsel %vm1076, %v5603, %v7038
        %v8712 = vsel %vm1076, %v5604, %v7039
        %v8713 = vsel %vm1076, %v5605, %v7040
        %v8714 = vsel %vm1076, %v5606, %v7041
        %v8715 = vsel %vm1076, %v5607, %v7042
        %v8716 = vsel %vm1076, %v5608, %v7043
        %v8717 = vsel %vm1076, %v5609, %v7044
        %v8718 = vsel %vm1076, %v5610, %v7045
        %v8719 = vsel %vm1076, %v5611, %v7046
        %v8720 = vsel %vm1076, %v5612, %v7047
        %v8721 = vsel %vm1076, %v5613, %v7048
        %v8722 = vsel %vm1076, %v5614, %v7049
        %v8723 = vsel %vm1076, %v5615, %v7050
        %v8724 = vsel %vm1076, %v5616, %v7051
        %v8725 = vsel %vm1076, %v5617, %v7052
        %v8726 = vsel %vm1076, %v5618, %v7053
        %v8727 = vsel %vm1076, %v5619, %v7054
        %v8728 = vsel %vm1076, %v5620, %v7055
        %v8729 = vsel %vm1076, %v5621, %v7056
        %v8730 = vsel %vm1076, %v5622, %v7057
        %v8731 = vsel %vm1076, %v5623, %v7058
        %v8732 = vsel %vm1076, %v5624, %v7059
        %v8733 = vsel %vm1076, %v5625, %v7060
        %v8734 = vsel %vm1076, %v5626, %v7061
        %v8735 = vsel %vm1076, %v5627, %v7062
        %v8736 = vsel %vm1076, %v5628, %v7063
        %v8737 = vsel %vm1076, %v5629, %v7064
        %v8738 = vsel %vm1076, %v5630, %v7065
        %v8739 = vsel %vm1076, %v5631, %v7066
        %v8740 = vsel %vm1076, %v5632, %v7067
        %v8741 = vsel %vm1076, %v5633, %v7068
        %v8742 = vsel %vm1076, %v5634, %v7069
        %v8743 = vsel %vm1076, %v5635, %v7070
        %v8744 = vsel %vm1076, %v5636, %v7071
        %v8745 = vsel %vm1076, %v5637, %v7072
        %v8746 = vsel %vm1076, %v5638, %v7073
        %v8747 = vsel %vm1076, %v5639, %v7074
        %v8748 = vsel %vm1076, %v5640, %v7075
        %v8749 = vsel %vm1076, %v5641, %v7076
        %v8750 = vsel %vm1076, %v5642, %v7077
        %v8751 = vsel %vm1076, %v5643, %v7078
        %v8752 = vsel %vm1076, %v5644, %v7079
        %v8753 = vsel %vm1076, %v5645, %v7080
        %v8754 = vsel %vm1076, %v5646, %v7081
        %v8755 = vsel %vm1076, %v5647, %v7082
        %v8756 = vsel %vm1076, %v5648, %v7083
        %v8757 = vsel %vm1076, %v5649, %v7084
        %v8758 = vsel %vm1076, %v5650, %v7085
        %v8759 = vsel %vm1076, %v5651, %v7086
        %v8760 = vsel %vm1076, %v5652, %v7087
        %v8761 = vsel %vm1076, %v5653, %v7088
        %v8762 = vsel %vm1076, %v5654, %v7089
        %v8763 = vsel %vm1076, %v5655, %v7090
        %v8764 = vsel %vm1076, %v5656, %v7091
        %v8765 = vsel %vm1076, %v5657, %v7092
        %v8766 = vsel %vm1076, %v5658, %v7093
        %v8767 = vsel %vm1076, %v5659, %v7094
        %v8768 = vsel %vm1076, %v5660, %v7095
        %v8769 = vsel %vm1076, %v5661, %v7096
        %v8770 = vsel %vm1076, %v5662, %v7097
        %v8771 = vsel %vm1076, %v5663, %v7098
        %v8772 = vsel %vm1076, %v5664, %v7099
        %v8773 = vsel %vm1076, %v5665, %v7100
        %v8774 = vsel %vm1076, %v5666, %v7101
        %v8775 = vsel %vm1076, %v5667, %v7102
        %v8776 = vsel %vm1076, %v5668, %v7103
        %v8777 = vsel %vm1076, %v5669, %v7104
        %v8778 = vsel %vm1076, %v5670, %v7105
        %v8779 = vsel %vm1076, %v5671, %v7106
        %v8780 = vsel %vm1076, %v5672, %v7107
        %v8781 = vsel %vm1076, %v5673, %v7108
        %v8782 = vsel %vm1076, %v5674, %v7109
        %v8783 = vsel %vm1076, %v5675, %v7110
        %v8784 = vsel %vm1076, %v5676, %v7111
        %v8785 = vsel %vm1076, %v5677, %v7112
        %v8786 = vsel %vm1076, %v5678, %v7113
        %v8787 = vsel %vm1076, %v5679, %v7114
        %v8788 = vsel %vm1076, %v5680, %v7115
        %v8789 = vsel %vm1076, %v5681, %v7116
        %v8790 = vsel %vm1076, %v5682, %v7117
        %v8791 = vsel %vm1076, %v5683, %v7118
        %v8792 = vsel %vm1076, %v5684, %v7119
        %v8793 = vsel %vm1076, %v5685, %v7120
        %v8794 = vsel %vm1076, %v5686, %v7121
        %v8795 = vsel %vm1076, %v5687, %v7122
        %v8796 = vsel %vm1076, %v5688, %v7123
        %v8797 = vsel %vm1076, %v5689, %v7124
        %v8798 = vsel %vm1076, %v5690, %v7125
        %v8799 = vsel %vm1076, %v5691, %v7126
        %v8800 = vsel %vm1076, %v5692, %v7127
        %v8801 = vsel %vm1076, %v5693, %v7128
        %v8802 = vsel %vm1076, %v5694, %v7129
        %v8803 = vsel %vm1076, %v5695, %v7130
        %v8804 = vsel %vm1076, %v5696, %v7131
        %v8805 = vsel %vm1076, %v5697, %v7132
        %v8806 = vsel %vm1076, %v5698, %v7133
        %v8807 = vsel %vm1076, %v5699, %v7134
        %v8808 = vsel %vm1076, %v5700, %v7135
        %v8809 = vsel %vm1076, %v5701, %v7136
        %v8810 = vsel %vm1076, %v5702, %v7137
        %v8811 = vsel %vm1076, %v5703, %v7138
        %v8812 = vsel %vm1076, %v5704, %v7139
        %v8813 = vsel %vm1076, %v5705, %v7140
        %v8814 = vsel %vm1076, %v5706, %v7141
        %v8815 = vsel %vm1076, %v5707, %v7142
        %v8816 = vsel %vm1076, %v5708, %v7143
        %v8817 = vsel %vm1076, %v5709, %v7144
        %v8818 = vsel %vm1076, %v5710, %v7145
        %v8819 = vsel %vm1076, %v5711, %v7146
        %v8820 = vsel %vm1076, %v5712, %v7147
        %v8821 = vsel %vm1076, %v5713, %v7148
        %v8822 = vsel %vm1076, %v5714, %v7149
        %v8823 = vsel %vm1076, %v5715, %v7150
        %v8824 = vsel %vm1076, %v5716, %v7151
        %v8825 = vsel %vm1076, %v5717, %v7152
        %v8826 = vsel %vm1076, %v5718, %v7153
        %v8827 = vsel %vm1076, %v5719, %v7154
        %v8828 = vsel %vm1076, %v5720, %v7155
        %v8829 = vsel %vm1076, %v5721, %v7156
        %v8830 = vsel %vm1076, %v5722, %v7157
        %v8831 = vsel %vm1076, %v5723, %v7158
        %v8832 = vsel %vm1076, %v5724, %v7159
        %v8833 = vsel %vm1076, %v5725, %v7160
        %v8834 = vsel %vm1076, %v5726, %v7161
        %v8835 = vsel %vm1076, %v5727, %v7162
        %v8836 = vsel %vm1076, %v5728, %v7163
        %v8837 = vsel %vm1076, %v5729, %v7164
        %v8838 = vsel %vm1076, %v5730, %v7165
        %v8839 = vsel %vm1076, %v5731, %v7166
        %v8840 = vsel %vm1076, %v5732, %v7167
        %v8841 = vsel %vm1076, %v5733, %v7168
        %v8842 = vsel %vm1076, %v5734, %v7169
        %v8843 = vsel %vm1076, %v5735, %v7170
        %v8844 = vsel %vm1076, %v5736, %v7171
        %v8845 = vsel %vm1076, %v5737, %v7172
        %v8846 = vsel %vm1076, %v5738, %v7173
        %v8847 = vsel %vm1076, %v5739, %v7174
        %v8848 = vsel %vm1076, %v5740, %v7175
        %v8849 = vsel %vm1076, %v5741, %v7176
        %v8850 = vsel %vm1076, %v5742, %v7177
        %v8851 = vsel %vm1076, %v5743, %v7178
        %v8852 = vsel %vm1076, %v5744, %v7179
        %v8853 = vsel %vm1076, %v5745, %v7180
        %v8854 = vsel %vm1076, %v5746, %v7181
        %v8855 = vsel %vm1076, %v5747, %v7182
        %v8856 = vsel %vm1076, %v5748, %v7183
        %v8857 = vsel %vm1076, %v5749, %v7184
        %v8858 = vsel %vm1076, %v5750, %v7185
        %v8859 = vsel %vm1076, %v5751, %v7186
        %v8860 = vsel %vm1076, %v5752, %v7187
        %v8861 = vsel %vm1076, %v5753, %v7188
        %v8862 = vsel %vm1076, %v5754, %v7189
        %v8863 = vsel %vm1076, %v5755, %v7190
        %v8864 = vsel %vm1076, %v5756, %v7191
        %v8865 = vsel %vm1076, %v5757, %v7192
        %v8866 = vsel %vm1076, %v5758, %v7193
        %v8867 = vsel %vm1076, %v5759, %v7194
        %v8868 = vsel %vm1076, %v5760, %v7195
        %v8869 = vsel %vm1076, %v5761, %v7196
        %v8870 = vsel %vm1076, %v5762, %v7197
        %v8871 = vsel %vm1076, %v5763, %v7198
        %v8872 = vsel %vm1076, %v5764, %v7199
        %v8873 = vsel %vm1076, %v5765, %v7200
        %v8874 = vsel %vm1076, %v5766, %v7201
        %v8875 = vsel %vm1076, %v5767, %v7202
        %v8876 = vsel %vm1076, %v5768, %v7203
        %v8877 = vsel %vm1076, %v5769, %v7204
        %v8878 = vsel %vm1076, %v5770, %v7205
        %v8879 = vsel %vm1076, %v5771, %v7206
        %v8880 = vsel %vm1076, %v5772, %v7207
        %v8881 = vsel %vm1076, %v5773, %v7208
        %v8882 = vsel %vm1076, %v5774, %v7209
        %v8883 = vsel %vm1076, %v5775, %v7210
        %v8884 = vsel %vm1076, %v5776, %v7211
        %v8885 = vsel %vm1076, %v5777, %v7212
        %v8886 = vsel %vm1076, %v5778, %v7213
        %v8887 = vsel %vm1076, %v5779, %v7214
        %v8888 = vsel %vm1076, %v5780, %v7215
        %v8889 = vsel %vm1076, %v5781, %v7216
        %v8890 = vsel %vm1076, %v5782, %v7217
        %v8891 = vsel %vm1076, %v5783, %v7218
        %v8892 = vsel %vm1076, %v5784, %v7219
        %v8893 = vsel %vm1076, %v5785, %v7220
        %v8894 = vsel %vm1076, %v5786, %v7221
        %v8895 = vsel %vm1076, %v5787, %v7222
        %v8896 = vsel %vm1076, %v5788, %v7223
        %v8897 = vsel %vm1076, %v5789, %v7224
        %v8898 = vsel %vm1076, %v5790, %v7225
        %v8899 = vsel %vm1076, %v5791, %v7226
        %v8900 = vsel %vm1076, %v5792, %v7227
        %v8901 = vsel %vm1076, %v5793, %v7228
        %v8902 = vsel %vm1076, %v5794, %v7229
        %v8903 = vsel %vm1076, %v5795, %v7230
        %v8904 = vsel %vm1076, %v5796, %v7231
        %v8905 = vsel %vm1076, %v5797, %v7232
        %v8906 = vsel %vm1076, %v5798, %v7233
        %v8907 = vsel %vm1076, %v5799, %v7234
        %v8908 = vsel %vm1076, %v5800, %v7235
        %v8909 = vsel %vm1076, %v5801, %v7236
        %v8910 = vsel %vm1076, %v5802, %v7237
        %v8911 = vsel %vm1076, %v5803, %v7238
        %v8912 = vsel %vm1076, %v5804, %v7239
        %v8913 = vsel %vm1076, %v5805, %v7240
        %v8914 = vsel %vm1076, %v5806, %v7241
        %v8915 = vsel %vm1076, %v5807, %v7242
        %v8916 = vsel %vm1076, %v5808, %v7243
        %v8917 = vsel %vm1076, %v5809, %v7244
        %v8918 = vsel %vm1076, %v5810, %v7245
        %v8919 = vsel %vm1076, %v5811, %v7246
        %v8920 = vsel %vm1076, %v5812, %v7247
        %v8921 = vsel %vm1076, %v5813, %v7248
        %v8922 = vsel %vm1076, %v5814, %v7249
        %v8923 = vsel %vm1076, %v5815, %v7250
        %v8924 = vsel %vm1076, %v5816, %v7251
        %v8925 = vsel %vm1076, %v5817, %v7252
        %v8926 = vsel %vm1076, %v5818, %v7253
        %v8927 = vsel %vm1076, %v5819, %v7254
        %v8928 = vsel %vm1076, %v5820, %v7255
        %v8929 = vsel %vm1076, %v5821, %v7256
        %v8930 = vsel %vm1076, %v5822, %v7257
        %v8931 = vsel %vm1076, %v5823, %v7258
        %v8932 = vsel %vm1076, %v5824, %v7259
        %v8933 = vsel %vm1076, %v5825, %v7260
        %v8934 = vsel %vm1076, %v5826, %v7261
        %v8935 = vsel %vm1076, %v5827, %v7262
        %v8936 = vsel %vm1076, %v5828, %v7263
        %v8937 = vsel %vm1076, %v5829, %v7264
        %v8938 = vsel %vm1076, %v5830, %v7265
        %v8939 = vsel %vm1076, %v5831, %v7266
        %v8940 = vsel %vm1076, %v5832, %v7267
        %v8941 = vsel %vm1076, %v5833, %v7268
        %v8942 = vsel %vm1076, %v5834, %v7269
        %v8943 = vsel %vm1076, %v5835, %v7270
        %v8944 = vsel %vm1076, %v5836, %v7271
        %v8945 = vsel %vm1076, %v5837, %v7272
        %v8946 = vsel %vm1076, %v5838, %v7273
        %v8947 = vsel %vm1076, %v5839, %v7274
        %v8948 = vsel %vm1076, %v5840, %v7275
        %v8949 = vsel %vm1076, %v5841, %v7276
        %v8950 = vsel %vm1076, %v5842, %v7277
        %v8951 = vsel %vm1076, %v5843, %v7278
        %v8952 = vsel %vm1076, %v5844, %v7279
        %v8953 = vsel %vm1076, %v5845, %v7280
        %v8954 = vsel %vm1076, %v5846, %v7281
        %v8955 = vsel %vm1076, %v5847, %v7282
        %v8956 = vsel %vm1076, %v5848, %v7283
        %v8957 = vsel %vm1076, %v5849, %v7284
        %v8958 = vsel %vm1076, %v5850, %v7285
        %v8959 = vsel %vm1076, %v5851, %v7286
        %v8960 = vsel %vm1076, %v5852, %v7287
        %v8961 = vsel %vm1076, %v5853, %v7288
        %v8962 = vsel %vm1076, %v5854, %v7289
        %v8963 = vsel %vm1076, %v5855, %v7290
        %v8964 = vsel %vm1076, %v5856, %v7291
        %v8965 = vsel %vm1076, %v5857, %v7292
        %v8966 = vsel %vm1076, %v5858, %v7293
        %v8967 = vsel %vm1076, %v5859, %v7294
        %v8968 = vsel %vm1076, %v5860, %v7295
        %v8969 = vsel %vm1076, %v5861, %v7296
        %v8970 = vsel %vm1076, %v5862, %v7297
        %v8971 = vsel %vm1076, %v5863, %v7298
        %v8972 = vsel %vm1076, %v5864, %v7299
        %v8973 = vsel %vm1076, %v5865, %v7300
        %v8974 = vsel %vm1076, %v5866, %v7301
        %v8975 = vsel %vm1076, %v5867, %v7302
        %v8976 = vsel %vm1076, %v5868, %v7303
        %v8977 = vsel %vm1076, %v5869, %v7304
        %v8978 = vsel %vm1076, %v5870, %v7305
        %v8979 = vsel %vm1076, %v5871, %v7306
        %v8980 = vsel %vm1076, %v5872, %v7307
        %v8981 = vsel %vm1076, %v5873, %v7308
        %v8982 = vsel %vm1076, %v5874, %v7309
        %v8983 = vsel %vm1076, %v5875, %v7310
        %v8984 = vsel %vm1076, %v5876, %v7311
        %v8985 = vsel %vm1076, %v5877, %v7312
        %v8986 = vsel %vm1076, %v5878, %v7313
        %v8987 = vsel %vm1076, %v5879, %v7314
        %v8988 = vsel %vm1076, %v5880, %v7315
        %v8989 = vsel %vm1076, %v5881, %v7316
        %v8990 = vsel %vm1076, %v5882, %v7317
        %v8991 = vsel %vm1076, %v5883, %v7318
        %v8992 = vsel %vm1076, %v5884, %v7319
        %v8993 = vsel %vm1076, %v5885, %v7320
        %v8994 = vsel %vm1076, %v5886, %v7321
        %v8995 = vsel %vm1076, %v5887, %v7322
        %v8996 = vsel %vm1076, %v5888, %v7323
        %v8997 = vsel %vm1076, %v5889, %v7324
        %v8998 = vsel %vm1076, %v5890, %v7325
        %v8999 = vsel %vm1076, %v5891, %v7326
        %v9000 = vsel %vm1076, %v5892, %v7327
        %v9001 = vsel %vm1076, %v5893, %v7328
        %v9002 = vsel %vm1076, %v5894, %v7329
        %v9003 = vsel %vm1076, %v5895, %v7330
        %v9004 = vsel %vm1076, %v5896, %v7331
        %v9005 = vsel %vm1076, %v5897, %v7332
        %v9006 = vsel %vm1076, %v5898, %v7333
        %v9007 = vsel %vm1076, %v5899, %v7334
        %v9008 = vsel %vm1076, %v5900, %v7335
        %v9009 = vsel %vm1076, %v5901, %v7336
        %v9010 = vsel %vm1076, %v5902, %v7337
        %v9011 = vsel %vm1076, %v5903, %v7338
        %v9012 = vsel %vm1076, %v5904, %v7339
        %v9013 = vsel %vm1076, %v5905, %v7340
        %v9014 = vsel %vm1076, %v5906, %v7341
        %v9015 = vsel %vm1076, %v5907, %v7342
        %v9016 = vsel %vm1076, %v5908, %v7343
        %v9017 = vsel %vm1076, %v5909, %v7344
        %v9018 = vsel %vm1076, %v5910, %v7345
        %v9019 = vsel %vm1076, %v5911, %v7346
        %v9020 = vsel %vm1076, %v5912, %v7347
        %v9021 = vsel %vm1076, %v5913, %v7348
        %v9022 = vsel %vm1076, %v5914, %v7349
        %v9023 = vsel %vm1076, %v5915, %v7350
        %v9024 = vsel %vm1076, %v5916, %v7351
        %v9025 = vsel %vm1076, %v5917, %v7352
        %vm9026 = vcmask 1045504
        %v9027 = vsel %vm9026, %v8548, %v8070
        %v9028 = vsel %vm9026, %v8549, %v8071
        %v9029 = vsel %vm9026, %v8550, %v8072
        %v9030 = vsel %vm9026, %v8551, %v8073
        %v9031 = vsel %vm9026, %v8552, %v8074
        %v9032 = vsel %vm9026, %v8553, %v8075
        %v9033 = vsel %vm9026, %v8554, %v8076
        %v9034 = vsel %vm9026, %v8555, %v8077
        %v9035 = vsel %vm9026, %v8556, %v8078
        %v9036 = vsel %vm9026, %v8557, %v8079
        %v9037 = vsel %vm9026, %v8558, %v8080
        %v9038 = vsel %vm9026, %v8559, %v8081
        %v9039 = vsel %vm9026, %v8560, %v8082
        %v9040 = vsel %vm9026, %v8561, %v8083
        %v9041 = vsel %vm9026, %v8562, %v8084
        %v9042 = vsel %vm9026, %v8563, %v8085
        %v9043 = vsel %vm9026, %v8564, %v8086
        %v9044 = vsel %vm9026, %v8565, %v8087
        %v9045 = vsel %vm9026, %v8566, %v8088
        %v9046 = vsel %vm9026, %v8567, %v8089
        %v9047 = vsel %vm9026, %v8568, %v8090
        %v9048 = vsel %vm9026, %v8569, %v8091
        %v9049 = vsel %vm9026, %v8570, %v8092
        %v9050 = vsel %vm9026, %v8571, %v8093
        %v9051 = vsel %vm9026, %v8572, %v8094
        %v9052 = vsel %vm9026, %v8573, %v8095
        %v9053 = vsel %vm9026, %v8574, %v8096
        %v9054 = vsel %vm9026, %v8575, %v8097
        %v9055 = vsel %vm9026, %v8576, %v8098
        %v9056 = vsel %vm9026, %v8577, %v8099
        %v9057 = vsel %vm9026, %v8578, %v8100
        %v9058 = vsel %vm9026, %v8579, %v8101
        %v9059 = vsel %vm9026, %v8580, %v8102
        %v9060 = vsel %vm9026, %v8581, %v8103
        %v9061 = vsel %vm9026, %v8582, %v8104
        %v9062 = vsel %vm9026, %v8583, %v8105
        %v9063 = vsel %vm9026, %v8584, %v8106
        %v9064 = vsel %vm9026, %v8585, %v8107
        %v9065 = vsel %vm9026, %v8586, %v8108
        %v9066 = vsel %vm9026, %v8587, %v8109
        %v9067 = vsel %vm9026, %v8588, %v8110
        %v9068 = vsel %vm9026, %v8589, %v8111
        %v9069 = vsel %vm9026, %v8590, %v8112
        %v9070 = vsel %vm9026, %v8591, %v8113
        %v9071 = vsel %vm9026, %v8592, %v8114
        %v9072 = vsel %vm9026, %v8593, %v8115
        %v9073 = vsel %vm9026, %v8594, %v8116
        %v9074 = vsel %vm9026, %v8595, %v8117
        %v9075 = vsel %vm9026, %v8596, %v8118
        %v9076 = vsel %vm9026, %v8597, %v8119
        %v9077 = vsel %vm9026, %v8598, %v8120
        %v9078 = vsel %vm9026, %v8599, %v8121
        %v9079 = vsel %vm9026, %v8600, %v8122
        %v9080 = vsel %vm9026, %v8601, %v8123
        %v9081 = vsel %vm9026, %v8602, %v8124
        %v9082 = vsel %vm9026, %v8603, %v8125
        %v9083 = vsel %vm9026, %v8604, %v8126
        %v9084 = vsel %vm9026, %v8605, %v8127
        %v9085 = vsel %vm9026, %v8606, %v8128
        %v9086 = vsel %vm9026, %v8607, %v8129
        %v9087 = vsel %vm9026, %v8608, %v8130
        %v9088 = vsel %vm9026, %v8609, %v8131
        %v9089 = vsel %vm9026, %v8610, %v8132
        %v9090 = vsel %vm9026, %v8611, %v8133
        %v9091 = vsel %vm9026, %v8612, %v8134
        %v9092 = vsel %vm9026, %v8613, %v8135
        %v9093 = vsel %vm9026, %v8614, %v8136
        %v9094 = vsel %vm9026, %v8615, %v8137
        %v9095 = vsel %vm9026, %v8616, %v8138
        %v9096 = vsel %vm9026, %v8617, %v8139
        %v9097 = vsel %vm9026, %v8618, %v8140
        %v9098 = vsel %vm9026, %v8619, %v8141
        %v9099 = vsel %vm9026, %v8620, %v8142
        %v9100 = vsel %vm9026, %v8621, %v8143
        %v9101 = vsel %vm9026, %v8622, %v8144
        %v9102 = vsel %vm9026, %v8623, %v8145
        %v9103 = vsel %vm9026, %v8624, %v8146
        %v9104 = vsel %vm9026, %v8625, %v8147
        %v9105 = vsel %vm9026, %v8626, %v8148
        %v9106 = vsel %vm9026, %v8627, %v8149
        %v9107 = vsel %vm9026, %v8628, %v8150
        %v9108 = vsel %vm9026, %v8629, %v8151
        %v9109 = vsel %vm9026, %v8630, %v8152
        %v9110 = vsel %vm9026, %v8631, %v8153
        %v9111 = vsel %vm9026, %v8632, %v8154
        %v9112 = vsel %vm9026, %v8633, %v8155
        %v9113 = vsel %vm9026, %v8634, %v8156
        %v9114 = vsel %vm9026, %v8635, %v8157
        %v9115 = vsel %vm9026, %v8636, %v8158
        %v9116 = vsel %vm9026, %v8637, %v8159
        %v9117 = vsel %vm9026, %v8638, %v8160
        %v9118 = vsel %vm9026, %v8639, %v8161
        %v9119 = vsel %vm9026, %v8640, %v8162
        %v9120 = vsel %vm9026, %v8641, %v8163
        %v9121 = vsel %vm9026, %v8642, %v8164
        %v9122 = vsel %vm9026, %v8643, %v8165
        %v9123 = vsel %vm9026, %v8644, %v8166
        %v9124 = vsel %vm9026, %v8645, %v8167
        %v9125 = vsel %vm9026, %v8646, %v8168
        %v9126 = vsel %vm9026, %v8647, %v8169
        %v9127 = vsel %vm9026, %v8648, %v8170
        %v9128 = vsel %vm9026, %v8649, %v8171
        %v9129 = vsel %vm9026, %v8650, %v8172
        %v9130 = vsel %vm9026, %v8651, %v8173
        %v9131 = vsel %vm9026, %v8652, %v8174
        %v9132 = vsel %vm9026, %v8653, %v8175
        %v9133 = vsel %vm9026, %v8654, %v8176
        %v9134 = vsel %vm9026, %v8655, %v8177
        %v9135 = vsel %vm9026, %v8656, %v8178
        %v9136 = vsel %vm9026, %v8657, %v8179
        %v9137 = vsel %vm9026, %v8658, %v8180
        %v9138 = vsel %vm9026, %v8659, %v8181
        %v9139 = vsel %vm9026, %v8660, %v8182
        %v9140 = vsel %vm9026, %v8661, %v8183
        %v9141 = vsel %vm9026, %v8662, %v8184
        %v9142 = vsel %vm9026, %v8663, %v8185
        %v9143 = vsel %vm9026, %v8664, %v8186
        %v9144 = vsel %vm9026, %v8665, %v8187
        %v9145 = vsel %vm9026, %v8666, %v8188
        %v9146 = vsel %vm9026, %v8667, %v8189
        %v9147 = vsel %vm9026, %v8668, %v8190
        %v9148 = vsel %vm9026, %v8669, %v8191
        %v9149 = vsel %vm9026, %v8670, %v8192
        %v9150 = vsel %vm9026, %v8671, %v8193
        %v9151 = vsel %vm9026, %v8672, %v8194
        %v9152 = vsel %vm9026, %v8673, %v8195
        %v9153 = vsel %vm9026, %v8674, %v8196
        %v9154 = vsel %vm9026, %v8675, %v8197
        %v9155 = vsel %vm9026, %v8676, %v8198
        %v9156 = vsel %vm9026, %v8677, %v8199
        %v9157 = vsel %vm9026, %v8678, %v8200
        %v9158 = vsel %vm9026, %v8679, %v8201
        %v9159 = vsel %vm9026, %v8680, %v8202
        %v9160 = vsel %vm9026, %v8681, %v8203
        %v9161 = vsel %vm9026, %v8682, %v8204
        %v9162 = vsel %vm9026, %v8683, %v8205
        %v9163 = vsel %vm9026, %v8684, %v8206
        %v9164 = vsel %vm9026, %v8685, %v8207
        %v9165 = vsel %vm9026, %v8686, %v8208
        %v9166 = vsel %vm9026, %v8687, %v8209
        %v9167 = vsel %vm9026, %v8688, %v8210
        %v9168 = vsel %vm9026, %v8689, %v8211
        %v9169 = vsel %vm9026, %v8690, %v8212
        %v9170 = vsel %vm9026, %v8691, %v8213
        %v9171 = vsel %vm9026, %v8692, %v8214
        %v9172 = vsel %vm9026, %v8693, %v8215
        %v9173 = vsel %vm9026, %v8694, %v8216
        %v9174 = vsel %vm9026, %v8695, %v8217
        %v9175 = vsel %vm9026, %v8696, %v8218
        %v9176 = vsel %vm9026, %v8697, %v8219
        %v9177 = vsel %vm9026, %v8698, %v8220
        %v9178 = vsel %vm9026, %v8699, %v8221
        %v9179 = vsel %vm9026, %v8700, %v8222
        %v9180 = vsel %vm9026, %v8701, %v8223
        %v9181 = vsel %vm9026, %v8702, %v8224
        %v9182 = vsel %vm9026, %v8703, %v8225
        %v9183 = vsel %vm9026, %v8704, %v8226
        %v9184 = vsel %vm9026, %v8705, %v8227
        %v9185 = vsel %vm9026, %v8706, %v8228
        %v9186 = vsel %vm9026, %v8707, %v8229
        %v9187 = vsel %vm9026, %v8708, %v8230
        %v9188 = vsel %vm9026, %v8709, %v8231
        %v9189 = vsel %vm9026, %v8710, %v8232
        %v9190 = vsel %vm9026, %v8711, %v8233
        %v9191 = vsel %vm9026, %v8712, %v8234
        %v9192 = vsel %vm9026, %v8713, %v8235
        %v9193 = vsel %vm9026, %v8714, %v8236
        %v9194 = vsel %vm9026, %v8715, %v8237
        %v9195 = vsel %vm9026, %v8716, %v8238
        %v9196 = vsel %vm9026, %v8717, %v8239
        %v9197 = vsel %vm9026, %v8718, %v8240
        %v9198 = vsel %vm9026, %v8719, %v8241
        %v9199 = vsel %vm9026, %v8720, %v8242
        %v9200 = vsel %vm9026, %v8721, %v8243
        %v9201 = vsel %vm9026, %v8722, %v8244
        %v9202 = vsel %vm9026, %v8723, %v8245
        %v9203 = vsel %vm9026, %v8724, %v8246
        %v9204 = vsel %vm9026, %v8725, %v8247
        %v9205 = vsel %vm9026, %v8726, %v8248
        %v9206 = vsel %vm9026, %v8727, %v8249
        %v9207 = vsel %vm9026, %v8728, %v8250
        %v9208 = vsel %vm9026, %v8729, %v8251
        %v9209 = vsel %vm9026, %v8730, %v8252
        %v9210 = vsel %vm9026, %v8731, %v8253
        %v9211 = vsel %vm9026, %v8732, %v8254
        %v9212 = vsel %vm9026, %v8733, %v8255
        %v9213 = vsel %vm9026, %v8734, %v8256
        %v9214 = vsel %vm9026, %v8735, %v8257
        %v9215 = vsel %vm9026, %v8736, %v8258
        %v9216 = vsel %vm9026, %v8737, %v8259
        %v9217 = vsel %vm9026, %v8738, %v8260
        %v9218 = vsel %vm9026, %v8739, %v8261
        %v9219 = vsel %vm9026, %v8740, %v8262
        %v9220 = vsel %vm9026, %v8741, %v8263
        %v9221 = vsel %vm9026, %v8742, %v8264
        %v9222 = vsel %vm9026, %v8743, %v8265
        %v9223 = vsel %vm9026, %v8744, %v8266
        %v9224 = vsel %vm9026, %v8745, %v8267
        %v9225 = vsel %vm9026, %v8746, %v8268
        %v9226 = vsel %vm9026, %v8747, %v8269
        %v9227 = vsel %vm9026, %v8748, %v8270
        %v9228 = vsel %vm9026, %v8749, %v8271
        %v9229 = vsel %vm9026, %v8750, %v8272
        %v9230 = vsel %vm9026, %v8751, %v8273
        %v9231 = vsel %vm9026, %v8752, %v8274
        %v9232 = vsel %vm9026, %v8753, %v8275
        %v9233 = vsel %vm9026, %v8754, %v8276
        %v9234 = vsel %vm9026, %v8755, %v8277
        %v9235 = vsel %vm9026, %v8756, %v8278
        %v9236 = vsel %vm9026, %v8757, %v8279
        %v9237 = vsel %vm9026, %v8758, %v8280
        %v9238 = vsel %vm9026, %v8759, %v8281
        %v9239 = vsel %vm9026, %v8760, %v8282
        %v9240 = vsel %vm9026, %v8761, %v8283
        %v9241 = vsel %vm9026, %v8762, %v8284
        %v9242 = vsel %vm9026, %v8763, %v8285
        %v9243 = vsel %vm9026, %v8764, %v8286
        %v9244 = vsel %vm9026, %v8765, %v8287
        %v9245 = vsel %vm9026, %v8766, %v8288
        %v9246 = vsel %vm9026, %v8767, %v8289
        %v9247 = vsel %vm9026, %v8768, %v8290
        %v9248 = vsel %vm9026, %v8769, %v8291
        %v9249 = vsel %vm9026, %v8770, %v8292
        %v9250 = vsel %vm9026, %v8771, %v8293
        %v9251 = vsel %vm9026, %v8772, %v8294
        %v9252 = vsel %vm9026, %v8773, %v8295
        %v9253 = vsel %vm9026, %v8774, %v8296
        %v9254 = vsel %vm9026, %v8775, %v8297
        %v9255 = vsel %vm9026, %v8776, %v8298
        %v9256 = vsel %vm9026, %v8777, %v8299
        %v9257 = vsel %vm9026, %v8778, %v8300
        %v9258 = vsel %vm9026, %v8779, %v8301
        %v9259 = vsel %vm9026, %v8780, %v8302
        %v9260 = vsel %vm9026, %v8781, %v8303
        %v9261 = vsel %vm9026, %v8782, %v8304
        %v9262 = vsel %vm9026, %v8783, %v8305
        %v9263 = vsel %vm9026, %v8784, %v8306
        %v9264 = vsel %vm9026, %v8785, %v8307
        %v9265 = vsel %vm9026, %v8786, %v8308
        %v9266 = vsel %vm9026, %v8787, %v8070
        %v9267 = vsel %vm9026, %v8788, %v8071
        %v9268 = vsel %vm9026, %v8789, %v8072
        %v9269 = vsel %vm9026, %v8790, %v8073
        %v9270 = vsel %vm9026, %v8791, %v8074
        %v9271 = vsel %vm9026, %v8792, %v8075
        %v9272 = vsel %vm9026, %v8793, %v8076
        %v9273 = vsel %vm9026, %v8794, %v8077
        %v9274 = vsel %vm9026, %v8795, %v8078
        %v9275 = vsel %vm9026, %v8796, %v8079
        %v9276 = vsel %vm9026, %v8797, %v8080
        %v9277 = vsel %vm9026, %v8798, %v8081
        %v9278 = vsel %vm9026, %v8799, %v8082
        %v9279 = vsel %vm9026, %v8800, %v8083
        %v9280 = vsel %vm9026, %v8801, %v8084
        %v9281 = vsel %vm9026, %v8802, %v8085
        %v9282 = vsel %vm9026, %v8803, %v8086
        %v9283 = vsel %vm9026, %v8804, %v8087
        %v9284 = vsel %vm9026, %v8805, %v8088
        %v9285 = vsel %vm9026, %v8806, %v8089
        %v9286 = vsel %vm9026, %v8807, %v8090
        %v9287 = vsel %vm9026, %v8808, %v8091
        %v9288 = vsel %vm9026, %v8809, %v8092
        %v9289 = vsel %vm9026, %v8810, %v8093
        %v9290 = vsel %vm9026, %v8811, %v8094
        %v9291 = vsel %vm9026, %v8812, %v8095
        %v9292 = vsel %vm9026, %v8813, %v8096
        %v9293 = vsel %vm9026, %v8814, %v8097
        %v9294 = vsel %vm9026, %v8815, %v8098
        %v9295 = vsel %vm9026, %v8816, %v8099
        %v9296 = vsel %vm9026, %v8817, %v8100
        %v9297 = vsel %vm9026, %v8818, %v8101
        %v9298 = vsel %vm9026, %v8819, %v8102
        %v9299 = vsel %vm9026, %v8820, %v8103
        %v9300 = vsel %vm9026, %v8821, %v8104
        %v9301 = vsel %vm9026, %v8822, %v8105
        %v9302 = vsel %vm9026, %v8823, %v8106
        %v9303 = vsel %vm9026, %v8824, %v8107
        %v9304 = vsel %vm9026, %v8825, %v8108
        %v9305 = vsel %vm9026, %v8826, %v8109
        %v9306 = vsel %vm9026, %v8827, %v8110
        %v9307 = vsel %vm9026, %v8828, %v8111
        %v9308 = vsel %vm9026, %v8829, %v8112
        %v9309 = vsel %vm9026, %v8830, %v8113
        %v9310 = vsel %vm9026, %v8831, %v8114
        %v9311 = vsel %vm9026, %v8832, %v8115
        %v9312 = vsel %vm9026, %v8833, %v8116
        %v9313 = vsel %vm9026, %v8834, %v8117
        %v9314 = vsel %vm9026, %v8835, %v8118
        %v9315 = vsel %vm9026, %v8836, %v8119
        %v9316 = vsel %vm9026, %v8837, %v8120
        %v9317 = vsel %vm9026, %v8838, %v8121
        %v9318 = vsel %vm9026, %v8839, %v8122
        %v9319 = vsel %vm9026, %v8840, %v8123
        %v9320 = vsel %vm9026, %v8841, %v8124
        %v9321 = vsel %vm9026, %v8842, %v8125
        %v9322 = vsel %vm9026, %v8843, %v8126
        %v9323 = vsel %vm9026, %v8844, %v8127
        %v9324 = vsel %vm9026, %v8845, %v8128
        %v9325 = vsel %vm9026, %v8846, %v8129
        %v9326 = vsel %vm9026, %v8847, %v8130
        %v9327 = vsel %vm9026, %v8848, %v8131
        %v9328 = vsel %vm9026, %v8849, %v8132
        %v9329 = vsel %vm9026, %v8850, %v8133
        %v9330 = vsel %vm9026, %v8851, %v8134
        %v9331 = vsel %vm9026, %v8852, %v8135
        %v9332 = vsel %vm9026, %v8853, %v8136
        %v9333 = vsel %vm9026, %v8854, %v8137
        %v9334 = vsel %vm9026, %v8855, %v8138
        %v9335 = vsel %vm9026, %v8856, %v8139
        %v9336 = vsel %vm9026, %v8857, %v8140
        %v9337 = vsel %vm9026, %v8858, %v8141
        %v9338 = vsel %vm9026, %v8859, %v8142
        %v9339 = vsel %vm9026, %v8860, %v8143
        %v9340 = vsel %vm9026, %v8861, %v8144
        %v9341 = vsel %vm9026, %v8862, %v8145
        %v9342 = vsel %vm9026, %v8863, %v8146
        %v9343 = vsel %vm9026, %v8864, %v8147
        %v9344 = vsel %vm9026, %v8865, %v8148
        %v9345 = vsel %vm9026, %v8866, %v8149
        %v9346 = vsel %vm9026, %v8867, %v8150
        %v9347 = vsel %vm9026, %v8868, %v8151
        %v9348 = vsel %vm9026, %v8869, %v8152
        %v9349 = vsel %vm9026, %v8870, %v8153
        %v9350 = vsel %vm9026, %v8871, %v8154
        %v9351 = vsel %vm9026, %v8872, %v8155
        %v9352 = vsel %vm9026, %v8873, %v8156
        %v9353 = vsel %vm9026, %v8874, %v8157
        %v9354 = vsel %vm9026, %v8875, %v8158
        %v9355 = vsel %vm9026, %v8876, %v8159
        %v9356 = vsel %vm9026, %v8877, %v8160
        %v9357 = vsel %vm9026, %v8878, %v8161
        %v9358 = vsel %vm9026, %v8879, %v8162
        %v9359 = vsel %vm9026, %v8880, %v8163
        %v9360 = vsel %vm9026, %v8881, %v8164
        %v9361 = vsel %vm9026, %v8882, %v8165
        %v9362 = vsel %vm9026, %v8883, %v8166
        %v9363 = vsel %vm9026, %v8884, %v8167
        %v9364 = vsel %vm9026, %v8885, %v8168
        %v9365 = vsel %vm9026, %v8886, %v8169
        %v9366 = vsel %vm9026, %v8887, %v8170
        %v9367 = vsel %vm9026, %v8888, %v8171
        %v9368 = vsel %vm9026, %v8889, %v8172
        %v9369 = vsel %vm9026, %v8890, %v8173
        %v9370 = vsel %vm9026, %v8891, %v8174
        %v9371 = vsel %vm9026, %v8892, %v8175
        %v9372 = vsel %vm9026, %v8893, %v8176
        %v9373 = vsel %vm9026, %v8894, %v8177
        %v9374 = vsel %vm9026, %v8895, %v8178
        %v9375 = vsel %vm9026, %v8896, %v8179
        %v9376 = vsel %vm9026, %v8897, %v8180
        %v9377 = vsel %vm9026, %v8898, %v8181
        %v9378 = vsel %vm9026, %v8899, %v8182
        %v9379 = vsel %vm9026, %v8900, %v8183
        %v9380 = vsel %vm9026, %v8901, %v8184
        %v9381 = vsel %vm9026, %v8902, %v8185
        %v9382 = vsel %vm9026, %v8903, %v8186
        %v9383 = vsel %vm9026, %v8904, %v8187
        %v9384 = vsel %vm9026, %v8905, %v8188
        %v9385 = vsel %vm9026, %v8906, %v8189
        %v9386 = vsel %vm9026, %v8907, %v8190
        %v9387 = vsel %vm9026, %v8908, %v8191
        %v9388 = vsel %vm9026, %v8909, %v8192
        %v9389 = vsel %vm9026, %v8910, %v8193
        %v9390 = vsel %vm9026, %v8911, %v8194
        %v9391 = vsel %vm9026, %v8912, %v8195
        %v9392 = vsel %vm9026, %v8913, %v8196
        %v9393 = vsel %vm9026, %v8914, %v8197
        %v9394 = vsel %vm9026, %v8915, %v8198
        %v9395 = vsel %vm9026, %v8916, %v8199
        %v9396 = vsel %vm9026, %v8917, %v8200
        %v9397 = vsel %vm9026, %v8918, %v8201
        %v9398 = vsel %vm9026, %v8919, %v8202
        %v9399 = vsel %vm9026, %v8920, %v8203
        %v9400 = vsel %vm9026, %v8921, %v8204
        %v9401 = vsel %vm9026, %v8922, %v8205
        %v9402 = vsel %vm9026, %v8923, %v8206
        %v9403 = vsel %vm9026, %v8924, %v8207
        %v9404 = vsel %vm9026, %v8925, %v8208
        %v9405 = vsel %vm9026, %v8926, %v8209
        %v9406 = vsel %vm9026, %v8927, %v8210
        %v9407 = vsel %vm9026, %v8928, %v8211
        %v9408 = vsel %vm9026, %v8929, %v8212
        %v9409 = vsel %vm9026, %v8930, %v8213
        %v9410 = vsel %vm9026, %v8931, %v8214
        %v9411 = vsel %vm9026, %v8932, %v8215
        %v9412 = vsel %vm9026, %v8933, %v8216
        %v9413 = vsel %vm9026, %v8934, %v8217
        %v9414 = vsel %vm9026, %v8935, %v8218
        %v9415 = vsel %vm9026, %v8936, %v8219
        %v9416 = vsel %vm9026, %v8937, %v8220
        %v9417 = vsel %vm9026, %v8938, %v8221
        %v9418 = vsel %vm9026, %v8939, %v8222
        %v9419 = vsel %vm9026, %v8940, %v8223
        %v9420 = vsel %vm9026, %v8941, %v8224
        %v9421 = vsel %vm9026, %v8942, %v8225
        %v9422 = vsel %vm9026, %v8943, %v8226
        %v9423 = vsel %vm9026, %v8944, %v8227
        %v9424 = vsel %vm9026, %v8945, %v8228
        %v9425 = vsel %vm9026, %v8946, %v8229
        %v9426 = vsel %vm9026, %v8947, %v8230
        %v9427 = vsel %vm9026, %v8948, %v8231
        %v9428 = vsel %vm9026, %v8949, %v8232
        %v9429 = vsel %vm9026, %v8950, %v8233
        %v9430 = vsel %vm9026, %v8951, %v8234
        %v9431 = vsel %vm9026, %v8952, %v8235
        %v9432 = vsel %vm9026, %v8953, %v8236
        %v9433 = vsel %vm9026, %v8954, %v8237
        %v9434 = vsel %vm9026, %v8955, %v8238
        %v9435 = vsel %vm9026, %v8956, %v8239
        %v9436 = vsel %vm9026, %v8957, %v8240
        %v9437 = vsel %vm9026, %v8958, %v8241
        %v9438 = vsel %vm9026, %v8959, %v8242
        %v9439 = vsel %vm9026, %v8960, %v8243
        %v9440 = vsel %vm9026, %v8961, %v8244
        %v9441 = vsel %vm9026, %v8962, %v8245
        %v9442 = vsel %vm9026, %v8963, %v8246
        %v9443 = vsel %vm9026, %v8964, %v8247
        %v9444 = vsel %vm9026, %v8965, %v8248
        %v9445 = vsel %vm9026, %v8966, %v8249
        %v9446 = vsel %vm9026, %v8967, %v8250
        %v9447 = vsel %vm9026, %v8968, %v8251
        %v9448 = vsel %vm9026, %v8969, %v8252
        %v9449 = vsel %vm9026, %v8970, %v8253
        %v9450 = vsel %vm9026, %v8971, %v8254
        %v9451 = vsel %vm9026, %v8972, %v8255
        %v9452 = vsel %vm9026, %v8973, %v8256
        %v9453 = vsel %vm9026, %v8974, %v8257
        %v9454 = vsel %vm9026, %v8975, %v8258
        %v9455 = vsel %vm9026, %v8976, %v8259
        %v9456 = vsel %vm9026, %v8977, %v8260
        %v9457 = vsel %vm9026, %v8978, %v8261
        %v9458 = vsel %vm9026, %v8979, %v8262
        %v9459 = vsel %vm9026, %v8980, %v8263
        %v9460 = vsel %vm9026, %v8981, %v8264
        %v9461 = vsel %vm9026, %v8982, %v8265
        %v9462 = vsel %vm9026, %v8983, %v8266
        %v9463 = vsel %vm9026, %v8984, %v8267
        %v9464 = vsel %vm9026, %v8985, %v8268
        %v9465 = vsel %vm9026, %v8986, %v8269
        %v9466 = vsel %vm9026, %v8987, %v8270
        %v9467 = vsel %vm9026, %v8988, %v8271
        %v9468 = vsel %vm9026, %v8989, %v8272
        %v9469 = vsel %vm9026, %v8990, %v8273
        %v9470 = vsel %vm9026, %v8991, %v8274
        %v9471 = vsel %vm9026, %v8992, %v8275
        %v9472 = vsel %vm9026, %v8993, %v8276
        %v9473 = vsel %vm9026, %v8994, %v8277
        %v9474 = vsel %vm9026, %v8995, %v8278
        %v9475 = vsel %vm9026, %v8996, %v8279
        %v9476 = vsel %vm9026, %v8997, %v8280
        %v9477 = vsel %vm9026, %v8998, %v8281
        %v9478 = vsel %vm9026, %v8999, %v8282
        %v9479 = vsel %vm9026, %v9000, %v8283
        %v9480 = vsel %vm9026, %v9001, %v8284
        %v9481 = vsel %vm9026, %v9002, %v8285
        %v9482 = vsel %vm9026, %v9003, %v8286
        %v9483 = vsel %vm9026, %v9004, %v8287
        %v9484 = vsel %vm9026, %v9005, %v8288
        %v9485 = vsel %vm9026, %v9006, %v8289
        %v9486 = vsel %vm9026, %v9007, %v8290
        %v9487 = vsel %vm9026, %v9008, %v8291
        %v9488 = vsel %vm9026, %v9009, %v8292
        %v9489 = vsel %vm9026, %v9010, %v8293
        %v9490 = vsel %vm9026, %v9011, %v8294
        %v9491 = vsel %vm9026, %v9012, %v8295
        %v9492 = vsel %vm9026, %v9013, %v8296
        %v9493 = vsel %vm9026, %v9014, %v8297
        %v9494 = vsel %vm9026, %v9015, %v8298
        %v9495 = vsel %vm9026, %v9016, %v8299
        %v9496 = vsel %vm9026, %v9017, %v8300
        %v9497 = vsel %vm9026, %v9018, %v8301
        %v9498 = vsel %vm9026, %v9019, %v8302
        %v9499 = vsel %vm9026, %v9020, %v8303
        %v9500 = vsel %vm9026, %v9021, %v8304
        %v9501 = vsel %vm9026, %v9022, %v8305
        %v9502 = vsel %vm9026, %v9023, %v8306
        %v9503 = vsel %vm9026, %v9024, %v8307
        %v9504 = vsel %vm9026, %v9025, %v8308
        %9505 = vst [vmem:[%s112] sm:$0xff] %v9027
        %9506 = vst [vmem:[%s112 + $0x8] sm:$0xff] %v9028
        %9507 = vst [vmem:[%s112 + $0x10] sm:$0xff] %v9029
        %9508 = vst [vmem:[%s112 + $0x18] sm:$0xff] %v9030
        %9509 = vst [vmem:[%s112 + $0x20] sm:$0xff] %v9031
        %9510 = vst [vmem:[%s112 + $0x28] sm:$0xff] %v9032
        %9511 = vst [vmem:[%s112 + $0x30] sm:$0xff] %v9033
        %9512 = vst [vmem:[%s112 + $0x38] sm:$0xff] %v9034
        %9513 = vst [vmem:[%s112 + $0x40] sm:$0xff] %v9035
        %9514 = vst [vmem:[%s112 + $0x48] sm:$0xff] %v9036
        %9515 = vst [vmem:[%s112 + $0x50] sm:$0xff] %v9037
        %9516 = vst [vmem:[%s112 + $0x58] sm:$0xff] %v9038
        %9517 = vst [vmem:[%s112 + $0x60] sm:$0xff] %v9039
        %9518 = vst [vmem:[%s112 + $0x68] sm:$0xff] %v9040
        %9519 = vst [vmem:[%s112 + $0x70] sm:$0xff] %v9041
        %9520 = vst [vmem:[%s112 + $0x78] sm:$0xff] %v9042
        %9521 = vst [vmem:[%s112 + $0x80] sm:$0xff] %v9043
        %9522 = vst [vmem:[%s112 + $0x88] sm:$0xff] %v9044
        %9523 = vst [vmem:[%s112 + $0x90] sm:$0xff] %v9045
        %9524 = vst [vmem:[%s112 + $0x98] sm:$0xff] %v9046
        %9525 = vst [vmem:[%s112 + $0xa0] sm:$0xff] %v9047
        %9526 = vst [vmem:[%s112 + $0xa8] sm:$0xff] %v9048
        %9527 = vst [vmem:[%s112 + $0xb0] sm:$0xff] %v9049
        %9528 = vst [vmem:[%s112 + $0xb8] sm:$0xff] %v9050
        %9529 = vst [vmem:[%s112 + $0xc0] sm:$0xff] %v9051
        %9530 = vst [vmem:[%s112 + $0xc8] sm:$0xff] %v9052
        %9531 = vst [vmem:[%s112 + $0xd0] sm:$0xff] %v9053
        %9532 = vst [vmem:[%s112 + $0xd8] sm:$0xff] %v9054
        %9533 = vst [vmem:[%s112 + $0xe0] sm:$0xff] %v9055
        %9534 = vst [vmem:[%s112 + $0xe8] sm:$0xff] %v9056
        %9535 = vst [vmem:[%s112 + $0xf0] sm:$0xff] %v9057
        %9536 = vst [vmem:[%s112 + $0xf8] sm:$0xff] %v9058
        %9537 = vst [vmem:[%s112 + $0x100] sm:$0xff] %v9059
        %9538 = vst [vmem:[%s112 + $0x108] sm:$0xff] %v9060
        %9539 = vst [vmem:[%s112 + $0x110] sm:$0xff] %v9061
        %9540 = vst [vmem:[%s112 + $0x118] sm:$0xff] %v9062
        %9541 = vst [vmem:[%s112 + $0x120] sm:$0xff] %v9063
        %9542 = vst [vmem:[%s112 + $0x128] sm:$0xff] %v9064
        %9543 = vst [vmem:[%s112 + $0x130] sm:$0xff] %v9065
        %9544 = vst [vmem:[%s112 + $0x138] sm:$0xff] %v9066
        %9545 = vst [vmem:[%s112 + $0x140] sm:$0xff] %v9067
        %9546 = vst [vmem:[%s112 + $0x148] sm:$0xff] %v9068
        %9547 = vst [vmem:[%s112 + $0x150] sm:$0xff] %v9069
        %9548 = vst [vmem:[%s112 + $0x158] sm:$0xff] %v9070
        %9549 = vst [vmem:[%s112 + $0x160] sm:$0xff] %v9071
        %9550 = vst [vmem:[%s112 + $0x168] sm:$0xff] %v9072
        %9551 = vst [vmem:[%s112 + $0x170] sm:$0xff] %v9073
        %9552 = vst [vmem:[%s112 + $0x178] sm:$0xff] %v9074
        %9553 = vst [vmem:[%s112 + $0x180] sm:$0xff] %v9075
        %9554 = vst [vmem:[%s112 + $0x188] sm:$0xff] %v9076
        %9555 = vst [vmem:[%s112 + $0x190] sm:$0xff] %v9077
        %9556 = vst [vmem:[%s112 + $0x198] sm:$0xff] %v9078
        %9557 = vst [vmem:[%s112 + $0x1a0] sm:$0xff] %v9079
        %9558 = vst [vmem:[%s112 + $0x1a8] sm:$0xff] %v9080
        %9559 = vst [vmem:[%s112 + $0x1b0] sm:$0xff] %v9081
        %9560 = vst [vmem:[%s112 + $0x1b8] sm:$0xff] %v9082
        %9561 = vst [vmem:[%s112 + $0x1c0] sm:$0xff] %v9083
        %9562 = vst [vmem:[%s112 + $0x1c8] sm:$0xff] %v9084
        %9563 = vst [vmem:[%s112 + $0x1d0] sm:$0xff] %v9085
        %9564 = vst [vmem:[%s112 + $0x1d8] sm:$0xff] %v9086
        %9565 = vst [vmem:[%s112 + $0x1e0] sm:$0xff] %v9087
        %9566 = vst [vmem:[%s112 + $0x1e8] sm:$0xff] %v9088
        %9567 = vst [vmem:[%s112 + $0x1f0] sm:$0xff] %v9089
        %9568 = vst [vmem:[%s112 + $0x1f8] sm:$0xff] %v9090
        %9569 = vst [vmem:[%s112 + $0x200] sm:$0xff] %v9091
        %9570 = vst [vmem:[%s112 + $0x208] sm:$0xff] %v9092
        %9571 = vst [vmem:[%s112 + $0x210] sm:$0xff] %v9093
        %9572 = vst [vmem:[%s112 + $0x218] sm:$0xff] %v9094
        %9573 = vst [vmem:[%s112 + $0x220] sm:$0xff] %v9095
        %9574 = vst [vmem:[%s112 + $0x228] sm:$0xff] %v9096
        %9575 = vst [vmem:[%s112 + $0x230] sm:$0xff] %v9097
        %9576 = vst [vmem:[%s112 + $0x238] sm:$0xff] %v9098
        %9577 = vst [vmem:[%s112 + $0x240] sm:$0xff] %v9099
        %9578 = vst [vmem:[%s112 + $0x248] sm:$0xff] %v9100
        %9579 = vst [vmem:[%s112 + $0x250] sm:$0xff] %v9101
        %9580 = vst [vmem:[%s112 + $0x258] sm:$0xff] %v9102
        %9581 = vst [vmem:[%s112 + $0x260] sm:$0xff] %v9103
        %9582 = vst [vmem:[%s112 + $0x268] sm:$0xff] %v9104
        %9583 = vst [vmem:[%s112 + $0x270] sm:$0xff] %v9105
        %9584 = vst [vmem:[%s112 + $0x278] sm:$0xff] %v9106
        %9585 = vst [vmem:[%s112 + $0x280] sm:$0xff] %v9107
        %9586 = vst [vmem:[%s112 + $0x288] sm:$0xff] %v9108
        %9587 = vst [vmem:[%s112 + $0x290] sm:$0xff] %v9109
        %9588 = vst [vmem:[%s112 + $0x298] sm:$0xff] %v9110
        %9589 = vst [vmem:[%s112 + $0x2a0] sm:$0xff] %v9111
        %9590 = vst [vmem:[%s112 + $0x2a8] sm:$0xff] %v9112
        %9591 = vst [vmem:[%s112 + $0x2b0] sm:$0xff] %v9113
        %9592 = vst [vmem:[%s112 + $0x2b8] sm:$0xff] %v9114
        %9593 = vst [vmem:[%s112 + $0x2c0] sm:$0xff] %v9115
        %9594 = vst [vmem:[%s112 + $0x2c8] sm:$0xff] %v9116
        %9595 = vst [vmem:[%s112 + $0x2d0] sm:$0xff] %v9117
        %9596 = vst [vmem:[%s112 + $0x2d8] sm:$0xff] %v9118
        %9597 = vst [vmem:[%s112 + $0x2e0] sm:$0xff] %v9119
        %9598 = vst [vmem:[%s112 + $0x2e8] sm:$0xff] %v9120
        %9599 = vst [vmem:[%s112 + $0x2f0] sm:$0xff] %v9121
        %9600 = vst [vmem:[%s112 + $0x2f8] sm:$0xff] %v9122
        %9601 = vst [vmem:[%s112 + $0x300] sm:$0xff] %v9123
        %9602 = vst [vmem:[%s112 + $0x308] sm:$0xff] %v9124
        %9603 = vst [vmem:[%s112 + $0x310] sm:$0xff] %v9125
        %9604 = vst [vmem:[%s112 + $0x318] sm:$0xff] %v9126
        %9605 = vst [vmem:[%s112 + $0x320] sm:$0xff] %v9127
        %9606 = vst [vmem:[%s112 + $0x328] sm:$0xff] %v9128
        %9607 = vst [vmem:[%s112 + $0x330] sm:$0xff] %v9129
        %9608 = vst [vmem:[%s112 + $0x338] sm:$0xff] %v9130
        %9609 = vst [vmem:[%s112 + $0x340] sm:$0xff] %v9131
        %9610 = vst [vmem:[%s112 + $0x348] sm:$0xff] %v9132
        %9611 = vst [vmem:[%s112 + $0x350] sm:$0xff] %v9133
        %9612 = vst [vmem:[%s112 + $0x358] sm:$0xff] %v9134
        %9613 = vst [vmem:[%s112 + $0x360] sm:$0xff] %v9135
        %9614 = vst [vmem:[%s112 + $0x368] sm:$0xff] %v9136
        %9615 = vst [vmem:[%s112 + $0x370] sm:$0xff] %v9137
        %9616 = vst [vmem:[%s112 + $0x378] sm:$0xff] %v9138
        %9617 = vst [vmem:[%s112 + $0x380] sm:$0xff] %v9139
        %9618 = vst [vmem:[%s112 + $0x388] sm:$0xff] %v9140
        %9619 = vst [vmem:[%s112 + $0x390] sm:$0xff] %v9141
        %9620 = vst [vmem:[%s112 + $0x398] sm:$0xff] %v9142
        %9621 = vst [vmem:[%s112 + $0x3a0] sm:$0xff] %v9143
        %9622 = vst [vmem:[%s112 + $0x3a8] sm:$0xff] %v9144
        %9623 = vst [vmem:[%s112 + $0x3b0] sm:$0xff] %v9145
        %9624 = vst [vmem:[%s112 + $0x3b8] sm:$0xff] %v9146
        %9625 = vst [vmem:[%s112 + $0x3c0] sm:$0xff] %v9147
        %9626 = vst [vmem:[%s112 + $0x3c8] sm:$0xff] %v9148
        %9627 = vst [vmem:[%s112 + $0x3d0] sm:$0xff] %v9149
        %9628 = vst [vmem:[%s112 + $0x3d8] sm:$0xff] %v9150
        %9629 = vst [vmem:[%s112 + $0x3e0] sm:$0xff] %v9151
        %9630 = vst [vmem:[%s112 + $0x3e8] sm:$0xff] %v9152
        %9631 = vst [vmem:[%s112 + $0x3f0] sm:$0xff] %v9153
        %9632 = vst [vmem:[%s112 + $0x3f8] sm:$0xff] %v9154
        %9633 = vst [vmem:[%s112 + $0x400] sm:$0xff] %v9155
        %9634 = vst [vmem:[%s112 + $0x408] sm:$0xff] %v9156
        %9635 = vst [vmem:[%s112 + $0x410] sm:$0xff] %v9157
        %9636 = vst [vmem:[%s112 + $0x418] sm:$0xff] %v9158
        %9637 = vst [vmem:[%s112 + $0x420] sm:$0xff] %v9159
        %9638 = vst [vmem:[%s112 + $0x428] sm:$0xff] %v9160
        %9639 = vst [vmem:[%s112 + $0x430] sm:$0xff] %v9161
        %9640 = vst [vmem:[%s112 + $0x438] sm:$0xff] %v9162
        %9641 = vst [vmem:[%s112 + $0x440] sm:$0xff] %v9163
        %9642 = vst [vmem:[%s112 + $0x448] sm:$0xff] %v9164
        %9643 = vst [vmem:[%s112 + $0x450] sm:$0xff] %v9165
        %9644 = vst [vmem:[%s112 + $0x458] sm:$0xff] %v9166
        %9645 = vst [vmem:[%s112 + $0x460] sm:$0xff] %v9167
        %9646 = vst [vmem:[%s112 + $0x468] sm:$0xff] %v9168
        %9647 = vst [vmem:[%s112 + $0x470] sm:$0xff] %v9169
        %9648 = vst [vmem:[%s112 + $0x478] sm:$0xff] %v9170
        %9649 = vst [vmem:[%s112 + $0x480] sm:$0xff] %v9171
        %9650 = vst [vmem:[%s112 + $0x488] sm:$0xff] %v9172
        %9651 = vst [vmem:[%s112 + $0x490] sm:$0xff] %v9173
        %9652 = vst [vmem:[%s112 + $0x498] sm:$0xff] %v9174
        %9653 = vst [vmem:[%s112 + $0x4a0] sm:$0xff] %v9175
        %9654 = vst [vmem:[%s112 + $0x4a8] sm:$0xff] %v9176
        %9655 = vst [vmem:[%s112 + $0x4b0] sm:$0xff] %v9177
        %9656 = vst [vmem:[%s112 + $0x4b8] sm:$0xff] %v9178
        %9657 = vst [vmem:[%s112 + $0x4c0] sm:$0xff] %v9179
        %9658 = vst [vmem:[%s112 + $0x4c8] sm:$0xff] %v9180
        %9659 = vst [vmem:[%s112 + $0x4d0] sm:$0xff] %v9181
        %9660 = vst [vmem:[%s112 + $0x4d8] sm:$0xff] %v9182
        %9661 = vst [vmem:[%s112 + $0x4e0] sm:$0xff] %v9183
        %9662 = vst [vmem:[%s112 + $0x4e8] sm:$0xff] %v9184
        %9663 = vst [vmem:[%s112 + $0x4f0] sm:$0xff] %v9185
        %9664 = vst [vmem:[%s112 + $0x4f8] sm:$0xff] %v9186
        %9665 = vst [vmem:[%s112 + $0x500] sm:$0xff] %v9187
        %9666 = vst [vmem:[%s112 + $0x508] sm:$0xff] %v9188
        %9667 = vst [vmem:[%s112 + $0x510] sm:$0xff] %v9189
        %9668 = vst [vmem:[%s112 + $0x518] sm:$0xff] %v9190
        %9669 = vst [vmem:[%s112 + $0x520] sm:$0xff] %v9191
        %9670 = vst [vmem:[%s112 + $0x528] sm:$0xff] %v9192
        %9671 = vst [vmem:[%s112 + $0x530] sm:$0xff] %v9193
        %9672 = vst [vmem:[%s112 + $0x538] sm:$0xff] %v9194
        %9673 = vst [vmem:[%s112 + $0x540] sm:$0xff] %v9195
        %9674 = vst [vmem:[%s112 + $0x548] sm:$0xff] %v9196
        %9675 = vst [vmem:[%s112 + $0x550] sm:$0xff] %v9197
        %9676 = vst [vmem:[%s112 + $0x558] sm:$0xff] %v9198
        %9677 = vst [vmem:[%s112 + $0x560] sm:$0xff] %v9199
        %9678 = vst [vmem:[%s112 + $0x568] sm:$0xff] %v9200
        %9679 = vst [vmem:[%s112 + $0x570] sm:$0xff] %v9201
        %9680 = vst [vmem:[%s112 + $0x578] sm:$0xff] %v9202
        %9681 = vst [vmem:[%s112 + $0x580] sm:$0xff] %v9203
        %9682 = vst [vmem:[%s112 + $0x588] sm:$0xff] %v9204
        %9683 = vst [vmem:[%s112 + $0x590] sm:$0xff] %v9205
        %9684 = vst [vmem:[%s112 + $0x598] sm:$0xff] %v9206
        %9685 = vst [vmem:[%s112 + $0x5a0] sm:$0xff] %v9207
        %9686 = vst [vmem:[%s112 + $0x5a8] sm:$0xff] %v9208
        %9687 = vst [vmem:[%s112 + $0x5b0] sm:$0xff] %v9209
        %9688 = vst [vmem:[%s112 + $0x5b8] sm:$0xff] %v9210
        %9689 = vst [vmem:[%s112 + $0x5c0] sm:$0xff] %v9211
        %9690 = vst [vmem:[%s112 + $0x5c8] sm:$0xff] %v9212
        %9691 = vst [vmem:[%s112 + $0x5d0] sm:$0xff] %v9213
        %9692 = vst [vmem:[%s112 + $0x5d8] sm:$0xff] %v9214
        %9693 = vst [vmem:[%s112 + $0x5e0] sm:$0xff] %v9215
        %9694 = vst [vmem:[%s112 + $0x5e8] sm:$0xff] %v9216
        %9695 = vst [vmem:[%s112 + $0x5f0] sm:$0xff] %v9217
        %9696 = vst [vmem:[%s112 + $0x5f8] sm:$0xff] %v9218
        %9697 = vst [vmem:[%s112 + $0x600] sm:$0xff] %v9219
        %9698 = vst [vmem:[%s112 + $0x608] sm:$0xff] %v9220
        %9699 = vst [vmem:[%s112 + $0x610] sm:$0xff] %v9221
        %9700 = vst [vmem:[%s112 + $0x618] sm:$0xff] %v9222
        %9701 = vst [vmem:[%s112 + $0x620] sm:$0xff] %v9223
        %9702 = vst [vmem:[%s112 + $0x628] sm:$0xff] %v9224
        %9703 = vst [vmem:[%s112 + $0x630] sm:$0xff] %v9225
        %9704 = vst [vmem:[%s112 + $0x638] sm:$0xff] %v9226
        %9705 = vst [vmem:[%s112 + $0x640] sm:$0xff] %v9227
        %9706 = vst [vmem:[%s112 + $0x648] sm:$0xff] %v9228
        %9707 = vst [vmem:[%s112 + $0x650] sm:$0xff] %v9229
        %9708 = vst [vmem:[%s112 + $0x658] sm:$0xff] %v9230
        %9709 = vst [vmem:[%s112 + $0x660] sm:$0xff] %v9231
        %9710 = vst [vmem:[%s112 + $0x668] sm:$0xff] %v9232
        %9711 = vst [vmem:[%s112 + $0x670] sm:$0xff] %v9233
        %9712 = vst [vmem:[%s112 + $0x678] sm:$0xff] %v9234
        %9713 = vst [vmem:[%s112 + $0x680] sm:$0xff] %v9235
        %9714 = vst [vmem:[%s112 + $0x688] sm:$0xff] %v9236
        %9715 = vst [vmem:[%s112 + $0x690] sm:$0xff] %v9237
        %9716 = vst [vmem:[%s112 + $0x698] sm:$0xff] %v9238
        %9717 = vst [vmem:[%s112 + $0x6a0] sm:$0xff] %v9239
        %9718 = vst [vmem:[%s112 + $0x6a8] sm:$0xff] %v9240
        %9719 = vst [vmem:[%s112 + $0x6b0] sm:$0xff] %v9241
        %9720 = vst [vmem:[%s112 + $0x6b8] sm:$0xff] %v9242
        %9721 = vst [vmem:[%s112 + $0x6c0] sm:$0xff] %v9243
        %9722 = vst [vmem:[%s112 + $0x6c8] sm:$0xff] %v9244
        %9723 = vst [vmem:[%s112 + $0x6d0] sm:$0xff] %v9245
        %9724 = vst [vmem:[%s112 + $0x6d8] sm:$0xff] %v9246
        %9725 = vst [vmem:[%s112 + $0x6e0] sm:$0xff] %v9247
        %9726 = vst [vmem:[%s112 + $0x6e8] sm:$0xff] %v9248
        %9727 = vst [vmem:[%s112 + $0x6f0] sm:$0xff] %v9249
        %9728 = vst [vmem:[%s112 + $0x6f8] sm:$0xff] %v9250
        %9729 = vst [vmem:[%s112 + $0x700] sm:$0xff] %v9251
        %9730 = vst [vmem:[%s112 + $0x708] sm:$0xff] %v9252
        %9731 = vst [vmem:[%s112 + $0x710] sm:$0xff] %v9253
        %9732 = vst [vmem:[%s112 + $0x718] sm:$0xff] %v9254
        %9733 = vst [vmem:[%s112 + $0x720] sm:$0xff] %v9255
        %9734 = vst [vmem:[%s112 + $0x728] sm:$0xff] %v9256
        %9735 = vst [vmem:[%s112 + $0x730] sm:$0xff] %v9257
        %9736 = vst [vmem:[%s112 + $0x738] sm:$0xff] %v9258
        %9737 = vst [vmem:[%s112 + $0x740] sm:$0xff] %v9259
        %9738 = vst [vmem:[%s112 + $0x748] sm:$0xff] %v9260
        %9739 = vst [vmem:[%s112 + $0x750] sm:$0xff] %v9261
        %9740 = vst [vmem:[%s112 + $0x758] sm:$0xff] %v9262
        %9741 = vst [vmem:[%s112 + $0x760] sm:$0xff] %v9263
        %9742 = vst [vmem:[%s112 + $0x768] sm:$0xff] %v9264
        %vm9743 = vcmask 474112
        %9744 = vst.msk [vmem:[%s112 + $0x770] sm:$0xff] %vm9743, %v9265
        %9745 = vst [vmem:[%s112 + $0x778] sm:$0xff] %v9266
        %9746 = vst [vmem:[%s112 + $0x780] sm:$0xff] %v9267
        %9747 = vst [vmem:[%s112 + $0x788] sm:$0xff] %v9268
        %9748 = vst [vmem:[%s112 + $0x790] sm:$0xff] %v9269
        %9749 = vst [vmem:[%s112 + $0x798] sm:$0xff] %v9270
        %9750 = vst [vmem:[%s112 + $0x7a0] sm:$0xff] %v9271
        %9751 = vst [vmem:[%s112 + $0x7a8] sm:$0xff] %v9272
        %9752 = vst [vmem:[%s112 + $0x7b0] sm:$0xff] %v9273
        %9753 = vst [vmem:[%s112 + $0x7b8] sm:$0xff] %v9274
        %9754 = vst [vmem:[%s112 + $0x7c0] sm:$0xff] %v9275
        %9755 = vst [vmem:[%s112 + $0x7c8] sm:$0xff] %v9276
        %9756 = vst [vmem:[%s112 + $0x7d0] sm:$0xff] %v9277
        %9757 = vst [vmem:[%s112 + $0x7d8] sm:$0xff] %v9278
        %9758 = vst [vmem:[%s112 + $0x7e0] sm:$0xff] %v9279
        %9759 = vst [vmem:[%s112 + $0x7e8] sm:$0xff] %v9280
        %9760 = vst [vmem:[%s112 + $0x7f0] sm:$0xff] %v9281
        %9761 = vst [vmem:[%s112 + $0x7f8] sm:$0xff] %v9282
        %9762 = vst [vmem:[%s112 + $0x800] sm:$0xff] %v9283
        %9763 = vst [vmem:[%s112 + $0x808] sm:$0xff] %v9284
        %9764 = vst [vmem:[%s112 + $0x810] sm:$0xff] %v9285
        %9765 = vst [vmem:[%s112 + $0x818] sm:$0xff] %v9286
        %9766 = vst [vmem:[%s112 + $0x820] sm:$0xff] %v9287
        %9767 = vst [vmem:[%s112 + $0x828] sm:$0xff] %v9288
        %9768 = vst [vmem:[%s112 + $0x830] sm:$0xff] %v9289
        %9769 = vst [vmem:[%s112 + $0x838] sm:$0xff] %v9290
        %9770 = vst [vmem:[%s112 + $0x840] sm:$0xff] %v9291
        %9771 = vst [vmem:[%s112 + $0x848] sm:$0xff] %v9292
        %9772 = vst [vmem:[%s112 + $0x850] sm:$0xff] %v9293
        %9773 = vst [vmem:[%s112 + $0x858] sm:$0xff] %v9294
        %9774 = vst [vmem:[%s112 + $0x860] sm:$0xff] %v9295
        %9775 = vst [vmem:[%s112 + $0x868] sm:$0xff] %v9296
        %9776 = vst [vmem:[%s112 + $0x870] sm:$0xff] %v9297
        %9777 = vst [vmem:[%s112 + $0x878] sm:$0xff] %v9298
        %9778 = vst [vmem:[%s112 + $0x880] sm:$0xff] %v9299
        %9779 = vst [vmem:[%s112 + $0x888] sm:$0xff] %v9300
        %9780 = vst [vmem:[%s112 + $0x890] sm:$0xff] %v9301
        %9781 = vst [vmem:[%s112 + $0x898] sm:$0xff] %v9302
        %9782 = vst [vmem:[%s112 + $0x8a0] sm:$0xff] %v9303
        %9783 = vst [vmem:[%s112 + $0x8a8] sm:$0xff] %v9304
        %9784 = vst [vmem:[%s112 + $0x8b0] sm:$0xff] %v9305
        %9785 = vst [vmem:[%s112 + $0x8b8] sm:$0xff] %v9306
        %9786 = vst [vmem:[%s112 + $0x8c0] sm:$0xff] %v9307
        %9787 = vst [vmem:[%s112 + $0x8c8] sm:$0xff] %v9308
        %9788 = vst [vmem:[%s112 + $0x8d0] sm:$0xff] %v9309
        %9789 = vst [vmem:[%s112 + $0x8d8] sm:$0xff] %v9310
        %9790 = vst [vmem:[%s112 + $0x8e0] sm:$0xff] %v9311
        %9791 = vst [vmem:[%s112 + $0x8e8] sm:$0xff] %v9312
        %9792 = vst [vmem:[%s112 + $0x8f0] sm:$0xff] %v9313
        %9793 = vst [vmem:[%s112 + $0x8f8] sm:$0xff] %v9314
        %9794 = vst [vmem:[%s112 + $0x900] sm:$0xff] %v9315
        %9795 = vst [vmem:[%s112 + $0x908] sm:$0xff] %v9316
        %9796 = vst [vmem:[%s112 + $0x910] sm:$0xff] %v9317
        %9797 = vst [vmem:[%s112 + $0x918] sm:$0xff] %v9318
        %9798 = vst [vmem:[%s112 + $0x920] sm:$0xff] %v9319
        %9799 = vst [vmem:[%s112 + $0x928] sm:$0xff] %v9320
        %9800 = vst [vmem:[%s112 + $0x930] sm:$0xff] %v9321
        %9801 = vst [vmem:[%s112 + $0x938] sm:$0xff] %v9322
        %9802 = vst [vmem:[%s112 + $0x940] sm:$0xff] %v9323
        %9803 = vst [vmem:[%s112 + $0x948] sm:$0xff] %v9324
        %9804 = vst [vmem:[%s112 + $0x950] sm:$0xff] %v9325
        %9805 = vst [vmem:[%s112 + $0x958] sm:$0xff] %v9326
        %9806 = vst [vmem:[%s112 + $0x960] sm:$0xff] %v9327
        %9807 = vst [vmem:[%s112 + $0x968] sm:$0xff] %v9328
        %9808 = vst [vmem:[%s112 + $0x970] sm:$0xff] %v9329
        %9809 = vst [vmem:[%s112 + $0x978] sm:$0xff] %v9330
        %9810 = vst [vmem:[%s112 + $0x980] sm:$0xff] %v9331
        %9811 = vst [vmem:[%s112 + $0x988] sm:$0xff] %v9332
        %9812 = vst [vmem:[%s112 + $0x990] sm:$0xff] %v9333
        %9813 = vst [vmem:[%s112 + $0x998] sm:$0xff] %v9334
        %9814 = vst [vmem:[%s112 + $0x9a0] sm:$0xff] %v9335
        %9815 = vst [vmem:[%s112 + $0x9a8] sm:$0xff] %v9336
        %9816 = vst [vmem:[%s112 + $0x9b0] sm:$0xff] %v9337
        %9817 = vst [vmem:[%s112 + $0x9b8] sm:$0xff] %v9338
        %9818 = vst [vmem:[%s112 + $0x9c0] sm:$0xff] %v9339
        %9819 = vst [vmem:[%s112 + $0x9c8] sm:$0xff] %v9340
        %9820 = vst [vmem:[%s112 + $0x9d0] sm:$0xff] %v9341
        %9821 = vst [vmem:[%s112 + $0x9d8] sm:$0xff] %v9342
        %9822 = vst [vmem:[%s112 + $0x9e0] sm:$0xff] %v9343
        %9823 = vst [vmem:[%s112 + $0x9e8] sm:$0xff] %v9344
        %9824 = vst [vmem:[%s112 + $0x9f0] sm:$0xff] %v9345
        %9825 = vst [vmem:[%s112 + $0x9f8] sm:$0xff] %v9346
        %9826 = vst [vmem:[%s112 + $0xa00] sm:$0xff] %v9347
        %9827 = vst [vmem:[%s112 + $0xa08] sm:$0xff] %v9348
        %9828 = vst [vmem:[%s112 + $0xa10] sm:$0xff] %v9349
        %9829 = vst [vmem:[%s112 + $0xa18] sm:$0xff] %v9350
        %9830 = vst [vmem:[%s112 + $0xa20] sm:$0xff] %v9351
        %9831 = vst [vmem:[%s112 + $0xa28] sm:$0xff] %v9352
        %9832 = vst [vmem:[%s112 + $0xa30] sm:$0xff] %v9353
        %9833 = vst [vmem:[%s112 + $0xa38] sm:$0xff] %v9354
        %9834 = vst [vmem:[%s112 + $0xa40] sm:$0xff] %v9355
        %9835 = vst [vmem:[%s112 + $0xa48] sm:$0xff] %v9356
        %9836 = vst [vmem:[%s112 + $0xa50] sm:$0xff] %v9357
        %9837 = vst [vmem:[%s112 + $0xa58] sm:$0xff] %v9358
        %9838 = vst [vmem:[%s112 + $0xa60] sm:$0xff] %v9359
        %9839 = vst [vmem:[%s112 + $0xa68] sm:$0xff] %v9360
        %9840 = vst [vmem:[%s112 + $0xa70] sm:$0xff] %v9361
        %9841 = vst [vmem:[%s112 + $0xa78] sm:$0xff] %v9362
        %9842 = vst [vmem:[%s112 + $0xa80] sm:$0xff] %v9363
        %9843 = vst [vmem:[%s112 + $0xa88] sm:$0xff] %v9364
        %9844 = vst [vmem:[%s112 + $0xa90] sm:$0xff] %v9365
        %9845 = vst [vmem:[%s112 + $0xa98] sm:$0xff] %v9366
        %9846 = vst [vmem:[%s112 + $0xaa0] sm:$0xff] %v9367
        %9847 = vst [vmem:[%s112 + $0xaa8] sm:$0xff] %v9368
        %9848 = vst [vmem:[%s112 + $0xab0] sm:$0xff] %v9369
        %9849 = vst [vmem:[%s112 + $0xab8] sm:$0xff] %v9370
        %9850 = vst [vmem:[%s112 + $0xac0] sm:$0xff] %v9371
        %9851 = vst [vmem:[%s112 + $0xac8] sm:$0xff] %v9372
        %9852 = vst [vmem:[%s112 + $0xad0] sm:$0xff] %v9373
        %9853 = vst [vmem:[%s112 + $0xad8] sm:$0xff] %v9374
        %9854 = vst [vmem:[%s112 + $0xae0] sm:$0xff] %v9375
        %9855 = vst [vmem:[%s112 + $0xae8] sm:$0xff] %v9376
        %9856 = vst [vmem:[%s112 + $0xaf0] sm:$0xff] %v9377
        %9857 = vst [vmem:[%s112 + $0xaf8] sm:$0xff] %v9378
        %9858 = vst [vmem:[%s112 + $0xb00] sm:$0xff] %v9379
        %9859 = vst [vmem:[%s112 + $0xb08] sm:$0xff] %v9380
        %9860 = vst [vmem:[%s112 + $0xb10] sm:$0xff] %v9381
        %9861 = vst [vmem:[%s112 + $0xb18] sm:$0xff] %v9382
        %9862 = vst [vmem:[%s112 + $0xb20] sm:$0xff] %v9383
        %9863 = vst [vmem:[%s112 + $0xb28] sm:$0xff] %v9384
        %9864 = vst [vmem:[%s112 + $0xb30] sm:$0xff] %v9385
        %9865 = vst [vmem:[%s112 + $0xb38] sm:$0xff] %v9386
        %9866 = vst [vmem:[%s112 + $0xb40] sm:$0xff] %v9387
        %9867 = vst [vmem:[%s112 + $0xb48] sm:$0xff] %v9388
        %9868 = vst [vmem:[%s112 + $0xb50] sm:$0xff] %v9389
        %9869 = vst [vmem:[%s112 + $0xb58] sm:$0xff] %v9390
        %9870 = vst [vmem:[%s112 + $0xb60] sm:$0xff] %v9391
        %9871 = vst [vmem:[%s112 + $0xb68] sm:$0xff] %v9392
        %9872 = vst [vmem:[%s112 + $0xb70] sm:$0xff] %v9393
        %9873 = vst [vmem:[%s112 + $0xb78] sm:$0xff] %v9394
        %9874 = vst [vmem:[%s112 + $0xb80] sm:$0xff] %v9395
        %9875 = vst [vmem:[%s112 + $0xb88] sm:$0xff] %v9396
        %9876 = vst [vmem:[%s112 + $0xb90] sm:$0xff] %v9397
        %9877 = vst [vmem:[%s112 + $0xb98] sm:$0xff] %v9398
        %9878 = vst [vmem:[%s112 + $0xba0] sm:$0xff] %v9399
        %9879 = vst [vmem:[%s112 + $0xba8] sm:$0xff] %v9400
        %9880 = vst [vmem:[%s112 + $0xbb0] sm:$0xff] %v9401
        %9881 = vst [vmem:[%s112 + $0xbb8] sm:$0xff] %v9402
        %9882 = vst [vmem:[%s112 + $0xbc0] sm:$0xff] %v9403
        %9883 = vst [vmem:[%s112 + $0xbc8] sm:$0xff] %v9404
        %9884 = vst [vmem:[%s112 + $0xbd0] sm:$0xff] %v9405
        %9885 = vst [vmem:[%s112 + $0xbd8] sm:$0xff] %v9406
        %9886 = vst [vmem:[%s112 + $0xbe0] sm:$0xff] %v9407
        %9887 = vst [vmem:[%s112 + $0xbe8] sm:$0xff] %v9408
        %9888 = vst [vmem:[%s112 + $0xbf0] sm:$0xff] %v9409
        %9889 = vst [vmem:[%s112 + $0xbf8] sm:$0xff] %v9410
        %9890 = vst [vmem:[%s112 + $0xc00] sm:$0xff] %v9411
        %9891 = vst [vmem:[%s112 + $0xc08] sm:$0xff] %v9412
        %9892 = vst [vmem:[%s112 + $0xc10] sm:$0xff] %v9413
        %9893 = vst [vmem:[%s112 + $0xc18] sm:$0xff] %v9414
        %9894 = vst [vmem:[%s112 + $0xc20] sm:$0xff] %v9415
        %9895 = vst [vmem:[%s112 + $0xc28] sm:$0xff] %v9416
        %9896 = vst [vmem:[%s112 + $0xc30] sm:$0xff] %v9417
        %9897 = vst [vmem:[%s112 + $0xc38] sm:$0xff] %v9418
        %9898 = vst [vmem:[%s112 + $0xc40] sm:$0xff] %v9419
        %9899 = vst [vmem:[%s112 + $0xc48] sm:$0xff] %v9420
        %9900 = vst [vmem:[%s112 + $0xc50] sm:$0xff] %v9421
        %9901 = vst [vmem:[%s112 + $0xc58] sm:$0xff] %v9422
        %9902 = vst [vmem:[%s112 + $0xc60] sm:$0xff] %v9423
        %9903 = vst [vmem:[%s112 + $0xc68] sm:$0xff] %v9424
        %9904 = vst [vmem:[%s112 + $0xc70] sm:$0xff] %v9425
        %9905 = vst [vmem:[%s112 + $0xc78] sm:$0xff] %v9426
        %9906 = vst [vmem:[%s112 + $0xc80] sm:$0xff] %v9427
        %9907 = vst [vmem:[%s112 + $0xc88] sm:$0xff] %v9428
        %9908 = vst [vmem:[%s112 + $0xc90] sm:$0xff] %v9429
        %9909 = vst [vmem:[%s112 + $0xc98] sm:$0xff] %v9430
        %9910 = vst [vmem:[%s112 + $0xca0] sm:$0xff] %v9431
        %9911 = vst [vmem:[%s112 + $0xca8] sm:$0xff] %v9432
        %9912 = vst [vmem:[%s112 + $0xcb0] sm:$0xff] %v9433
        %9913 = vst [vmem:[%s112 + $0xcb8] sm:$0xff] %v9434
        %9914 = vst [vmem:[%s112 + $0xcc0] sm:$0xff] %v9435
        %9915 = vst [vmem:[%s112 + $0xcc8] sm:$0xff] %v9436
        %9916 = vst [vmem:[%s112 + $0xcd0] sm:$0xff] %v9437
        %9917 = vst [vmem:[%s112 + $0xcd8] sm:$0xff] %v9438
        %9918 = vst [vmem:[%s112 + $0xce0] sm:$0xff] %v9439
        %9919 = vst [vmem:[%s112 + $0xce8] sm:$0xff] %v9440
        %9920 = vst [vmem:[%s112 + $0xcf0] sm:$0xff] %v9441
        %9921 = vst [vmem:[%s112 + $0xcf8] sm:$0xff] %v9442
        %9922 = vst [vmem:[%s112 + $0xd00] sm:$0xff] %v9443
        %9923 = vst [vmem:[%s112 + $0xd08] sm:$0xff] %v9444
        %9924 = vst [vmem:[%s112 + $0xd10] sm:$0xff] %v9445
        %9925 = vst [vmem:[%s112 + $0xd18] sm:$0xff] %v9446
        %9926 = vst [vmem:[%s112 + $0xd20] sm:$0xff] %v9447
        %9927 = vst [vmem:[%s112 + $0xd28] sm:$0xff] %v9448
        %9928 = vst [vmem:[%s112 + $0xd30] sm:$0xff] %v9449
        %9929 = vst [vmem:[%s112 + $0xd38] sm:$0xff] %v9450
        %9930 = vst [vmem:[%s112 + $0xd40] sm:$0xff] %v9451
        %9931 = vst [vmem:[%s112 + $0xd48] sm:$0xff] %v9452
        %9932 = vst [vmem:[%s112 + $0xd50] sm:$0xff] %v9453
        %9933 = vst [vmem:[%s112 + $0xd58] sm:$0xff] %v9454
        %9934 = vst [vmem:[%s112 + $0xd60] sm:$0xff] %v9455
        %9935 = vst [vmem:[%s112 + $0xd68] sm:$0xff] %v9456
        %9936 = vst [vmem:[%s112 + $0xd70] sm:$0xff] %v9457
        %9937 = vst [vmem:[%s112 + $0xd78] sm:$0xff] %v9458
        %9938 = vst [vmem:[%s112 + $0xd80] sm:$0xff] %v9459
        %9939 = vst [vmem:[%s112 + $0xd88] sm:$0xff] %v9460
        %9940 = vst [vmem:[%s112 + $0xd90] sm:$0xff] %v9461
        %9941 = vst [vmem:[%s112 + $0xd98] sm:$0xff] %v9462
        %9942 = vst [vmem:[%s112 + $0xda0] sm:$0xff] %v9463
        %9943 = vst [vmem:[%s112 + $0xda8] sm:$0xff] %v9464
        %9944 = vst [vmem:[%s112 + $0xdb0] sm:$0xff] %v9465
        %9945 = vst [vmem:[%s112 + $0xdb8] sm:$0xff] %v9466
        %9946 = vst [vmem:[%s112 + $0xdc0] sm:$0xff] %v9467
        %9947 = vst [vmem:[%s112 + $0xdc8] sm:$0xff] %v9468
        %9948 = vst [vmem:[%s112 + $0xdd0] sm:$0xff] %v9469
        %9949 = vst [vmem:[%s112 + $0xdd8] sm:$0xff] %v9470
        %9950 = vst [vmem:[%s112 + $0xde0] sm:$0xff] %v9471
        %9951 = vst [vmem:[%s112 + $0xde8] sm:$0xff] %v9472
        %9952 = vst [vmem:[%s112 + $0xdf0] sm:$0xff] %v9473
        %9953 = vst [vmem:[%s112 + $0xdf8] sm:$0xff] %v9474
        %9954 = vst [vmem:[%s112 + $0xe00] sm:$0xff] %v9475
        %9955 = vst [vmem:[%s112 + $0xe08] sm:$0xff] %v9476
        %9956 = vst [vmem:[%s112 + $0xe10] sm:$0xff] %v9477
        %9957 = vst [vmem:[%s112 + $0xe18] sm:$0xff] %v9478
        %9958 = vst [vmem:[%s112 + $0xe20] sm:$0xff] %v9479
        %9959 = vst [vmem:[%s112 + $0xe28] sm:$0xff] %v9480
        %9960 = vst [vmem:[%s112 + $0xe30] sm:$0xff] %v9481
        %9961 = vst [vmem:[%s112 + $0xe38] sm:$0xff] %v9482
        %9962 = vst [vmem:[%s112 + $0xe40] sm:$0xff] %v9483
        %9963 = vst [vmem:[%s112 + $0xe48] sm:$0xff] %v9484
        %9964 = vst [vmem:[%s112 + $0xe50] sm:$0xff] %v9485
        %9965 = vst [vmem:[%s112 + $0xe58] sm:$0xff] %v9486
        %9966 = vst [vmem:[%s112 + $0xe60] sm:$0xff] %v9487
        %9967 = vst [vmem:[%s112 + $0xe68] sm:$0xff] %v9488
        %9968 = vst [vmem:[%s112 + $0xe70] sm:$0xff] %v9489
        %9969 = vst [vmem:[%s112 + $0xe78] sm:$0xff] %v9490
        %9970 = vst [vmem:[%s112 + $0xe80] sm:$0xff] %v9491
        %9971 = vst [vmem:[%s112 + $0xe88] sm:$0xff] %v9492
        %9972 = vst [vmem:[%s112 + $0xe90] sm:$0xff] %v9493
        %9973 = vst [vmem:[%s112 + $0xe98] sm:$0xff] %v9494
        %9974 = vst [vmem:[%s112 + $0xea0] sm:$0xff] %v9495
        %9975 = vst [vmem:[%s112 + $0xea8] sm:$0xff] %v9496
        %9976 = vst [vmem:[%s112 + $0xeb0] sm:$0xff] %v9497
        %9977 = vst [vmem:[%s112 + $0xeb8] sm:$0xff] %v9498
        %9978 = vst [vmem:[%s112 + $0xec0] sm:$0xff] %v9499
        %9979 = vst [vmem:[%s112 + $0xec8] sm:$0xff] %v9500
        %9980 = vst [vmem:[%s112 + $0xed0] sm:$0xff] %v9501
        %9981 = vst [vmem:[%s112 + $0xed8] sm:$0xff] %v9502
        %9982 = vst [vmem:[%s112 + $0xee0] sm:$0xff] %v9503
        %9983 = vst.msk [vmem:[%s112 + $0xee8] sm:$0xff] %vm9743, %v9504
        %s9984 = sand.u32 %s49, 1
        %s9985 = scalar_lea.sflag [#allocation3], %s9984
        %s9986 = sand.u32 %s49, 1
        %s9987 = smul.addr %s9986, 3824
        %s9988 = scalar_lea.vmem [#allocation2], %s9987
        // Predicated region
        $region25: #{tpu_custom_call.1} parent=23 // pred_check
          %p9989 = pneg %p59
        $region26: #{tpu_custom_call.1} parent=23 // pred_check_branch
          %9991 = sbr.rel (%p9989) target = $region28
        $region27: #{tpu_custom_call.1} parent=23 // pred_region
          %s9992 = smul.u32 2, %s15
          %s9994 = ssub.s32 61184, 61184
          %9995 = vsyncadd %s9985, %s9994
          %s9996 = smul.addr %s9992, 239
          %s9997 = smul.addr %s9996, 128
          %s9998 = scalar_lea.hbm %s1, %s9997
          %s9999 = sshll.u32 %s9988, 4
          %s10000 = int_to_ptr.vmem [resolvable:$true] %s9999
          %10005 = dma.vmem_to_hbm [thread:$0]  %s10000, 61184, %s9998, %s9985, 30592, 30592, 1912
        $region28: #{tpu_custom_call.1} parent=23 // pred_fallthru
          _
      $region24: #{tpu_custom_call.1} parent=5 // pred_fallthru
        _
      %p10006 = scmp.le.s32.totalorder 2, %s10
      // Predicated region
      $region29: #{tpu_custom_call.1} parent=5 // pred_check
        %p10007 = pneg %p10006
      $region30: #{tpu_custom_call.1} parent=5 // pred_check_branch
        %10009 = sbr.rel (%p10007) target = $region32
      $region31: #{tpu_custom_call.1} parent=5 // pred_region
        %s10010 = ssub.s32 %s10, 2
        // Predicated region
        $region33: #{tpu_custom_call.1} parent=31 // pred_check
          %p10011 = pneg %p65
        $region34: #{tpu_custom_call.1} parent=31 // pred_check_branch
          %10013 = sbr.rel (%p10011) target = $region36
        $region35: #{tpu_custom_call.1} parent=31 // pred_region
          %s10014 = sand.u32 %s50, 1
          %s10015 = scalar_lea.sflag [#allocation3], %s10014
          %s10016 = sand.u32 %s50, 1
          %s10017 = smul.addr %s10016, 3824
          %s10018 = scalar_lea.vmem [#allocation2], %s10017
          %10019 = dma.done %s10015, 61184
        $region36: #{tpu_custom_call.1} parent=31 // pred_fallthru
          _
      $region32: #{tpu_custom_call.1} parent=5 // pred_fallthru
        _
    $region6: #{tpu_custom_call.1} parent=1 // loop_footer
      %s14 = sadd.s32 1, %s10
    $region7: #{tpu_custom_call.1} parent=1 // loop_footer_branch
      %9 = sbr.rel target = $region3
    $region8: #{tpu_custom_call.1} parent=1 // loop_exit
      _
    %10020 = vsyncpa [#allocation3], 1
    %s10021 = scalar_lea.sflag [#allocation3], 1
    %10022 = vsyncpa %s10021, 1

</llo_original>
